<compile_context>
chip_gen: v7x
topology: tpu7x:2x2x1
jax: 0.10.0
libtpu: 0.0.40
codegen_flags: <defaults>
</compile_context>

<pallas_src>
import functools

import jax
import jax.numpy as jnp
from jax.experimental import pallas as pl
from jax.experimental.pallas import tpu as pltpu

LN_EPS = 1e-5                       # PyTorch nn.LayerNorm default
LOG_EPS = -18.420680743952367       # log(1e-8)


# ----------------------------- shared math ----------------------------------
# These helpers use only jnp/lax ops so the Pallas kernel and the pure-JAX
# reference share bit-for-bit the same formulas.

def _layernorm(x, w, b):
    mu = jnp.mean(x, axis=-1, keepdims=True)
    var = jnp.mean((x - mu) ** 2, axis=-1, keepdims=True)
    return (x - mu) * jax.lax.rsqrt(var + LN_EPS) * w + b


def _cell_update(gates, C, n, m, h):
    """One plaCell state update from fused gate pre-activations.

    gates: (b, 6h) pre-activations in order [i, f, o, q, k, v]
           (the k block is already scaled by 1/sqrt(h); biases already added).
    C: (b, h, h)   n, m: (b, h)
    """
    i_til = jnp.clip(gates[:, 0 * h:1 * h], -100.0, 100.0)
    f_til = jnp.clip(gates[:, 1 * h:2 * h], -100.0, 100.0)
    o_til = jnp.clip(gates[:, 2 * h:3 * h], -100.0, 100.0)
    q_t = gates[:, 3 * h:4 * h]
    k_t = gates[:, 4 * h:5 * h]
    v_t = gates[:, 5 * h:6 * h]

    i_t = jnp.exp(i_til)
    f_t = jax.nn.sigmoid(f_til)
    o_t = jax.nn.sigmoid(o_til)

    # log(clamp(exp(i_tilda), 1e-8)) == max(i_tilda, log 1e-8)  (exact, one fewer log)
    log_i = jnp.maximum(i_til, LOG_EPS)
    log_f = jnp.log(jnp.maximum(f_t, 1e-8))
    m_t = jnp.maximum(log_f + m, log_i)
    # NOTE: uses i_t (= exp(i_tilda)), not i_tilda — exactly as the PyTorch reference.
    i_prime = jnp.exp(jnp.minimum(i_t - m_t, 20.0))

    outer = v_t[:, :, None] * k_t[:, None, :]                 # einsum('bi,bk->bik')
    C_t = f_t[:, :, None] * C + i_prime[:, :, None] * outer
    n_t = f_t * n + i_prime * k_t

    norm_inner = jnp.sum(n_t * q_t, axis=-1, keepdims=True)    # einsum('bh,bh->b')
    divisor = jnp.maximum(jnp.abs(norm_inner), 1.0)
    h_tilda = jnp.sum(C_t * q_t[:, None, :], axis=-1) / divisor
    h_t = o_t * h_tilda
    return h_t, C_t, n_t, m_t


# ------------------------------ Pallas kernel --------------------------------

def _pla_kernel(x_ref, w0_ref, b0_ref, ln0_ref,
                w1_ref, b1_ref, ln1_ref,
                wf0_ref, wf1_ref, bf_ref,
                y_ref, m_out_ref,
                C_scr, n_scr, m_scr, *, hidden_size, chunk, batch):
    c = pl.program_id(0)
    h = hidden_size

    # init_hidden: zero (C, n, m) at the very first time chunk.
    @pl.when(c == 0)
    def _():
        C_scr[...] = jnp.zeros_like(C_scr)
        n_scr[...] = jnp.zeros_like(n_scr)
        m_scr[...] = jnp.zeros_like(m_scr)

    # ---- layer 0: gate pre-activations for the WHOLE chunk in one matmul ----
    # (layer-0 gates depend only on x_t, not on the recurrent state)
    x2d = x_ref[0]                                   # (chunk*batch, input_size)
    xn0 = _layernorm(x2d, ln0_ref[0], ln0_ref[1])
    pre0 = jnp.dot(xn0.astype(jnp.bfloat16), w0_ref[...],
                   preferred_element_type=jnp.float32) + b0_ref[0]   # (chunk*b, 6h)

    # hoist weight / bias loads out of the unrolled loop
    w1 = w1_ref[...]
    b1 = b1_ref[0]
    ln1_w = ln1_ref[0]
    ln1_b = ln1_ref[1]
    wf0 = wf0_ref[...]
    wf1 = wf1_ref[...]
    bf = bf_ref[0]

    C = C_scr[...]
    n = n_scr[...]
    m = m_scr[...]

    # Compile-time-unrolled sequential loop over the chunk's time steps.
    for tl in range(chunk):
        g0 = pre0[tl * batch:(tl + 1) * batch, :]     # (batch, 6h) static slice
        h0, C, n, m = _cell_update(g0, C, n, m, h)

        # layer 1 (input is h0, which depends on the shared recurrent state)
        xn1 = _layernorm(h0, ln1_w, ln1_b)
        g1 = jnp.dot(xn1.astype(jnp.bfloat16), w1,
                     preferred_element_type=jnp.float32) + b1
        h1, C, n, m = _cell_update(g1, C, n, m, h)

        # fusion MLP without in-kernel concatenate (wf pre-split into wf0/wf1)
        fused = (jnp.dot(h0.astype(jnp.bfloat16), wf0, preferred_element_type=jnp.float32)
                 + jnp.dot(h1.astype(jnp.bfloat16), wf1, preferred_element_type=jnp.float32)
                 + bf)
        y_ref[tl] = (fused + h1).astype(y_ref.dtype)

    # persist recurrent state for the next time chunk
    C_scr[...] = C
    n_scr[...] = n
    m_scr[...] = m

    # only the final m matters; write it once on the last chunk
    @pl.when(c == pl.num_programs(0) - 1)
    def _():
        m_out_ref[...] = m.astype(m_out_ref.dtype)


def pla_forward(x, prep, hidden_size, chunk=None):
    """x: (seq_len, batch, input_size) f32.  Returns (outputs, m_t[1])."""
    seq_len, batch, input_size = x.shape
    if chunk is None:
        chunk = next(d for d in range(min(seq_len, 8), 0, -1) if seq_len % d == 0)
    assert seq_len % chunk == 0
    num_chunks = seq_len // chunk
    w0, b0, ln0, w1, b1, ln1, wf0, wf1, bf = prep

    # Present x as (num_chunks, chunk*batch, input_size) so layer-0 gates for a
    # whole chunk are a single lane-dense matmul (no in-kernel reshape needed).
    x_chunks = x.reshape(num_chunks, chunk * batch, input_size)

    kernel = functools.partial(_pla_kernel, hidden_size=hidden_size,
                               chunk=chunk, batch=batch)

    def full2d(a):
        return pl.BlockSpec(a.shape, lambda c: (0, 0))

    outputs, m_last = pl.pallas_call(
        kernel,
        out_shape=(jax.ShapeDtypeStruct((seq_len, batch, hidden_size), jnp.float32),
                   jax.ShapeDtypeStruct((batch, hidden_size), jnp.float32)),
        grid_spec=pltpu.PrefetchScalarGridSpec(
            num_scalar_prefetch=0,
            grid=(num_chunks,),
            in_specs=[pl.BlockSpec((1, chunk * batch, input_size), lambda c: (c, 0, 0)),
                      full2d(w0), full2d(b0), full2d(ln0),
                      full2d(w1), full2d(b1), full2d(ln1),
                      full2d(wf0), full2d(wf1), full2d(bf)],
            out_specs=[pl.BlockSpec((chunk, batch, hidden_size), lambda c: (c, 0, 0)),
                       pl.BlockSpec((batch, hidden_size), lambda c: (0, 0))],
            scratch_shapes=[pltpu.VMEM((batch, hidden_size, hidden_size), jnp.float32),
                            pltpu.VMEM((batch, hidden_size), jnp.float32),
                            pltpu.VMEM((batch, hidden_size), jnp.float32)]),
        compiler_params=pltpu.CompilerParams(dimension_semantics=("arbitrary",)),
    )(x_chunks, w0, b0, ln0, w1, b1, ln1, wf0, wf1, bf)
    # PyTorch returns (outputs, states[-1][1]) == m_t[1] (batch index 1).
    return outputs, m_last[1]


# --------------------------- pure-JAX reference ------------------------------

def pla_reference(x, prep, hidden_size):
    """Per-time-step loop mirroring the PyTorch forward (same prepared params)."""
    w0, b0, ln0, w1, b1, ln1, wf0, wf1, bf = prep
    seq_len, batch, _ = x.shape
    h = hidden_size
    C = jnp.zeros((batch, h, h), jnp.float32)
    n = jnp.zeros((batch, h), jnp.float32)
    m = jnp.zeros((batch, h), jnp.float32)
    outs = []
    for t in range(seq_len):
        xn0 = _layernorm(x[t], ln0[0], ln0[1])
        g0 = jnp.dot(xn0.astype(jnp.bfloat16), w0,
                     preferred_element_type=jnp.float32) + b0[0]
        h0, C, n, m = _cell_update(g0, C, n, m, h)
        xn1 = _layernorm(h0, ln1[0], ln1[1])
        g1 = jnp.dot(xn1.astype(jnp.bfloat16), w1,
                     preferred_element_type=jnp.float32) + b1[0]
        h1, C, n, m = _cell_update(g1, C, n, m, h)
        fused = (jnp.dot(h0.astype(jnp.bfloat16), wf0, preferred_element_type=jnp.float32)
                 + jnp.dot(h1.astype(jnp.bfloat16), wf1, preferred_element_type=jnp.float32)
                 + bf[0])
        outs.append(fused + h1)
    return jnp.stack(outs, axis=0), m[1]


# ----------------------- deterministic parameter setup -----------------------

def _orthogonal(key, shape):
    rows, cols = shape
    big, small = max(rows, cols), min(rows, cols)
    a = jax.random.normal(key, (big, small), dtype=jnp.float32)
    q, r = jnp.linalg.qr(a)
    q = q * jnp.sign(jnp.diagonal(r))
    if rows < cols:
        q = q.T
    return q[:rows, :cols].astype(jnp.float32)


def make_cell_params(key, in_size, hid):
    """Per-gate orthogonal weights / zero biases / default LayerNorm, like PyTorch."""
    keys = jax.random.split(key, 6)
    W = {name: _orthogonal(k, (in_size, hid)) for name, k in zip("ifoqkv", keys)}
    B = {name: jnp.zeros((hid,), jnp.float32) for name in "ifoqkv"}
    ln_w = jnp.ones((in_size,), jnp.float32)
    ln_b = jnp.zeros((in_size,), jnp.float32)
    return W, B, ln_w, ln_b


def prepare_cell_params(W, B, hid, ln_w, ln_b):
    """Fuse the 6 gate weights into (in, 6h) bf16, fold 1/sqrt(h) into W_k."""
    scale = 1.0 / jnp.sqrt(jnp.float32(hid))
    w_all = jnp.concatenate(
        [W["i"], W["f"], W["o"], W["q"], W["k"] * scale, W["v"]],
        axis=1).astype(jnp.bfloat16)                                    # (in, 6h)
    b_all = jnp.concatenate(
        [B["i"], B["f"], B["o"], B["q"], B["k"], B["v"]])[None, :]      # (1, 6h) f32
    ln = jnp.stack([ln_w, ln_b])                                        # (2, in)  f32
    return w_all, b_all, ln


if __name__ == "__main__":
    input_size, hidden_size, num_layers = 16, 32, 2
    seq_len, batch = 8, 2   # batch >= 2: the module returns states[-1][1]

    key = jax.random.PRNGKey(0)
    k_x, k0, k1, kf = jax.random.split(key, 4)

    x = jax.random.normal(k_x, (seq_len, batch, input_size), dtype=jnp.float32)

    W0, B0, ln0w, ln0b = make_cell_params(k0, input_size, hidden_size)
    W1, B1, ln1w, ln1b = make_cell_params(k1, hidden_size, hidden_size)
    wf = 0.05 * jax.random.normal(kf, (hidden_size * num_layers, hidden_size),
                                  dtype=jnp.float32)
    bfusion = jnp.zeros((1, hidden_size), jnp.float32)

    w0a, b0a, ln0 = prepare_cell_params(W0, B0, hidden_size, ln0w, ln0b)
    w1a, b1a, ln1 = prepare_cell_params(W1, B1, hidden_size, ln1w, ln1b)
    wf0 = wf[:hidden_size].astype(jnp.bfloat16)    # multiplies h0 (layer-0 output)
    wf1 = wf[hidden_size:].astype(jnp.bfloat16)    # multiplies h1 (layer-1 output)
    prep = (w0a, b0a, ln0, w1a, b1a, ln1, wf0, wf1, bfusion)

    outputs, m_last = jax.block_until_ready(pla_forward(x, prep, hidden_size))

    ref_out, ref_m = pla_reference(x, prep, hidden_size)
    assert outputs.shape == (seq_len, batch, hidden_size)
    assert m_last.shape == (hidden_size,)
    assert jnp.allclose(outputs, ref_out, atol=2e-3, rtol=2e-3), \
        float(jnp.max(jnp.abs(outputs - ref_out)))
    assert jnp.allclose(m_last, ref_m, atol=2e-3, rtol=2e-3), \
        float(jnp.max(jnp.abs(m_last - ref_m)))

    print("KERNEL_OK")
</pallas_src>

<mosaic_0001>
module attributes {stable_mosaic.version = 11 : i64} {
  func.func @_pla_kernel(%arg0: i32, %arg1: memref<1x16x16xf32, #tpu.memory_space<vmem>>, %arg2: memref<16x192xbf16, #tpu.memory_space<vmem>>, %arg3: memref<1x192xf32, #tpu.memory_space<vmem>>, %arg4: memref<2x16xf32, #tpu.memory_space<vmem>>, %arg5: memref<32x192xbf16, #tpu.memory_space<vmem>>, %arg6: memref<1x192xf32, #tpu.memory_space<vmem>>, %arg7: memref<2x32xf32, #tpu.memory_space<vmem>>, %arg8: memref<32x32xbf16, #tpu.memory_space<vmem>>, %arg9: memref<32x32xbf16, #tpu.memory_space<vmem>>, %arg10: memref<1x32xf32, #tpu.memory_space<vmem>>, %arg11: memref<8x2x32xf32, #tpu.memory_space<vmem>>, %arg12: memref<2x32xf32, #tpu.memory_space<vmem>>, %arg13: memref<2x32x32xf32, #tpu.memory_space<vmem>>, %arg14: memref<2x32xf32, #tpu.memory_space<vmem>>, %arg15: memref<2x32xf32, #tpu.memory_space<vmem>>) attributes {dimension_semantics = [#tpu.dimension_semantics<arbitrary>], iteration_bounds = array<i64: 1>, scalar_prefetch = 0 : i64, scratch_operands = 3 : i64, tpu.core_type = #tpu.core_type<tc>, window_params = [{transform_indices = @transform_0, window_bounds = array<i64: 1, 16, 16>}, {pipeline_mode = #tpu.pipeline_mode<synchronous>, transform_indices = @transform_1, window_bounds = array<i64: 16, 192>}, {pipeline_mode = #tpu.pipeline_mode<synchronous>, transform_indices = @transform_2, window_bounds = array<i64: 1, 192>}, {pipeline_mode = #tpu.pipeline_mode<synchronous>, transform_indices = @transform_3, window_bounds = array<i64: 2, 16>}, {pipeline_mode = #tpu.pipeline_mode<synchronous>, transform_indices = @transform_4, window_bounds = array<i64: 32, 192>}, {pipeline_mode = #tpu.pipeline_mode<synchronous>, transform_indices = @transform_5, window_bounds = array<i64: 1, 192>}, {pipeline_mode = #tpu.pipeline_mode<synchronous>, transform_indices = @transform_6, window_bounds = array<i64: 2, 32>}, {pipeline_mode = #tpu.pipeline_mode<synchronous>, transform_indices = @transform_7, window_bounds = array<i64: 32, 32>}, {pipeline_mode = #tpu.pipeline_mode<synchronous>, transform_indices = @transform_8, window_bounds = array<i64: 32, 32>}, {pipeline_mode = #tpu.pipeline_mode<synchronous>, transform_indices = @transform_9, window_bounds = array<i64: 1, 32>}, {transform_indices = @transform_10, window_bounds = array<i64: 8, 2, 32>}, {pipeline_mode = #tpu.pipeline_mode<synchronous>, transform_indices = @transform_11, window_bounds = array<i64: 2, 32>}]} {
    %c0_i32 = arith.constant 0 : i32
    %0 = arith.cmpi eq, %arg0, %c0_i32 : i32
    %1 = arith.extui %0 : i1 to i32
    %c0_i32_0 = arith.constant 0 : i32
    %2 = arith.cmpi ne, %1, %c0_i32_0 : i32
    scf.if %2 {
      %cst_351 = arith.constant 0.000000e+00 : f32
      %1485 = vector.broadcast %cst_351 : f32 to vector<2x32x32xf32>
      %c0_352 = arith.constant 0 : index
      %c0_353 = arith.constant 0 : index
      %c0_354 = arith.constant 0 : index
      %1486 = vector.load %arg13[%c0_352, %c0_353, %c0_354] : memref<2x32x32xf32, #tpu.memory_space<vmem>>, vector<2x32x32xf32>
      tpu.vector_store %arg13[%c0_352, %c0_353, %c0_354], %1485 {strides = array<i32>} : memref<2x32x32xf32, #tpu.memory_space<vmem>>, vector<2x32x32xf32>,
      %cst_355 = arith.constant 0.000000e+00 : f32
      %1487 = vector.broadcast %cst_355 : f32 to vector<2x32xf32>
      %c0_356 = arith.constant 0 : index
      %c0_357 = arith.constant 0 : index
      %1488 = vector.load %arg14[%c0_356, %c0_357] : memref<2x32xf32, #tpu.memory_space<vmem>>, vector<2x32xf32>
      tpu.vector_store %arg14[%c0_356, %c0_357], %1487 {strides = array<i32>} : memref<2x32xf32, #tpu.memory_space<vmem>>, vector<2x32xf32>,
      %cst_358 = arith.constant 0.000000e+00 : f32
      %1489 = vector.broadcast %cst_358 : f32 to vector<2x32xf32>
      %c0_359 = arith.constant 0 : index
      %c0_360 = arith.constant 0 : index
      %1490 = vector.load %arg15[%c0_359, %c0_360] : memref<2x32xf32, #tpu.memory_space<vmem>>, vector<2x32xf32>
      tpu.vector_store %arg15[%c0_359, %c0_360], %1489 {strides = array<i32>} : memref<2x32xf32, #tpu.memory_space<vmem>>, vector<2x32xf32>,
    } else {
    }
    %c0 = arith.constant 0 : index
    %c0_1 = arith.constant 0 : index
    %c0_2 = arith.constant 0 : index
    %3 = vector.load %arg1[%c0, %c0_1, %c0_2] : memref<1x16x16xf32, #tpu.memory_space<vmem>>, vector<1x16x16xf32>
    %4 = vector.shape_cast %3 : vector<1x16x16xf32> to vector<16x16xf32>
    %c0_3 = arith.constant 0 : index
    %c0_4 = arith.constant 0 : index
    %5 = vector.load %arg4[%c0_3, %c0_4] : memref<2x16xf32, #tpu.memory_space<vmem>>, vector<1x16xf32>
    %6 = vector.shape_cast %5 : vector<1x16xf32> to vector<16xf32>
    %c1 = arith.constant 1 : index
    %c0_5 = arith.constant 0 : index
    %7 = vector.load %arg4[%c1, %c0_5] : memref<2x16xf32, #tpu.memory_space<vmem>>, vector<1x16xf32>
    %8 = vector.shape_cast %7 : vector<1x16xf32> to vector<16xf32>
    %cst = arith.constant dense<0.000000e+00> : vector<16xf32>
    %9 = vector.multi_reduction <add>, %4, %cst [1] : vector<16x16xf32> to vector<16xf32>
    %10 = vector.shape_cast %9 : vector<16xf32> to vector<16x1xf32>
    %cst_6 = arith.constant 1.600000e+01 : f32
    %11 = vector.broadcast %cst_6 : f32 to vector<16x1xf32>
    %12 = arith.divf %10, %11 : vector<16x1xf32>
    %13 = vector.broadcast %12 : vector<16x1xf32> to vector<16x16xf32>
    %14 = arith.subf %4, %13 : vector<16x16xf32>
    %15 = arith.mulf %14, %14 : vector<16x16xf32>
    %cst_7 = arith.constant dense<0.000000e+00> : vector<16xf32>
    %16 = vector.multi_reduction <add>, %15, %cst_7 [1] : vector<16x16xf32> to vector<16xf32>
    %17 = vector.shape_cast %16 : vector<16xf32> to vector<16x1xf32>
    %cst_8 = arith.constant 1.600000e+01 : f32
    %18 = vector.broadcast %cst_8 : f32 to vector<16x1xf32>
    %19 = arith.divf %17, %18 : vector<16x1xf32>
    %20 = vector.broadcast %12 : vector<16x1xf32> to vector<16x16xf32>
    %21 = arith.subf %4, %20 : vector<16x16xf32>
    %cst_9 = arith.constant 9.99999974E-6 : f32
    %22 = vector.broadcast %cst_9 : f32 to vector<16x1xf32>
    %23 = arith.addf %19, %22 : vector<16x1xf32>
    %24 = math.rsqrt %23 : vector<16x1xf32>
    %25 = vector.broadcast %24 : vector<16x1xf32> to vector<16x16xf32>
    %26 = arith.mulf %21, %25 : vector<16x16xf32>
    %27 = vector.shape_cast %6 : vector<16xf32> to vector<1x16xf32>
    %28 = vector.broadcast %27 : vector<1x16xf32> to vector<16x16xf32>
    %29 = arith.mulf %26, %28 : vector<16x16xf32>
    %30 = vector.shape_cast %8 : vector<16xf32> to vector<1x16xf32>
    %31 = vector.broadcast %30 : vector<1x16xf32> to vector<16x16xf32>
    %32 = arith.addf %29, %31 : vector<16x16xf32>
    %33 = arith.truncf %32 : vector<16x16xf32> to vector<16x16xbf16>
    %c0_10 = arith.constant 0 : index
    %c0_11 = arith.constant 0 : index
    %34 = vector.load %arg2[%c0_10, %c0_11] : memref<16x192xbf16, #tpu.memory_space<vmem>>, vector<16x192xbf16>
    %cst_12 = arith.constant dense<0.000000e+00> : vector<16x192xf32>
    %35 = tpu.matmul %33, %34, %cst_12 {dimension_numbers = #tpu.dot_dimension_numbers<[1], [0], [0], [1], [0, 0, 1, 1], [], []>} : vector<16x16xbf16>, vector<16x192xbf16>, vector<16x192xf32> -> vector<16x192xf32>
    %c0_13 = arith.constant 0 : index
    %c0_14 = arith.constant 0 : index
    %36 = vector.load %arg3[%c0_13, %c0_14] : memref<1x192xf32, #tpu.memory_space<vmem>>, vector<1x192xf32>
    %37 = vector.shape_cast %36 : vector<1x192xf32> to vector<192xf32>
    %38 = vector.shape_cast %37 : vector<192xf32> to vector<1x192xf32>
    %39 = vector.broadcast %38 : vector<1x192xf32> to vector<16x192xf32>
    %40 = arith.addf %35, %39 : vector<16x192xf32>
    %c0_15 = arith.constant 0 : index
    %c0_16 = arith.constant 0 : index
    %41 = vector.load %arg5[%c0_15, %c0_16] : memref<32x192xbf16, #tpu.memory_space<vmem>>, vector<32x192xbf16>
    %c0_17 = arith.constant 0 : index
    %c0_18 = arith.constant 0 : index
    %42 = vector.load %arg6[%c0_17, %c0_18] : memref<1x192xf32, #tpu.memory_space<vmem>>, vector<1x192xf32>
    %43 = vector.shape_cast %42 : vector<1x192xf32> to vector<192xf32>
    %c0_19 = arith.constant 0 : index
    %c0_20 = arith.constant 0 : index
    %44 = vector.load %arg7[%c0_19, %c0_20] : memref<2x32xf32, #tpu.memory_space<vmem>>, vector<1x32xf32>
    %45 = vector.shape_cast %44 : vector<1x32xf32> to vector<32xf32>
    %c1_21 = arith.constant 1 : index
    %c0_22 = arith.constant 0 : index
    %46 = vector.load %arg7[%c1_21, %c0_22] : memref<2x32xf32, #tpu.memory_space<vmem>>, vector<1x32xf32>
    %47 = vector.shape_cast %46 : vector<1x32xf32> to vector<32xf32>
    %c0_23 = arith.constant 0 : index
    %c0_24 = arith.constant 0 : index
    %48 = vector.load %arg8[%c0_23, %c0_24] : memref<32x32xbf16, #tpu.memory_space<vmem>>, vector<32x32xbf16>
    %c0_25 = arith.constant 0 : index
    %c0_26 = arith.constant 0 : index
    %49 = vector.load %arg9[%c0_25, %c0_26] : memref<32x32xbf16, #tpu.memory_space<vmem>>, vector<32x32xbf16>
    %c0_27 = arith.constant 0 : index
    %c0_28 = arith.constant 0 : index
    %50 = vector.load %arg10[%c0_27, %c0_28] : memref<1x32xf32, #tpu.memory_space<vmem>>, vector<1x32xf32>
    %51 = vector.shape_cast %50 : vector<1x32xf32> to vector<32xf32>
    %c0_29 = arith.constant 0 : index
    %c0_30 = arith.constant 0 : index
    %c0_31 = arith.constant 0 : index
    %52 = vector.load %arg13[%c0_29, %c0_30, %c0_31] : memref<2x32x32xf32, #tpu.memory_space<vmem>>, vector<2x32x32xf32>
    %c0_32 = arith.constant 0 : index
    %c0_33 = arith.constant 0 : index
    %53 = vector.load %arg14[%c0_32, %c0_33] : memref<2x32xf32, #tpu.memory_space<vmem>>, vector<2x32xf32>
    %c0_34 = arith.constant 0 : index
    %c0_35 = arith.constant 0 : index
    %54 = vector.load %arg15[%c0_34, %c0_35] : memref<2x32xf32, #tpu.memory_space<vmem>>, vector<2x32xf32>
    %55 = vector.extract_strided_slice %40 {offsets = [0, 0], sizes = [2, 192], strides = [1, 1]} : vector<16x192xf32> to vector<2x192xf32>
    %56 = vector.extract_strided_slice %55 {offsets = [0, 0], sizes = [2, 32], strides = [1, 1]} : vector<2x192xf32> to vector<2x32xf32>
    %cst_36 = arith.constant -1.000000e+02 : f32
    %cst_37 = arith.constant 1.000000e+02 : f32
    %57 = vector.broadcast %cst_36 : f32 to vector<2x32xf32>
    %58 = arith.maximumf %57, %56 : vector<2x32xf32>
    %59 = vector.broadcast %cst_37 : f32 to vector<2x32xf32>
    %60 = arith.minimumf %59, %58 : vector<2x32xf32>
    %61 = vector.extract_strided_slice %55 {offsets = [0, 32], sizes = [2, 32], strides = [1, 1]} : vector<2x192xf32> to vector<2x32xf32>
    %cst_38 = arith.constant -1.000000e+02 : f32
    %cst_39 = arith.constant 1.000000e+02 : f32
    %62 = vector.broadcast %cst_38 : f32 to vector<2x32xf32>
    %63 = arith.maximumf %62, %61 : vector<2x32xf32>
    %64 = vector.broadcast %cst_39 : f32 to vector<2x32xf32>
    %65 = arith.minimumf %64, %63 : vector<2x32xf32>
    %66 = vector.extract_strided_slice %55 {offsets = [0, 64], sizes = [2, 32], strides = [1, 1]} : vector<2x192xf32> to vector<2x32xf32>
    %cst_40 = arith.constant -1.000000e+02 : f32
    %cst_41 = arith.constant 1.000000e+02 : f32
    %67 = vector.broadcast %cst_40 : f32 to vector<2x32xf32>
    %68 = arith.maximumf %67, %66 : vector<2x32xf32>
    %69 = vector.broadcast %cst_41 : f32 to vector<2x32xf32>
    %70 = arith.minimumf %69, %68 : vector<2x32xf32>
    %71 = vector.extract_strided_slice %55 {offsets = [0, 96], sizes = [2, 32], strides = [1, 1]} : vector<2x192xf32> to vector<2x32xf32>
    %72 = vector.extract_strided_slice %55 {offsets = [0, 128], sizes = [2, 32], strides = [1, 1]} : vector<2x192xf32> to vector<2x32xf32>
    %73 = vector.extract_strided_slice %55 {offsets = [0, 160], sizes = [2, 32], strides = [1, 1]} : vector<2x192xf32> to vector<2x32xf32>
    %74 = math.exp %60 : vector<2x32xf32>
    %75 = arith.negf %65 : vector<2x32xf32>
    %76 = math.exp %75 : vector<2x32xf32>
    %cst_42 = arith.constant 1.000000e+00 : f32
    %77 = vector.broadcast %cst_42 : f32 to vector<2x32xf32>
    %78 = arith.addf %77, %76 : vector<2x32xf32>
    %79 = arith.divf %77, %78 : vector<2x32xf32>
    %80 = arith.negf %70 : vector<2x32xf32>
    %81 = math.exp %80 : vector<2x32xf32>
    %cst_43 = arith.constant 1.000000e+00 : f32
    %82 = vector.broadcast %cst_43 : f32 to vector<2x32xf32>
    %83 = arith.addf %82, %81 : vector<2x32xf32>
    %84 = arith.divf %82, %83 : vector<2x32xf32>
    %cst_44 = arith.constant -18.420681 : f32
    %85 = vector.broadcast %cst_44 : f32 to vector<2x32xf32>
    %86 = arith.maximumf %60, %85 : vector<2x32xf32>
    %cst_45 = arith.constant 9.99999993E-9 : f32
    %87 = vector.broadcast %cst_45 : f32 to vector<2x32xf32>
    %88 = arith.maximumf %79, %87 : vector<2x32xf32>
    %89 = math.log %88 : vector<2x32xf32>
    %90 = arith.addf %89, %54 : vector<2x32xf32>
    %91 = arith.maximumf %90, %86 : vector<2x32xf32>
    %92 = arith.subf %74, %91 : vector<2x32xf32>
    %cst_46 = arith.constant 2.000000e+01 : f32
    %93 = vector.broadcast %cst_46 : f32 to vector<2x32xf32>
    %94 = arith.minimumf %92, %93 : vector<2x32xf32>
    %95 = math.exp %94 : vector<2x32xf32>
    %96 = vector.shape_cast %73 : vector<2x32xf32> to vector<2x32x1xf32>
    %97 = vector.shape_cast %72 : vector<2x32xf32> to vector<2x1x32xf32>
    %98 = vector.broadcast %96 : vector<2x32x1xf32> to vector<2x32x32xf32>
    %99 = vector.broadcast %97 : vector<2x1x32xf32> to vector<2x32x32xf32>
    %100 = arith.mulf %98, %99 : vector<2x32x32xf32>
    %101 = vector.shape_cast %79 : vector<2x32xf32> to vector<2x32x1xf32>
    %102 = vector.broadcast %101 : vector<2x32x1xf32> to vector<2x32x32xf32>
    %103 = arith.mulf %102, %52 : vector<2x32x32xf32>
    %104 = vector.shape_cast %95 : vector<2x32xf32> to vector<2x32x1xf32>
    %105 = vector.broadcast %104 : vector<2x32x1xf32> to vector<2x32x32xf32>
    %106 = arith.mulf %105, %100 : vector<2x32x32xf32>
    %107 = arith.addf %103, %106 : vector<2x32x32xf32>
    %108 = arith.mulf %79, %53 : vector<2x32xf32>
    %109 = arith.mulf %95, %72 : vector<2x32xf32>
    %110 = arith.addf %108, %109 : vector<2x32xf32>
    %111 = arith.mulf %110, %71 : vector<2x32xf32>
    %cst_47 = arith.constant dense<0.000000e+00> : vector<2xf32>
    %112 = vector.multi_reduction <add>, %111, %cst_47 [1] : vector<2x32xf32> to vector<2xf32>
    %113 = vector.shape_cast %112 : vector<2xf32> to vector<2x1xf32>
    %114 = math.absf %113 : vector<2x1xf32>
    %cst_48 = arith.constant 1.000000e+00 : f32
    %115 = vector.broadcast %cst_48 : f32 to vector<2x1xf32>
    %116 = arith.maximumf %114, %115 : vector<2x1xf32>
    %117 = vector.shape_cast %71 : vector<2x32xf32> to vector<2x1x32xf32>
    %118 = vector.broadcast %117 : vector<2x1x32xf32> to vector<2x32x32xf32>
    %119 = arith.mulf %107, %118 : vector<2x32x32xf32>
    %cst_49 = arith.constant dense<0.000000e+00> : vector<2x32xf32>
    %120 = vector.multi_reduction <add>, %119, %cst_49 [2] : vector<2x32x32xf32> to vector<2x32xf32>
    %121 = vector.broadcast %116 : vector<2x1xf32> to vector<2x32xf32>
    %122 = arith.divf %120, %121 : vector<2x32xf32>
    %123 = arith.mulf %84, %122 : vector<2x32xf32>
    %cst_50 = arith.constant dense<0.000000e+00> : vector<2xf32>
    %124 = vector.multi_reduction <add>, %123, %cst_50 [1] : vector<2x32xf32> to vector<2xf32>
    %125 = vector.shape_cast %124 : vector<2xf32> to vector<2x1xf32>
    %cst_51 = arith.constant 3.200000e+01 : f32
    %126 = vector.broadcast %cst_51 : f32 to vector<2x1xf32>
    %127 = arith.divf %125, %126 : vector<2x1xf32>
    %128 = vector.broadcast %127 : vector<2x1xf32> to vector<2x32xf32>
    %129 = arith.subf %123, %128 : vector<2x32xf32>
    %130 = arith.mulf %129, %129 : vector<2x32xf32>
    %cst_52 = arith.constant dense<0.000000e+00> : vector<2xf32>
    %131 = vector.multi_reduction <add>, %130, %cst_52 [1] : vector<2x32xf32> to vector<2xf32>
    %132 = vector.shape_cast %131 : vector<2xf32> to vector<2x1xf32>
    %cst_53 = arith.constant 3.200000e+01 : f32
    %133 = vector.broadcast %cst_53 : f32 to vector<2x1xf32>
    %134 = arith.divf %132, %133 : vector<2x1xf32>
    %135 = vector.broadcast %127 : vector<2x1xf32> to vector<2x32xf32>
    %136 = arith.subf %123, %135 : vector<2x32xf32>
    %cst_54 = arith.constant 9.99999974E-6 : f32
    %137 = vector.broadcast %cst_54 : f32 to vector<2x1xf32>
    %138 = arith.addf %134, %137 : vector<2x1xf32>
    %139 = math.rsqrt %138 : vector<2x1xf32>
    %140 = vector.broadcast %139 : vector<2x1xf32> to vector<2x32xf32>
    %141 = arith.mulf %136, %140 : vector<2x32xf32>
    %142 = vector.shape_cast %45 : vector<32xf32> to vector<1x32xf32>
    %143 = vector.broadcast %142 : vector<1x32xf32> to vector<2x32xf32>
    %144 = arith.mulf %141, %143 : vector<2x32xf32>
    %145 = vector.shape_cast %47 : vector<32xf32> to vector<1x32xf32>
    %146 = vector.broadcast %145 : vector<1x32xf32> to vector<2x32xf32>
    %147 = arith.addf %144, %146 : vector<2x32xf32>
    %148 = arith.truncf %147 : vector<2x32xf32> to vector<2x32xbf16>
    %cst_55 = arith.constant dense<0.000000e+00> : vector<2x192xf32>
    %149 = tpu.matmul %148, %41, %cst_55 {dimension_numbers = #tpu.dot_dimension_numbers<[1], [0], [0], [1], [0, 0, 1, 1], [], []>} : vector<2x32xbf16>, vector<32x192xbf16>, vector<2x192xf32> -> vector<2x192xf32>
    %150 = vector.shape_cast %43 : vector<192xf32> to vector<1x192xf32>
    %151 = vector.broadcast %150 : vector<1x192xf32> to vector<2x192xf32>
    %152 = arith.addf %149, %151 : vector<2x192xf32>
    %153 = vector.extract_strided_slice %152 {offsets = [0, 0], sizes = [2, 32], strides = [1, 1]} : vector<2x192xf32> to vector<2x32xf32>
    %cst_56 = arith.constant -1.000000e+02 : f32
    %cst_57 = arith.constant 1.000000e+02 : f32
    %154 = vector.broadcast %cst_56 : f32 to vector<2x32xf32>
    %155 = arith.maximumf %154, %153 : vector<2x32xf32>
    %156 = vector.broadcast %cst_57 : f32 to vector<2x32xf32>
    %157 = arith.minimumf %156, %155 : vector<2x32xf32>
    %158 = vector.extract_strided_slice %152 {offsets = [0, 32], sizes = [2, 32], strides = [1, 1]} : vector<2x192xf32> to vector<2x32xf32>
    %cst_58 = arith.constant -1.000000e+02 : f32
    %cst_59 = arith.constant 1.000000e+02 : f32
    %159 = vector.broadcast %cst_58 : f32 to vector<2x32xf32>
    %160 = arith.maximumf %159, %158 : vector<2x32xf32>
    %161 = vector.broadcast %cst_59 : f32 to vector<2x32xf32>
    %162 = arith.minimumf %161, %160 : vector<2x32xf32>
    %163 = vector.extract_strided_slice %152 {offsets = [0, 64], sizes = [2, 32], strides = [1, 1]} : vector<2x192xf32> to vector<2x32xf32>
    %cst_60 = arith.constant -1.000000e+02 : f32
    %cst_61 = arith.constant 1.000000e+02 : f32
    %164 = vector.broadcast %cst_60 : f32 to vector<2x32xf32>
    %165 = arith.maximumf %164, %163 : vector<2x32xf32>
    %166 = vector.broadcast %cst_61 : f32 to vector<2x32xf32>
    %167 = arith.minimumf %166, %165 : vector<2x32xf32>
    %168 = vector.extract_strided_slice %152 {offsets = [0, 96], sizes = [2, 32], strides = [1, 1]} : vector<2x192xf32> to vector<2x32xf32>
    %169 = vector.extract_strided_slice %152 {offsets = [0, 128], sizes = [2, 32], strides = [1, 1]} : vector<2x192xf32> to vector<2x32xf32>
    %170 = vector.extract_strided_slice %152 {offsets = [0, 160], sizes = [2, 32], strides = [1, 1]} : vector<2x192xf32> to vector<2x32xf32>
    %171 = math.exp %157 : vector<2x32xf32>
    %172 = arith.negf %162 : vector<2x32xf32>
    %173 = math.exp %172 : vector<2x32xf32>
    %cst_62 = arith.constant 1.000000e+00 : f32
    %174 = vector.broadcast %cst_62 : f32 to vector<2x32xf32>
    %175 = arith.addf %174, %173 : vector<2x32xf32>
    %176 = arith.divf %174, %175 : vector<2x32xf32>
    %177 = arith.negf %167 : vector<2x32xf32>
    %178 = math.exp %177 : vector<2x32xf32>
    %cst_63 = arith.constant 1.000000e+00 : f32
    %179 = vector.broadcast %cst_63 : f32 to vector<2x32xf32>
    %180 = arith.addf %179, %178 : vector<2x32xf32>
    %181 = arith.divf %179, %180 : vector<2x32xf32>
    %cst_64 = arith.constant -18.420681 : f32
    %182 = vector.broadcast %cst_64 : f32 to vector<2x32xf32>
    %183 = arith.maximumf %157, %182 : vector<2x32xf32>
    %cst_65 = arith.constant 9.99999993E-9 : f32
    %184 = vector.broadcast %cst_65 : f32 to vector<2x32xf32>
    %185 = arith.maximumf %176, %184 : vector<2x32xf32>
    %186 = math.log %185 : vector<2x32xf32>
    %187 = arith.addf %186, %91 : vector<2x32xf32>
    %188 = arith.maximumf %187, %183 : vector<2x32xf32>
    %189 = arith.subf %171, %188 : vector<2x32xf32>
    %cst_66 = arith.constant 2.000000e+01 : f32
    %190 = vector.broadcast %cst_66 : f32 to vector<2x32xf32>
    %191 = arith.minimumf %189, %190 : vector<2x32xf32>
    %192 = math.exp %191 : vector<2x32xf32>
    %193 = vector.shape_cast %170 : vector<2x32xf32> to vector<2x32x1xf32>
    %194 = vector.shape_cast %169 : vector<2x32xf32> to vector<2x1x32xf32>
    %195 = vector.broadcast %193 : vector<2x32x1xf32> to vector<2x32x32xf32>
    %196 = vector.broadcast %194 : vector<2x1x32xf32> to vector<2x32x32xf32>
    %197 = arith.mulf %195, %196 : vector<2x32x32xf32>
    %198 = vector.shape_cast %176 : vector<2x32xf32> to vector<2x32x1xf32>
    %199 = vector.broadcast %198 : vector<2x32x1xf32> to vector<2x32x32xf32>
    %200 = arith.mulf %199, %107 : vector<2x32x32xf32>
    %201 = vector.shape_cast %192 : vector<2x32xf32> to vector<2x32x1xf32>
    %202 = vector.broadcast %201 : vector<2x32x1xf32> to vector<2x32x32xf32>
    %203 = arith.mulf %202, %197 : vector<2x32x32xf32>
    %204 = arith.addf %200, %203 : vector<2x32x32xf32>
    %205 = arith.mulf %176, %110 : vector<2x32xf32>
    %206 = arith.mulf %192, %169 : vector<2x32xf32>
    %207 = arith.addf %205, %206 : vector<2x32xf32>
    %208 = arith.mulf %207, %168 : vector<2x32xf32>
    %cst_67 = arith.constant dense<0.000000e+00> : vector<2xf32>
    %209 = vector.multi_reduction <add>, %208, %cst_67 [1] : vector<2x32xf32> to vector<2xf32>
    %210 = vector.shape_cast %209 : vector<2xf32> to vector<2x1xf32>
    %211 = math.absf %210 : vector<2x1xf32>
    %cst_68 = arith.constant 1.000000e+00 : f32
    %212 = vector.broadcast %cst_68 : f32 to vector<2x1xf32>
    %213 = arith.maximumf %211, %212 : vector<2x1xf32>
    %214 = vector.shape_cast %168 : vector<2x32xf32> to vector<2x1x32xf32>
    %215 = vector.broadcast %214 : vector<2x1x32xf32> to vector<2x32x32xf32>
    %216 = arith.mulf %204, %215 : vector<2x32x32xf32>
    %cst_69 = arith.constant dense<0.000000e+00> : vector<2x32xf32>
    %217 = vector.multi_reduction <add>, %216, %cst_69 [2] : vector<2x32x32xf32> to vector<2x32xf32>
    %218 = vector.broadcast %213 : vector<2x1xf32> to vector<2x32xf32>
    %219 = arith.divf %217, %218 : vector<2x32xf32>
    %220 = arith.mulf %181, %219 : vector<2x32xf32>
    %221 = arith.truncf %123 : vector<2x32xf32> to vector<2x32xbf16>
    %cst_70 = arith.constant dense<0.000000e+00> : vector<2x32xf32>
    %222 = tpu.matmul %221, %48, %cst_70 {dimension_numbers = #tpu.dot_dimension_numbers<[1], [0], [0], [1], [0, 0, 1, 1], [], []>} : vector<2x32xbf16>, vector<32x32xbf16>, vector<2x32xf32> -> vector<2x32xf32>
    %223 = arith.truncf %220 : vector<2x32xf32> to vector<2x32xbf16>
    %cst_71 = arith.constant dense<0.000000e+00> : vector<2x32xf32>
    %224 = tpu.matmul %223, %49, %cst_71 {dimension_numbers = #tpu.dot_dimension_numbers<[1], [0], [0], [1], [0, 0, 1, 1], [], []>} : vector<2x32xbf16>, vector<32x32xbf16>, vector<2x32xf32> -> vector<2x32xf32>
    %225 = arith.addf %222, %224 : vector<2x32xf32>
    %226 = vector.shape_cast %51 : vector<32xf32> to vector<1x32xf32>
    %227 = vector.broadcast %226 : vector<1x32xf32> to vector<2x32xf32>
    %228 = arith.addf %225, %227 : vector<2x32xf32>
    %229 = arith.addf %228, %220 : vector<2x32xf32>
    %c0_72 = arith.constant 0 : index
    %c0_73 = arith.constant 0 : index
    %c0_74 = arith.constant 0 : index
    %230 = vector.load %arg11[%c0_72, %c0_73, %c0_74] : memref<8x2x32xf32, #tpu.memory_space<vmem>>, vector<1x2x32xf32>
    %231 = vector.shape_cast %230 : vector<1x2x32xf32> to vector<2x32xf32>
    %232 = vector.shape_cast %229 : vector<2x32xf32> to vector<1x2x32xf32>
    tpu.vector_store %arg11[%c0_72, %c0_73, %c0_74], %232 {strides = array<i32>} : memref<8x2x32xf32, #tpu.memory_space<vmem>>, vector<1x2x32xf32>,
    %233 = vector.extract_strided_slice %40 {offsets = [2, 0], sizes = [2, 192], strides = [1, 1]} : vector<16x192xf32> to vector<2x192xf32>
    %234 = vector.extract_strided_slice %233 {offsets = [0, 0], sizes = [2, 32], strides = [1, 1]} : vector<2x192xf32> to vector<2x32xf32>
    %cst_75 = arith.constant -1.000000e+02 : f32
    %cst_76 = arith.constant 1.000000e+02 : f32
    %235 = vector.broadcast %cst_75 : f32 to vector<2x32xf32>
    %236 = arith.maximumf %235, %234 : vector<2x32xf32>
    %237 = vector.broadcast %cst_76 : f32 to vector<2x32xf32>
    %238 = arith.minimumf %237, %236 : vector<2x32xf32>
    %239 = vector.extract_strided_slice %233 {offsets = [0, 32], sizes = [2, 32], strides = [1, 1]} : vector<2x192xf32> to vector<2x32xf32>
    %cst_77 = arith.constant -1.000000e+02 : f32
    %cst_78 = arith.constant 1.000000e+02 : f32
    %240 = vector.broadcast %cst_77 : f32 to vector<2x32xf32>
    %241 = arith.maximumf %240, %239 : vector<2x32xf32>
    %242 = vector.broadcast %cst_78 : f32 to vector<2x32xf32>
    %243 = arith.minimumf %242, %241 : vector<2x32xf32>
    %244 = vector.extract_strided_slice %233 {offsets = [0, 64], sizes = [2, 32], strides = [1, 1]} : vector<2x192xf32> to vector<2x32xf32>
    %cst_79 = arith.constant -1.000000e+02 : f32
    %cst_80 = arith.constant 1.000000e+02 : f32
    %245 = vector.broadcast %cst_79 : f32 to vector<2x32xf32>
    %246 = arith.maximumf %245, %244 : vector<2x32xf32>
    %247 = vector.broadcast %cst_80 : f32 to vector<2x32xf32>
    %248 = arith.minimumf %247, %246 : vector<2x32xf32>
    %249 = vector.extract_strided_slice %233 {offsets = [0, 96], sizes = [2, 32], strides = [1, 1]} : vector<2x192xf32> to vector<2x32xf32>
    %250 = vector.extract_strided_slice %233 {offsets = [0, 128], sizes = [2, 32], strides = [1, 1]} : vector<2x192xf32> to vector<2x32xf32>
    %251 = vector.extract_strided_slice %233 {offsets = [0, 160], sizes = [2, 32], strides = [1, 1]} : vector<2x192xf32> to vector<2x32xf32>
    %252 = math.exp %238 : vector<2x32xf32>
    %253 = arith.negf %243 : vector<2x32xf32>
    %254 = math.exp %253 : vector<2x32xf32>
    %cst_81 = arith.constant 1.000000e+00 : f32
    %255 = vector.broadcast %cst_81 : f32 to vector<2x32xf32>
    %256 = arith.addf %255, %254 : vector<2x32xf32>
    %257 = arith.divf %255, %256 : vector<2x32xf32>
    %258 = arith.negf %248 : vector<2x32xf32>
    %259 = math.exp %258 : vector<2x32xf32>
    %cst_82 = arith.constant 1.000000e+00 : f32
    %260 = vector.broadcast %cst_82 : f32 to vector<2x32xf32>
    %261 = arith.addf %260, %259 : vector<2x32xf32>
    %262 = arith.divf %260, %261 : vector<2x32xf32>
    %cst_83 = arith.constant -18.420681 : f32
    %263 = vector.broadcast %cst_83 : f32 to vector<2x32xf32>
    %264 = arith.maximumf %238, %263 : vector<2x32xf32>
    %cst_84 = arith.constant 9.99999993E-9 : f32
    %265 = vector.broadcast %cst_84 : f32 to vector<2x32xf32>
    %266 = arith.maximumf %257, %265 : vector<2x32xf32>
    %267 = math.log %266 : vector<2x32xf32>
    %268 = arith.addf %267, %188 : vector<2x32xf32>
    %269 = arith.maximumf %268, %264 : vector<2x32xf32>
    %270 = arith.subf %252, %269 : vector<2x32xf32>
    %cst_85 = arith.constant 2.000000e+01 : f32
    %271 = vector.broadcast %cst_85 : f32 to vector<2x32xf32>
    %272 = arith.minimumf %270, %271 : vector<2x32xf32>
    %273 = math.exp %272 : vector<2x32xf32>
    %274 = vector.shape_cast %251 : vector<2x32xf32> to vector<2x32x1xf32>
    %275 = vector.shape_cast %250 : vector<2x32xf32> to vector<2x1x32xf32>
    %276 = vector.broadcast %274 : vector<2x32x1xf32> to vector<2x32x32xf32>
    %277 = vector.broadcast %275 : vector<2x1x32xf32> to vector<2x32x32xf32>
    %278 = arith.mulf %276, %277 : vector<2x32x32xf32>
    %279 = vector.shape_cast %257 : vector<2x32xf32> to vector<2x32x1xf32>
    %280 = vector.broadcast %279 : vector<2x32x1xf32> to vector<2x32x32xf32>
    %281 = arith.mulf %280, %204 : vector<2x32x32xf32>
    %282 = vector.shape_cast %273 : vector<2x32xf32> to vector<2x32x1xf32>
    %283 = vector.broadcast %282 : vector<2x32x1xf32> to vector<2x32x32xf32>
    %284 = arith.mulf %283, %278 : vector<2x32x32xf32>
    %285 = arith.addf %281, %284 : vector<2x32x32xf32>
    %286 = arith.mulf %257, %207 : vector<2x32xf32>
    %287 = arith.mulf %273, %250 : vector<2x32xf32>
    %288 = arith.addf %286, %287 : vector<2x32xf32>
    %289 = arith.mulf %288, %249 : vector<2x32xf32>
    %cst_86 = arith.constant dense<0.000000e+00> : vector<2xf32>
    %290 = vector.multi_reduction <add>, %289, %cst_86 [1] : vector<2x32xf32> to vector<2xf32>
    %291 = vector.shape_cast %290 : vector<2xf32> to vector<2x1xf32>
    %292 = math.absf %291 : vector<2x1xf32>
    %cst_87 = arith.constant 1.000000e+00 : f32
    %293 = vector.broadcast %cst_87 : f32 to vector<2x1xf32>
    %294 = arith.maximumf %292, %293 : vector<2x1xf32>
    %295 = vector.shape_cast %249 : vector<2x32xf32> to vector<2x1x32xf32>
    %296 = vector.broadcast %295 : vector<2x1x32xf32> to vector<2x32x32xf32>
    %297 = arith.mulf %285, %296 : vector<2x32x32xf32>
    %cst_88 = arith.constant dense<0.000000e+00> : vector<2x32xf32>
    %298 = vector.multi_reduction <add>, %297, %cst_88 [2] : vector<2x32x32xf32> to vector<2x32xf32>
    %299 = vector.broadcast %294 : vector<2x1xf32> to vector<2x32xf32>
    %300 = arith.divf %298, %299 : vector<2x32xf32>
    %301 = arith.mulf %262, %300 : vector<2x32xf32>
    %cst_89 = arith.constant dense<0.000000e+00> : vector<2xf32>
    %302 = vector.multi_reduction <add>, %301, %cst_89 [1] : vector<2x32xf32> to vector<2xf32>
    %303 = vector.shape_cast %302 : vector<2xf32> to vector<2x1xf32>
    %cst_90 = arith.constant 3.200000e+01 : f32
    %304 = vector.broadcast %cst_90 : f32 to vector<2x1xf32>
    %305 = arith.divf %303, %304 : vector<2x1xf32>
    %306 = vector.broadcast %305 : vector<2x1xf32> to vector<2x32xf32>
    %307 = arith.subf %301, %306 : vector<2x32xf32>
    %308 = arith.mulf %307, %307 : vector<2x32xf32>
    %cst_91 = arith.constant dense<0.000000e+00> : vector<2xf32>
    %309 = vector.multi_reduction <add>, %308, %cst_91 [1] : vector<2x32xf32> to vector<2xf32>
    %310 = vector.shape_cast %309 : vector<2xf32> to vector<2x1xf32>
    %cst_92 = arith.constant 3.200000e+01 : f32
    %311 = vector.broadcast %cst_92 : f32 to vector<2x1xf32>
    %312 = arith.divf %310, %311 : vector<2x1xf32>
    %313 = vector.broadcast %305 : vector<2x1xf32> to vector<2x32xf32>
    %314 = arith.subf %301, %313 : vector<2x32xf32>
    %cst_93 = arith.constant 9.99999974E-6 : f32
    %315 = vector.broadcast %cst_93 : f32 to vector<2x1xf32>
    %316 = arith.addf %312, %315 : vector<2x1xf32>
    %317 = math.rsqrt %316 : vector<2x1xf32>
    %318 = vector.broadcast %317 : vector<2x1xf32> to vector<2x32xf32>
    %319 = arith.mulf %314, %318 : vector<2x32xf32>
    %320 = vector.shape_cast %45 : vector<32xf32> to vector<1x32xf32>
    %321 = vector.broadcast %320 : vector<1x32xf32> to vector<2x32xf32>
    %322 = arith.mulf %319, %321 : vector<2x32xf32>
    %323 = vector.shape_cast %47 : vector<32xf32> to vector<1x32xf32>
    %324 = vector.broadcast %323 : vector<1x32xf32> to vector<2x32xf32>
    %325 = arith.addf %322, %324 : vector<2x32xf32>
    %326 = arith.truncf %325 : vector<2x32xf32> to vector<2x32xbf16>
    %cst_94 = arith.constant dense<0.000000e+00> : vector<2x192xf32>
    %327 = tpu.matmul %326, %41, %cst_94 {dimension_numbers = #tpu.dot_dimension_numbers<[1], [0], [0], [1], [0, 0, 1, 1], [], []>} : vector<2x32xbf16>, vector<32x192xbf16>, vector<2x192xf32> -> vector<2x192xf32>
    %328 = vector.shape_cast %43 : vector<192xf32> to vector<1x192xf32>
    %329 = vector.broadcast %328 : vector<1x192xf32> to vector<2x192xf32>
    %330 = arith.addf %327, %329 : vector<2x192xf32>
    %331 = vector.extract_strided_slice %330 {offsets = [0, 0], sizes = [2, 32], strides = [1, 1]} : vector<2x192xf32> to vector<2x32xf32>
    %cst_95 = arith.constant -1.000000e+02 : f32
    %cst_96 = arith.constant 1.000000e+02 : f32
    %332 = vector.broadcast %cst_95 : f32 to vector<2x32xf32>
    %333 = arith.maximumf %332, %331 : vector<2x32xf32>
    %334 = vector.broadcast %cst_96 : f32 to vector<2x32xf32>
    %335 = arith.minimumf %334, %333 : vector<2x32xf32>
    %336 = vector.extract_strided_slice %330 {offsets = [0, 32], sizes = [2, 32], strides = [1, 1]} : vector<2x192xf32> to vector<2x32xf32>
    %cst_97 = arith.constant -1.000000e+02 : f32
    %cst_98 = arith.constant 1.000000e+02 : f32
    %337 = vector.broadcast %cst_97 : f32 to vector<2x32xf32>
    %338 = arith.maximumf %337, %336 : vector<2x32xf32>
    %339 = vector.broadcast %cst_98 : f32 to vector<2x32xf32>
    %340 = arith.minimumf %339, %338 : vector<2x32xf32>
    %341 = vector.extract_strided_slice %330 {offsets = [0, 64], sizes = [2, 32], strides = [1, 1]} : vector<2x192xf32> to vector<2x32xf32>
    %cst_99 = arith.constant -1.000000e+02 : f32
    %cst_100 = arith.constant 1.000000e+02 : f32
    %342 = vector.broadcast %cst_99 : f32 to vector<2x32xf32>
    %343 = arith.maximumf %342, %341 : vector<2x32xf32>
    %344 = vector.broadcast %cst_100 : f32 to vector<2x32xf32>
    %345 = arith.minimumf %344, %343 : vector<2x32xf32>
    %346 = vector.extract_strided_slice %330 {offsets = [0, 96], sizes = [2, 32], strides = [1, 1]} : vector<2x192xf32> to vector<2x32xf32>
    %347 = vector.extract_strided_slice %330 {offsets = [0, 128], sizes = [2, 32], strides = [1, 1]} : vector<2x192xf32> to vector<2x32xf32>
    %348 = vector.extract_strided_slice %330 {offsets = [0, 160], sizes = [2, 32], strides = [1, 1]} : vector<2x192xf32> to vector<2x32xf32>
    %349 = math.exp %335 : vector<2x32xf32>
    %350 = arith.negf %340 : vector<2x32xf32>
    %351 = math.exp %350 : vector<2x32xf32>
    %cst_101 = arith.constant 1.000000e+00 : f32
    %352 = vector.broadcast %cst_101 : f32 to vector<2x32xf32>
    %353 = arith.addf %352, %351 : vector<2x32xf32>
    %354 = arith.divf %352, %353 : vector<2x32xf32>
    %355 = arith.negf %345 : vector<2x32xf32>
    %356 = math.exp %355 : vector<2x32xf32>
    %cst_102 = arith.constant 1.000000e+00 : f32
    %357 = vector.broadcast %cst_102 : f32 to vector<2x32xf32>
    %358 = arith.addf %357, %356 : vector<2x32xf32>
    %359 = arith.divf %357, %358 : vector<2x32xf32>
    %cst_103 = arith.constant -18.420681 : f32
    %360 = vector.broadcast %cst_103 : f32 to vector<2x32xf32>
    %361 = arith.maximumf %335, %360 : vector<2x32xf32>
    %cst_104 = arith.constant 9.99999993E-9 : f32
    %362 = vector.broadcast %cst_104 : f32 to vector<2x32xf32>
    %363 = arith.maximumf %354, %362 : vector<2x32xf32>
    %364 = math.log %363 : vector<2x32xf32>
    %365 = arith.addf %364, %269 : vector<2x32xf32>
    %366 = arith.maximumf %365, %361 : vector<2x32xf32>
    %367 = arith.subf %349, %366 : vector<2x32xf32>
    %cst_105 = arith.constant 2.000000e+01 : f32
    %368 = vector.broadcast %cst_105 : f32 to vector<2x32xf32>
    %369 = arith.minimumf %367, %368 : vector<2x32xf32>
    %370 = math.exp %369 : vector<2x32xf32>
    %371 = vector.shape_cast %348 : vector<2x32xf32> to vector<2x32x1xf32>
    %372 = vector.shape_cast %347 : vector<2x32xf32> to vector<2x1x32xf32>
    %373 = vector.broadcast %371 : vector<2x32x1xf32> to vector<2x32x32xf32>
    %374 = vector.broadcast %372 : vector<2x1x32xf32> to vector<2x32x32xf32>
    %375 = arith.mulf %373, %374 : vector<2x32x32xf32>
    %376 = vector.shape_cast %354 : vector<2x32xf32> to vector<2x32x1xf32>
    %377 = vector.broadcast %376 : vector<2x32x1xf32> to vector<2x32x32xf32>
    %378 = arith.mulf %377, %285 : vector<2x32x32xf32>
    %379 = vector.shape_cast %370 : vector<2x32xf32> to vector<2x32x1xf32>
    %380 = vector.broadcast %379 : vector<2x32x1xf32> to vector<2x32x32xf32>
    %381 = arith.mulf %380, %375 : vector<2x32x32xf32>
    %382 = arith.addf %378, %381 : vector<2x32x32xf32>
    %383 = arith.mulf %354, %288 : vector<2x32xf32>
    %384 = arith.mulf %370, %347 : vector<2x32xf32>
    %385 = arith.addf %383, %384 : vector<2x32xf32>
    %386 = arith.mulf %385, %346 : vector<2x32xf32>
    %cst_106 = arith.constant dense<0.000000e+00> : vector<2xf32>
    %387 = vector.multi_reduction <add>, %386, %cst_106 [1] : vector<2x32xf32> to vector<2xf32>
    %388 = vector.shape_cast %387 : vector<2xf32> to vector<2x1xf32>
    %389 = math.absf %388 : vector<2x1xf32>
    %cst_107 = arith.constant 1.000000e+00 : f32
    %390 = vector.broadcast %cst_107 : f32 to vector<2x1xf32>
    %391 = arith.maximumf %389, %390 : vector<2x1xf32>
    %392 = vector.shape_cast %346 : vector<2x32xf32> to vector<2x1x32xf32>
    %393 = vector.broadcast %392 : vector<2x1x32xf32> to vector<2x32x32xf32>
    %394 = arith.mulf %382, %393 : vector<2x32x32xf32>
    %cst_108 = arith.constant dense<0.000000e+00> : vector<2x32xf32>
    %395 = vector.multi_reduction <add>, %394, %cst_108 [2] : vector<2x32x32xf32> to vector<2x32xf32>
    %396 = vector.broadcast %391 : vector<2x1xf32> to vector<2x32xf32>
    %397 = arith.divf %395, %396 : vector<2x32xf32>
    %398 = arith.mulf %359, %397 : vector<2x32xf32>
    %399 = arith.truncf %301 : vector<2x32xf32> to vector<2x32xbf16>
    %cst_109 = arith.constant dense<0.000000e+00> : vector<2x32xf32>
    %400 = tpu.matmul %399, %48, %cst_109 {dimension_numbers = #tpu.dot_dimension_numbers<[1], [0], [0], [1], [0, 0, 1, 1], [], []>} : vector<2x32xbf16>, vector<32x32xbf16>, vector<2x32xf32> -> vector<2x32xf32>
    %401 = arith.truncf %398 : vector<2x32xf32> to vector<2x32xbf16>
    %cst_110 = arith.constant dense<0.000000e+00> : vector<2x32xf32>
    %402 = tpu.matmul %401, %49, %cst_110 {dimension_numbers = #tpu.dot_dimension_numbers<[1], [0], [0], [1], [0, 0, 1, 1], [], []>} : vector<2x32xbf16>, vector<32x32xbf16>, vector<2x32xf32> -> vector<2x32xf32>
    %403 = arith.addf %400, %402 : vector<2x32xf32>
    %404 = vector.shape_cast %51 : vector<32xf32> to vector<1x32xf32>
    %405 = vector.broadcast %404 : vector<1x32xf32> to vector<2x32xf32>
    %406 = arith.addf %403, %405 : vector<2x32xf32>
    %407 = arith.addf %406, %398 : vector<2x32xf32>
    %c1_111 = arith.constant 1 : index
    %c0_112 = arith.constant 0 : index
    %c0_113 = arith.constant 0 : index
    %408 = vector.load %arg11[%c1_111, %c0_112, %c0_113] : memref<8x2x32xf32, #tpu.memory_space<vmem>>, vector<1x2x32xf32>
    %409 = vector.shape_cast %408 : vector<1x2x32xf32> to vector<2x32xf32>
    %410 = vector.shape_cast %407 : vector<2x32xf32> to vector<1x2x32xf32>
    tpu.vector_store %arg11[%c1_111, %c0_112, %c0_113], %410 {strides = array<i32>} : memref<8x2x32xf32, #tpu.memory_space<vmem>>, vector<1x2x32xf32>,
    %411 = vector.extract_strided_slice %40 {offsets = [4, 0], sizes = [2, 192], strides = [1, 1]} : vector<16x192xf32> to vector<2x192xf32>
    %412 = vector.extract_strided_slice %411 {offsets = [0, 0], sizes = [2, 32], strides = [1, 1]} : vector<2x192xf32> to vector<2x32xf32>
    %cst_114 = arith.constant -1.000000e+02 : f32
    %cst_115 = arith.constant 1.000000e+02 : f32
    %413 = vector.broadcast %cst_114 : f32 to vector<2x32xf32>
    %414 = arith.maximumf %413, %412 : vector<2x32xf32>
    %415 = vector.broadcast %cst_115 : f32 to vector<2x32xf32>
    %416 = arith.minimumf %415, %414 : vector<2x32xf32>
    %417 = vector.extract_strided_slice %411 {offsets = [0, 32], sizes = [2, 32], strides = [1, 1]} : vector<2x192xf32> to vector<2x32xf32>
    %cst_116 = arith.constant -1.000000e+02 : f32
    %cst_117 = arith.constant 1.000000e+02 : f32
    %418 = vector.broadcast %cst_116 : f32 to vector<2x32xf32>
    %419 = arith.maximumf %418, %417 : vector<2x32xf32>
    %420 = vector.broadcast %cst_117 : f32 to vector<2x32xf32>
    %421 = arith.minimumf %420, %419 : vector<2x32xf32>
    %422 = vector.extract_strided_slice %411 {offsets = [0, 64], sizes = [2, 32], strides = [1, 1]} : vector<2x192xf32> to vector<2x32xf32>
    %cst_118 = arith.constant -1.000000e+02 : f32
    %cst_119 = arith.constant 1.000000e+02 : f32
    %423 = vector.broadcast %cst_118 : f32 to vector<2x32xf32>
    %424 = arith.maximumf %423, %422 : vector<2x32xf32>
    %425 = vector.broadcast %cst_119 : f32 to vector<2x32xf32>
    %426 = arith.minimumf %425, %424 : vector<2x32xf32>
    %427 = vector.extract_strided_slice %411 {offsets = [0, 96], sizes = [2, 32], strides = [1, 1]} : vector<2x192xf32> to vector<2x32xf32>
    %428 = vector.extract_strided_slice %411 {offsets = [0, 128], sizes = [2, 32], strides = [1, 1]} : vector<2x192xf32> to vector<2x32xf32>
    %429 = vector.extract_strided_slice %411 {offsets = [0, 160], sizes = [2, 32], strides = [1, 1]} : vector<2x192xf32> to vector<2x32xf32>
    %430 = math.exp %416 : vector<2x32xf32>
    %431 = arith.negf %421 : vector<2x32xf32>
    %432 = math.exp %431 : vector<2x32xf32>
    %cst_120 = arith.constant 1.000000e+00 : f32
    %433 = vector.broadcast %cst_120 : f32 to vector<2x32xf32>
    %434 = arith.addf %433, %432 : vector<2x32xf32>
    %435 = arith.divf %433, %434 : vector<2x32xf32>
    %436 = arith.negf %426 : vector<2x32xf32>
    %437 = math.exp %436 : vector<2x32xf32>
    %cst_121 = arith.constant 1.000000e+00 : f32
    %438 = vector.broadcast %cst_121 : f32 to vector<2x32xf32>
    %439 = arith.addf %438, %437 : vector<2x32xf32>
    %440 = arith.divf %438, %439 : vector<2x32xf32>
    %cst_122 = arith.constant -18.420681 : f32
    %441 = vector.broadcast %cst_122 : f32 to vector<2x32xf32>
    %442 = arith.maximumf %416, %441 : vector<2x32xf32>
    %cst_123 = arith.constant 9.99999993E-9 : f32
    %443 = vector.broadcast %cst_123 : f32 to vector<2x32xf32>
    %444 = arith.maximumf %435, %443 : vector<2x32xf32>
    %445 = math.log %444 : vector<2x32xf32>
    %446 = arith.addf %445, %366 : vector<2x32xf32>
    %447 = arith.maximumf %446, %442 : vector<2x32xf32>
    %448 = arith.subf %430, %447 : vector<2x32xf32>
    %cst_124 = arith.constant 2.000000e+01 : f32
    %449 = vector.broadcast %cst_124 : f32 to vector<2x32xf32>
    %450 = arith.minimumf %448, %449 : vector<2x32xf32>
    %451 = math.exp %450 : vector<2x32xf32>
    %452 = vector.shape_cast %429 : vector<2x32xf32> to vector<2x32x1xf32>
    %453 = vector.shape_cast %428 : vector<2x32xf32> to vector<2x1x32xf32>
    %454 = vector.broadcast %452 : vector<2x32x1xf32> to vector<2x32x32xf32>
    %455 = vector.broadcast %453 : vector<2x1x32xf32> to vector<2x32x32xf32>
    %456 = arith.mulf %454, %455 : vector<2x32x32xf32>
    %457 = vector.shape_cast %435 : vector<2x32xf32> to vector<2x32x1xf32>
    %458 = vector.broadcast %457 : vector<2x32x1xf32> to vector<2x32x32xf32>
    %459 = arith.mulf %458, %382 : vector<2x32x32xf32>
    %460 = vector.shape_cast %451 : vector<2x32xf32> to vector<2x32x1xf32>
    %461 = vector.broadcast %460 : vector<2x32x1xf32> to vector<2x32x32xf32>
    %462 = arith.mulf %461, %456 : vector<2x32x32xf32>
    %463 = arith.addf %459, %462 : vector<2x32x32xf32>
    %464 = arith.mulf %435, %385 : vector<2x32xf32>
    %465 = arith.mulf %451, %428 : vector<2x32xf32>
    %466 = arith.addf %464, %465 : vector<2x32xf32>
    %467 = arith.mulf %466, %427 : vector<2x32xf32>
    %cst_125 = arith.constant dense<0.000000e+00> : vector<2xf32>
    %468 = vector.multi_reduction <add>, %467, %cst_125 [1] : vector<2x32xf32> to vector<2xf32>
    %469 = vector.shape_cast %468 : vector<2xf32> to vector<2x1xf32>
    %470 = math.absf %469 : vector<2x1xf32>
    %cst_126 = arith.constant 1.000000e+00 : f32
    %471 = vector.broadcast %cst_126 : f32 to vector<2x1xf32>
    %472 = arith.maximumf %470, %471 : vector<2x1xf32>
    %473 = vector.shape_cast %427 : vector<2x32xf32> to vector<2x1x32xf32>
    %474 = vector.broadcast %473 : vector<2x1x32xf32> to vector<2x32x32xf32>
    %475 = arith.mulf %463, %474 : vector<2x32x32xf32>
    %cst_127 = arith.constant dense<0.000000e+00> : vector<2x32xf32>
    %476 = vector.multi_reduction <add>, %475, %cst_127 [2] : vector<2x32x32xf32> to vector<2x32xf32>
    %477 = vector.broadcast %472 : vector<2x1xf32> to vector<2x32xf32>
    %478 = arith.divf %476, %477 : vector<2x32xf32>
    %479 = arith.mulf %440, %478 : vector<2x32xf32>
    %cst_128 = arith.constant dense<0.000000e+00> : vector<2xf32>
    %480 = vector.multi_reduction <add>, %479, %cst_128 [1] : vector<2x32xf32> to vector<2xf32>
    %481 = vector.shape_cast %480 : vector<2xf32> to vector<2x1xf32>
    %cst_129 = arith.constant 3.200000e+01 : f32
    %482 = vector.broadcast %cst_129 : f32 to vector<2x1xf32>
    %483 = arith.divf %481, %482 : vector<2x1xf32>
    %484 = vector.broadcast %483 : vector<2x1xf32> to vector<2x32xf32>
    %485 = arith.subf %479, %484 : vector<2x32xf32>
    %486 = arith.mulf %485, %485 : vector<2x32xf32>
    %cst_130 = arith.constant dense<0.000000e+00> : vector<2xf32>
    %487 = vector.multi_reduction <add>, %486, %cst_130 [1] : vector<2x32xf32> to vector<2xf32>
    %488 = vector.shape_cast %487 : vector<2xf32> to vector<2x1xf32>
    %cst_131 = arith.constant 3.200000e+01 : f32
    %489 = vector.broadcast %cst_131 : f32 to vector<2x1xf32>
    %490 = arith.divf %488, %489 : vector<2x1xf32>
    %491 = vector.broadcast %483 : vector<2x1xf32> to vector<2x32xf32>
    %492 = arith.subf %479, %491 : vector<2x32xf32>
    %cst_132 = arith.constant 9.99999974E-6 : f32
    %493 = vector.broadcast %cst_132 : f32 to vector<2x1xf32>
    %494 = arith.addf %490, %493 : vector<2x1xf32>
    %495 = math.rsqrt %494 : vector<2x1xf32>
    %496 = vector.broadcast %495 : vector<2x1xf32> to vector<2x32xf32>
    %497 = arith.mulf %492, %496 : vector<2x32xf32>
    %498 = vector.shape_cast %45 : vector<32xf32> to vector<1x32xf32>
    %499 = vector.broadcast %498 : vector<1x32xf32> to vector<2x32xf32>
    %500 = arith.mulf %497, %499 : vector<2x32xf32>
    %501 = vector.shape_cast %47 : vector<32xf32> to vector<1x32xf32>
    %502 = vector.broadcast %501 : vector<1x32xf32> to vector<2x32xf32>
    %503 = arith.addf %500, %502 : vector<2x32xf32>
    %504 = arith.truncf %503 : vector<2x32xf32> to vector<2x32xbf16>
    %cst_133 = arith.constant dense<0.000000e+00> : vector<2x192xf32>
    %505 = tpu.matmul %504, %41, %cst_133 {dimension_numbers = #tpu.dot_dimension_numbers<[1], [0], [0], [1], [0, 0, 1, 1], [], []>} : vector<2x32xbf16>, vector<32x192xbf16>, vector<2x192xf32> -> vector<2x192xf32>
    %506 = vector.shape_cast %43 : vector<192xf32> to vector<1x192xf32>
    %507 = vector.broadcast %506 : vector<1x192xf32> to vector<2x192xf32>
    %508 = arith.addf %505, %507 : vector<2x192xf32>
    %509 = vector.extract_strided_slice %508 {offsets = [0, 0], sizes = [2, 32], strides = [1, 1]} : vector<2x192xf32> to vector<2x32xf32>
    %cst_134 = arith.constant -1.000000e+02 : f32
    %cst_135 = arith.constant 1.000000e+02 : f32
    %510 = vector.broadcast %cst_134 : f32 to vector<2x32xf32>
    %511 = arith.maximumf %510, %509 : vector<2x32xf32>
    %512 = vector.broadcast %cst_135 : f32 to vector<2x32xf32>
    %513 = arith.minimumf %512, %511 : vector<2x32xf32>
    %514 = vector.extract_strided_slice %508 {offsets = [0, 32], sizes = [2, 32], strides = [1, 1]} : vector<2x192xf32> to vector<2x32xf32>
    %cst_136 = arith.constant -1.000000e+02 : f32
    %cst_137 = arith.constant 1.000000e+02 : f32
    %515 = vector.broadcast %cst_136 : f32 to vector<2x32xf32>
    %516 = arith.maximumf %515, %514 : vector<2x32xf32>
    %517 = vector.broadcast %cst_137 : f32 to vector<2x32xf32>
    %518 = arith.minimumf %517, %516 : vector<2x32xf32>
    %519 = vector.extract_strided_slice %508 {offsets = [0, 64], sizes = [2, 32], strides = [1, 1]} : vector<2x192xf32> to vector<2x32xf32>
    %cst_138 = arith.constant -1.000000e+02 : f32
    %cst_139 = arith.constant 1.000000e+02 : f32
    %520 = vector.broadcast %cst_138 : f32 to vector<2x32xf32>
    %521 = arith.maximumf %520, %519 : vector<2x32xf32>
    %522 = vector.broadcast %cst_139 : f32 to vector<2x32xf32>
    %523 = arith.minimumf %522, %521 : vector<2x32xf32>
    %524 = vector.extract_strided_slice %508 {offsets = [0, 96], sizes = [2, 32], strides = [1, 1]} : vector<2x192xf32> to vector<2x32xf32>
    %525 = vector.extract_strided_slice %508 {offsets = [0, 128], sizes = [2, 32], strides = [1, 1]} : vector<2x192xf32> to vector<2x32xf32>
    %526 = vector.extract_strided_slice %508 {offsets = [0, 160], sizes = [2, 32], strides = [1, 1]} : vector<2x192xf32> to vector<2x32xf32>
    %527 = math.exp %513 : vector<2x32xf32>
    %528 = arith.negf %518 : vector<2x32xf32>
    %529 = math.exp %528 : vector<2x32xf32>
    %cst_140 = arith.constant 1.000000e+00 : f32
    %530 = vector.broadcast %cst_140 : f32 to vector<2x32xf32>
    %531 = arith.addf %530, %529 : vector<2x32xf32>
    %532 = arith.divf %530, %531 : vector<2x32xf32>
    %533 = arith.negf %523 : vector<2x32xf32>
    %534 = math.exp %533 : vector<2x32xf32>
    %cst_141 = arith.constant 1.000000e+00 : f32
    %535 = vector.broadcast %cst_141 : f32 to vector<2x32xf32>
    %536 = arith.addf %535, %534 : vector<2x32xf32>
    %537 = arith.divf %535, %536 : vector<2x32xf32>
    %cst_142 = arith.constant -18.420681 : f32
    %538 = vector.broadcast %cst_142 : f32 to vector<2x32xf32>
    %539 = arith.maximumf %513, %538 : vector<2x32xf32>
    %cst_143 = arith.constant 9.99999993E-9 : f32
    %540 = vector.broadcast %cst_143 : f32 to vector<2x32xf32>
    %541 = arith.maximumf %532, %540 : vector<2x32xf32>
    %542 = math.log %541 : vector<2x32xf32>
    %543 = arith.addf %542, %447 : vector<2x32xf32>
    %544 = arith.maximumf %543, %539 : vector<2x32xf32>
    %545 = arith.subf %527, %544 : vector<2x32xf32>
    %cst_144 = arith.constant 2.000000e+01 : f32
    %546 = vector.broadcast %cst_144 : f32 to vector<2x32xf32>
    %547 = arith.minimumf %545, %546 : vector<2x32xf32>
    %548 = math.exp %547 : vector<2x32xf32>
    %549 = vector.shape_cast %526 : vector<2x32xf32> to vector<2x32x1xf32>
    %550 = vector.shape_cast %525 : vector<2x32xf32> to vector<2x1x32xf32>
    %551 = vector.broadcast %549 : vector<2x32x1xf32> to vector<2x32x32xf32>
    %552 = vector.broadcast %550 : vector<2x1x32xf32> to vector<2x32x32xf32>
    %553 = arith.mulf %551, %552 : vector<2x32x32xf32>
    %554 = vector.shape_cast %532 : vector<2x32xf32> to vector<2x32x1xf32>
    %555 = vector.broadcast %554 : vector<2x32x1xf32> to vector<2x32x32xf32>
    %556 = arith.mulf %555, %463 : vector<2x32x32xf32>
    %557 = vector.shape_cast %548 : vector<2x32xf32> to vector<2x32x1xf32>
    %558 = vector.broadcast %557 : vector<2x32x1xf32> to vector<2x32x32xf32>
    %559 = arith.mulf %558, %553 : vector<2x32x32xf32>
    %560 = arith.addf %556, %559 : vector<2x32x32xf32>
    %561 = arith.mulf %532, %466 : vector<2x32xf32>
    %562 = arith.mulf %548, %525 : vector<2x32xf32>
    %563 = arith.addf %561, %562 : vector<2x32xf32>
    %564 = arith.mulf %563, %524 : vector<2x32xf32>
    %cst_145 = arith.constant dense<0.000000e+00> : vector<2xf32>
    %565 = vector.multi_reduction <add>, %564, %cst_145 [1] : vector<2x32xf32> to vector<2xf32>
    %566 = vector.shape_cast %565 : vector<2xf32> to vector<2x1xf32>
    %567 = math.absf %566 : vector<2x1xf32>
    %cst_146 = arith.constant 1.000000e+00 : f32
    %568 = vector.broadcast %cst_146 : f32 to vector<2x1xf32>
    %569 = arith.maximumf %567, %568 : vector<2x1xf32>
    %570 = vector.shape_cast %524 : vector<2x32xf32> to vector<2x1x32xf32>
    %571 = vector.broadcast %570 : vector<2x1x32xf32> to vector<2x32x32xf32>
    %572 = arith.mulf %560, %571 : vector<2x32x32xf32>
    %cst_147 = arith.constant dense<0.000000e+00> : vector<2x32xf32>
    %573 = vector.multi_reduction <add>, %572, %cst_147 [2] : vector<2x32x32xf32> to vector<2x32xf32>
    %574 = vector.broadcast %569 : vector<2x1xf32> to vector<2x32xf32>
    %575 = arith.divf %573, %574 : vector<2x32xf32>
    %576 = arith.mulf %537, %575 : vector<2x32xf32>
    %577 = arith.truncf %479 : vector<2x32xf32> to vector<2x32xbf16>
    %cst_148 = arith.constant dense<0.000000e+00> : vector<2x32xf32>
    %578 = tpu.matmul %577, %48, %cst_148 {dimension_numbers = #tpu.dot_dimension_numbers<[1], [0], [0], [1], [0, 0, 1, 1], [], []>} : vector<2x32xbf16>, vector<32x32xbf16>, vector<2x32xf32> -> vector<2x32xf32>
    %579 = arith.truncf %576 : vector<2x32xf32> to vector<2x32xbf16>
    %cst_149 = arith.constant dense<0.000000e+00> : vector<2x32xf32>
    %580 = tpu.matmul %579, %49, %cst_149 {dimension_numbers = #tpu.dot_dimension_numbers<[1], [0], [0], [1], [0, 0, 1, 1], [], []>} : vector<2x32xbf16>, vector<32x32xbf16>, vector<2x32xf32> -> vector<2x32xf32>
    %581 = arith.addf %578, %580 : vector<2x32xf32>
    %582 = vector.shape_cast %51 : vector<32xf32> to vector<1x32xf32>
    %583 = vector.broadcast %582 : vector<1x32xf32> to vector<2x32xf32>
    %584 = arith.addf %581, %583 : vector<2x32xf32>
    %585 = arith.addf %584, %576 : vector<2x32xf32>
    %c2 = arith.constant 2 : index
    %c0_150 = arith.constant 0 : index
    %c0_151 = arith.constant 0 : index
    %586 = vector.load %arg11[%c2, %c0_150, %c0_151] : memref<8x2x32xf32, #tpu.memory_space<vmem>>, vector<1x2x32xf32>
    %587 = vector.shape_cast %586 : vector<1x2x32xf32> to vector<2x32xf32>
    %588 = vector.shape_cast %585 : vector<2x32xf32> to vector<1x2x32xf32>
    tpu.vector_store %arg11[%c2, %c0_150, %c0_151], %588 {strides = array<i32>} : memref<8x2x32xf32, #tpu.memory_space<vmem>>, vector<1x2x32xf32>,
    %589 = vector.extract_strided_slice %40 {offsets = [6, 0], sizes = [2, 192], strides = [1, 1]} : vector<16x192xf32> to vector<2x192xf32>
    %590 = vector.extract_strided_slice %589 {offsets = [0, 0], sizes = [2, 32], strides = [1, 1]} : vector<2x192xf32> to vector<2x32xf32>
    %cst_152 = arith.constant -1.000000e+02 : f32
    %cst_153 = arith.constant 1.000000e+02 : f32
    %591 = vector.broadcast %cst_152 : f32 to vector<2x32xf32>
    %592 = arith.maximumf %591, %590 : vector<2x32xf32>
    %593 = vector.broadcast %cst_153 : f32 to vector<2x32xf32>
    %594 = arith.minimumf %593, %592 : vector<2x32xf32>
    %595 = vector.extract_strided_slice %589 {offsets = [0, 32], sizes = [2, 32], strides = [1, 1]} : vector<2x192xf32> to vector<2x32xf32>
    %cst_154 = arith.constant -1.000000e+02 : f32
    %cst_155 = arith.constant 1.000000e+02 : f32
    %596 = vector.broadcast %cst_154 : f32 to vector<2x32xf32>
    %597 = arith.maximumf %596, %595 : vector<2x32xf32>
    %598 = vector.broadcast %cst_155 : f32 to vector<2x32xf32>
    %599 = arith.minimumf %598, %597 : vector<2x32xf32>
    %600 = vector.extract_strided_slice %589 {offsets = [0, 64], sizes = [2, 32], strides = [1, 1]} : vector<2x192xf32> to vector<2x32xf32>
    %cst_156 = arith.constant -1.000000e+02 : f32
    %cst_157 = arith.constant 1.000000e+02 : f32
    %601 = vector.broadcast %cst_156 : f32 to vector<2x32xf32>
    %602 = arith.maximumf %601, %600 : vector<2x32xf32>
    %603 = vector.broadcast %cst_157 : f32 to vector<2x32xf32>
    %604 = arith.minimumf %603, %602 : vector<2x32xf32>
    %605 = vector.extract_strided_slice %589 {offsets = [0, 96], sizes = [2, 32], strides = [1, 1]} : vector<2x192xf32> to vector<2x32xf32>
    %606 = vector.extract_strided_slice %589 {offsets = [0, 128], sizes = [2, 32], strides = [1, 1]} : vector<2x192xf32> to vector<2x32xf32>
    %607 = vector.extract_strided_slice %589 {offsets = [0, 160], sizes = [2, 32], strides = [1, 1]} : vector<2x192xf32> to vector<2x32xf32>
    %608 = math.exp %594 : vector<2x32xf32>
    %609 = arith.negf %599 : vector<2x32xf32>
    %610 = math.exp %609 : vector<2x32xf32>
    %cst_158 = arith.constant 1.000000e+00 : f32
    %611 = vector.broadcast %cst_158 : f32 to vector<2x32xf32>
    %612 = arith.addf %611, %610 : vector<2x32xf32>
    %613 = arith.divf %611, %612 : vector<2x32xf32>
    %614 = arith.negf %604 : vector<2x32xf32>
    %615 = math.exp %614 : vector<2x32xf32>
    %cst_159 = arith.constant 1.000000e+00 : f32
    %616 = vector.broadcast %cst_159 : f32 to vector<2x32xf32>
    %617 = arith.addf %616, %615 : vector<2x32xf32>
    %618 = arith.divf %616, %617 : vector<2x32xf32>
    %cst_160 = arith.constant -18.420681 : f32
    %619 = vector.broadcast %cst_160 : f32 to vector<2x32xf32>
    %620 = arith.maximumf %594, %619 : vector<2x32xf32>
    %cst_161 = arith.constant 9.99999993E-9 : f32
    %621 = vector.broadcast %cst_161 : f32 to vector<2x32xf32>
    %622 = arith.maximumf %613, %621 : vector<2x32xf32>
    %623 = math.log %622 : vector<2x32xf32>
    %624 = arith.addf %623, %544 : vector<2x32xf32>
    %625 = arith.maximumf %624, %620 : vector<2x32xf32>
    %626 = arith.subf %608, %625 : vector<2x32xf32>
    %cst_162 = arith.constant 2.000000e+01 : f32
    %627 = vector.broadcast %cst_162 : f32 to vector<2x32xf32>
    %628 = arith.minimumf %626, %627 : vector<2x32xf32>
    %629 = math.exp %628 : vector<2x32xf32>
    %630 = vector.shape_cast %607 : vector<2x32xf32> to vector<2x32x1xf32>
    %631 = vector.shape_cast %606 : vector<2x32xf32> to vector<2x1x32xf32>
    %632 = vector.broadcast %630 : vector<2x32x1xf32> to vector<2x32x32xf32>
    %633 = vector.broadcast %631 : vector<2x1x32xf32> to vector<2x32x32xf32>
    %634 = arith.mulf %632, %633 : vector<2x32x32xf32>
    %635 = vector.shape_cast %613 : vector<2x32xf32> to vector<2x32x1xf32>
    %636 = vector.broadcast %635 : vector<2x32x1xf32> to vector<2x32x32xf32>
    %637 = arith.mulf %636, %560 : vector<2x32x32xf32>
    %638 = vector.shape_cast %629 : vector<2x32xf32> to vector<2x32x1xf32>
    %639 = vector.broadcast %638 : vector<2x32x1xf32> to vector<2x32x32xf32>
    %640 = arith.mulf %639, %634 : vector<2x32x32xf32>
    %641 = arith.addf %637, %640 : vector<2x32x32xf32>
    %642 = arith.mulf %613, %563 : vector<2x32xf32>
    %643 = arith.mulf %629, %606 : vector<2x32xf32>
    %644 = arith.addf %642, %643 : vector<2x32xf32>
    %645 = arith.mulf %644, %605 : vector<2x32xf32>
    %cst_163 = arith.constant dense<0.000000e+00> : vector<2xf32>
    %646 = vector.multi_reduction <add>, %645, %cst_163 [1] : vector<2x32xf32> to vector<2xf32>
    %647 = vector.shape_cast %646 : vector<2xf32> to vector<2x1xf32>
    %648 = math.absf %647 : vector<2x1xf32>
    %cst_164 = arith.constant 1.000000e+00 : f32
    %649 = vector.broadcast %cst_164 : f32 to vector<2x1xf32>
    %650 = arith.maximumf %648, %649 : vector<2x1xf32>
    %651 = vector.shape_cast %605 : vector<2x32xf32> to vector<2x1x32xf32>
    %652 = vector.broadcast %651 : vector<2x1x32xf32> to vector<2x32x32xf32>
    %653 = arith.mulf %641, %652 : vector<2x32x32xf32>
    %cst_165 = arith.constant dense<0.000000e+00> : vector<2x32xf32>
    %654 = vector.multi_reduction <add>, %653, %cst_165 [2] : vector<2x32x32xf32> to vector<2x32xf32>
    %655 = vector.broadcast %650 : vector<2x1xf32> to vector<2x32xf32>
    %656 = arith.divf %654, %655 : vector<2x32xf32>
    %657 = arith.mulf %618, %656 : vector<2x32xf32>
    %cst_166 = arith.constant dense<0.000000e+00> : vector<2xf32>
    %658 = vector.multi_reduction <add>, %657, %cst_166 [1] : vector<2x32xf32> to vector<2xf32>
    %659 = vector.shape_cast %658 : vector<2xf32> to vector<2x1xf32>
    %cst_167 = arith.constant 3.200000e+01 : f32
    %660 = vector.broadcast %cst_167 : f32 to vector<2x1xf32>
    %661 = arith.divf %659, %660 : vector<2x1xf32>
    %662 = vector.broadcast %661 : vector<2x1xf32> to vector<2x32xf32>
    %663 = arith.subf %657, %662 : vector<2x32xf32>
    %664 = arith.mulf %663, %663 : vector<2x32xf32>
    %cst_168 = arith.constant dense<0.000000e+00> : vector<2xf32>
    %665 = vector.multi_reduction <add>, %664, %cst_168 [1] : vector<2x32xf32> to vector<2xf32>
    %666 = vector.shape_cast %665 : vector<2xf32> to vector<2x1xf32>
    %cst_169 = arith.constant 3.200000e+01 : f32
    %667 = vector.broadcast %cst_169 : f32 to vector<2x1xf32>
    %668 = arith.divf %666, %667 : vector<2x1xf32>
    %669 = vector.broadcast %661 : vector<2x1xf32> to vector<2x32xf32>
    %670 = arith.subf %657, %669 : vector<2x32xf32>
    %cst_170 = arith.constant 9.99999974E-6 : f32
    %671 = vector.broadcast %cst_170 : f32 to vector<2x1xf32>
    %672 = arith.addf %668, %671 : vector<2x1xf32>
    %673 = math.rsqrt %672 : vector<2x1xf32>
    %674 = vector.broadcast %673 : vector<2x1xf32> to vector<2x32xf32>
    %675 = arith.mulf %670, %674 : vector<2x32xf32>
    %676 = vector.shape_cast %45 : vector<32xf32> to vector<1x32xf32>
    %677 = vector.broadcast %676 : vector<1x32xf32> to vector<2x32xf32>
    %678 = arith.mulf %675, %677 : vector<2x32xf32>
    %679 = vector.shape_cast %47 : vector<32xf32> to vector<1x32xf32>
    %680 = vector.broadcast %679 : vector<1x32xf32> to vector<2x32xf32>
    %681 = arith.addf %678, %680 : vector<2x32xf32>
    %682 = arith.truncf %681 : vector<2x32xf32> to vector<2x32xbf16>
    %cst_171 = arith.constant dense<0.000000e+00> : vector<2x192xf32>
    %683 = tpu.matmul %682, %41, %cst_171 {dimension_numbers = #tpu.dot_dimension_numbers<[1], [0], [0], [1], [0, 0, 1, 1], [], []>} : vector<2x32xbf16>, vector<32x192xbf16>, vector<2x192xf32> -> vector<2x192xf32>
    %684 = vector.shape_cast %43 : vector<192xf32> to vector<1x192xf32>
    %685 = vector.broadcast %684 : vector<1x192xf32> to vector<2x192xf32>
    %686 = arith.addf %683, %685 : vector<2x192xf32>
    %687 = vector.extract_strided_slice %686 {offsets = [0, 0], sizes = [2, 32], strides = [1, 1]} : vector<2x192xf32> to vector<2x32xf32>
    %cst_172 = arith.constant -1.000000e+02 : f32
    %cst_173 = arith.constant 1.000000e+02 : f32
    %688 = vector.broadcast %cst_172 : f32 to vector<2x32xf32>
    %689 = arith.maximumf %688, %687 : vector<2x32xf32>
    %690 = vector.broadcast %cst_173 : f32 to vector<2x32xf32>
    %691 = arith.minimumf %690, %689 : vector<2x32xf32>
    %692 = vector.extract_strided_slice %686 {offsets = [0, 32], sizes = [2, 32], strides = [1, 1]} : vector<2x192xf32> to vector<2x32xf32>
    %cst_174 = arith.constant -1.000000e+02 : f32
    %cst_175 = arith.constant 1.000000e+02 : f32
    %693 = vector.broadcast %cst_174 : f32 to vector<2x32xf32>
    %694 = arith.maximumf %693, %692 : vector<2x32xf32>
    %695 = vector.broadcast %cst_175 : f32 to vector<2x32xf32>
    %696 = arith.minimumf %695, %694 : vector<2x32xf32>
    %697 = vector.extract_strided_slice %686 {offsets = [0, 64], sizes = [2, 32], strides = [1, 1]} : vector<2x192xf32> to vector<2x32xf32>
    %cst_176 = arith.constant -1.000000e+02 : f32
    %cst_177 = arith.constant 1.000000e+02 : f32
    %698 = vector.broadcast %cst_176 : f32 to vector<2x32xf32>
    %699 = arith.maximumf %698, %697 : vector<2x32xf32>
    %700 = vector.broadcast %cst_177 : f32 to vector<2x32xf32>
    %701 = arith.minimumf %700, %699 : vector<2x32xf32>
    %702 = vector.extract_strided_slice %686 {offsets = [0, 96], sizes = [2, 32], strides = [1, 1]} : vector<2x192xf32> to vector<2x32xf32>
    %703 = vector.extract_strided_slice %686 {offsets = [0, 128], sizes = [2, 32], strides = [1, 1]} : vector<2x192xf32> to vector<2x32xf32>
    %704 = vector.extract_strided_slice %686 {offsets = [0, 160], sizes = [2, 32], strides = [1, 1]} : vector<2x192xf32> to vector<2x32xf32>
    %705 = math.exp %691 : vector<2x32xf32>
    %706 = arith.negf %696 : vector<2x32xf32>
    %707 = math.exp %706 : vector<2x32xf32>
    %cst_178 = arith.constant 1.000000e+00 : f32
    %708 = vector.broadcast %cst_178 : f32 to vector<2x32xf32>
    %709 = arith.addf %708, %707 : vector<2x32xf32>
    %710 = arith.divf %708, %709 : vector<2x32xf32>
    %711 = arith.negf %701 : vector<2x32xf32>
    %712 = math.exp %711 : vector<2x32xf32>
    %cst_179 = arith.constant 1.000000e+00 : f32
    %713 = vector.broadcast %cst_179 : f32 to vector<2x32xf32>
    %714 = arith.addf %713, %712 : vector<2x32xf32>
    %715 = arith.divf %713, %714 : vector<2x32xf32>
    %cst_180 = arith.constant -18.420681 : f32
    %716 = vector.broadcast %cst_180 : f32 to vector<2x32xf32>
    %717 = arith.maximumf %691, %716 : vector<2x32xf32>
    %cst_181 = arith.constant 9.99999993E-9 : f32
    %718 = vector.broadcast %cst_181 : f32 to vector<2x32xf32>
    %719 = arith.maximumf %710, %718 : vector<2x32xf32>
    %720 = math.log %719 : vector<2x32xf32>
    %721 = arith.addf %720, %625 : vector<2x32xf32>
    %722 = arith.maximumf %721, %717 : vector<2x32xf32>
    %723 = arith.subf %705, %722 : vector<2x32xf32>
    %cst_182 = arith.constant 2.000000e+01 : f32
    %724 = vector.broadcast %cst_182 : f32 to vector<2x32xf32>
    %725 = arith.minimumf %723, %724 : vector<2x32xf32>
    %726 = math.exp %725 : vector<2x32xf32>
    %727 = vector.shape_cast %704 : vector<2x32xf32> to vector<2x32x1xf32>
    %728 = vector.shape_cast %703 : vector<2x32xf32> to vector<2x1x32xf32>
    %729 = vector.broadcast %727 : vector<2x32x1xf32> to vector<2x32x32xf32>
    %730 = vector.broadcast %728 : vector<2x1x32xf32> to vector<2x32x32xf32>
    %731 = arith.mulf %729, %730 : vector<2x32x32xf32>
    %732 = vector.shape_cast %710 : vector<2x32xf32> to vector<2x32x1xf32>
    %733 = vector.broadcast %732 : vector<2x32x1xf32> to vector<2x32x32xf32>
    %734 = arith.mulf %733, %641 : vector<2x32x32xf32>
    %735 = vector.shape_cast %726 : vector<2x32xf32> to vector<2x32x1xf32>
    %736 = vector.broadcast %735 : vector<2x32x1xf32> to vector<2x32x32xf32>
    %737 = arith.mulf %736, %731 : vector<2x32x32xf32>
    %738 = arith.addf %734, %737 : vector<2x32x32xf32>
    %739 = arith.mulf %710, %644 : vector<2x32xf32>
    %740 = arith.mulf %726, %703 : vector<2x32xf32>
    %741 = arith.addf %739, %740 : vector<2x32xf32>
    %742 = arith.mulf %741, %702 : vector<2x32xf32>
    %cst_183 = arith.constant dense<0.000000e+00> : vector<2xf32>
    %743 = vector.multi_reduction <add>, %742, %cst_183 [1] : vector<2x32xf32> to vector<2xf32>
    %744 = vector.shape_cast %743 : vector<2xf32> to vector<2x1xf32>
    %745 = math.absf %744 : vector<2x1xf32>
    %cst_184 = arith.constant 1.000000e+00 : f32
    %746 = vector.broadcast %cst_184 : f32 to vector<2x1xf32>
    %747 = arith.maximumf %745, %746 : vector<2x1xf32>
    %748 = vector.shape_cast %702 : vector<2x32xf32> to vector<2x1x32xf32>
    %749 = vector.broadcast %748 : vector<2x1x32xf32> to vector<2x32x32xf32>
    %750 = arith.mulf %738, %749 : vector<2x32x32xf32>
    %cst_185 = arith.constant dense<0.000000e+00> : vector<2x32xf32>
    %751 = vector.multi_reduction <add>, %750, %cst_185 [2] : vector<2x32x32xf32> to vector<2x32xf32>
    %752 = vector.broadcast %747 : vector<2x1xf32> to vector<2x32xf32>
    %753 = arith.divf %751, %752 : vector<2x32xf32>
    %754 = arith.mulf %715, %753 : vector<2x32xf32>
    %755 = arith.truncf %657 : vector<2x32xf32> to vector<2x32xbf16>
    %cst_186 = arith.constant dense<0.000000e+00> : vector<2x32xf32>
    %756 = tpu.matmul %755, %48, %cst_186 {dimension_numbers = #tpu.dot_dimension_numbers<[1], [0], [0], [1], [0, 0, 1, 1], [], []>} : vector<2x32xbf16>, vector<32x32xbf16>, vector<2x32xf32> -> vector<2x32xf32>
    %757 = arith.truncf %754 : vector<2x32xf32> to vector<2x32xbf16>
    %cst_187 = arith.constant dense<0.000000e+00> : vector<2x32xf32>
    %758 = tpu.matmul %757, %49, %cst_187 {dimension_numbers = #tpu.dot_dimension_numbers<[1], [0], [0], [1], [0, 0, 1, 1], [], []>} : vector<2x32xbf16>, vector<32x32xbf16>, vector<2x32xf32> -> vector<2x32xf32>
    %759 = arith.addf %756, %758 : vector<2x32xf32>
    %760 = vector.shape_cast %51 : vector<32xf32> to vector<1x32xf32>
    %761 = vector.broadcast %760 : vector<1x32xf32> to vector<2x32xf32>
    %762 = arith.addf %759, %761 : vector<2x32xf32>
    %763 = arith.addf %762, %754 : vector<2x32xf32>
    %c3 = arith.constant 3 : index
    %c0_188 = arith.constant 0 : index
    %c0_189 = arith.constant 0 : index
    %764 = vector.load %arg11[%c3, %c0_188, %c0_189] : memref<8x2x32xf32, #tpu.memory_space<vmem>>, vector<1x2x32xf32>
    %765 = vector.shape_cast %764 : vector<1x2x32xf32> to vector<2x32xf32>
    %766 = vector.shape_cast %763 : vector<2x32xf32> to vector<1x2x32xf32>
    tpu.vector_store %arg11[%c3, %c0_188, %c0_189], %766 {strides = array<i32>} : memref<8x2x32xf32, #tpu.memory_space<vmem>>, vector<1x2x32xf32>,
    %767 = vector.extract_strided_slice %40 {offsets = [8, 0], sizes = [2, 192], strides = [1, 1]} : vector<16x192xf32> to vector<2x192xf32>
    %768 = vector.extract_strided_slice %767 {offsets = [0, 0], sizes = [2, 32], strides = [1, 1]} : vector<2x192xf32> to vector<2x32xf32>
    %cst_190 = arith.constant -1.000000e+02 : f32
    %cst_191 = arith.constant 1.000000e+02 : f32
    %769 = vector.broadcast %cst_190 : f32 to vector<2x32xf32>
    %770 = arith.maximumf %769, %768 : vector<2x32xf32>
    %771 = vector.broadcast %cst_191 : f32 to vector<2x32xf32>
    %772 = arith.minimumf %771, %770 : vector<2x32xf32>
    %773 = vector.extract_strided_slice %767 {offsets = [0, 32], sizes = [2, 32], strides = [1, 1]} : vector<2x192xf32> to vector<2x32xf32>
    %cst_192 = arith.constant -1.000000e+02 : f32
    %cst_193 = arith.constant 1.000000e+02 : f32
    %774 = vector.broadcast %cst_192 : f32 to vector<2x32xf32>
    %775 = arith.maximumf %774, %773 : vector<2x32xf32>
    %776 = vector.broadcast %cst_193 : f32 to vector<2x32xf32>
    %777 = arith.minimumf %776, %775 : vector<2x32xf32>
    %778 = vector.extract_strided_slice %767 {offsets = [0, 64], sizes = [2, 32], strides = [1, 1]} : vector<2x192xf32> to vector<2x32xf32>
    %cst_194 = arith.constant -1.000000e+02 : f32
    %cst_195 = arith.constant 1.000000e+02 : f32
    %779 = vector.broadcast %cst_194 : f32 to vector<2x32xf32>
    %780 = arith.maximumf %779, %778 : vector<2x32xf32>
    %781 = vector.broadcast %cst_195 : f32 to vector<2x32xf32>
    %782 = arith.minimumf %781, %780 : vector<2x32xf32>
    %783 = vector.extract_strided_slice %767 {offsets = [0, 96], sizes = [2, 32], strides = [1, 1]} : vector<2x192xf32> to vector<2x32xf32>
    %784 = vector.extract_strided_slice %767 {offsets = [0, 128], sizes = [2, 32], strides = [1, 1]} : vector<2x192xf32> to vector<2x32xf32>
    %785 = vector.extract_strided_slice %767 {offsets = [0, 160], sizes = [2, 32], strides = [1, 1]} : vector<2x192xf32> to vector<2x32xf32>
    %786 = math.exp %772 : vector<2x32xf32>
    %787 = arith.negf %777 : vector<2x32xf32>
    %788 = math.exp %787 : vector<2x32xf32>
    %cst_196 = arith.constant 1.000000e+00 : f32
    %789 = vector.broadcast %cst_196 : f32 to vector<2x32xf32>
    %790 = arith.addf %789, %788 : vector<2x32xf32>
    %791 = arith.divf %789, %790 : vector<2x32xf32>
    %792 = arith.negf %782 : vector<2x32xf32>
    %793 = math.exp %792 : vector<2x32xf32>
    %cst_197 = arith.constant 1.000000e+00 : f32
    %794 = vector.broadcast %cst_197 : f32 to vector<2x32xf32>
    %795 = arith.addf %794, %793 : vector<2x32xf32>
    %796 = arith.divf %794, %795 : vector<2x32xf32>
    %cst_198 = arith.constant -18.420681 : f32
    %797 = vector.broadcast %cst_198 : f32 to vector<2x32xf32>
    %798 = arith.maximumf %772, %797 : vector<2x32xf32>
    %cst_199 = arith.constant 9.99999993E-9 : f32
    %799 = vector.broadcast %cst_199 : f32 to vector<2x32xf32>
    %800 = arith.maximumf %791, %799 : vector<2x32xf32>
    %801 = math.log %800 : vector<2x32xf32>
    %802 = arith.addf %801, %722 : vector<2x32xf32>
    %803 = arith.maximumf %802, %798 : vector<2x32xf32>
    %804 = arith.subf %786, %803 : vector<2x32xf32>
    %cst_200 = arith.constant 2.000000e+01 : f32
    %805 = vector.broadcast %cst_200 : f32 to vector<2x32xf32>
    %806 = arith.minimumf %804, %805 : vector<2x32xf32>
    %807 = math.exp %806 : vector<2x32xf32>
    %808 = vector.shape_cast %785 : vector<2x32xf32> to vector<2x32x1xf32>
    %809 = vector.shape_cast %784 : vector<2x32xf32> to vector<2x1x32xf32>
    %810 = vector.broadcast %808 : vector<2x32x1xf32> to vector<2x32x32xf32>
    %811 = vector.broadcast %809 : vector<2x1x32xf32> to vector<2x32x32xf32>
    %812 = arith.mulf %810, %811 : vector<2x32x32xf32>
    %813 = vector.shape_cast %791 : vector<2x32xf32> to vector<2x32x1xf32>
    %814 = vector.broadcast %813 : vector<2x32x1xf32> to vector<2x32x32xf32>
    %815 = arith.mulf %814, %738 : vector<2x32x32xf32>
    %816 = vector.shape_cast %807 : vector<2x32xf32> to vector<2x32x1xf32>
    %817 = vector.broadcast %816 : vector<2x32x1xf32> to vector<2x32x32xf32>
    %818 = arith.mulf %817, %812 : vector<2x32x32xf32>
    %819 = arith.addf %815, %818 : vector<2x32x32xf32>
    %820 = arith.mulf %791, %741 : vector<2x32xf32>
    %821 = arith.mulf %807, %784 : vector<2x32xf32>
    %822 = arith.addf %820, %821 : vector<2x32xf32>
    %823 = arith.mulf %822, %783 : vector<2x32xf32>
    %cst_201 = arith.constant dense<0.000000e+00> : vector<2xf32>
    %824 = vector.multi_reduction <add>, %823, %cst_201 [1] : vector<2x32xf32> to vector<2xf32>
    %825 = vector.shape_cast %824 : vector<2xf32> to vector<2x1xf32>
    %826 = math.absf %825 : vector<2x1xf32>
    %cst_202 = arith.constant 1.000000e+00 : f32
    %827 = vector.broadcast %cst_202 : f32 to vector<2x1xf32>
    %828 = arith.maximumf %826, %827 : vector<2x1xf32>
    %829 = vector.shape_cast %783 : vector<2x32xf32> to vector<2x1x32xf32>
    %830 = vector.broadcast %829 : vector<2x1x32xf32> to vector<2x32x32xf32>
    %831 = arith.mulf %819, %830 : vector<2x32x32xf32>
    %cst_203 = arith.constant dense<0.000000e+00> : vector<2x32xf32>
    %832 = vector.multi_reduction <add>, %831, %cst_203 [2] : vector<2x32x32xf32> to vector<2x32xf32>
    %833 = vector.broadcast %828 : vector<2x1xf32> to vector<2x32xf32>
    %834 = arith.divf %832, %833 : vector<2x32xf32>
    %835 = arith.mulf %796, %834 : vector<2x32xf32>
    %cst_204 = arith.constant dense<0.000000e+00> : vector<2xf32>
    %836 = vector.multi_reduction <add>, %835, %cst_204 [1] : vector<2x32xf32> to vector<2xf32>
    %837 = vector.shape_cast %836 : vector<2xf32> to vector<2x1xf32>
    %cst_205 = arith.constant 3.200000e+01 : f32
    %838 = vector.broadcast %cst_205 : f32 to vector<2x1xf32>
    %839 = arith.divf %837, %838 : vector<2x1xf32>
    %840 = vector.broadcast %839 : vector<2x1xf32> to vector<2x32xf32>
    %841 = arith.subf %835, %840 : vector<2x32xf32>
    %842 = arith.mulf %841, %841 : vector<2x32xf32>
    %cst_206 = arith.constant dense<0.000000e+00> : vector<2xf32>
    %843 = vector.multi_reduction <add>, %842, %cst_206 [1] : vector<2x32xf32> to vector<2xf32>
    %844 = vector.shape_cast %843 : vector<2xf32> to vector<2x1xf32>
    %cst_207 = arith.constant 3.200000e+01 : f32
    %845 = vector.broadcast %cst_207 : f32 to vector<2x1xf32>
    %846 = arith.divf %844, %845 : vector<2x1xf32>
    %847 = vector.broadcast %839 : vector<2x1xf32> to vector<2x32xf32>
    %848 = arith.subf %835, %847 : vector<2x32xf32>
    %cst_208 = arith.constant 9.99999974E-6 : f32
    %849 = vector.broadcast %cst_208 : f32 to vector<2x1xf32>
    %850 = arith.addf %846, %849 : vector<2x1xf32>
    %851 = math.rsqrt %850 : vector<2x1xf32>
    %852 = vector.broadcast %851 : vector<2x1xf32> to vector<2x32xf32>
    %853 = arith.mulf %848, %852 : vector<2x32xf32>
    %854 = vector.shape_cast %45 : vector<32xf32> to vector<1x32xf32>
    %855 = vector.broadcast %854 : vector<1x32xf32> to vector<2x32xf32>
    %856 = arith.mulf %853, %855 : vector<2x32xf32>
    %857 = vector.shape_cast %47 : vector<32xf32> to vector<1x32xf32>
    %858 = vector.broadcast %857 : vector<1x32xf32> to vector<2x32xf32>
    %859 = arith.addf %856, %858 : vector<2x32xf32>
    %860 = arith.truncf %859 : vector<2x32xf32> to vector<2x32xbf16>
    %cst_209 = arith.constant dense<0.000000e+00> : vector<2x192xf32>
    %861 = tpu.matmul %860, %41, %cst_209 {dimension_numbers = #tpu.dot_dimension_numbers<[1], [0], [0], [1], [0, 0, 1, 1], [], []>} : vector<2x32xbf16>, vector<32x192xbf16>, vector<2x192xf32> -> vector<2x192xf32>
    %862 = vector.shape_cast %43 : vector<192xf32> to vector<1x192xf32>
    %863 = vector.broadcast %862 : vector<1x192xf32> to vector<2x192xf32>
    %864 = arith.addf %861, %863 : vector<2x192xf32>
    %865 = vector.extract_strided_slice %864 {offsets = [0, 0], sizes = [2, 32], strides = [1, 1]} : vector<2x192xf32> to vector<2x32xf32>
    %cst_210 = arith.constant -1.000000e+02 : f32
    %cst_211 = arith.constant 1.000000e+02 : f32
    %866 = vector.broadcast %cst_210 : f32 to vector<2x32xf32>
    %867 = arith.maximumf %866, %865 : vector<2x32xf32>
    %868 = vector.broadcast %cst_211 : f32 to vector<2x32xf32>
    %869 = arith.minimumf %868, %867 : vector<2x32xf32>
    %870 = vector.extract_strided_slice %864 {offsets = [0, 32], sizes = [2, 32], strides = [1, 1]} : vector<2x192xf32> to vector<2x32xf32>
    %cst_212 = arith.constant -1.000000e+02 : f32
    %cst_213 = arith.constant 1.000000e+02 : f32
    %871 = vector.broadcast %cst_212 : f32 to vector<2x32xf32>
    %872 = arith.maximumf %871, %870 : vector<2x32xf32>
    %873 = vector.broadcast %cst_213 : f32 to vector<2x32xf32>
    %874 = arith.minimumf %873, %872 : vector<2x32xf32>
    %875 = vector.extract_strided_slice %864 {offsets = [0, 64], sizes = [2, 32], strides = [1, 1]} : vector<2x192xf32> to vector<2x32xf32>
    %cst_214 = arith.constant -1.000000e+02 : f32
    %cst_215 = arith.constant 1.000000e+02 : f32
    %876 = vector.broadcast %cst_214 : f32 to vector<2x32xf32>
    %877 = arith.maximumf %876, %875 : vector<2x32xf32>
    %878 = vector.broadcast %cst_215 : f32 to vector<2x32xf32>
    %879 = arith.minimumf %878, %877 : vector<2x32xf32>
    %880 = vector.extract_strided_slice %864 {offsets = [0, 96], sizes = [2, 32], strides = [1, 1]} : vector<2x192xf32> to vector<2x32xf32>
    %881 = vector.extract_strided_slice %864 {offsets = [0, 128], sizes = [2, 32], strides = [1, 1]} : vector<2x192xf32> to vector<2x32xf32>
    %882 = vector.extract_strided_slice %864 {offsets = [0, 160], sizes = [2, 32], strides = [1, 1]} : vector<2x192xf32> to vector<2x32xf32>
    %883 = math.exp %869 : vector<2x32xf32>
    %884 = arith.negf %874 : vector<2x32xf32>
    %885 = math.exp %884 : vector<2x32xf32>
    %cst_216 = arith.constant 1.000000e+00 : f32
    %886 = vector.broadcast %cst_216 : f32 to vector<2x32xf32>
    %887 = arith.addf %886, %885 : vector<2x32xf32>
    %888 = arith.divf %886, %887 : vector<2x32xf32>
    %889 = arith.negf %879 : vector<2x32xf32>
    %890 = math.exp %889 : vector<2x32xf32>
    %cst_217 = arith.constant 1.000000e+00 : f32
    %891 = vector.broadcast %cst_217 : f32 to vector<2x32xf32>
    %892 = arith.addf %891, %890 : vector<2x32xf32>
    %893 = arith.divf %891, %892 : vector<2x32xf32>
    %cst_218 = arith.constant -18.420681 : f32
    %894 = vector.broadcast %cst_218 : f32 to vector<2x32xf32>
    %895 = arith.maximumf %869, %894 : vector<2x32xf32>
    %cst_219 = arith.constant 9.99999993E-9 : f32
    %896 = vector.broadcast %cst_219 : f32 to vector<2x32xf32>
    %897 = arith.maximumf %888, %896 : vector<2x32xf32>
    %898 = math.log %897 : vector<2x32xf32>
    %899 = arith.addf %898, %803 : vector<2x32xf32>
    %900 = arith.maximumf %899, %895 : vector<2x32xf32>
    %901 = arith.subf %883, %900 : vector<2x32xf32>
    %cst_220 = arith.constant 2.000000e+01 : f32
    %902 = vector.broadcast %cst_220 : f32 to vector<2x32xf32>
    %903 = arith.minimumf %901, %902 : vector<2x32xf32>
    %904 = math.exp %903 : vector<2x32xf32>
    %905 = vector.shape_cast %882 : vector<2x32xf32> to vector<2x32x1xf32>
    %906 = vector.shape_cast %881 : vector<2x32xf32> to vector<2x1x32xf32>
    %907 = vector.broadcast %905 : vector<2x32x1xf32> to vector<2x32x32xf32>
    %908 = vector.broadcast %906 : vector<2x1x32xf32> to vector<2x32x32xf32>
    %909 = arith.mulf %907, %908 : vector<2x32x32xf32>
    %910 = vector.shape_cast %888 : vector<2x32xf32> to vector<2x32x1xf32>
    %911 = vector.broadcast %910 : vector<2x32x1xf32> to vector<2x32x32xf32>
    %912 = arith.mulf %911, %819 : vector<2x32x32xf32>
    %913 = vector.shape_cast %904 : vector<2x32xf32> to vector<2x32x1xf32>
    %914 = vector.broadcast %913 : vector<2x32x1xf32> to vector<2x32x32xf32>
    %915 = arith.mulf %914, %909 : vector<2x32x32xf32>
    %916 = arith.addf %912, %915 : vector<2x32x32xf32>
    %917 = arith.mulf %888, %822 : vector<2x32xf32>
    %918 = arith.mulf %904, %881 : vector<2x32xf32>
    %919 = arith.addf %917, %918 : vector<2x32xf32>
    %920 = arith.mulf %919, %880 : vector<2x32xf32>
    %cst_221 = arith.constant dense<0.000000e+00> : vector<2xf32>
    %921 = vector.multi_reduction <add>, %920, %cst_221 [1] : vector<2x32xf32> to vector<2xf32>
    %922 = vector.shape_cast %921 : vector<2xf32> to vector<2x1xf32>
    %923 = math.absf %922 : vector<2x1xf32>
    %cst_222 = arith.constant 1.000000e+00 : f32
    %924 = vector.broadcast %cst_222 : f32 to vector<2x1xf32>
    %925 = arith.maximumf %923, %924 : vector<2x1xf32>
    %926 = vector.shape_cast %880 : vector<2x32xf32> to vector<2x1x32xf32>
    %927 = vector.broadcast %926 : vector<2x1x32xf32> to vector<2x32x32xf32>
    %928 = arith.mulf %916, %927 : vector<2x32x32xf32>
    %cst_223 = arith.constant dense<0.000000e+00> : vector<2x32xf32>
    %929 = vector.multi_reduction <add>, %928, %cst_223 [2] : vector<2x32x32xf32> to vector<2x32xf32>
    %930 = vector.broadcast %925 : vector<2x1xf32> to vector<2x32xf32>
    %931 = arith.divf %929, %930 : vector<2x32xf32>
    %932 = arith.mulf %893, %931 : vector<2x32xf32>
    %933 = arith.truncf %835 : vector<2x32xf32> to vector<2x32xbf16>
    %cst_224 = arith.constant dense<0.000000e+00> : vector<2x32xf32>
    %934 = tpu.matmul %933, %48, %cst_224 {dimension_numbers = #tpu.dot_dimension_numbers<[1], [0], [0], [1], [0, 0, 1, 1], [], []>} : vector<2x32xbf16>, vector<32x32xbf16>, vector<2x32xf32> -> vector<2x32xf32>
    %935 = arith.truncf %932 : vector<2x32xf32> to vector<2x32xbf16>
    %cst_225 = arith.constant dense<0.000000e+00> : vector<2x32xf32>
    %936 = tpu.matmul %935, %49, %cst_225 {dimension_numbers = #tpu.dot_dimension_numbers<[1], [0], [0], [1], [0, 0, 1, 1], [], []>} : vector<2x32xbf16>, vector<32x32xbf16>, vector<2x32xf32> -> vector<2x32xf32>
    %937 = arith.addf %934, %936 : vector<2x32xf32>
    %938 = vector.shape_cast %51 : vector<32xf32> to vector<1x32xf32>
    %939 = vector.broadcast %938 : vector<1x32xf32> to vector<2x32xf32>
    %940 = arith.addf %937, %939 : vector<2x32xf32>
    %941 = arith.addf %940, %932 : vector<2x32xf32>
    %c4 = arith.constant 4 : index
    %c0_226 = arith.constant 0 : index
    %c0_227 = arith.constant 0 : index
    %942 = vector.load %arg11[%c4, %c0_226, %c0_227] : memref<8x2x32xf32, #tpu.memory_space<vmem>>, vector<1x2x32xf32>
    %943 = vector.shape_cast %942 : vector<1x2x32xf32> to vector<2x32xf32>
    %944 = vector.shape_cast %941 : vector<2x32xf32> to vector<1x2x32xf32>
    tpu.vector_store %arg11[%c4, %c0_226, %c0_227], %944 {strides = array<i32>} : memref<8x2x32xf32, #tpu.memory_space<vmem>>, vector<1x2x32xf32>,
    %945 = vector.extract_strided_slice %40 {offsets = [10, 0], sizes = [2, 192], strides = [1, 1]} : vector<16x192xf32> to vector<2x192xf32>
    %946 = vector.extract_strided_slice %945 {offsets = [0, 0], sizes = [2, 32], strides = [1, 1]} : vector<2x192xf32> to vector<2x32xf32>
    %cst_228 = arith.constant -1.000000e+02 : f32
    %cst_229 = arith.constant 1.000000e+02 : f32
    %947 = vector.broadcast %cst_228 : f32 to vector<2x32xf32>
    %948 = arith.maximumf %947, %946 : vector<2x32xf32>
    %949 = vector.broadcast %cst_229 : f32 to vector<2x32xf32>
    %950 = arith.minimumf %949, %948 : vector<2x32xf32>
    %951 = vector.extract_strided_slice %945 {offsets = [0, 32], sizes = [2, 32], strides = [1, 1]} : vector<2x192xf32> to vector<2x32xf32>
    %cst_230 = arith.constant -1.000000e+02 : f32
    %cst_231 = arith.constant 1.000000e+02 : f32
    %952 = vector.broadcast %cst_230 : f32 to vector<2x32xf32>
    %953 = arith.maximumf %952, %951 : vector<2x32xf32>
    %954 = vector.broadcast %cst_231 : f32 to vector<2x32xf32>
    %955 = arith.minimumf %954, %953 : vector<2x32xf32>
    %956 = vector.extract_strided_slice %945 {offsets = [0, 64], sizes = [2, 32], strides = [1, 1]} : vector<2x192xf32> to vector<2x32xf32>
    %cst_232 = arith.constant -1.000000e+02 : f32
    %cst_233 = arith.constant 1.000000e+02 : f32
    %957 = vector.broadcast %cst_232 : f32 to vector<2x32xf32>
    %958 = arith.maximumf %957, %956 : vector<2x32xf32>
    %959 = vector.broadcast %cst_233 : f32 to vector<2x32xf32>
    %960 = arith.minimumf %959, %958 : vector<2x32xf32>
    %961 = vector.extract_strided_slice %945 {offsets = [0, 96], sizes = [2, 32], strides = [1, 1]} : vector<2x192xf32> to vector<2x32xf32>
    %962 = vector.extract_strided_slice %945 {offsets = [0, 128], sizes = [2, 32], strides = [1, 1]} : vector<2x192xf32> to vector<2x32xf32>
    %963 = vector.extract_strided_slice %945 {offsets = [0, 160], sizes = [2, 32], strides = [1, 1]} : vector<2x192xf32> to vector<2x32xf32>
    %964 = math.exp %950 : vector<2x32xf32>
    %965 = arith.negf %955 : vector<2x32xf32>
    %966 = math.exp %965 : vector<2x32xf32>
    %cst_234 = arith.constant 1.000000e+00 : f32
    %967 = vector.broadcast %cst_234 : f32 to vector<2x32xf32>
    %968 = arith.addf %967, %966 : vector<2x32xf32>
    %969 = arith.divf %967, %968 : vector<2x32xf32>
    %970 = arith.negf %960 : vector<2x32xf32>
    %971 = math.exp %970 : vector<2x32xf32>
    %cst_235 = arith.constant 1.000000e+00 : f32
    %972 = vector.broadcast %cst_235 : f32 to vector<2x32xf32>
    %973 = arith.addf %972, %971 : vector<2x32xf32>
    %974 = arith.divf %972, %973 : vector<2x32xf32>
    %cst_236 = arith.constant -18.420681 : f32
    %975 = vector.broadcast %cst_236 : f32 to vector<2x32xf32>
    %976 = arith.maximumf %950, %975 : vector<2x32xf32>
    %cst_237 = arith.constant 9.99999993E-9 : f32
    %977 = vector.broadcast %cst_237 : f32 to vector<2x32xf32>
    %978 = arith.maximumf %969, %977 : vector<2x32xf32>
    %979 = math.log %978 : vector<2x32xf32>
    %980 = arith.addf %979, %900 : vector<2x32xf32>
    %981 = arith.maximumf %980, %976 : vector<2x32xf32>
    %982 = arith.subf %964, %981 : vector<2x32xf32>
    %cst_238 = arith.constant 2.000000e+01 : f32
    %983 = vector.broadcast %cst_238 : f32 to vector<2x32xf32>
    %984 = arith.minimumf %982, %983 : vector<2x32xf32>
    %985 = math.exp %984 : vector<2x32xf32>
    %986 = vector.shape_cast %963 : vector<2x32xf32> to vector<2x32x1xf32>
    %987 = vector.shape_cast %962 : vector<2x32xf32> to vector<2x1x32xf32>
    %988 = vector.broadcast %986 : vector<2x32x1xf32> to vector<2x32x32xf32>
    %989 = vector.broadcast %987 : vector<2x1x32xf32> to vector<2x32x32xf32>
    %990 = arith.mulf %988, %989 : vector<2x32x32xf32>
    %991 = vector.shape_cast %969 : vector<2x32xf32> to vector<2x32x1xf32>
    %992 = vector.broadcast %991 : vector<2x32x1xf32> to vector<2x32x32xf32>
    %993 = arith.mulf %992, %916 : vector<2x32x32xf32>
    %994 = vector.shape_cast %985 : vector<2x32xf32> to vector<2x32x1xf32>
    %995 = vector.broadcast %994 : vector<2x32x1xf32> to vector<2x32x32xf32>
    %996 = arith.mulf %995, %990 : vector<2x32x32xf32>
    %997 = arith.addf %993, %996 : vector<2x32x32xf32>
    %998 = arith.mulf %969, %919 : vector<2x32xf32>
    %999 = arith.mulf %985, %962 : vector<2x32xf32>
    %1000 = arith.addf %998, %999 : vector<2x32xf32>
    %1001 = arith.mulf %1000, %961 : vector<2x32xf32>
    %cst_239 = arith.constant dense<0.000000e+00> : vector<2xf32>
    %1002 = vector.multi_reduction <add>, %1001, %cst_239 [1] : vector<2x32xf32> to vector<2xf32>
    %1003 = vector.shape_cast %1002 : vector<2xf32> to vector<2x1xf32>
    %1004 = math.absf %1003 : vector<2x1xf32>
    %cst_240 = arith.constant 1.000000e+00 : f32
    %1005 = vector.broadcast %cst_240 : f32 to vector<2x1xf32>
    %1006 = arith.maximumf %1004, %1005 : vector<2x1xf32>
    %1007 = vector.shape_cast %961 : vector<2x32xf32> to vector<2x1x32xf32>
    %1008 = vector.broadcast %1007 : vector<2x1x32xf32> to vector<2x32x32xf32>
    %1009 = arith.mulf %997, %1008 : vector<2x32x32xf32>
    %cst_241 = arith.constant dense<0.000000e+00> : vector<2x32xf32>
    %1010 = vector.multi_reduction <add>, %1009, %cst_241 [2] : vector<2x32x32xf32> to vector<2x32xf32>
    %1011 = vector.broadcast %1006 : vector<2x1xf32> to vector<2x32xf32>
    %1012 = arith.divf %1010, %1011 : vector<2x32xf32>
    %1013 = arith.mulf %974, %1012 : vector<2x32xf32>
    %cst_242 = arith.constant dense<0.000000e+00> : vector<2xf32>
    %1014 = vector.multi_reduction <add>, %1013, %cst_242 [1] : vector<2x32xf32> to vector<2xf32>
    %1015 = vector.shape_cast %1014 : vector<2xf32> to vector<2x1xf32>
    %cst_243 = arith.constant 3.200000e+01 : f32
    %1016 = vector.broadcast %cst_243 : f32 to vector<2x1xf32>
    %1017 = arith.divf %1015, %1016 : vector<2x1xf32>
    %1018 = vector.broadcast %1017 : vector<2x1xf32> to vector<2x32xf32>
    %1019 = arith.subf %1013, %1018 : vector<2x32xf32>
    %1020 = arith.mulf %1019, %1019 : vector<2x32xf32>
    %cst_244 = arith.constant dense<0.000000e+00> : vector<2xf32>
    %1021 = vector.multi_reduction <add>, %1020, %cst_244 [1] : vector<2x32xf32> to vector<2xf32>
    %1022 = vector.shape_cast %1021 : vector<2xf32> to vector<2x1xf32>
    %cst_245 = arith.constant 3.200000e+01 : f32
    %1023 = vector.broadcast %cst_245 : f32 to vector<2x1xf32>
    %1024 = arith.divf %1022, %1023 : vector<2x1xf32>
    %1025 = vector.broadcast %1017 : vector<2x1xf32> to vector<2x32xf32>
    %1026 = arith.subf %1013, %1025 : vector<2x32xf32>
    %cst_246 = arith.constant 9.99999974E-6 : f32
    %1027 = vector.broadcast %cst_246 : f32 to vector<2x1xf32>
    %1028 = arith.addf %1024, %1027 : vector<2x1xf32>
    %1029 = math.rsqrt %1028 : vector<2x1xf32>
    %1030 = vector.broadcast %1029 : vector<2x1xf32> to vector<2x32xf32>
    %1031 = arith.mulf %1026, %1030 : vector<2x32xf32>
    %1032 = vector.shape_cast %45 : vector<32xf32> to vector<1x32xf32>
    %1033 = vector.broadcast %1032 : vector<1x32xf32> to vector<2x32xf32>
    %1034 = arith.mulf %1031, %1033 : vector<2x32xf32>
    %1035 = vector.shape_cast %47 : vector<32xf32> to vector<1x32xf32>
    %1036 = vector.broadcast %1035 : vector<1x32xf32> to vector<2x32xf32>
    %1037 = arith.addf %1034, %1036 : vector<2x32xf32>
    %1038 = arith.truncf %1037 : vector<2x32xf32> to vector<2x32xbf16>
    %cst_247 = arith.constant dense<0.000000e+00> : vector<2x192xf32>
    %1039 = tpu.matmul %1038, %41, %cst_247 {dimension_numbers = #tpu.dot_dimension_numbers<[1], [0], [0], [1], [0, 0, 1, 1], [], []>} : vector<2x32xbf16>, vector<32x192xbf16>, vector<2x192xf32> -> vector<2x192xf32>
    %1040 = vector.shape_cast %43 : vector<192xf32> to vector<1x192xf32>
    %1041 = vector.broadcast %1040 : vector<1x192xf32> to vector<2x192xf32>
    %1042 = arith.addf %1039, %1041 : vector<2x192xf32>
    %1043 = vector.extract_strided_slice %1042 {offsets = [0, 0], sizes = [2, 32], strides = [1, 1]} : vector<2x192xf32> to vector<2x32xf32>
    %cst_248 = arith.constant -1.000000e+02 : f32
    %cst_249 = arith.constant 1.000000e+02 : f32
    %1044 = vector.broadcast %cst_248 : f32 to vector<2x32xf32>
    %1045 = arith.maximumf %1044, %1043 : vector<2x32xf32>
    %1046 = vector.broadcast %cst_249 : f32 to vector<2x32xf32>
    %1047 = arith.minimumf %1046, %1045 : vector<2x32xf32>
    %1048 = vector.extract_strided_slice %1042 {offsets = [0, 32], sizes = [2, 32], strides = [1, 1]} : vector<2x192xf32> to vector<2x32xf32>
    %cst_250 = arith.constant -1.000000e+02 : f32
    %cst_251 = arith.constant 1.000000e+02 : f32
    %1049 = vector.broadcast %cst_250 : f32 to vector<2x32xf32>
    %1050 = arith.maximumf %1049, %1048 : vector<2x32xf32>
    %1051 = vector.broadcast %cst_251 : f32 to vector<2x32xf32>
    %1052 = arith.minimumf %1051, %1050 : vector<2x32xf32>
    %1053 = vector.extract_strided_slice %1042 {offsets = [0, 64], sizes = [2, 32], strides = [1, 1]} : vector<2x192xf32> to vector<2x32xf32>
    %cst_252 = arith.constant -1.000000e+02 : f32
    %cst_253 = arith.constant 1.000000e+02 : f32
    %1054 = vector.broadcast %cst_252 : f32 to vector<2x32xf32>
    %1055 = arith.maximumf %1054, %1053 : vector<2x32xf32>
    %1056 = vector.broadcast %cst_253 : f32 to vector<2x32xf32>
    %1057 = arith.minimumf %1056, %1055 : vector<2x32xf32>
    %1058 = vector.extract_strided_slice %1042 {offsets = [0, 96], sizes = [2, 32], strides = [1, 1]} : vector<2x192xf32> to vector<2x32xf32>
    %1059 = vector.extract_strided_slice %1042 {offsets = [0, 128], sizes = [2, 32], strides = [1, 1]} : vector<2x192xf32> to vector<2x32xf32>
    %1060 = vector.extract_strided_slice %1042 {offsets = [0, 160], sizes = [2, 32], strides = [1, 1]} : vector<2x192xf32> to vector<2x32xf32>
    %1061 = math.exp %1047 : vector<2x32xf32>
    %1062 = arith.negf %1052 : vector<2x32xf32>
    %1063 = math.exp %1062 : vector<2x32xf32>
    %cst_254 = arith.constant 1.000000e+00 : f32
    %1064 = vector.broadcast %cst_254 : f32 to vector<2x32xf32>
    %1065 = arith.addf %1064, %1063 : vector<2x32xf32>
    %1066 = arith.divf %1064, %1065 : vector<2x32xf32>
    %1067 = arith.negf %1057 : vector<2x32xf32>
    %1068 = math.exp %1067 : vector<2x32xf32>
    %cst_255 = arith.constant 1.000000e+00 : f32
    %1069 = vector.broadcast %cst_255 : f32 to vector<2x32xf32>
    %1070 = arith.addf %1069, %1068 : vector<2x32xf32>
    %1071 = arith.divf %1069, %1070 : vector<2x32xf32>
    %cst_256 = arith.constant -18.420681 : f32
    %1072 = vector.broadcast %cst_256 : f32 to vector<2x32xf32>
    %1073 = arith.maximumf %1047, %1072 : vector<2x32xf32>
    %cst_257 = arith.constant 9.99999993E-9 : f32
    %1074 = vector.broadcast %cst_257 : f32 to vector<2x32xf32>
    %1075 = arith.maximumf %1066, %1074 : vector<2x32xf32>
    %1076 = math.log %1075 : vector<2x32xf32>
    %1077 = arith.addf %1076, %981 : vector<2x32xf32>
    %1078 = arith.maximumf %1077, %1073 : vector<2x32xf32>
    %1079 = arith.subf %1061, %1078 : vector<2x32xf32>
    %cst_258 = arith.constant 2.000000e+01 : f32
    %1080 = vector.broadcast %cst_258 : f32 to vector<2x32xf32>
    %1081 = arith.minimumf %1079, %1080 : vector<2x32xf32>
    %1082 = math.exp %1081 : vector<2x32xf32>
    %1083 = vector.shape_cast %1060 : vector<2x32xf32> to vector<2x32x1xf32>
    %1084 = vector.shape_cast %1059 : vector<2x32xf32> to vector<2x1x32xf32>
    %1085 = vector.broadcast %1083 : vector<2x32x1xf32> to vector<2x32x32xf32>
    %1086 = vector.broadcast %1084 : vector<2x1x32xf32> to vector<2x32x32xf32>
    %1087 = arith.mulf %1085, %1086 : vector<2x32x32xf32>
    %1088 = vector.shape_cast %1066 : vector<2x32xf32> to vector<2x32x1xf32>
    %1089 = vector.broadcast %1088 : vector<2x32x1xf32> to vector<2x32x32xf32>
    %1090 = arith.mulf %1089, %997 : vector<2x32x32xf32>
    %1091 = vector.shape_cast %1082 : vector<2x32xf32> to vector<2x32x1xf32>
    %1092 = vector.broadcast %1091 : vector<2x32x1xf32> to vector<2x32x32xf32>
    %1093 = arith.mulf %1092, %1087 : vector<2x32x32xf32>
    %1094 = arith.addf %1090, %1093 : vector<2x32x32xf32>
    %1095 = arith.mulf %1066, %1000 : vector<2x32xf32>
    %1096 = arith.mulf %1082, %1059 : vector<2x32xf32>
    %1097 = arith.addf %1095, %1096 : vector<2x32xf32>
    %1098 = arith.mulf %1097, %1058 : vector<2x32xf32>
    %cst_259 = arith.constant dense<0.000000e+00> : vector<2xf32>
    %1099 = vector.multi_reduction <add>, %1098, %cst_259 [1] : vector<2x32xf32> to vector<2xf32>
    %1100 = vector.shape_cast %1099 : vector<2xf32> to vector<2x1xf32>
    %1101 = math.absf %1100 : vector<2x1xf32>
    %cst_260 = arith.constant 1.000000e+00 : f32
    %1102 = vector.broadcast %cst_260 : f32 to vector<2x1xf32>
    %1103 = arith.maximumf %1101, %1102 : vector<2x1xf32>
    %1104 = vector.shape_cast %1058 : vector<2x32xf32> to vector<2x1x32xf32>
    %1105 = vector.broadcast %1104 : vector<2x1x32xf32> to vector<2x32x32xf32>
    %1106 = arith.mulf %1094, %1105 : vector<2x32x32xf32>
    %cst_261 = arith.constant dense<0.000000e+00> : vector<2x32xf32>
    %1107 = vector.multi_reduction <add>, %1106, %cst_261 [2] : vector<2x32x32xf32> to vector<2x32xf32>
    %1108 = vector.broadcast %1103 : vector<2x1xf32> to vector<2x32xf32>
    %1109 = arith.divf %1107, %1108 : vector<2x32xf32>
    %1110 = arith.mulf %1071, %1109 : vector<2x32xf32>
    %1111 = arith.truncf %1013 : vector<2x32xf32> to vector<2x32xbf16>
    %cst_262 = arith.constant dense<0.000000e+00> : vector<2x32xf32>
    %1112 = tpu.matmul %1111, %48, %cst_262 {dimension_numbers = #tpu.dot_dimension_numbers<[1], [0], [0], [1], [0, 0, 1, 1], [], []>} : vector<2x32xbf16>, vector<32x32xbf16>, vector<2x32xf32> -> vector<2x32xf32>
    %1113 = arith.truncf %1110 : vector<2x32xf32> to vector<2x32xbf16>
    %cst_263 = arith.constant dense<0.000000e+00> : vector<2x32xf32>
    %1114 = tpu.matmul %1113, %49, %cst_263 {dimension_numbers = #tpu.dot_dimension_numbers<[1], [0], [0], [1], [0, 0, 1, 1], [], []>} : vector<2x32xbf16>, vector<32x32xbf16>, vector<2x32xf32> -> vector<2x32xf32>
    %1115 = arith.addf %1112, %1114 : vector<2x32xf32>
    %1116 = vector.shape_cast %51 : vector<32xf32> to vector<1x32xf32>
    %1117 = vector.broadcast %1116 : vector<1x32xf32> to vector<2x32xf32>
    %1118 = arith.addf %1115, %1117 : vector<2x32xf32>
    %1119 = arith.addf %1118, %1110 : vector<2x32xf32>
    %c5 = arith.constant 5 : index
    %c0_264 = arith.constant 0 : index
    %c0_265 = arith.constant 0 : index
    %1120 = vector.load %arg11[%c5, %c0_264, %c0_265] : memref<8x2x32xf32, #tpu.memory_space<vmem>>, vector<1x2x32xf32>
    %1121 = vector.shape_cast %1120 : vector<1x2x32xf32> to vector<2x32xf32>
    %1122 = vector.shape_cast %1119 : vector<2x32xf32> to vector<1x2x32xf32>
    tpu.vector_store %arg11[%c5, %c0_264, %c0_265], %1122 {strides = array<i32>} : memref<8x2x32xf32, #tpu.memory_space<vmem>>, vector<1x2x32xf32>,
    %1123 = vector.extract_strided_slice %40 {offsets = [12, 0], sizes = [2, 192], strides = [1, 1]} : vector<16x192xf32> to vector<2x192xf32>
    %1124 = vector.extract_strided_slice %1123 {offsets = [0, 0], sizes = [2, 32], strides = [1, 1]} : vector<2x192xf32> to vector<2x32xf32>
    %cst_266 = arith.constant -1.000000e+02 : f32
    %cst_267 = arith.constant 1.000000e+02 : f32
    %1125 = vector.broadcast %cst_266 : f32 to vector<2x32xf32>
    %1126 = arith.maximumf %1125, %1124 : vector<2x32xf32>
    %1127 = vector.broadcast %cst_267 : f32 to vector<2x32xf32>
    %1128 = arith.minimumf %1127, %1126 : vector<2x32xf32>
    %1129 = vector.extract_strided_slice %1123 {offsets = [0, 32], sizes = [2, 32], strides = [1, 1]} : vector<2x192xf32> to vector<2x32xf32>
    %cst_268 = arith.constant -1.000000e+02 : f32
    %cst_269 = arith.constant 1.000000e+02 : f32
    %1130 = vector.broadcast %cst_268 : f32 to vector<2x32xf32>
    %1131 = arith.maximumf %1130, %1129 : vector<2x32xf32>
    %1132 = vector.broadcast %cst_269 : f32 to vector<2x32xf32>
    %1133 = arith.minimumf %1132, %1131 : vector<2x32xf32>
    %1134 = vector.extract_strided_slice %1123 {offsets = [0, 64], sizes = [2, 32], strides = [1, 1]} : vector<2x192xf32> to vector<2x32xf32>
    %cst_270 = arith.constant -1.000000e+02 : f32
    %cst_271 = arith.constant 1.000000e+02 : f32
    %1135 = vector.broadcast %cst_270 : f32 to vector<2x32xf32>
    %1136 = arith.maximumf %1135, %1134 : vector<2x32xf32>
    %1137 = vector.broadcast %cst_271 : f32 to vector<2x32xf32>
    %1138 = arith.minimumf %1137, %1136 : vector<2x32xf32>
    %1139 = vector.extract_strided_slice %1123 {offsets = [0, 96], sizes = [2, 32], strides = [1, 1]} : vector<2x192xf32> to vector<2x32xf32>
    %1140 = vector.extract_strided_slice %1123 {offsets = [0, 128], sizes = [2, 32], strides = [1, 1]} : vector<2x192xf32> to vector<2x32xf32>
    %1141 = vector.extract_strided_slice %1123 {offsets = [0, 160], sizes = [2, 32], strides = [1, 1]} : vector<2x192xf32> to vector<2x32xf32>
    %1142 = math.exp %1128 : vector<2x32xf32>
    %1143 = arith.negf %1133 : vector<2x32xf32>
    %1144 = math.exp %1143 : vector<2x32xf32>
    %cst_272 = arith.constant 1.000000e+00 : f32
    %1145 = vector.broadcast %cst_272 : f32 to vector<2x32xf32>
    %1146 = arith.addf %1145, %1144 : vector<2x32xf32>
    %1147 = arith.divf %1145, %1146 : vector<2x32xf32>
    %1148 = arith.negf %1138 : vector<2x32xf32>
    %1149 = math.exp %1148 : vector<2x32xf32>
    %cst_273 = arith.constant 1.000000e+00 : f32
    %1150 = vector.broadcast %cst_273 : f32 to vector<2x32xf32>
    %1151 = arith.addf %1150, %1149 : vector<2x32xf32>
    %1152 = arith.divf %1150, %1151 : vector<2x32xf32>
    %cst_274 = arith.constant -18.420681 : f32
    %1153 = vector.broadcast %cst_274 : f32 to vector<2x32xf32>
    %1154 = arith.maximumf %1128, %1153 : vector<2x32xf32>
    %cst_275 = arith.constant 9.99999993E-9 : f32
    %1155 = vector.broadcast %cst_275 : f32 to vector<2x32xf32>
    %1156 = arith.maximumf %1147, %1155 : vector<2x32xf32>
    %1157 = math.log %1156 : vector<2x32xf32>
    %1158 = arith.addf %1157, %1078 : vector<2x32xf32>
    %1159 = arith.maximumf %1158, %1154 : vector<2x32xf32>
    %1160 = arith.subf %1142, %1159 : vector<2x32xf32>
    %cst_276 = arith.constant 2.000000e+01 : f32
    %1161 = vector.broadcast %cst_276 : f32 to vector<2x32xf32>
    %1162 = arith.minimumf %1160, %1161 : vector<2x32xf32>
    %1163 = math.exp %1162 : vector<2x32xf32>
    %1164 = vector.shape_cast %1141 : vector<2x32xf32> to vector<2x32x1xf32>
    %1165 = vector.shape_cast %1140 : vector<2x32xf32> to vector<2x1x32xf32>
    %1166 = vector.broadcast %1164 : vector<2x32x1xf32> to vector<2x32x32xf32>
    %1167 = vector.broadcast %1165 : vector<2x1x32xf32> to vector<2x32x32xf32>
    %1168 = arith.mulf %1166, %1167 : vector<2x32x32xf32>
    %1169 = vector.shape_cast %1147 : vector<2x32xf32> to vector<2x32x1xf32>
    %1170 = vector.broadcast %1169 : vector<2x32x1xf32> to vector<2x32x32xf32>
    %1171 = arith.mulf %1170, %1094 : vector<2x32x32xf32>
    %1172 = vector.shape_cast %1163 : vector<2x32xf32> to vector<2x32x1xf32>
    %1173 = vector.broadcast %1172 : vector<2x32x1xf32> to vector<2x32x32xf32>
    %1174 = arith.mulf %1173, %1168 : vector<2x32x32xf32>
    %1175 = arith.addf %1171, %1174 : vector<2x32x32xf32>
    %1176 = arith.mulf %1147, %1097 : vector<2x32xf32>
    %1177 = arith.mulf %1163, %1140 : vector<2x32xf32>
    %1178 = arith.addf %1176, %1177 : vector<2x32xf32>
    %1179 = arith.mulf %1178, %1139 : vector<2x32xf32>
    %cst_277 = arith.constant dense<0.000000e+00> : vector<2xf32>
    %1180 = vector.multi_reduction <add>, %1179, %cst_277 [1] : vector<2x32xf32> to vector<2xf32>
    %1181 = vector.shape_cast %1180 : vector<2xf32> to vector<2x1xf32>
    %1182 = math.absf %1181 : vector<2x1xf32>
    %cst_278 = arith.constant 1.000000e+00 : f32
    %1183 = vector.broadcast %cst_278 : f32 to vector<2x1xf32>
    %1184 = arith.maximumf %1182, %1183 : vector<2x1xf32>
    %1185 = vector.shape_cast %1139 : vector<2x32xf32> to vector<2x1x32xf32>
    %1186 = vector.broadcast %1185 : vector<2x1x32xf32> to vector<2x32x32xf32>
    %1187 = arith.mulf %1175, %1186 : vector<2x32x32xf32>
    %cst_279 = arith.constant dense<0.000000e+00> : vector<2x32xf32>
    %1188 = vector.multi_reduction <add>, %1187, %cst_279 [2] : vector<2x32x32xf32> to vector<2x32xf32>
    %1189 = vector.broadcast %1184 : vector<2x1xf32> to vector<2x32xf32>
    %1190 = arith.divf %1188, %1189 : vector<2x32xf32>
    %1191 = arith.mulf %1152, %1190 : vector<2x32xf32>
    %cst_280 = arith.constant dense<0.000000e+00> : vector<2xf32>
    %1192 = vector.multi_reduction <add>, %1191, %cst_280 [1] : vector<2x32xf32> to vector<2xf32>
    %1193 = vector.shape_cast %1192 : vector<2xf32> to vector<2x1xf32>
    %cst_281 = arith.constant 3.200000e+01 : f32
    %1194 = vector.broadcast %cst_281 : f32 to vector<2x1xf32>
    %1195 = arith.divf %1193, %1194 : vector<2x1xf32>
    %1196 = vector.broadcast %1195 : vector<2x1xf32> to vector<2x32xf32>
    %1197 = arith.subf %1191, %1196 : vector<2x32xf32>
    %1198 = arith.mulf %1197, %1197 : vector<2x32xf32>
    %cst_282 = arith.constant dense<0.000000e+00> : vector<2xf32>
    %1199 = vector.multi_reduction <add>, %1198, %cst_282 [1] : vector<2x32xf32> to vector<2xf32>
    %1200 = vector.shape_cast %1199 : vector<2xf32> to vector<2x1xf32>
    %cst_283 = arith.constant 3.200000e+01 : f32
    %1201 = vector.broadcast %cst_283 : f32 to vector<2x1xf32>
    %1202 = arith.divf %1200, %1201 : vector<2x1xf32>
    %1203 = vector.broadcast %1195 : vector<2x1xf32> to vector<2x32xf32>
    %1204 = arith.subf %1191, %1203 : vector<2x32xf32>
    %cst_284 = arith.constant 9.99999974E-6 : f32
    %1205 = vector.broadcast %cst_284 : f32 to vector<2x1xf32>
    %1206 = arith.addf %1202, %1205 : vector<2x1xf32>
    %1207 = math.rsqrt %1206 : vector<2x1xf32>
    %1208 = vector.broadcast %1207 : vector<2x1xf32> to vector<2x32xf32>
    %1209 = arith.mulf %1204, %1208 : vector<2x32xf32>
    %1210 = vector.shape_cast %45 : vector<32xf32> to vector<1x32xf32>
    %1211 = vector.broadcast %1210 : vector<1x32xf32> to vector<2x32xf32>
    %1212 = arith.mulf %1209, %1211 : vector<2x32xf32>
    %1213 = vector.shape_cast %47 : vector<32xf32> to vector<1x32xf32>
    %1214 = vector.broadcast %1213 : vector<1x32xf32> to vector<2x32xf32>
    %1215 = arith.addf %1212, %1214 : vector<2x32xf32>
    %1216 = arith.truncf %1215 : vector<2x32xf32> to vector<2x32xbf16>
    %cst_285 = arith.constant dense<0.000000e+00> : vector<2x192xf32>
    %1217 = tpu.matmul %1216, %41, %cst_285 {dimension_numbers = #tpu.dot_dimension_numbers<[1], [0], [0], [1], [0, 0, 1, 1], [], []>} : vector<2x32xbf16>, vector<32x192xbf16>, vector<2x192xf32> -> vector<2x192xf32>
    %1218 = vector.shape_cast %43 : vector<192xf32> to vector<1x192xf32>
    %1219 = vector.broadcast %1218 : vector<1x192xf32> to vector<2x192xf32>
    %1220 = arith.addf %1217, %1219 : vector<2x192xf32>
    %1221 = vector.extract_strided_slice %1220 {offsets = [0, 0], sizes = [2, 32], strides = [1, 1]} : vector<2x192xf32> to vector<2x32xf32>
    %cst_286 = arith.constant -1.000000e+02 : f32
    %cst_287 = arith.constant 1.000000e+02 : f32
    %1222 = vector.broadcast %cst_286 : f32 to vector<2x32xf32>
    %1223 = arith.maximumf %1222, %1221 : vector<2x32xf32>
    %1224 = vector.broadcast %cst_287 : f32 to vector<2x32xf32>
    %1225 = arith.minimumf %1224, %1223 : vector<2x32xf32>
    %1226 = vector.extract_strided_slice %1220 {offsets = [0, 32], sizes = [2, 32], strides = [1, 1]} : vector<2x192xf32> to vector<2x32xf32>
    %cst_288 = arith.constant -1.000000e+02 : f32
    %cst_289 = arith.constant 1.000000e+02 : f32
    %1227 = vector.broadcast %cst_288 : f32 to vector<2x32xf32>
    %1228 = arith.maximumf %1227, %1226 : vector<2x32xf32>
    %1229 = vector.broadcast %cst_289 : f32 to vector<2x32xf32>
    %1230 = arith.minimumf %1229, %1228 : vector<2x32xf32>
    %1231 = vector.extract_strided_slice %1220 {offsets = [0, 64], sizes = [2, 32], strides = [1, 1]} : vector<2x192xf32> to vector<2x32xf32>
    %cst_290 = arith.constant -1.000000e+02 : f32
    %cst_291 = arith.constant 1.000000e+02 : f32
    %1232 = vector.broadcast %cst_290 : f32 to vector<2x32xf32>
    %1233 = arith.maximumf %1232, %1231 : vector<2x32xf32>
    %1234 = vector.broadcast %cst_291 : f32 to vector<2x32xf32>
    %1235 = arith.minimumf %1234, %1233 : vector<2x32xf32>
    %1236 = vector.extract_strided_slice %1220 {offsets = [0, 96], sizes = [2, 32], strides = [1, 1]} : vector<2x192xf32> to vector<2x32xf32>
    %1237 = vector.extract_strided_slice %1220 {offsets = [0, 128], sizes = [2, 32], strides = [1, 1]} : vector<2x192xf32> to vector<2x32xf32>
    %1238 = vector.extract_strided_slice %1220 {offsets = [0, 160], sizes = [2, 32], strides = [1, 1]} : vector<2x192xf32> to vector<2x32xf32>
    %1239 = math.exp %1225 : vector<2x32xf32>
    %1240 = arith.negf %1230 : vector<2x32xf32>
    %1241 = math.exp %1240 : vector<2x32xf32>
    %cst_292 = arith.constant 1.000000e+00 : f32
    %1242 = vector.broadcast %cst_292 : f32 to vector<2x32xf32>
    %1243 = arith.addf %1242, %1241 : vector<2x32xf32>
    %1244 = arith.divf %1242, %1243 : vector<2x32xf32>
    %1245 = arith.negf %1235 : vector<2x32xf32>
    %1246 = math.exp %1245 : vector<2x32xf32>
    %cst_293 = arith.constant 1.000000e+00 : f32
    %1247 = vector.broadcast %cst_293 : f32 to vector<2x32xf32>
    %1248 = arith.addf %1247, %1246 : vector<2x32xf32>
    %1249 = arith.divf %1247, %1248 : vector<2x32xf32>
    %cst_294 = arith.constant -18.420681 : f32
    %1250 = vector.broadcast %cst_294 : f32 to vector<2x32xf32>
    %1251 = arith.maximumf %1225, %1250 : vector<2x32xf32>
    %cst_295 = arith.constant 9.99999993E-9 : f32
    %1252 = vector.broadcast %cst_295 : f32 to vector<2x32xf32>
    %1253 = arith.maximumf %1244, %1252 : vector<2x32xf32>
    %1254 = math.log %1253 : vector<2x32xf32>
    %1255 = arith.addf %1254, %1159 : vector<2x32xf32>
    %1256 = arith.maximumf %1255, %1251 : vector<2x32xf32>
    %1257 = arith.subf %1239, %1256 : vector<2x32xf32>
    %cst_296 = arith.constant 2.000000e+01 : f32
    %1258 = vector.broadcast %cst_296 : f32 to vector<2x32xf32>
    %1259 = arith.minimumf %1257, %1258 : vector<2x32xf32>
    %1260 = math.exp %1259 : vector<2x32xf32>
    %1261 = vector.shape_cast %1238 : vector<2x32xf32> to vector<2x32x1xf32>
    %1262 = vector.shape_cast %1237 : vector<2x32xf32> to vector<2x1x32xf32>
    %1263 = vector.broadcast %1261 : vector<2x32x1xf32> to vector<2x32x32xf32>
    %1264 = vector.broadcast %1262 : vector<2x1x32xf32> to vector<2x32x32xf32>
    %1265 = arith.mulf %1263, %1264 : vector<2x32x32xf32>
    %1266 = vector.shape_cast %1244 : vector<2x32xf32> to vector<2x32x1xf32>
    %1267 = vector.broadcast %1266 : vector<2x32x1xf32> to vector<2x32x32xf32>
    %1268 = arith.mulf %1267, %1175 : vector<2x32x32xf32>
    %1269 = vector.shape_cast %1260 : vector<2x32xf32> to vector<2x32x1xf32>
    %1270 = vector.broadcast %1269 : vector<2x32x1xf32> to vector<2x32x32xf32>
    %1271 = arith.mulf %1270, %1265 : vector<2x32x32xf32>
    %1272 = arith.addf %1268, %1271 : vector<2x32x32xf32>
    %1273 = arith.mulf %1244, %1178 : vector<2x32xf32>
    %1274 = arith.mulf %1260, %1237 : vector<2x32xf32>
    %1275 = arith.addf %1273, %1274 : vector<2x32xf32>
    %1276 = arith.mulf %1275, %1236 : vector<2x32xf32>
    %cst_297 = arith.constant dense<0.000000e+00> : vector<2xf32>
    %1277 = vector.multi_reduction <add>, %1276, %cst_297 [1] : vector<2x32xf32> to vector<2xf32>
    %1278 = vector.shape_cast %1277 : vector<2xf32> to vector<2x1xf32>
    %1279 = math.absf %1278 : vector<2x1xf32>
    %cst_298 = arith.constant 1.000000e+00 : f32
    %1280 = vector.broadcast %cst_298 : f32 to vector<2x1xf32>
    %1281 = arith.maximumf %1279, %1280 : vector<2x1xf32>
    %1282 = vector.shape_cast %1236 : vector<2x32xf32> to vector<2x1x32xf32>
    %1283 = vector.broadcast %1282 : vector<2x1x32xf32> to vector<2x32x32xf32>
    %1284 = arith.mulf %1272, %1283 : vector<2x32x32xf32>
    %cst_299 = arith.constant dense<0.000000e+00> : vector<2x32xf32>
    %1285 = vector.multi_reduction <add>, %1284, %cst_299 [2] : vector<2x32x32xf32> to vector<2x32xf32>
    %1286 = vector.broadcast %1281 : vector<2x1xf32> to vector<2x32xf32>
    %1287 = arith.divf %1285, %1286 : vector<2x32xf32>
    %1288 = arith.mulf %1249, %1287 : vector<2x32xf32>
    %1289 = arith.truncf %1191 : vector<2x32xf32> to vector<2x32xbf16>
    %cst_300 = arith.constant dense<0.000000e+00> : vector<2x32xf32>
    %1290 = tpu.matmul %1289, %48, %cst_300 {dimension_numbers = #tpu.dot_dimension_numbers<[1], [0], [0], [1], [0, 0, 1, 1], [], []>} : vector<2x32xbf16>, vector<32x32xbf16>, vector<2x32xf32> -> vector<2x32xf32>
    %1291 = arith.truncf %1288 : vector<2x32xf32> to vector<2x32xbf16>
    %cst_301 = arith.constant dense<0.000000e+00> : vector<2x32xf32>
    %1292 = tpu.matmul %1291, %49, %cst_301 {dimension_numbers = #tpu.dot_dimension_numbers<[1], [0], [0], [1], [0, 0, 1, 1], [], []>} : vector<2x32xbf16>, vector<32x32xbf16>, vector<2x32xf32> -> vector<2x32xf32>
    %1293 = arith.addf %1290, %1292 : vector<2x32xf32>
    %1294 = vector.shape_cast %51 : vector<32xf32> to vector<1x32xf32>
    %1295 = vector.broadcast %1294 : vector<1x32xf32> to vector<2x32xf32>
    %1296 = arith.addf %1293, %1295 : vector<2x32xf32>
    %1297 = arith.addf %1296, %1288 : vector<2x32xf32>
    %c6 = arith.constant 6 : index
    %c0_302 = arith.constant 0 : index
    %c0_303 = arith.constant 0 : index
    %1298 = vector.load %arg11[%c6, %c0_302, %c0_303] : memref<8x2x32xf32, #tpu.memory_space<vmem>>, vector<1x2x32xf32>
    %1299 = vector.shape_cast %1298 : vector<1x2x32xf32> to vector<2x32xf32>
    %1300 = vector.shape_cast %1297 : vector<2x32xf32> to vector<1x2x32xf32>
    tpu.vector_store %arg11[%c6, %c0_302, %c0_303], %1300 {strides = array<i32>} : memref<8x2x32xf32, #tpu.memory_space<vmem>>, vector<1x2x32xf32>,
    %1301 = vector.extract_strided_slice %40 {offsets = [14, 0], sizes = [2, 192], strides = [1, 1]} : vector<16x192xf32> to vector<2x192xf32>
    %1302 = vector.extract_strided_slice %1301 {offsets = [0, 0], sizes = [2, 32], strides = [1, 1]} : vector<2x192xf32> to vector<2x32xf32>
    %cst_304 = arith.constant -1.000000e+02 : f32
    %cst_305 = arith.constant 1.000000e+02 : f32
    %1303 = vector.broadcast %cst_304 : f32 to vector<2x32xf32>
    %1304 = arith.maximumf %1303, %1302 : vector<2x32xf32>
    %1305 = vector.broadcast %cst_305 : f32 to vector<2x32xf32>
    %1306 = arith.minimumf %1305, %1304 : vector<2x32xf32>
    %1307 = vector.extract_strided_slice %1301 {offsets = [0, 32], sizes = [2, 32], strides = [1, 1]} : vector<2x192xf32> to vector<2x32xf32>
    %cst_306 = arith.constant -1.000000e+02 : f32
    %cst_307 = arith.constant 1.000000e+02 : f32
    %1308 = vector.broadcast %cst_306 : f32 to vector<2x32xf32>
    %1309 = arith.maximumf %1308, %1307 : vector<2x32xf32>
    %1310 = vector.broadcast %cst_307 : f32 to vector<2x32xf32>
    %1311 = arith.minimumf %1310, %1309 : vector<2x32xf32>
    %1312 = vector.extract_strided_slice %1301 {offsets = [0, 64], sizes = [2, 32], strides = [1, 1]} : vector<2x192xf32> to vector<2x32xf32>
    %cst_308 = arith.constant -1.000000e+02 : f32
    %cst_309 = arith.constant 1.000000e+02 : f32
    %1313 = vector.broadcast %cst_308 : f32 to vector<2x32xf32>
    %1314 = arith.maximumf %1313, %1312 : vector<2x32xf32>
    %1315 = vector.broadcast %cst_309 : f32 to vector<2x32xf32>
    %1316 = arith.minimumf %1315, %1314 : vector<2x32xf32>
    %1317 = vector.extract_strided_slice %1301 {offsets = [0, 96], sizes = [2, 32], strides = [1, 1]} : vector<2x192xf32> to vector<2x32xf32>
    %1318 = vector.extract_strided_slice %1301 {offsets = [0, 128], sizes = [2, 32], strides = [1, 1]} : vector<2x192xf32> to vector<2x32xf32>
    %1319 = vector.extract_strided_slice %1301 {offsets = [0, 160], sizes = [2, 32], strides = [1, 1]} : vector<2x192xf32> to vector<2x32xf32>
    %1320 = math.exp %1306 : vector<2x32xf32>
    %1321 = arith.negf %1311 : vector<2x32xf32>
    %1322 = math.exp %1321 : vector<2x32xf32>
    %cst_310 = arith.constant 1.000000e+00 : f32
    %1323 = vector.broadcast %cst_310 : f32 to vector<2x32xf32>
    %1324 = arith.addf %1323, %1322 : vector<2x32xf32>
    %1325 = arith.divf %1323, %1324 : vector<2x32xf32>
    %1326 = arith.negf %1316 : vector<2x32xf32>
    %1327 = math.exp %1326 : vector<2x32xf32>
    %cst_311 = arith.constant 1.000000e+00 : f32
    %1328 = vector.broadcast %cst_311 : f32 to vector<2x32xf32>
    %1329 = arith.addf %1328, %1327 : vector<2x32xf32>
    %1330 = arith.divf %1328, %1329 : vector<2x32xf32>
    %cst_312 = arith.constant -18.420681 : f32
    %1331 = vector.broadcast %cst_312 : f32 to vector<2x32xf32>
    %1332 = arith.maximumf %1306, %1331 : vector<2x32xf32>
    %cst_313 = arith.constant 9.99999993E-9 : f32
    %1333 = vector.broadcast %cst_313 : f32 to vector<2x32xf32>
    %1334 = arith.maximumf %1325, %1333 : vector<2x32xf32>
    %1335 = math.log %1334 : vector<2x32xf32>
    %1336 = arith.addf %1335, %1256 : vector<2x32xf32>
    %1337 = arith.maximumf %1336, %1332 : vector<2x32xf32>
    %1338 = arith.subf %1320, %1337 : vector<2x32xf32>
    %cst_314 = arith.constant 2.000000e+01 : f32
    %1339 = vector.broadcast %cst_314 : f32 to vector<2x32xf32>
    %1340 = arith.minimumf %1338, %1339 : vector<2x32xf32>
    %1341 = math.exp %1340 : vector<2x32xf32>
    %1342 = vector.shape_cast %1319 : vector<2x32xf32> to vector<2x32x1xf32>
    %1343 = vector.shape_cast %1318 : vector<2x32xf32> to vector<2x1x32xf32>
    %1344 = vector.broadcast %1342 : vector<2x32x1xf32> to vector<2x32x32xf32>
    %1345 = vector.broadcast %1343 : vector<2x1x32xf32> to vector<2x32x32xf32>
    %1346 = arith.mulf %1344, %1345 : vector<2x32x32xf32>
    %1347 = vector.shape_cast %1325 : vector<2x32xf32> to vector<2x32x1xf32>
    %1348 = vector.broadcast %1347 : vector<2x32x1xf32> to vector<2x32x32xf32>
    %1349 = arith.mulf %1348, %1272 : vector<2x32x32xf32>
    %1350 = vector.shape_cast %1341 : vector<2x32xf32> to vector<2x32x1xf32>
    %1351 = vector.broadcast %1350 : vector<2x32x1xf32> to vector<2x32x32xf32>
    %1352 = arith.mulf %1351, %1346 : vector<2x32x32xf32>
    %1353 = arith.addf %1349, %1352 : vector<2x32x32xf32>
    %1354 = arith.mulf %1325, %1275 : vector<2x32xf32>
    %1355 = arith.mulf %1341, %1318 : vector<2x32xf32>
    %1356 = arith.addf %1354, %1355 : vector<2x32xf32>
    %1357 = arith.mulf %1356, %1317 : vector<2x32xf32>
    %cst_315 = arith.constant dense<0.000000e+00> : vector<2xf32>
    %1358 = vector.multi_reduction <add>, %1357, %cst_315 [1] : vector<2x32xf32> to vector<2xf32>
    %1359 = vector.shape_cast %1358 : vector<2xf32> to vector<2x1xf32>
    %1360 = math.absf %1359 : vector<2x1xf32>
    %cst_316 = arith.constant 1.000000e+00 : f32
    %1361 = vector.broadcast %cst_316 : f32 to vector<2x1xf32>
    %1362 = arith.maximumf %1360, %1361 : vector<2x1xf32>
    %1363 = vector.shape_cast %1317 : vector<2x32xf32> to vector<2x1x32xf32>
    %1364 = vector.broadcast %1363 : vector<2x1x32xf32> to vector<2x32x32xf32>
    %1365 = arith.mulf %1353, %1364 : vector<2x32x32xf32>
    %cst_317 = arith.constant dense<0.000000e+00> : vector<2x32xf32>
    %1366 = vector.multi_reduction <add>, %1365, %cst_317 [2] : vector<2x32x32xf32> to vector<2x32xf32>
    %1367 = vector.broadcast %1362 : vector<2x1xf32> to vector<2x32xf32>
    %1368 = arith.divf %1366, %1367 : vector<2x32xf32>
    %1369 = arith.mulf %1330, %1368 : vector<2x32xf32>
    %cst_318 = arith.constant dense<0.000000e+00> : vector<2xf32>
    %1370 = vector.multi_reduction <add>, %1369, %cst_318 [1] : vector<2x32xf32> to vector<2xf32>
    %1371 = vector.shape_cast %1370 : vector<2xf32> to vector<2x1xf32>
    %cst_319 = arith.constant 3.200000e+01 : f32
    %1372 = vector.broadcast %cst_319 : f32 to vector<2x1xf32>
    %1373 = arith.divf %1371, %1372 : vector<2x1xf32>
    %1374 = vector.broadcast %1373 : vector<2x1xf32> to vector<2x32xf32>
    %1375 = arith.subf %1369, %1374 : vector<2x32xf32>
    %1376 = arith.mulf %1375, %1375 : vector<2x32xf32>
    %cst_320 = arith.constant dense<0.000000e+00> : vector<2xf32>
    %1377 = vector.multi_reduction <add>, %1376, %cst_320 [1] : vector<2x32xf32> to vector<2xf32>
    %1378 = vector.shape_cast %1377 : vector<2xf32> to vector<2x1xf32>
    %cst_321 = arith.constant 3.200000e+01 : f32
    %1379 = vector.broadcast %cst_321 : f32 to vector<2x1xf32>
    %1380 = arith.divf %1378, %1379 : vector<2x1xf32>
    %1381 = vector.broadcast %1373 : vector<2x1xf32> to vector<2x32xf32>
    %1382 = arith.subf %1369, %1381 : vector<2x32xf32>
    %cst_322 = arith.constant 9.99999974E-6 : f32
    %1383 = vector.broadcast %cst_322 : f32 to vector<2x1xf32>
    %1384 = arith.addf %1380, %1383 : vector<2x1xf32>
    %1385 = math.rsqrt %1384 : vector<2x1xf32>
    %1386 = vector.broadcast %1385 : vector<2x1xf32> to vector<2x32xf32>
    %1387 = arith.mulf %1382, %1386 : vector<2x32xf32>
    %1388 = vector.shape_cast %45 : vector<32xf32> to vector<1x32xf32>
    %1389 = vector.broadcast %1388 : vector<1x32xf32> to vector<2x32xf32>
    %1390 = arith.mulf %1387, %1389 : vector<2x32xf32>
    %1391 = vector.shape_cast %47 : vector<32xf32> to vector<1x32xf32>
    %1392 = vector.broadcast %1391 : vector<1x32xf32> to vector<2x32xf32>
    %1393 = arith.addf %1390, %1392 : vector<2x32xf32>
    %1394 = arith.truncf %1393 : vector<2x32xf32> to vector<2x32xbf16>
    %cst_323 = arith.constant dense<0.000000e+00> : vector<2x192xf32>
    %1395 = tpu.matmul %1394, %41, %cst_323 {dimension_numbers = #tpu.dot_dimension_numbers<[1], [0], [0], [1], [0, 0, 1, 1], [], []>} : vector<2x32xbf16>, vector<32x192xbf16>, vector<2x192xf32> -> vector<2x192xf32>
    %1396 = vector.shape_cast %43 : vector<192xf32> to vector<1x192xf32>
    %1397 = vector.broadcast %1396 : vector<1x192xf32> to vector<2x192xf32>
    %1398 = arith.addf %1395, %1397 : vector<2x192xf32>
    %1399 = vector.extract_strided_slice %1398 {offsets = [0, 0], sizes = [2, 32], strides = [1, 1]} : vector<2x192xf32> to vector<2x32xf32>
    %cst_324 = arith.constant -1.000000e+02 : f32
    %cst_325 = arith.constant 1.000000e+02 : f32
    %1400 = vector.broadcast %cst_324 : f32 to vector<2x32xf32>
    %1401 = arith.maximumf %1400, %1399 : vector<2x32xf32>
    %1402 = vector.broadcast %cst_325 : f32 to vector<2x32xf32>
    %1403 = arith.minimumf %1402, %1401 : vector<2x32xf32>
    %1404 = vector.extract_strided_slice %1398 {offsets = [0, 32], sizes = [2, 32], strides = [1, 1]} : vector<2x192xf32> to vector<2x32xf32>
    %cst_326 = arith.constant -1.000000e+02 : f32
    %cst_327 = arith.constant 1.000000e+02 : f32
    %1405 = vector.broadcast %cst_326 : f32 to vector<2x32xf32>
    %1406 = arith.maximumf %1405, %1404 : vector<2x32xf32>
    %1407 = vector.broadcast %cst_327 : f32 to vector<2x32xf32>
    %1408 = arith.minimumf %1407, %1406 : vector<2x32xf32>
    %1409 = vector.extract_strided_slice %1398 {offsets = [0, 64], sizes = [2, 32], strides = [1, 1]} : vector<2x192xf32> to vector<2x32xf32>
    %cst_328 = arith.constant -1.000000e+02 : f32
    %cst_329 = arith.constant 1.000000e+02 : f32
    %1410 = vector.broadcast %cst_328 : f32 to vector<2x32xf32>
    %1411 = arith.maximumf %1410, %1409 : vector<2x32xf32>
    %1412 = vector.broadcast %cst_329 : f32 to vector<2x32xf32>
    %1413 = arith.minimumf %1412, %1411 : vector<2x32xf32>
    %1414 = vector.extract_strided_slice %1398 {offsets = [0, 96], sizes = [2, 32], strides = [1, 1]} : vector<2x192xf32> to vector<2x32xf32>
    %1415 = vector.extract_strided_slice %1398 {offsets = [0, 128], sizes = [2, 32], strides = [1, 1]} : vector<2x192xf32> to vector<2x32xf32>
    %1416 = vector.extract_strided_slice %1398 {offsets = [0, 160], sizes = [2, 32], strides = [1, 1]} : vector<2x192xf32> to vector<2x32xf32>
    %1417 = math.exp %1403 : vector<2x32xf32>
    %1418 = arith.negf %1408 : vector<2x32xf32>
    %1419 = math.exp %1418 : vector<2x32xf32>
    %cst_330 = arith.constant 1.000000e+00 : f32
    %1420 = vector.broadcast %cst_330 : f32 to vector<2x32xf32>
    %1421 = arith.addf %1420, %1419 : vector<2x32xf32>
    %1422 = arith.divf %1420, %1421 : vector<2x32xf32>
    %1423 = arith.negf %1413 : vector<2x32xf32>
    %1424 = math.exp %1423 : vector<2x32xf32>
    %cst_331 = arith.constant 1.000000e+00 : f32
    %1425 = vector.broadcast %cst_331 : f32 to vector<2x32xf32>
    %1426 = arith.addf %1425, %1424 : vector<2x32xf32>
    %1427 = arith.divf %1425, %1426 : vector<2x32xf32>
    %cst_332 = arith.constant -18.420681 : f32
    %1428 = vector.broadcast %cst_332 : f32 to vector<2x32xf32>
    %1429 = arith.maximumf %1403, %1428 : vector<2x32xf32>
    %cst_333 = arith.constant 9.99999993E-9 : f32
    %1430 = vector.broadcast %cst_333 : f32 to vector<2x32xf32>
    %1431 = arith.maximumf %1422, %1430 : vector<2x32xf32>
    %1432 = math.log %1431 : vector<2x32xf32>
    %1433 = arith.addf %1432, %1337 : vector<2x32xf32>
    %1434 = arith.maximumf %1433, %1429 : vector<2x32xf32>
    %1435 = arith.subf %1417, %1434 : vector<2x32xf32>
    %cst_334 = arith.constant 2.000000e+01 : f32
    %1436 = vector.broadcast %cst_334 : f32 to vector<2x32xf32>
    %1437 = arith.minimumf %1435, %1436 : vector<2x32xf32>
    %1438 = math.exp %1437 : vector<2x32xf32>
    %1439 = vector.shape_cast %1416 : vector<2x32xf32> to vector<2x32x1xf32>
    %1440 = vector.shape_cast %1415 : vector<2x32xf32> to vector<2x1x32xf32>
    %1441 = vector.broadcast %1439 : vector<2x32x1xf32> to vector<2x32x32xf32>
    %1442 = vector.broadcast %1440 : vector<2x1x32xf32> to vector<2x32x32xf32>
    %1443 = arith.mulf %1441, %1442 : vector<2x32x32xf32>
    %1444 = vector.shape_cast %1422 : vector<2x32xf32> to vector<2x32x1xf32>
    %1445 = vector.broadcast %1444 : vector<2x32x1xf32> to vector<2x32x32xf32>
    %1446 = arith.mulf %1445, %1353 : vector<2x32x32xf32>
    %1447 = vector.shape_cast %1438 : vector<2x32xf32> to vector<2x32x1xf32>
    %1448 = vector.broadcast %1447 : vector<2x32x1xf32> to vector<2x32x32xf32>
    %1449 = arith.mulf %1448, %1443 : vector<2x32x32xf32>
    %1450 = arith.addf %1446, %1449 : vector<2x32x32xf32>
    %1451 = arith.mulf %1422, %1356 : vector<2x32xf32>
    %1452 = arith.mulf %1438, %1415 : vector<2x32xf32>
    %1453 = arith.addf %1451, %1452 : vector<2x32xf32>
    %1454 = arith.mulf %1453, %1414 : vector<2x32xf32>
    %cst_335 = arith.constant dense<0.000000e+00> : vector<2xf32>
    %1455 = vector.multi_reduction <add>, %1454, %cst_335 [1] : vector<2x32xf32> to vector<2xf32>
    %1456 = vector.shape_cast %1455 : vector<2xf32> to vector<2x1xf32>
    %1457 = math.absf %1456 : vector<2x1xf32>
    %cst_336 = arith.constant 1.000000e+00 : f32
    %1458 = vector.broadcast %cst_336 : f32 to vector<2x1xf32>
    %1459 = arith.maximumf %1457, %1458 : vector<2x1xf32>
    %1460 = vector.shape_cast %1414 : vector<2x32xf32> to vector<2x1x32xf32>
    %1461 = vector.broadcast %1460 : vector<2x1x32xf32> to vector<2x32x32xf32>
    %1462 = arith.mulf %1450, %1461 : vector<2x32x32xf32>
    %cst_337 = arith.constant dense<0.000000e+00> : vector<2x32xf32>
    %1463 = vector.multi_reduction <add>, %1462, %cst_337 [2] : vector<2x32x32xf32> to vector<2x32xf32>
    %1464 = vector.broadcast %1459 : vector<2x1xf32> to vector<2x32xf32>
    %1465 = arith.divf %1463, %1464 : vector<2x32xf32>
    %1466 = arith.mulf %1427, %1465 : vector<2x32xf32>
    %1467 = arith.truncf %1369 : vector<2x32xf32> to vector<2x32xbf16>
    %cst_338 = arith.constant dense<0.000000e+00> : vector<2x32xf32>
    %1468 = tpu.matmul %1467, %48, %cst_338 {dimension_numbers = #tpu.dot_dimension_numbers<[1], [0], [0], [1], [0, 0, 1, 1], [], []>} : vector<2x32xbf16>, vector<32x32xbf16>, vector<2x32xf32> -> vector<2x32xf32>
    %1469 = arith.truncf %1466 : vector<2x32xf32> to vector<2x32xbf16>
    %cst_339 = arith.constant dense<0.000000e+00> : vector<2x32xf32>
    %1470 = tpu.matmul %1469, %49, %cst_339 {dimension_numbers = #tpu.dot_dimension_numbers<[1], [0], [0], [1], [0, 0, 1, 1], [], []>} : vector<2x32xbf16>, vector<32x32xbf16>, vector<2x32xf32> -> vector<2x32xf32>
    %1471 = arith.addf %1468, %1470 : vector<2x32xf32>
    %1472 = vector.shape_cast %51 : vector<32xf32> to vector<1x32xf32>
    %1473 = vector.broadcast %1472 : vector<1x32xf32> to vector<2x32xf32>
    %1474 = arith.addf %1471, %1473 : vector<2x32xf32>
    %1475 = arith.addf %1474, %1466 : vector<2x32xf32>
    %c7 = arith.constant 7 : index
    %c0_340 = arith.constant 0 : index
    %c0_341 = arith.constant 0 : index
    %1476 = vector.load %arg11[%c7, %c0_340, %c0_341] : memref<8x2x32xf32, #tpu.memory_space<vmem>>, vector<1x2x32xf32>
    %1477 = vector.shape_cast %1476 : vector<1x2x32xf32> to vector<2x32xf32>
    %1478 = vector.shape_cast %1475 : vector<2x32xf32> to vector<1x2x32xf32>
    tpu.vector_store %arg11[%c7, %c0_340, %c0_341], %1478 {strides = array<i32>} : memref<8x2x32xf32, #tpu.memory_space<vmem>>, vector<1x2x32xf32>,
    %c0_342 = arith.constant 0 : index
    %c0_343 = arith.constant 0 : index
    %c0_344 = arith.constant 0 : index
    %1479 = vector.load %arg13[%c0_342, %c0_343, %c0_344] : memref<2x32x32xf32, #tpu.memory_space<vmem>>, vector<2x32x32xf32>
    tpu.vector_store %arg13[%c0_342, %c0_343, %c0_344], %1450 {strides = array<i32>} : memref<2x32x32xf32, #tpu.memory_space<vmem>>, vector<2x32x32xf32>,
    %c0_345 = arith.constant 0 : index
    %c0_346 = arith.constant 0 : index
    %1480 = vector.load %arg14[%c0_345, %c0_346] : memref<2x32xf32, #tpu.memory_space<vmem>>, vector<2x32xf32>
    tpu.vector_store %arg14[%c0_345, %c0_346], %1453 {strides = array<i32>} : memref<2x32xf32, #tpu.memory_space<vmem>>, vector<2x32xf32>,
    %c0_347 = arith.constant 0 : index
    %c0_348 = arith.constant 0 : index
    %1481 = vector.load %arg15[%c0_347, %c0_348] : memref<2x32xf32, #tpu.memory_space<vmem>>, vector<2x32xf32>
    tpu.vector_store %arg15[%c0_347, %c0_348], %1434 {strides = array<i32>} : memref<2x32xf32, #tpu.memory_space<vmem>>, vector<2x32xf32>,
    %c0_i32_349 = arith.constant 0 : i32
    %1482 = arith.cmpi eq, %arg0, %c0_i32_349 : i32
    %1483 = arith.extui %1482 : i1 to i32
    %c0_i32_350 = arith.constant 0 : i32
    %1484 = arith.cmpi ne, %1483, %c0_i32_350 : i32
    scf.if %1484 {
      %c0_351 = arith.constant 0 : index
      %c0_352 = arith.constant 0 : index
      %1485 = vector.load %arg12[%c0_351, %c0_352] : memref<2x32xf32, #tpu.memory_space<vmem>>, vector<2x32xf32>
      tpu.vector_store %arg12[%c0_351, %c0_352], %1434 {strides = array<i32>} : memref<2x32xf32, #tpu.memory_space<vmem>>, vector<2x32xf32>,
    } else {
    }
    return
  }
  func.func @transform_0(%arg0: i32) -> (i32, i32, i32) {
    %c0_i32 = arith.constant 0 : i32
    %c0_i32_0 = arith.constant 0 : i32
    %c0_i32_1 = arith.constant 0 : i32
    return %arg0, %c0_i32, %c0_i32_0 : i32, i32, i32
  }
  func.func @transform_1(%arg0: i32) -> (i32, i32) {
    %c0_i32 = arith.constant 0 : i32
    %c0_i32_0 = arith.constant 0 : i32
    %c0_i32_1 = arith.constant 0 : i32
    return %c0_i32, %c0_i32_0 : i32, i32
  }
  func.func @transform_2(%arg0: i32) -> (i32, i32) {
    %c0_i32 = arith.constant 0 : i32
    %c0_i32_0 = arith.constant 0 : i32
    %c0_i32_1 = arith.constant 0 : i32
    return %c0_i32, %c0_i32_0 : i32, i32
  }
  func.func @transform_3(%arg0: i32) -> (i32, i32) {
    %c0_i32 = arith.constant 0 : i32
    %c0_i32_0 = arith.constant 0 : i32
    %c0_i32_1 = arith.constant 0 : i32
    return %c0_i32, %c0_i32_0 : i32, i32
  }
  func.func @transform_4(%arg0: i32) -> (i32, i32) {
    %c0_i32 = arith.constant 0 : i32
    %c0_i32_0 = arith.constant 0 : i32
    %c0_i32_1 = arith.constant 0 : i32
    return %c0_i32, %c0_i32_0 : i32, i32
  }
  func.func @transform_5(%arg0: i32) -> (i32, i32) {
    %c0_i32 = arith.constant 0 : i32
    %c0_i32_0 = arith.constant 0 : i32
    %c0_i32_1 = arith.constant 0 : i32
    return %c0_i32, %c0_i32_0 : i32, i32
  }
  func.func @transform_6(%arg0: i32) -> (i32, i32) {
    %c0_i32 = arith.constant 0 : i32
    %c0_i32_0 = arith.constant 0 : i32
    %c0_i32_1 = arith.constant 0 : i32
    return %c0_i32, %c0_i32_0 : i32, i32
  }
  func.func @transform_7(%arg0: i32) -> (i32, i32) {
    %c0_i32 = arith.constant 0 : i32
    %c0_i32_0 = arith.constant 0 : i32
    %c0_i32_1 = arith.constant 0 : i32
    return %c0_i32, %c0_i32_0 : i32, i32
  }
  func.func @transform_8(%arg0: i32) -> (i32, i32) {
    %c0_i32 = arith.constant 0 : i32
    %c0_i32_0 = arith.constant 0 : i32
    %c0_i32_1 = arith.constant 0 : i32
    return %c0_i32, %c0_i32_0 : i32, i32
  }
  func.func @transform_9(%arg0: i32) -> (i32, i32) {
    %c0_i32 = arith.constant 0 : i32
    %c0_i32_0 = arith.constant 0 : i32
    %c0_i32_1 = arith.constant 0 : i32
    return %c0_i32, %c0_i32_0 : i32, i32
  }
  func.func @transform_10(%arg0: i32) -> (i32, i32, i32) {
    %c0_i32 = arith.constant 0 : i32
    %c0_i32_0 = arith.constant 0 : i32
    %c0_i32_1 = arith.constant 0 : i32
    return %arg0, %c0_i32, %c0_i32_0 : i32, i32, i32
  }
  func.func @transform_11(%arg0: i32) -> (i32, i32) {
    %c0_i32 = arith.constant 0 : i32
    %c0_i32_0 = arith.constant 0 : i32
    %c0_i32_1 = arith.constant 0 : i32
    return %c0_i32, %c0_i32_0 : i32, i32
  }
}

</mosaic_0001>

<llo_original>
// kernel: tpu_custom_call.1
$region0: #{tpu_custom_call.1}
  #allocation0 [shape = 'u32[]', space=smem, size = 0x4, offset = 0x4, fixed_abs, tag = 'smem constant byte address 0x4 - core index']
  #allocation1 [shape = 'u32[144,128]{1,0:T(1,128)}', space=vmem, size = 0x12000, scoped, tag = 'internal scratch']
  #allocation2 [shape = 'f32[2,32,32]{2,1,0:T(8,128)}', space=vmem, size = 0x8000, scoped, tag = 'scratch operand']
  #allocation3 [shape = 'f32[2,32]{1,0:T(2,128)}', space=vmem, size = 0x400, scoped, tag = 'scratch operand']
  #allocation4 [shape = 'f32[2,32]{1,0:T(2,128)}', space=vmem, size = 0x400, scoped, tag = 'scratch operand']
  %s0 = inlined_call_operand.hbm [shape: f32[1,16,16], index: 0, kind: input, shape index: {}]
  %s1 = inlined_call_operand.hbm [shape: bf16[16,192], index: 1, kind: input, shape index: {}]
  %s2 = inlined_call_operand.vmem [shape: f32[1,192], index: 2, kind: input, shape index: {}]
  %s3 = inlined_call_operand.vmem [shape: f32[2,16], index: 3, kind: input, shape index: {}]
  %s4 = inlined_call_operand.hbm [shape: bf16[32,192], index: 4, kind: input, shape index: {}]
  %s5 = inlined_call_operand.vmem [shape: f32[1,192], index: 5, kind: input, shape index: {}]
  %s6 = inlined_call_operand.vmem [shape: f32[2,32], index: 6, kind: input, shape index: {}]
  %s7 = inlined_call_operand.vmem [shape: bf16[32,32], index: 7, kind: input, shape index: {}]
  %s8 = inlined_call_operand.hbm [shape: bf16[32,32], index: 8, kind: input, shape index: {}]
  %s9 = inlined_call_operand.vmem [shape: f32[1,32], index: 9, kind: input, shape index: {}]
  %s10 = inlined_call_operand.hbm [shape: f32[8,2,32], index: 10, kind: output, shape index: {0}]
  %s11 = inlined_call_operand.hbm [shape: f32[2,32], index: 11, kind: output, shape index: {1}]
  %12 = xla_tuple %s10, %s11
  %s13 = sld [smem:[#allocation0]]
  $region82: #{tpu_custom_call.1} parent=0
    _
  %s15 = ssub.s32 1, %s13
  %s16 = scalar_select 0, %s15, %s13
  $region1: #{tpu_custom_call.1} parent=0
    #allocation5 [shape = 'u8[8192]{0}', space=vmem, size = 0x2000, scoped, tag = 'input window, operand 0, single buffered']
    #allocation6 [shape = 's32[1]{0}', space=sflag, size = 0x4, scoped, tag = 'scoped memory for tpu_custom_call.1']
    #allocation7 [shape = 's32[1]{0}', space=sflag, size = 0x4, scoped, tag = 'scoped memory for tpu_custom_call.1']
    #allocation8 [shape = 'u8[8192]{0}', space=vmem, size = 0x2000, scoped, tag = 'input window, operand 1, single buffered']
    #allocation9 [shape = 's32[1]{0}', space=sflag, size = 0x4, scoped, tag = 'scoped memory for tpu_custom_call.1']
    #allocation10 [shape = 'u8[16384]{0}', space=vmem, size = 0x4000, scoped, tag = 'input window, operand 4, single buffered']
    #allocation11 [shape = 'u8[8192]{0}', space=vmem, size = 0x2000, scoped, tag = 'input window, operand 8, single buffered']
    #allocation12 [shape = 's32[1]{0}', space=sflag, size = 0x4, scoped, tag = 'scoped memory for tpu_custom_call.1']
    #allocation13 [shape = 'u8[8192]{0}', space=vmem, size = 0x2000, scoped, tag = 'output window, operand 0, single buffered']
    #allocation14 [shape = 'u8[1024]{0}', space=vmem, size = 0x400, scoped, tag = 'output window, operand 1, single buffered']
    #allocation15 [shape = 's32[1]{0}', space=sflag, size = 0x4, scoped, tag = 'scoped memory for tpu_custom_call.1']
    %17 = vsyncpa [#allocation6], 0
    %18 = vsyncpa [#allocation9], 0
    %19 = vsyncpa [#allocation12], 0
    %20 = vsyncpa [#allocation7], 0
    %21 = vsyncpa [#allocation15], 0
    // Predicated region
    $region2: #{tpu_custom_call.1} parent=1 // pred_check
      _
    $region3: #{tpu_custom_call.1} parent=1 // pred_check_branch
      %23 = sbr.rel (0) target = $region5
    $region4: #{tpu_custom_call.1} parent=1 // pred_region
      %s25 = ssub.s32 256, 256
      %26 = vsyncadd [#allocation6], %s25
      %s27 = sshll.u32 [#allocation5], 4
      %s28 = int_to_ptr.vmem [resolvable:$true] %s27
      %33 = dma.hbm_to_vmem [thread:$0]  %s0, 256, %s28, [#allocation6], 128, 128, 8
    $region5: #{tpu_custom_call.1} parent=1 // pred_fallthru
      _
    // Predicated region
    $region6: #{tpu_custom_call.1} parent=1 // pred_check
      _
    $region7: #{tpu_custom_call.1} parent=1 // pred_check_branch
      %35 = sbr.rel (0) target = $region9
    $region8: #{tpu_custom_call.1} parent=1 // pred_region
      %s37 = ssub.s32 256, 256
      %38 = vsyncadd [#allocation9], %s37
      %s39 = sshll.u32 [#allocation8], 4
      %s40 = int_to_ptr.vmem [resolvable:$true] %s39
      %45 = dma.hbm_to_vmem [thread:$0]  %s1, 256, %s40, [#allocation9], 128, 128, 8
    $region9: #{tpu_custom_call.1} parent=1 // pred_fallthru
      _
    // Predicated region
    $region10: #{tpu_custom_call.1} parent=1 // pred_check
      _
    $region11: #{tpu_custom_call.1} parent=1 // pred_check_branch
      %47 = sbr.rel (0) target = $region13
    $region12: #{tpu_custom_call.1} parent=1 // pred_region
      _
    $region13: #{tpu_custom_call.1} parent=1 // pred_fallthru
      _
    // Predicated region
    $region14: #{tpu_custom_call.1} parent=1 // pred_check
      _
    $region15: #{tpu_custom_call.1} parent=1 // pred_check_branch
      %49 = sbr.rel (0) target = $region17
    $region16: #{tpu_custom_call.1} parent=1 // pred_region
      _
    $region17: #{tpu_custom_call.1} parent=1 // pred_fallthru
      _
    // Predicated region
    $region18: #{tpu_custom_call.1} parent=1 // pred_check
      _
    $region19: #{tpu_custom_call.1} parent=1 // pred_check_branch
      %51 = sbr.rel (0) target = $region21
    $region20: #{tpu_custom_call.1} parent=1 // pred_region
      %s53 = ssub.s32 512, 512
      %54 = vsyncadd [#allocation9], %s53
      %s55 = sshll.u32 [#allocation10], 4
      %s56 = int_to_ptr.vmem [resolvable:$true] %s55
      %61 = dma.hbm_to_vmem [thread:$0]  %s4, 512, %s56, [#allocation9], 128, 128, 8
    $region21: #{tpu_custom_call.1} parent=1 // pred_fallthru
      _
    // Predicated region
    $region22: #{tpu_custom_call.1} parent=1 // pred_check
      _
    $region23: #{tpu_custom_call.1} parent=1 // pred_check_branch
      %63 = sbr.rel (0) target = $region25
    $region24: #{tpu_custom_call.1} parent=1 // pred_region
      _
    $region25: #{tpu_custom_call.1} parent=1 // pred_fallthru
      _
    // Predicated region
    $region26: #{tpu_custom_call.1} parent=1 // pred_check
      _
    $region27: #{tpu_custom_call.1} parent=1 // pred_check_branch
      %65 = sbr.rel (0) target = $region29
    $region28: #{tpu_custom_call.1} parent=1 // pred_region
      _
    $region29: #{tpu_custom_call.1} parent=1 // pred_fallthru
      _
    // Predicated region
    $region30: #{tpu_custom_call.1} parent=1 // pred_check
      _
    $region31: #{tpu_custom_call.1} parent=1 // pred_check_branch
      %67 = sbr.rel (0) target = $region33
    $region32: #{tpu_custom_call.1} parent=1 // pred_region
      _
    $region33: #{tpu_custom_call.1} parent=1 // pred_fallthru
      _
    // Predicated region
    $region34: #{tpu_custom_call.1} parent=1 // pred_check
      _
    $region35: #{tpu_custom_call.1} parent=1 // pred_check_branch
      %69 = sbr.rel (0) target = $region37
    $region36: #{tpu_custom_call.1} parent=1 // pred_region
      %s71 = ssub.s32 256, 256
      %72 = vsyncadd [#allocation12], %s71
      %s73 = sshll.u32 [#allocation11], 4
      %s74 = int_to_ptr.vmem [resolvable:$true] %s73
      %79 = dma.hbm_to_vmem [thread:$0]  %s8, 256, %s74, [#allocation12], 64, 64, 4
    $region37: #{tpu_custom_call.1} parent=1 // pred_fallthru
      _
    // Predicated region
    $region38: #{tpu_custom_call.1} parent=1 // pred_check
      _
    $region39: #{tpu_custom_call.1} parent=1 // pred_check_branch
      %81 = sbr.rel (0) target = $region41
    $region40: #{tpu_custom_call.1} parent=1 // pred_region
      _
    $region41: #{tpu_custom_call.1} parent=1 // pred_fallthru
      _
    // Predicated region
    $region42: #{tpu_custom_call.1} parent=1 // pred_check
      _
    $region43: #{tpu_custom_call.1} parent=1 // pred_check_branch
      %83 = sbr.rel (0) target = $region45
    $region44: #{tpu_custom_call.1} parent=1 // pred_region
      %84 = dma.done [#allocation6], 256
    $region45: #{tpu_custom_call.1} parent=1 // pred_fallthru
      _
    // Predicated region
    $region46: #{tpu_custom_call.1} parent=1 // pred_check
      _
    $region47: #{tpu_custom_call.1} parent=1 // pred_check_branch
      %86 = sbr.rel (0) target = $region49
    $region48: #{tpu_custom_call.1} parent=1 // pred_region
      %87 = dma.done [#allocation9], 256
    $region49: #{tpu_custom_call.1} parent=1 // pred_fallthru
      _
    // Predicated region
    $region50: #{tpu_custom_call.1} parent=1 // pred_check
      _
    $region51: #{tpu_custom_call.1} parent=1 // pred_check_branch
      %89 = sbr.rel (0) target = $region53
    $region52: #{tpu_custom_call.1} parent=1 // pred_region
      %90 = dma.done [#allocation9], 512
    $region53: #{tpu_custom_call.1} parent=1 // pred_fallthru
      _
    // Predicated region
    $region54: #{tpu_custom_call.1} parent=1 // pred_check
      _
    $region55: #{tpu_custom_call.1} parent=1 // pred_check_branch
      %92 = sbr.rel (0) target = $region57
    $region56: #{tpu_custom_call.1} parent=1 // pred_region
      %93 = dma.done [#allocation12], 256
    $region57: #{tpu_custom_call.1} parent=1 // pred_fallthru
      _
    %p95 = scmp.eq.s32.totalorder 0, 0
    // Predicated region
    $region58: #{tpu_custom_call.1} parent=1 // pred_check
      %p96 = pneg %p95
    $region59: #{tpu_custom_call.1} parent=1 // pred_check_branch
      %98 = sbr.rel (%p96) target = $region61
    $region60: #{tpu_custom_call.1} parent=1 // pred_region
      %vm99 = vcmask 261120
      %100 = vst.msk [vmem:[#allocation2] sm:$0xff] %vm99, 0.0
      %101 = vst.msk [vmem:[#allocation2 + $0x8] sm:$0xff] %vm99, 0.0
      %102 = vst.msk [vmem:[#allocation2 + $0x10] sm:$0xff] %vm99, 0.0
      %103 = vst.msk [vmem:[#allocation2 + $0x18] sm:$0xff] %vm99, 0.0
      %104 = vst.msk [vmem:[#allocation2 + $0x20] sm:$0xff] %vm99, 0.0
      %105 = vst.msk [vmem:[#allocation2 + $0x28] sm:$0xff] %vm99, 0.0
      %106 = vst.msk [vmem:[#allocation2 + $0x30] sm:$0xff] %vm99, 0.0
      %107 = vst.msk [vmem:[#allocation2 + $0x38] sm:$0xff] %vm99, 0.0
      %vm108 = vcmask 254976
      %109 = vst.msk [vmem:[#allocation3] sm:$0x3] %vm108, 0.0
      %110 = vst.msk [vmem:[#allocation4] sm:$0x3] %vm108, 0.0
    $region61: #{tpu_custom_call.1} parent=1 // pred_fallthru
      _
    %v111 = vld [vmem:[#allocation5] sm:$0xff]
    %v112 = vld [vmem:[#allocation5 + $0x8] sm:$0xff]
    %v113 = vld [vmem:[%s3] sm:$0x1]
    %v114 = vld [vmem:[%s3 + $0x1] sm:$0x1]
    %vm115 = vcmask 130048
    %v116 = vsel %vm115, %v111, 0.0
    %117 = vadd.xlane.f32.xlu0 %v116
    %v118 = vpop.xlane.xlu0 %117
    %v119 = vsel %vm115, %v112, 0.0
    %120 = vadd.xlane.f32.xlu0 %v119
    %v121 = vpop.xlane.xlu0 %120
    %v122 = vrcp.pop 16.0
    %v123 = vmul.f32 %v118, %v122
    %v124 = vmul.f32 %v121, %v122
    %v125 = vsub.f32 %v111, %v123
    %v126 = vsub.f32 %v112, %v124
    %v127 = vmul.f32 %v125, %v125
    %v128 = vmul.f32 %v126, %v126
    %v129 = vsel %vm115, %v127, 0.0
    %130 = vadd.xlane.f32.xlu0 %v129
    %v131 = vpop.xlane.xlu0 %130
    %v132 = vsel %vm115, %v128, 0.0
    %133 = vadd.xlane.f32.xlu0 %v132
    %v134 = vpop.xlane.xlu0 %133
    %v135 = vmul.f32 %v131, %v122
    %v136 = vmul.f32 %v134, %v122
    %v137 = vadd.f32 %v135, 1e-05
    %v138 = vadd.f32 %v136, 1e-05
    %v139 = vrsqrt.pop %v137
    %v140 = vrsqrt.pop %v138
    %v141 = vmul.f32 %v125, %v139
    %v142 = vmul.f32 %v126, %v140
    %v143 = vlaneseq
    %v144 = vshrl.u32 %v143, 7
    %v145 = vsub.s32 0, %v144
    %v146 = vrot.slane %v113, %v145
    %v147 = vmul.f32 %v141, %v146
    %v148 = vmul.f32 %v142, %v146
    %v149 = vlaneseq
    %v150 = vshrl.u32 %v149, 7
    %v151 = vsub.s32 0, %v150
    %v152 = vrot.slane %v114, %v151
    %v153 = vadd.f32 %v147, %v152
    %v154 = vadd.f32 %v148, %v152
    %v155 = vpack.c.bf16 %v154, %v153
    %v156 = vld [vmem:[#allocation8] sm:$0xff]
    %v157 = vld [vmem:[#allocation8 + $0x8] sm:$0xff]
    %v158 = vld [vmem:[%s2] sm:$0x3]
    %v160 = vlaneseq
    %v161 = vshrl.u32 %v160, 7
    %v162 = vsub.s32 0, %v161
    %v163 = vrot.slane %v158, %v162
    %v164 = vlaneseq
    %v165 = vshrl.u32 %v164, 7
    %v166 = vsub.s32 1, %v165
    %v167 = vrot.slane %v158, %v166
    %v172 = vunpack.c.l.b16 %v156
    %v173 = vunpack.c.h.b16 %v156
    %v174 = vunpack.c.l.b16 %v157
    %v175 = vunpack.c.h.b16 %v157
    %v176 = vpack.c.b16 %v174, %v172
    %v177 = vpack.c.b16 %v175, %v173
    %v181 = vsel %vm115, %v155, 0
    %183 = vmatprep.subr.bf16.mxu0 %v177
    %184 = vmatpush1.bf16.msra.mxu0 %v176
    %185 = vmatprep.subr.bf16.mxu0 0
    %186 = vmatpush1.bf16.msra.mxu0 0
    %187 = vmatprep.subr.bf16.mxu0 0
    %188 = vmatpush1.bf16.msra.mxu0 0
    %189 = vmatprep.subr.bf16.mxu0 0
    %190 = vmatpush1.bf16.msra.mxu0 0
    %191 = vmatprep.subr.bf16.mxu0 0
    %192 = vmatpush1.bf16.msra.mxu0 0
    %193 = vmatprep.subr.bf16.mxu0 0
    %194 = vmatpush1.bf16.msra.mxu0 0
    %195 = vmatprep.subr.bf16.mxu0 0
    %196 = vmatpush1.bf16.msra.mxu0 0
    %197 = vmatprep.subr.bf16.mxu0 0
    %198 = vmatpush1.bf16.msra.mxu0 0
    %199 = vmatprep.subr.bf16.mxu0 0
    %200 = vmatpush1.bf16.msra.mxu0 0
    %201 = vmatprep.subr.bf16.mxu0 0
    %202 = vmatpush1.bf16.msra.mxu0 0
    %203 = vmatprep.subr.bf16.mxu0 0
    %204 = vmatpush1.bf16.msra.mxu0 0
    %205 = vmatprep.subr.bf16.mxu0 0
    %206 = vmatpush1.bf16.msra.mxu0 0
    %207 = vmatprep.subr.bf16.mxu0 0
    %208 = vmatpush1.bf16.msra.mxu0 0
    %209 = vmatprep.subr.bf16.mxu0 0
    %210 = vmatpush1.bf16.msra.mxu0 0
    %211 = vmatprep.subr.bf16.mxu0 0
    %212 = vmatpush1.bf16.msra.mxu0 0
    %213 = vmatprep.subr.bf16.mxu0 0
    %214 = vmatpush1.bf16.msra.mxu0 0
    %215 = vmatprep.mubr.bf16.mxu0 0
    %216 = vmatmul.mubr.bf16.gmra.mrb[0].mxu0 %v181
    %v217 = vpop.f32.mrb[0].mxu0
    %v218 = vadd.f32 %v163, %v217
    %v219 = vpop.f32.mrb[0].mxu0
    %v220 = vadd.f32 %v167, %v219
    %v221 = vpop.f32.mrb[0].mxu0
    %v222 = vadd.f32 %v163, %v221
    %v223 = vpop.f32.mrb[0].mxu0
    %v224 = vadd.f32 %v167, %v223
    %225 = vdwg.mxu0
    %v226 = vld [vmem:[#allocation10] sm:$0xff]
    %v227 = vld [vmem:[#allocation10 + $0x8] sm:$0xff]
    %v228 = vld [vmem:[#allocation10 + $0x10] sm:$0xff]
    %v229 = vld [vmem:[#allocation10 + $0x18] sm:$0xff]
    %v230 = vld [vmem:[%s5] sm:$0x3]
    %v231 = vld [vmem:[%s6] sm:$0x1]
    %v232 = vld [vmem:[%s6 + $0x1] sm:$0x1]
    %v233 = vld [vmem:[%s7] sm:$0xf]
    %v234 = vld [vmem:[%s7 + $0x4] sm:$0xf]
    %v235 = vld [vmem:[%s7 + $0x8] sm:$0xf]
    %v236 = vld [vmem:[%s7 + $0xc] sm:$0xf]
    %v237 = vld [vmem:[#allocation11] sm:$0xf]
    %v238 = vld [vmem:[#allocation11 + $0x4] sm:$0xf]
    %v239 = vld [vmem:[#allocation11 + $0x8] sm:$0xf]
    %v240 = vld [vmem:[#allocation11 + $0xc] sm:$0xf]
    %v241 = vld [vmem:[%s9] sm:$0x1]
    %v242 = vld [vmem:[#allocation2] sm:$0xff]
    %v243 = vld [vmem:[#allocation2 + $0x8] sm:$0xff]
    %v244 = vld [vmem:[#allocation2 + $0x10] sm:$0xff]
    %v245 = vld [vmem:[#allocation2 + $0x18] sm:$0xff]
    %v246 = vld [vmem:[#allocation2 + $0x20] sm:$0xff]
    %v247 = vld [vmem:[#allocation2 + $0x28] sm:$0xff]
    %v248 = vld [vmem:[#allocation2 + $0x30] sm:$0xff]
    %v249 = vld [vmem:[#allocation2 + $0x38] sm:$0xff]
    %v250 = vld [vmem:[#allocation3] sm:$0x3]
    %v251 = vld [vmem:[#allocation4] sm:$0x3]
    %v252 = vmax.f32 %v218, -100.0
    %v253 = vmin.f32 %v252, 100.0
    %v254 = vmul.f32 %v253, 1.442695
    %v255 = vpow.pop %v254
    %v256 = vxor.u32 %v253, 2147483648
    %v257 = vmul.f32 %v256, 1.442695
    %v258 = vpow.pop %v257
    %v259 = vadd.f32 %v258, 1.0
    %v260 = vrcp.pop %v259
    %v261 = vmul.f32 1.0, %v260
    %v262 = vmax.f32 %v253, -18.420681
    %v263 = vmax.f32 %v261, 1e-08
    %v264 = vlog2.pop %v263
    %v265 = vmul.f32 %v264, 0.6931472
    %267 = vrot.lane.b32.xlu0 %v251, 32
    %v268 = vpop.permute.xlu0 %267
    %v270 = vadd.f32 %v265, %v268
    %272 = vrot.lane.b32.xlu0 %v262, 32
    %v273 = vpop.permute.xlu0 %272
    %v275 = vmax.f32 %v270, %v273
    %277 = vrot.lane.b32.xlu0 %v275, 96
    %v278 = vpop.permute.xlu0 %277
    %v280 = vsub.f32 %v255, %v278
    %v281 = vmin.f32 %v280, 20.0
    %v282 = vmul.f32 %v281, 1.442695
    %v283 = vpow.pop %v282
    %v284 = vlaneseq
    %v285 = vshrl.u32 %v284, 7
    %v286 = vsub.s32 0, %v285
    %v287 = vrot.slane %v220, %v286
    %s289 = sor.u32 256, 32
    %290 = vbcast.lane.b32.xlu0 %v287, %s289
    %v291 = vpop.permute.xlu0 %290
    %s293 = sor.u32 256, 40
    %294 = vbcast.lane.b32.xlu0 %v287, %s293
    %v295 = vpop.permute.xlu0 %294
    %s297 = sor.u32 256, 48
    %298 = vbcast.lane.b32.xlu0 %v287, %s297
    %v299 = vpop.permute.xlu0 %298
    %s301 = sor.u32 256, 56
    %302 = vbcast.lane.b32.xlu0 %v287, %s301
    %v303 = vpop.permute.xlu0 %302
    %v304 = vlaneseq
    %v305 = vshrl.u32 %v304, 7
    %v306 = vsub.s32 1, %v305
    %v307 = vrot.slane %v220, %v306
    %s309 = sor.u32 256, 32
    %310 = vbcast.lane.b32.xlu0 %v307, %s309
    %v311 = vpop.permute.xlu0 %310
    %s313 = sor.u32 256, 40
    %314 = vbcast.lane.b32.xlu0 %v307, %s313
    %v315 = vpop.permute.xlu0 %314
    %s317 = sor.u32 256, 48
    %318 = vbcast.lane.b32.xlu0 %v307, %s317
    %v319 = vpop.permute.xlu0 %318
    %s321 = sor.u32 256, 56
    %322 = vbcast.lane.b32.xlu0 %v307, %s321
    %v323 = vpop.permute.xlu0 %322
    %v326 = vunpack.c.l.s4 1966171168
    %v327 = vunpack.c.0.s8 %v326
    %v328 = vlaneseq
    %v329 = vshrl.u32 %v328, 7
    %v330 = vsub.s32 %v327, %v329
    %v331 = vrot.slane %v220, %v330
    %v332 = vcombine.high %v331, %v331
    %v334 = vunpack.c.l.s4 1966171168
    %v335 = vunpack.c.0.s8 %v334
    %v336 = vlaneseq
    %v337 = vshrl.u32 %v336, 7
    %v338 = vsub.s32 %v335, %v337
    %v339 = vrot.slane %v331, %v338
    %v341 = vunpack.c.l.s4 1966171168
    %v342 = vunpack.c.0.s8 %v341
    %v343 = vlaneseq
    %v344 = vshrl.u32 %v343, 7
    %v345 = vsub.s32 %v342, %v344
    %v346 = vrot.slane %v332, %v345
    %v347 = vlaneseq
    %v348 = vshrl.u32 %v347, 7
    %v349 = vsub.s32 0, %v348
    %v350 = vrot.slane %v339, %v349
    %v351 = vlaneseq
    %v352 = vshrl.u32 %v351, 7
    %v353 = vsub.s32 0, %v352
    %v354 = vrot.slane %v346, %v353
    %v357 = vmul.f32 %v291, %v350
    %v358 = vmul.f32 %v295, %v350
    %v359 = vmul.f32 %v299, %v350
    %v360 = vmul.f32 %v303, %v350
    %v361 = vmul.f32 %v311, %v354
    %v362 = vmul.f32 %v315, %v354
    %v363 = vmul.f32 %v319, %v354
    %v364 = vmul.f32 %v323, %v354
    %v365 = vlaneseq
    %v366 = vshrl.u32 %v365, 7
    %v367 = vsub.s32 0, %v366
    %v368 = vrot.slane %v261, %v367
    %s370 = sor.u32 256, 32
    %371 = vbcast.lane.b32.xlu0 %v368, %s370
    %v372 = vpop.permute.xlu0 %371
    %s374 = sor.u32 256, 40
    %375 = vbcast.lane.b32.xlu0 %v368, %s374
    %v376 = vpop.permute.xlu0 %375
    %s378 = sor.u32 256, 48
    %379 = vbcast.lane.b32.xlu0 %v368, %s378
    %v380 = vpop.permute.xlu0 %379
    %s382 = sor.u32 256, 56
    %383 = vbcast.lane.b32.xlu0 %v368, %s382
    %v384 = vpop.permute.xlu0 %383
    %v385 = vlaneseq
    %v386 = vshrl.u32 %v385, 7
    %v387 = vsub.s32 1, %v386
    %v388 = vrot.slane %v261, %v387
    %s390 = sor.u32 256, 32
    %391 = vbcast.lane.b32.xlu0 %v388, %s390
    %v392 = vpop.permute.xlu0 %391
    %s394 = sor.u32 256, 40
    %395 = vbcast.lane.b32.xlu0 %v388, %s394
    %v396 = vpop.permute.xlu0 %395
    %s398 = sor.u32 256, 48
    %399 = vbcast.lane.b32.xlu0 %v388, %s398
    %v400 = vpop.permute.xlu0 %399
    %s402 = sor.u32 256, 56
    %403 = vbcast.lane.b32.xlu0 %v388, %s402
    %v404 = vpop.permute.xlu0 %403
    %v405 = vmul.f32 %v372, %v242
    %v406 = vmul.f32 %v376, %v243
    %v407 = vmul.f32 %v380, %v244
    %v408 = vmul.f32 %v384, %v245
    %v409 = vmul.f32 %v392, %v246
    %v410 = vmul.f32 %v396, %v247
    %v411 = vmul.f32 %v400, %v248
    %v412 = vmul.f32 %v404, %v249
    %v413 = vlaneseq
    %v414 = vshrl.u32 %v413, 7
    %v415 = vsub.s32 0, %v414
    %v416 = vrot.slane %v283, %v415
    %418 = vbcast.lane.b32.xlu0 %v416, 256
    %v419 = vpop.permute.xlu0 %418
    %s421 = sor.u32 256, 8
    %422 = vbcast.lane.b32.xlu0 %v416, %s421
    %v423 = vpop.permute.xlu0 %422
    %s425 = sor.u32 256, 16
    %426 = vbcast.lane.b32.xlu0 %v416, %s425
    %v427 = vpop.permute.xlu0 %426
    %s429 = sor.u32 256, 24
    %430 = vbcast.lane.b32.xlu0 %v416, %s429
    %v431 = vpop.permute.xlu0 %430
    %v432 = vlaneseq
    %v433 = vshrl.u32 %v432, 7
    %v434 = vsub.s32 1, %v433
    %v435 = vrot.slane %v283, %v434
    %437 = vbcast.lane.b32.xlu0 %v435, 256
    %v438 = vpop.permute.xlu0 %437
    %s440 = sor.u32 256, 8
    %441 = vbcast.lane.b32.xlu0 %v435, %s440
    %v442 = vpop.permute.xlu0 %441
    %s444 = sor.u32 256, 16
    %445 = vbcast.lane.b32.xlu0 %v435, %s444
    %v446 = vpop.permute.xlu0 %445
    %s448 = sor.u32 256, 24
    %449 = vbcast.lane.b32.xlu0 %v435, %s448
    %v450 = vpop.permute.xlu0 %449
    %v451 = vmul.f32 %v419, %v357
    %v452 = vmul.f32 %v423, %v358
    %v453 = vmul.f32 %v427, %v359
    %v454 = vmul.f32 %v431, %v360
    %v455 = vmul.f32 %v438, %v361
    %v456 = vmul.f32 %v442, %v362
    %v457 = vmul.f32 %v446, %v363
    %v458 = vmul.f32 %v450, %v364
    %v459 = vadd.f32 %v405, %v451
    %v460 = vadd.f32 %v406, %v452
    %v461 = vadd.f32 %v407, %v453
    %v462 = vadd.f32 %v408, %v454
    %v463 = vadd.f32 %v409, %v455
    %v464 = vadd.f32 %v410, %v456
    %v465 = vadd.f32 %v411, %v457
    %v466 = vadd.f32 %v412, %v458
    %468 = vrot.lane.b32.xlu0 %v250, 32
    %v469 = vpop.permute.xlu0 %468
    %v471 = vmul.f32 %v261, %v469
    %v472 = vmul.f32 %v283, %v220
    %474 = vrot.lane.b32.xlu0 %v472, 32
    %v475 = vpop.permute.xlu0 %474
    %v477 = vadd.f32 %v471, %v475
    %479 = vrot.lane.b32.xlu0 %v218, 64
    %v480 = vpop.permute.xlu0 %479
    %v482 = vmul.f32 %v477, %v480
    %484 = vrot.lane.b32.xlu0 %v482, 96
    %v485 = vpop.permute.xlu0 %484
    %vm487 = vcmask 254976
    %v488 = vsel %vm487, %v485, 0.0
    %489 = vadd.xlane.f32.xlu0 %v488
    %v490 = vpop.xlane.xlu0 %489
    %v491 = vand.u32 2147483647, %v490
    %v492 = vmax.f32 %v491, 1.0
    %v494 = vunpack.c.l.s4 1966171168
    %v495 = vunpack.c.0.s8 %v494
    %v496 = vlaneseq
    %v497 = vshrl.u32 %v496, 7
    %v498 = vsub.s32 %v495, %v497
    %v499 = vrot.slane %v218, %v498
    %v500 = vcombine.high %v499, %v499
    %v502 = vunpack.c.l.s4 1966171168
    %v503 = vunpack.c.0.s8 %v502
    %v504 = vlaneseq
    %v505 = vshrl.u32 %v504, 7
    %v506 = vsub.s32 %v503, %v505
    %v507 = vrot.slane %v499, %v506
    %v509 = vunpack.c.l.s4 1966171168
    %v510 = vunpack.c.0.s8 %v509
    %v511 = vlaneseq
    %v512 = vshrl.u32 %v511, 7
    %v513 = vsub.s32 %v510, %v512
    %v514 = vrot.slane %v500, %v513
    %v515 = vlaneseq
    %v516 = vshrl.u32 %v515, 7
    %v517 = vsub.s32 0, %v516
    %v518 = vrot.slane %v507, %v517
    %v519 = vlaneseq
    %v520 = vshrl.u32 %v519, 7
    %v521 = vsub.s32 0, %v520
    %v522 = vrot.slane %v514, %v521
    %523 = vrot.lane.b32.xlu0 %v518, 32
    %v524 = vpop.permute.xlu0 %523
    %525 = vrot.lane.b32.xlu0 %v522, 32
    %v526 = vpop.permute.xlu0 %525
    %v529 = vmul.f32 %v459, %v524
    %v530 = vmul.f32 %v460, %v524
    %v531 = vmul.f32 %v461, %v524
    %v532 = vmul.f32 %v462, %v524
    %v533 = vmul.f32 %v463, %v526
    %v534 = vmul.f32 %v464, %v526
    %v535 = vmul.f32 %v465, %v526
    %v536 = vmul.f32 %v466, %v526
    %vm537 = vcmask 261120
    %v538 = vsel %vm537, %v529, 0.0
    %539 = vadd.xlane.f32.xlu0 %v538
    %v540 = vpop.xlane.xlu0 %539
    %v541 = vsel %vm537, %v530, 0.0
    %542 = vadd.xlane.f32.xlu0 %v541
    %v543 = vpop.xlane.xlu0 %542
    %v544 = vsel %vm537, %v531, 0.0
    %545 = vadd.xlane.f32.xlu0 %v544
    %v546 = vpop.xlane.xlu0 %545
    %v547 = vsel %vm537, %v532, 0.0
    %548 = vadd.xlane.f32.xlu0 %v547
    %v549 = vpop.xlane.xlu0 %548
    %v550 = vsel %vm537, %v533, 0.0
    %551 = vadd.xlane.f32.xlu0 %v550
    %v552 = vpop.xlane.xlu0 %551
    %v553 = vsel %vm537, %v534, 0.0
    %554 = vadd.xlane.f32.xlu0 %v553
    %v555 = vpop.xlane.xlu0 %554
    %v556 = vsel %vm537, %v535, 0.0
    %557 = vadd.xlane.f32.xlu0 %v556
    %v558 = vpop.xlane.xlu0 %557
    %v559 = vsel %vm537, %v536, 0.0
    %560 = vadd.xlane.f32.xlu0 %v559
    %v561 = vpop.xlane.xlu0 %560
    %v563 = vlaneseq
    %v564 = vshrl.u32 %v563, 7
    %v565 = vsub.s32 0, %v564
    %v566 = vrot.slane %v492, %v565
    %v567 = vlaneseq
    %v568 = vshrl.u32 %v567, 7
    %v569 = vsub.s32 1, %v568
    %v570 = vrot.slane %v492, %v569
    %v573 = vrcp.pop %v566
    %v574 = vmul.f32 %v540, %v573
    %v575 = vmul.f32 %v543, %v573
    %v576 = vmul.f32 %v546, %v573
    %v577 = vmul.f32 %v549, %v573
    %v578 = vrcp.pop %v570
    %v579 = vmul.f32 %v552, %v578
    %v580 = vmul.f32 %v555, %v578
    %v581 = vmul.f32 %v558, %v578
    %v582 = vmul.f32 %v561, %v578
    %591 = vset.pattern.permute.xlu0 0
    %592 = vperm.xlu0 %591, %v574
    %v593 = vpop.permute.xlu0 %592
    %594 = vset.pattern.permute.xlu0 0
    %595 = vperm.xlu0 %594, %v575
    %v596 = vpop.permute.xlu0 %595
    %597 = vset.pattern.permute.xlu0 0
    %598 = vperm.xlu0 %597, %v576
    %v599 = vpop.permute.xlu0 %598
    %600 = vset.pattern.permute.xlu0 0
    %601 = vperm.xlu0 %600, %v577
    %v602 = vpop.permute.xlu0 %601
    %603 = vset.pattern.permute.xlu0 0
    %604 = vperm.xlu0 %603, %v579
    %v605 = vpop.permute.xlu0 %604
    %606 = vset.pattern.permute.xlu0 0
    %607 = vperm.xlu0 %606, %v580
    %v608 = vpop.permute.xlu0 %607
    %609 = vset.pattern.permute.xlu0 0
    %610 = vperm.xlu0 %609, %v581
    %v611 = vpop.permute.xlu0 %610
    %612 = vset.pattern.permute.xlu0 0
    %613 = vperm.xlu0 %612, %v582
    %v614 = vpop.permute.xlu0 %613
    %v615 = vlaneseq
    %v616 = vand.u32 %v615, 127
    %v617 = vadd.s32 %v616, 4294967232
    %v618 = vlaneseq
    %v619 = vshrl.u32 %v618, 7
    %v620 = vsub.s32 %v617, %v619
    %v621 = vrot.slane %v593, %v620
    %v622 = vadd.s32 %v616, 4294967224
    %v623 = vlaneseq
    %v624 = vshrl.u32 %v623, 7
    %v625 = vsub.s32 %v622, %v624
    %v626 = vrot.slane %v596, %v625
    %vm627 = vcmask 654912
    %v628 = vsel %vm627, %v626, %v621
    %v629 = vadd.s32 %v616, 4294967216
    %v630 = vlaneseq
    %v631 = vshrl.u32 %v630, 7
    %v632 = vsub.s32 %v629, %v631
    %v633 = vrot.slane %v599, %v632
    %vm634 = vcmask 720512
    %v635 = vsel %vm634, %v633, %v628
    %v636 = vadd.s32 %v616, 4294967208
    %v637 = vlaneseq
    %v638 = vshrl.u32 %v637, 7
    %v639 = vsub.s32 %v636, %v638
    %v640 = vrot.slane %v602, %v639
    %vm641 = vcmask 786112
    %v642 = vsel %vm641, %v640, %v635
    %v643 = vlaneseq
    %v644 = vshrl.u32 %v643, 7
    %v645 = vsub.s32 %v617, %v644
    %v646 = vrot.slane %v605, %v645
    %v647 = vlaneseq
    %v648 = vshrl.u32 %v647, 7
    %v649 = vsub.s32 %v622, %v648
    %v650 = vrot.slane %v608, %v649
    %v651 = vsel %vm627, %v650, %v646
    %v652 = vlaneseq
    %v653 = vshrl.u32 %v652, 7
    %v654 = vsub.s32 %v629, %v653
    %v655 = vrot.slane %v611, %v654
    %v656 = vsel %vm634, %v655, %v651
    %v657 = vlaneseq
    %v658 = vshrl.u32 %v657, 7
    %v659 = vsub.s32 %v636, %v658
    %v660 = vrot.slane %v614, %v659
    %v661 = vsel %vm641, %v660, %v656
    %vm662 = vcmask 1041409
    %v663 = vsel %vm662, %v661, %v642
    %v665 = vmul.f32 %v261, %v663
    %667 = vrot.lane.b32.xlu0 %v665, 64
    %v668 = vpop.permute.xlu0 %667
    %v670 = vsel %vm487, %v668, 0.0
    %671 = vadd.xlane.f32.xlu0 %v670
    %v672 = vpop.xlane.xlu0 %671
    %v673 = vrcp.pop 32.0
    %v674 = vmul.f32 %v672, %v673
    %v675 = vsub.f32 %v665, %v674
    %v676 = vmul.f32 %v675, %v675
    %678 = vrot.lane.b32.xlu0 %v676, 64
    %v679 = vpop.permute.xlu0 %678
    %v681 = vsel %vm487, %v679, 0.0
    %682 = vadd.xlane.f32.xlu0 %v681
    %v683 = vpop.xlane.xlu0 %682
    %v684 = vmul.f32 %v683, %v673
    %v685 = vadd.f32 %v684, 1e-05
    %v686 = vrsqrt.pop %v685
    %v687 = vmul.f32 %v675, %v686
    %v688 = vlaneseq
    %v689 = vshrl.u32 %v688, 7
    %v690 = vsub.s32 0, %v689
    %v691 = vrot.slane %v231, %v690
    %693 = vrot.lane.b32.xlu0 %v691, 64
    %v694 = vpop.permute.xlu0 %693
    %v696 = vmul.f32 %v687, %v694
    %v697 = vlaneseq
    %v698 = vshrl.u32 %v697, 7
    %v699 = vsub.s32 0, %v698
    %v700 = vrot.slane %v232, %v699
    %702 = vrot.lane.b32.xlu0 %v700, 64
    %v703 = vpop.permute.xlu0 %702
    %v705 = vadd.f32 %v696, %v703
    %v706 = vpack.c.bf16 %v705, %v705
    %v708 = vlaneseq
    %v709 = vshrl.u32 %v708, 7
    %v710 = vsub.s32 0, %v709
    %v711 = vrot.slane %v230, %v710
    %v712 = vlaneseq
    %v713 = vshrl.u32 %v712, 7
    %v714 = vsub.s32 1, %v713
    %v715 = vrot.slane %v230, %v714
    %719 = vrot.lane.b32.xlu0 %v706, 64
    %v720 = vpop.permute.xlu0 %719
    %v725 = vunpack.c.l.b16 %v226
    %v726 = vunpack.c.h.b16 %v226
    %v727 = vunpack.c.l.b16 %v227
    %v728 = vunpack.c.h.b16 %v227
    %v729 = vunpack.c.l.b16 %v228
    %v730 = vunpack.c.h.b16 %v228
    %v731 = vunpack.c.l.b16 %v229
    %v732 = vunpack.c.h.b16 %v229
    %v733 = vpack.c.b16 %v727, %v725
    %v734 = vpack.c.b16 %v728, %v726
    %v735 = vpack.c.b16 %v731, %v729
    %v736 = vpack.c.b16 %v732, %v730
    %v742 = vsel %vm537, %v720, 0
    %744 = vmatprep.subr.bf16.mxu0 %v734
    %745 = vmatpush1.bf16.msra.mxu0 %v733
    %746 = vmatprep.subr.bf16.mxu0 %v736
    %747 = vmatpush1.bf16.msra.mxu0 %v735
    %748 = vmatprep.subr.bf16.mxu0 0
    %749 = vmatpush1.bf16.msra.mxu0 0
    %750 = vmatprep.subr.bf16.mxu0 0
    %751 = vmatpush1.bf16.msra.mxu0 0
    %752 = vmatprep.subr.bf16.mxu0 0
    %753 = vmatpush1.bf16.msra.mxu0 0
    %754 = vmatprep.subr.bf16.mxu0 0
    %755 = vmatpush1.bf16.msra.mxu0 0
    %756 = vmatprep.subr.bf16.mxu0 0
    %757 = vmatpush1.bf16.msra.mxu0 0
    %758 = vmatprep.subr.bf16.mxu0 0
    %759 = vmatpush1.bf16.msra.mxu0 0
    %760 = vmatprep.subr.bf16.mxu0 0
    %761 = vmatpush1.bf16.msra.mxu0 0
    %762 = vmatprep.subr.bf16.mxu0 0
    %763 = vmatpush1.bf16.msra.mxu0 0
    %764 = vmatprep.subr.bf16.mxu0 0
    %765 = vmatpush1.bf16.msra.mxu0 0
    %766 = vmatprep.subr.bf16.mxu0 0
    %767 = vmatpush1.bf16.msra.mxu0 0
    %768 = vmatprep.subr.bf16.mxu0 0
    %769 = vmatpush1.bf16.msra.mxu0 0
    %770 = vmatprep.subr.bf16.mxu0 0
    %771 = vmatpush1.bf16.msra.mxu0 0
    %772 = vmatprep.subr.bf16.mxu0 0
    %773 = vmatpush1.bf16.msra.mxu0 0
    %774 = vmatprep.subr.bf16.mxu0 0
    %775 = vmatpush1.bf16.msra.mxu0 0
    %776 = vmatprep.mubr.bf16.mxu0 0
    %777 = vmatmul.mubr.bf16.gmra.mrb[0].mxu0 %v742
    %v778 = vpop.f32.mrb[0].mxu0
    %v779 = vadd.f32 %v711, %v778
    %v780 = vpop.f32.mrb[0].mxu0
    %v781 = vadd.f32 %v715, %v780
    %v782 = vpop.f32.mrb[0].mxu0
    %v783 = vpop.f32.mrb[0].mxu0
    %784 = vdwg.mxu0
    %v785 = vmax.f32 %v779, -100.0
    %v786 = vmin.f32 %v785, 100.0
    %v787 = vmul.f32 %v786, 1.442695
    %v788 = vpow.pop %v787
    %v789 = vxor.u32 %v786, 2147483648
    %v790 = vmul.f32 %v789, 1.442695
    %v791 = vpow.pop %v790
    %v792 = vadd.f32 %v791, 1.0
    %v793 = vrcp.pop %v792
    %v794 = vmul.f32 1.0, %v793
    %v795 = vmax.f32 %v786, -18.420681
    %v796 = vmax.f32 %v794, 1e-08
    %v797 = vlog2.pop %v796
    %v798 = vmul.f32 %v797, 0.6931472
    %v799 = vadd.f32 %v798, %v275
    %801 = vrot.lane.b32.xlu0 %v795, 32
    %v802 = vpop.permute.xlu0 %801
    %v804 = vmax.f32 %v799, %v802
    %806 = vrot.lane.b32.xlu0 %v804, 96
    %v807 = vpop.permute.xlu0 %806
    %v809 = vsub.f32 %v788, %v807
    %v810 = vmin.f32 %v809, 20.0
    %v811 = vmul.f32 %v810, 1.442695
    %v812 = vpow.pop %v811
    %v813 = vlaneseq
    %v814 = vshrl.u32 %v813, 7
    %v815 = vsub.s32 0, %v814
    %v816 = vrot.slane %v781, %v815
    %s818 = sor.u32 256, 32
    %819 = vbcast.lane.b32.xlu0 %v816, %s818
    %v820 = vpop.permute.xlu0 %819
    %s822 = sor.u32 256, 40
    %823 = vbcast.lane.b32.xlu0 %v816, %s822
    %v824 = vpop.permute.xlu0 %823
    %s826 = sor.u32 256, 48
    %827 = vbcast.lane.b32.xlu0 %v816, %s826
    %v828 = vpop.permute.xlu0 %827
    %s830 = sor.u32 256, 56
    %831 = vbcast.lane.b32.xlu0 %v816, %s830
    %v832 = vpop.permute.xlu0 %831
    %v833 = vlaneseq
    %v834 = vshrl.u32 %v833, 7
    %v835 = vsub.s32 1, %v834
    %v836 = vrot.slane %v781, %v835
    %s838 = sor.u32 256, 32
    %839 = vbcast.lane.b32.xlu0 %v836, %s838
    %v840 = vpop.permute.xlu0 %839
    %s842 = sor.u32 256, 40
    %843 = vbcast.lane.b32.xlu0 %v836, %s842
    %v844 = vpop.permute.xlu0 %843
    %s846 = sor.u32 256, 48
    %847 = vbcast.lane.b32.xlu0 %v836, %s846
    %v848 = vpop.permute.xlu0 %847
    %s850 = sor.u32 256, 56
    %851 = vbcast.lane.b32.xlu0 %v836, %s850
    %v852 = vpop.permute.xlu0 %851
    %v855 = vunpack.c.l.s4 1966171168
    %v856 = vunpack.c.0.s8 %v855
    %v857 = vlaneseq
    %v858 = vshrl.u32 %v857, 7
    %v859 = vsub.s32 %v856, %v858
    %v860 = vrot.slane %v781, %v859
    %v861 = vcombine.high %v860, %v860
    %v863 = vunpack.c.l.s4 1966171168
    %v864 = vunpack.c.0.s8 %v863
    %v865 = vlaneseq
    %v866 = vshrl.u32 %v865, 7
    %v867 = vsub.s32 %v864, %v866
    %v868 = vrot.slane %v860, %v867
    %v870 = vunpack.c.l.s4 1966171168
    %v871 = vunpack.c.0.s8 %v870
    %v872 = vlaneseq
    %v873 = vshrl.u32 %v872, 7
    %v874 = vsub.s32 %v871, %v873
    %v875 = vrot.slane %v861, %v874
    %v876 = vlaneseq
    %v877 = vshrl.u32 %v876, 7
    %v878 = vsub.s32 0, %v877
    %v879 = vrot.slane %v868, %v878
    %v880 = vlaneseq
    %v881 = vshrl.u32 %v880, 7
    %v882 = vsub.s32 0, %v881
    %v883 = vrot.slane %v875, %v882
    %v886 = vmul.f32 %v820, %v879
    %v887 = vmul.f32 %v824, %v879
    %v888 = vmul.f32 %v828, %v879
    %v889 = vmul.f32 %v832, %v879
    %v890 = vmul.f32 %v840, %v883
    %v891 = vmul.f32 %v844, %v883
    %v892 = vmul.f32 %v848, %v883
    %v893 = vmul.f32 %v852, %v883
    %v894 = vlaneseq
    %v895 = vshrl.u32 %v894, 7
    %v896 = vsub.s32 0, %v895
    %v897 = vrot.slane %v794, %v896
    %s899 = sor.u32 256, 32
    %900 = vbcast.lane.b32.xlu0 %v897, %s899
    %v901 = vpop.permute.xlu0 %900
    %s903 = sor.u32 256, 40
    %904 = vbcast.lane.b32.xlu0 %v897, %s903
    %v905 = vpop.permute.xlu0 %904
    %s907 = sor.u32 256, 48
    %908 = vbcast.lane.b32.xlu0 %v897, %s907
    %v909 = vpop.permute.xlu0 %908
    %s911 = sor.u32 256, 56
    %912 = vbcast.lane.b32.xlu0 %v897, %s911
    %v913 = vpop.permute.xlu0 %912
    %v914 = vlaneseq
    %v915 = vshrl.u32 %v914, 7
    %v916 = vsub.s32 1, %v915
    %v917 = vrot.slane %v794, %v916
    %s919 = sor.u32 256, 32
    %920 = vbcast.lane.b32.xlu0 %v917, %s919
    %v921 = vpop.permute.xlu0 %920
    %s923 = sor.u32 256, 40
    %924 = vbcast.lane.b32.xlu0 %v917, %s923
    %v925 = vpop.permute.xlu0 %924
    %s927 = sor.u32 256, 48
    %928 = vbcast.lane.b32.xlu0 %v917, %s927
    %v929 = vpop.permute.xlu0 %928
    %s931 = sor.u32 256, 56
    %932 = vbcast.lane.b32.xlu0 %v917, %s931
    %v933 = vpop.permute.xlu0 %932
    %v934 = vmul.f32 %v901, %v459
    %v935 = vmul.f32 %v905, %v460
    %v936 = vmul.f32 %v909, %v461
    %v937 = vmul.f32 %v913, %v462
    %v938 = vmul.f32 %v921, %v463
    %v939 = vmul.f32 %v925, %v464
    %v940 = vmul.f32 %v929, %v465
    %v941 = vmul.f32 %v933, %v466
    %v942 = vlaneseq
    %v943 = vshrl.u32 %v942, 7
    %v944 = vsub.s32 0, %v943
    %v945 = vrot.slane %v812, %v944
    %947 = vbcast.lane.b32.xlu0 %v945, 256
    %v948 = vpop.permute.xlu0 %947
    %s950 = sor.u32 256, 8
    %951 = vbcast.lane.b32.xlu0 %v945, %s950
    %v952 = vpop.permute.xlu0 %951
    %s954 = sor.u32 256, 16
    %955 = vbcast.lane.b32.xlu0 %v945, %s954
    %v956 = vpop.permute.xlu0 %955
    %s958 = sor.u32 256, 24
    %959 = vbcast.lane.b32.xlu0 %v945, %s958
    %v960 = vpop.permute.xlu0 %959
    %v961 = vlaneseq
    %v962 = vshrl.u32 %v961, 7
    %v963 = vsub.s32 1, %v962
    %v964 = vrot.slane %v812, %v963
    %966 = vbcast.lane.b32.xlu0 %v964, 256
    %v967 = vpop.permute.xlu0 %966
    %s969 = sor.u32 256, 8
    %970 = vbcast.lane.b32.xlu0 %v964, %s969
    %v971 = vpop.permute.xlu0 %970
    %s973 = sor.u32 256, 16
    %974 = vbcast.lane.b32.xlu0 %v964, %s973
    %v975 = vpop.permute.xlu0 %974
    %s977 = sor.u32 256, 24
    %978 = vbcast.lane.b32.xlu0 %v964, %s977
    %v979 = vpop.permute.xlu0 %978
    %v980 = vmul.f32 %v948, %v886
    %v981 = vmul.f32 %v952, %v887
    %v982 = vmul.f32 %v956, %v888
    %v983 = vmul.f32 %v960, %v889
    %v984 = vmul.f32 %v967, %v890
    %v985 = vmul.f32 %v971, %v891
    %v986 = vmul.f32 %v975, %v892
    %v987 = vmul.f32 %v979, %v893
    %v988 = vadd.f32 %v934, %v980
    %v989 = vadd.f32 %v935, %v981
    %v990 = vadd.f32 %v936, %v982
    %v991 = vadd.f32 %v937, %v983
    %v992 = vadd.f32 %v938, %v984
    %v993 = vadd.f32 %v939, %v985
    %v994 = vadd.f32 %v940, %v986
    %v995 = vadd.f32 %v941, %v987
    %v996 = vmul.f32 %v794, %v477
    %v997 = vmul.f32 %v812, %v781
    %999 = vrot.lane.b32.xlu0 %v997, 32
    %v1000 = vpop.permute.xlu0 %999
    %v1002 = vadd.f32 %v996, %v1000
    %1004 = vrot.lane.b32.xlu0 %v779, 64
    %v1005 = vpop.permute.xlu0 %1004
    %v1007 = vmul.f32 %v1002, %v1005
    %1009 = vrot.lane.b32.xlu0 %v1007, 96
    %v1010 = vpop.permute.xlu0 %1009
    %v1012 = vsel %vm487, %v1010, 0.0
    %1013 = vadd.xlane.f32.xlu0 %v1012
    %v1014 = vpop.xlane.xlu0 %1013
    %v1015 = vand.u32 2147483647, %v1014
    %v1016 = vmax.f32 %v1015, 1.0
    %v1018 = vunpack.c.l.s4 1966171168
    %v1019 = vunpack.c.0.s8 %v1018
    %v1020 = vlaneseq
    %v1021 = vshrl.u32 %v1020, 7
    %v1022 = vsub.s32 %v1019, %v1021
    %v1023 = vrot.slane %v779, %v1022
    %v1024 = vcombine.high %v1023, %v1023
    %v1026 = vunpack.c.l.s4 1966171168
    %v1027 = vunpack.c.0.s8 %v1026
    %v1028 = vlaneseq
    %v1029 = vshrl.u32 %v1028, 7
    %v1030 = vsub.s32 %v1027, %v1029
    %v1031 = vrot.slane %v1023, %v1030
    %v1033 = vunpack.c.l.s4 1966171168
    %v1034 = vunpack.c.0.s8 %v1033
    %v1035 = vlaneseq
    %v1036 = vshrl.u32 %v1035, 7
    %v1037 = vsub.s32 %v1034, %v1036
    %v1038 = vrot.slane %v1024, %v1037
    %v1039 = vlaneseq
    %v1040 = vshrl.u32 %v1039, 7
    %v1041 = vsub.s32 0, %v1040
    %v1042 = vrot.slane %v1031, %v1041
    %v1043 = vlaneseq
    %v1044 = vshrl.u32 %v1043, 7
    %v1045 = vsub.s32 0, %v1044
    %v1046 = vrot.slane %v1038, %v1045
    %1047 = vrot.lane.b32.xlu0 %v1042, 32
    %v1048 = vpop.permute.xlu0 %1047
    %1049 = vrot.lane.b32.xlu0 %v1046, 32
    %v1050 = vpop.permute.xlu0 %1049
    %v1053 = vmul.f32 %v988, %v1048
    %v1054 = vmul.f32 %v989, %v1048
    %v1055 = vmul.f32 %v990, %v1048
    %v1056 = vmul.f32 %v991, %v1048
    %v1057 = vmul.f32 %v992, %v1050
    %v1058 = vmul.f32 %v993, %v1050
    %v1059 = vmul.f32 %v994, %v1050
    %v1060 = vmul.f32 %v995, %v1050
    %v1061 = vsel %vm537, %v1053, 0.0
    %1062 = vadd.xlane.f32.xlu0 %v1061
    %v1063 = vpop.xlane.xlu0 %1062
    %v1064 = vsel %vm537, %v1054, 0.0
    %1065 = vadd.xlane.f32.xlu0 %v1064
    %v1066 = vpop.xlane.xlu0 %1065
    %v1067 = vsel %vm537, %v1055, 0.0
    %1068 = vadd.xlane.f32.xlu0 %v1067
    %v1069 = vpop.xlane.xlu0 %1068
    %v1070 = vsel %vm537, %v1056, 0.0
    %1071 = vadd.xlane.f32.xlu0 %v1070
    %v1072 = vpop.xlane.xlu0 %1071
    %v1073 = vsel %vm537, %v1057, 0.0
    %1074 = vadd.xlane.f32.xlu0 %v1073
    %v1075 = vpop.xlane.xlu0 %1074
    %v1076 = vsel %vm537, %v1058, 0.0
    %1077 = vadd.xlane.f32.xlu0 %v1076
    %v1078 = vpop.xlane.xlu0 %1077
    %v1079 = vsel %vm537, %v1059, 0.0
    %1080 = vadd.xlane.f32.xlu0 %v1079
    %v1081 = vpop.xlane.xlu0 %1080
    %v1082 = vsel %vm537, %v1060, 0.0
    %1083 = vadd.xlane.f32.xlu0 %v1082
    %v1084 = vpop.xlane.xlu0 %1083
    %v1086 = vlaneseq
    %v1087 = vshrl.u32 %v1086, 7
    %v1088 = vsub.s32 0, %v1087
    %v1089 = vrot.slane %v1016, %v1088
    %v1090 = vlaneseq
    %v1091 = vshrl.u32 %v1090, 7
    %v1092 = vsub.s32 1, %v1091
    %v1093 = vrot.slane %v1016, %v1092
    %v1096 = vrcp.pop %v1089
    %v1097 = vmul.f32 %v1063, %v1096
    %v1098 = vmul.f32 %v1066, %v1096
    %v1099 = vmul.f32 %v1069, %v1096
    %v1100 = vmul.f32 %v1072, %v1096
    %v1101 = vrcp.pop %v1093
    %v1102 = vmul.f32 %v1075, %v1101
    %v1103 = vmul.f32 %v1078, %v1101
    %v1104 = vmul.f32 %v1081, %v1101
    %v1105 = vmul.f32 %v1084, %v1101
    %1114 = vset.pattern.permute.xlu0 0
    %1115 = vperm.xlu0 %1114, %v1097
    %v1116 = vpop.permute.xlu0 %1115
    %1117 = vset.pattern.permute.xlu0 0
    %1118 = vperm.xlu0 %1117, %v1098
    %v1119 = vpop.permute.xlu0 %1118
    %1120 = vset.pattern.permute.xlu0 0
    %1121 = vperm.xlu0 %1120, %v1099
    %v1122 = vpop.permute.xlu0 %1121
    %1123 = vset.pattern.permute.xlu0 0
    %1124 = vperm.xlu0 %1123, %v1100
    %v1125 = vpop.permute.xlu0 %1124
    %1126 = vset.pattern.permute.xlu0 0
    %1127 = vperm.xlu0 %1126, %v1102
    %v1128 = vpop.permute.xlu0 %1127
    %1129 = vset.pattern.permute.xlu0 0
    %1130 = vperm.xlu0 %1129, %v1103
    %v1131 = vpop.permute.xlu0 %1130
    %1132 = vset.pattern.permute.xlu0 0
    %1133 = vperm.xlu0 %1132, %v1104
    %v1134 = vpop.permute.xlu0 %1133
    %1135 = vset.pattern.permute.xlu0 0
    %1136 = vperm.xlu0 %1135, %v1105
    %v1137 = vpop.permute.xlu0 %1136
    %v1138 = vlaneseq
    %v1139 = vshrl.u32 %v1138, 7
    %v1140 = vsub.s32 %v617, %v1139
    %v1141 = vrot.slane %v1116, %v1140
    %v1142 = vlaneseq
    %v1143 = vshrl.u32 %v1142, 7
    %v1144 = vsub.s32 %v622, %v1143
    %v1145 = vrot.slane %v1119, %v1144
    %v1146 = vsel %vm627, %v1145, %v1141
    %v1147 = vlaneseq
    %v1148 = vshrl.u32 %v1147, 7
    %v1149 = vsub.s32 %v629, %v1148
    %v1150 = vrot.slane %v1122, %v1149
    %v1151 = vsel %vm634, %v1150, %v1146
    %v1152 = vlaneseq
    %v1153 = vshrl.u32 %v1152, 7
    %v1154 = vsub.s32 %v636, %v1153
    %v1155 = vrot.slane %v1125, %v1154
    %v1156 = vsel %vm641, %v1155, %v1151
    %v1157 = vlaneseq
    %v1158 = vshrl.u32 %v1157, 7
    %v1159 = vsub.s32 %v617, %v1158
    %v1160 = vrot.slane %v1128, %v1159
    %v1161 = vlaneseq
    %v1162 = vshrl.u32 %v1161, 7
    %v1163 = vsub.s32 %v622, %v1162
    %v1164 = vrot.slane %v1131, %v1163
    %v1165 = vsel %vm627, %v1164, %v1160
    %v1166 = vlaneseq
    %v1167 = vshrl.u32 %v1166, 7
    %v1168 = vsub.s32 %v629, %v1167
    %v1169 = vrot.slane %v1134, %v1168
    %v1170 = vsel %vm634, %v1169, %v1165
    %v1171 = vlaneseq
    %v1172 = vshrl.u32 %v1171, 7
    %v1173 = vsub.s32 %v636, %v1172
    %v1174 = vrot.slane %v1137, %v1173
    %v1175 = vsel %vm641, %v1174, %v1170
    %v1176 = vsel %vm662, %v1175, %v1156
    %v1178 = vmul.f32 %v794, %v1176
    %v1179 = vpack.c.bf16 %v665, %v665
    %v1180 = vpack.c.bf16 %v1178, %v1178
    %1182 = vrot.lane.b32.xlu0 %v1180, 64
    %v1183 = vpop.permute.xlu0 %1182
    %v1188 = vunpack.c.l.b16 %v237
    %v1189 = vunpack.c.l.b16 %v238
    %v1190 = vunpack.c.l.b16 %v239
    %v1191 = vunpack.c.l.b16 %v240
    %v1192 = vpack.c.b16 %v1189, %v1188
    %v1193 = vpack.c.b16 %v1191, %v1190
    %v1197 = vsel %vm537, %v1183, 0
    %1199 = vmatprep.subr.bf16.mxu0 0
    %1200 = vmatpush1.bf16.msra.mxu0 %v1192
    %1201 = vmatprep.subr.bf16.mxu0 0
    %1202 = vmatpush1.bf16.msra.mxu0 %v1193
    %1203 = vmatprep.subr.bf16.mxu0 0
    %1204 = vmatpush1.bf16.msra.mxu0 0
    %1205 = vmatprep.subr.bf16.mxu0 0
    %1206 = vmatpush1.bf16.msra.mxu0 0
    %1207 = vmatprep.subr.bf16.mxu0 0
    %1208 = vmatpush1.bf16.msra.mxu0 0
    %1209 = vmatprep.subr.bf16.mxu0 0
    %1210 = vmatpush1.bf16.msra.mxu0 0
    %1211 = vmatprep.subr.bf16.mxu0 0
    %1212 = vmatpush1.bf16.msra.mxu0 0
    %1213 = vmatprep.subr.bf16.mxu0 0
    %1214 = vmatpush1.bf16.msra.mxu0 0
    %1215 = vmatprep.subr.bf16.mxu0 0
    %1216 = vmatpush1.bf16.msra.mxu0 0
    %1217 = vmatprep.subr.bf16.mxu0 0
    %1218 = vmatpush1.bf16.msra.mxu0 0
    %1219 = vmatprep.subr.bf16.mxu0 0
    %1220 = vmatpush1.bf16.msra.mxu0 0
    %1221 = vmatprep.subr.bf16.mxu0 0
    %1222 = vmatpush1.bf16.msra.mxu0 0
    %1223 = vmatprep.subr.bf16.mxu0 0
    %1224 = vmatpush1.bf16.msra.mxu0 0
    %1225 = vmatprep.subr.bf16.mxu0 0
    %1226 = vmatpush1.bf16.msra.mxu0 0
    %1227 = vmatprep.subr.bf16.mxu0 0
    %1228 = vmatpush1.bf16.msra.mxu0 0
    %1229 = vmatprep.subr.bf16.mxu0 0
    %1230 = vmatpush1.bf16.msra.mxu0 0
    %1231 = vmatprep.mubr.bf16.mxu0 0
    %1232 = vmatmul.mubr.bf16.gmra.mrb[0].mxu0 %v1197
    %v1233 = vpop.f32.mrb[0].mxu0
    %v1234 = vadd.f32 0.0, %v1233
    %v1235 = vpop.f32.mrb[0].mxu0
    %v1236 = vpop.f32.mrb[0].mxu0
    %v1237 = vpop.f32.mrb[0].mxu0
    %1238 = vdwg.mxu0
    %1240 = vrot.lane.b32.xlu0 %v1179, 64
    %v1241 = vpop.permute.xlu0 %1240
    %v1246 = vunpack.c.l.b16 %v233
    %v1247 = vunpack.c.l.b16 %v234
    %v1248 = vunpack.c.l.b16 %v235
    %v1249 = vunpack.c.l.b16 %v236
    %v1250 = vpack.c.b16 %v1247, %v1246
    %v1251 = vpack.c.b16 %v1249, %v1248
    %v1255 = vsel %vm537, %v1241, 0
    %1257 = vmatprep.subr.bf16.mxu0 0
    %1258 = vmatpush1.bf16.msra.mxu0 %v1250
    %1259 = vmatprep.subr.bf16.mxu0 0
    %1260 = vmatpush1.bf16.msra.mxu0 %v1251
    %1261 = vmatprep.subr.bf16.mxu0 0
    %1262 = vmatpush1.bf16.msra.mxu0 0
    %1263 = vmatprep.subr.bf16.mxu0 0
    %1264 = vmatpush1.bf16.msra.mxu0 0
    %1265 = vmatprep.subr.bf16.mxu0 0
    %1266 = vmatpush1.bf16.msra.mxu0 0
    %1267 = vmatprep.subr.bf16.mxu0 0
    %1268 = vmatpush1.bf16.msra.mxu0 0
    %1269 = vmatprep.subr.bf16.mxu0 0
    %1270 = vmatpush1.bf16.msra.mxu0 0
    %1271 = vmatprep.subr.bf16.mxu0 0
    %1272 = vmatpush1.bf16.msra.mxu0 0
    %1273 = vmatprep.subr.bf16.mxu0 0
    %1274 = vmatpush1.bf16.msra.mxu0 0
    %1275 = vmatprep.subr.bf16.mxu0 0
    %1276 = vmatpush1.bf16.msra.mxu0 0
    %1277 = vmatprep.subr.bf16.mxu0 0
    %1278 = vmatpush1.bf16.msra.mxu0 0
    %1279 = vmatprep.subr.bf16.mxu0 0
    %1280 = vmatpush1.bf16.msra.mxu0 0
    %1281 = vmatprep.subr.bf16.mxu0 0
    %1282 = vmatpush1.bf16.msra.mxu0 0
    %1283 = vmatprep.subr.bf16.mxu0 0
    %1284 = vmatpush1.bf16.msra.mxu0 0
    %1285 = vmatprep.subr.bf16.mxu0 0
    %1286 = vmatpush1.bf16.msra.mxu0 0
    %1287 = vmatprep.subr.bf16.mxu0 0
    %1288 = vmatpush1.bf16.msra.mxu0 0
    %1289 = vmatprep.mubr.bf16.mxu0 0
    %1290 = vmatmul.mubr.bf16.gmra.mrb[0].mxu0 %v1255
    %v1291 = vpop.f32.mrb[0].mxu0
    %v1292 = vadd.f32 %v1234, %v1291
    %v1293 = vpop.f32.mrb[0].mxu0
    %v1294 = vpop.f32.mrb[0].mxu0
    %v1295 = vpop.f32.mrb[0].mxu0
    %1296 = vdwg.mxu0
    %v1298 = vlaneseq
    %v1299 = vshrl.u32 %v1298, 7
    %v1300 = vsub.s32 0, %v1299
    %v1301 = vrot.slane %v241, %v1300
    %v1303 = vadd.f32 %v1292, %v1301
    %1305 = vrot.lane.b32.xlu0 %v1178, 64
    %v1306 = vpop.permute.xlu0 %1305
    %v1308 = vadd.f32 %v1303, %v1306
    %1309 = vst.msk [vmem:[#allocation13] sm:$0x3] %vm487, %v1308
    %v1310 = vrot.slane %v804, 6
    %v1312 = vadd.f32 %v265, %v1310
    %v1313 = vmax.f32 %v1312, %v273
    %1315 = vrot.lane.b32.xlu0 %v1313, 96
    %v1316 = vpop.permute.xlu0 %1315
    %v1318 = vsub.f32 %v255, %v1316
    %v1319 = vmin.f32 %v1318, 20.0
    %v1320 = vmul.f32 %v1319, 1.442695
    %v1321 = vpow.pop %v1320
    %v1322 = vlaneseq
    %v1323 = vshrl.u32 %v1322, 7
    %v1324 = vsub.s32 2, %v1323
    %v1325 = vrot.slane %v220, %v1324
    %s1327 = sor.u32 256, 32
    %1328 = vbcast.lane.b32.xlu0 %v1325, %s1327
    %v1329 = vpop.permute.xlu0 %1328
    %s1331 = sor.u32 256, 40
    %1332 = vbcast.lane.b32.xlu0 %v1325, %s1331
    %v1333 = vpop.permute.xlu0 %1332
    %s1335 = sor.u32 256, 48
    %1336 = vbcast.lane.b32.xlu0 %v1325, %s1335
    %v1337 = vpop.permute.xlu0 %1336
    %s1339 = sor.u32 256, 56
    %1340 = vbcast.lane.b32.xlu0 %v1325, %s1339
    %v1341 = vpop.permute.xlu0 %1340
    %v1342 = vlaneseq
    %v1343 = vshrl.u32 %v1342, 7
    %v1344 = vsub.s32 3, %v1343
    %v1345 = vrot.slane %v220, %v1344
    %s1347 = sor.u32 256, 32
    %1348 = vbcast.lane.b32.xlu0 %v1345, %s1347
    %v1349 = vpop.permute.xlu0 %1348
    %s1351 = sor.u32 256, 40
    %1352 = vbcast.lane.b32.xlu0 %v1345, %s1351
    %v1353 = vpop.permute.xlu0 %1352
    %s1355 = sor.u32 256, 48
    %1356 = vbcast.lane.b32.xlu0 %v1345, %s1355
    %v1357 = vpop.permute.xlu0 %1356
    %s1359 = sor.u32 256, 56
    %1360 = vbcast.lane.b32.xlu0 %v1345, %s1359
    %v1361 = vpop.permute.xlu0 %1360
    %v1362 = vcombine.high %v339, %v339
    %v1363 = vcombine.high %v346, %v346
    %v1364 = vlaneseq
    %v1365 = vshrl.u32 %v1364, 7
    %v1366 = vsub.s32 0, %v1365
    %v1367 = vrot.slane %v1362, %v1366
    %v1368 = vlaneseq
    %v1369 = vshrl.u32 %v1368, 7
    %v1370 = vsub.s32 0, %v1369
    %v1371 = vrot.slane %v1363, %v1370
    %v1374 = vmul.f32 %v1329, %v1367
    %v1375 = vmul.f32 %v1333, %v1367
    %v1376 = vmul.f32 %v1337, %v1367
    %v1377 = vmul.f32 %v1341, %v1367
    %v1378 = vmul.f32 %v1349, %v1371
    %v1379 = vmul.f32 %v1353, %v1371
    %v1380 = vmul.f32 %v1357, %v1371
    %v1381 = vmul.f32 %v1361, %v1371
    %v1382 = vlaneseq
    %v1383 = vshrl.u32 %v1382, 7
    %v1384 = vsub.s32 2, %v1383
    %v1385 = vrot.slane %v261, %v1384
    %s1387 = sor.u32 256, 32
    %1388 = vbcast.lane.b32.xlu0 %v1385, %s1387
    %v1389 = vpop.permute.xlu0 %1388
    %s1391 = sor.u32 256, 40
    %1392 = vbcast.lane.b32.xlu0 %v1385, %s1391
    %v1393 = vpop.permute.xlu0 %1392
    %s1395 = sor.u32 256, 48
    %1396 = vbcast.lane.b32.xlu0 %v1385, %s1395
    %v1397 = vpop.permute.xlu0 %1396
    %s1399 = sor.u32 256, 56
    %1400 = vbcast.lane.b32.xlu0 %v1385, %s1399
    %v1401 = vpop.permute.xlu0 %1400
    %v1402 = vlaneseq
    %v1403 = vshrl.u32 %v1402, 7
    %v1404 = vsub.s32 3, %v1403
    %v1405 = vrot.slane %v261, %v1404
    %s1407 = sor.u32 256, 32
    %1408 = vbcast.lane.b32.xlu0 %v1405, %s1407
    %v1409 = vpop.permute.xlu0 %1408
    %s1411 = sor.u32 256, 40
    %1412 = vbcast.lane.b32.xlu0 %v1405, %s1411
    %v1413 = vpop.permute.xlu0 %1412
    %s1415 = sor.u32 256, 48
    %1416 = vbcast.lane.b32.xlu0 %v1405, %s1415
    %v1417 = vpop.permute.xlu0 %1416
    %s1419 = sor.u32 256, 56
    %1420 = vbcast.lane.b32.xlu0 %v1405, %s1419
    %v1421 = vpop.permute.xlu0 %1420
    %v1422 = vmul.f32 %v1389, %v988
    %v1423 = vmul.f32 %v1393, %v989
    %v1424 = vmul.f32 %v1397, %v990
    %v1425 = vmul.f32 %v1401, %v991
    %v1426 = vmul.f32 %v1409, %v992
    %v1427 = vmul.f32 %v1413, %v993
    %v1428 = vmul.f32 %v1417, %v994
    %v1429 = vmul.f32 %v1421, %v995
    %v1430 = vlaneseq
    %v1431 = vshrl.u32 %v1430, 7
    %v1432 = vsub.s32 2, %v1431
    %v1433 = vrot.slane %v1321, %v1432
    %1435 = vbcast.lane.b32.xlu0 %v1433, 256
    %v1436 = vpop.permute.xlu0 %1435
    %s1438 = sor.u32 256, 8
    %1439 = vbcast.lane.b32.xlu0 %v1433, %s1438
    %v1440 = vpop.permute.xlu0 %1439
    %s1442 = sor.u32 256, 16
    %1443 = vbcast.lane.b32.xlu0 %v1433, %s1442
    %v1444 = vpop.permute.xlu0 %1443
    %s1446 = sor.u32 256, 24
    %1447 = vbcast.lane.b32.xlu0 %v1433, %s1446
    %v1448 = vpop.permute.xlu0 %1447
    %v1449 = vlaneseq
    %v1450 = vshrl.u32 %v1449, 7
    %v1451 = vsub.s32 3, %v1450
    %v1452 = vrot.slane %v1321, %v1451
    %1454 = vbcast.lane.b32.xlu0 %v1452, 256
    %v1455 = vpop.permute.xlu0 %1454
    %s1457 = sor.u32 256, 8
    %1458 = vbcast.lane.b32.xlu0 %v1452, %s1457
    %v1459 = vpop.permute.xlu0 %1458
    %s1461 = sor.u32 256, 16
    %1462 = vbcast.lane.b32.xlu0 %v1452, %s1461
    %v1463 = vpop.permute.xlu0 %1462
    %s1465 = sor.u32 256, 24
    %1466 = vbcast.lane.b32.xlu0 %v1452, %s1465
    %v1467 = vpop.permute.xlu0 %1466
    %v1468 = vmul.f32 %v1436, %v1374
    %v1469 = vmul.f32 %v1440, %v1375
    %v1470 = vmul.f32 %v1444, %v1376
    %v1471 = vmul.f32 %v1448, %v1377
    %v1472 = vmul.f32 %v1455, %v1378
    %v1473 = vmul.f32 %v1459, %v1379
    %v1474 = vmul.f32 %v1463, %v1380
    %v1475 = vmul.f32 %v1467, %v1381
    %v1476 = vadd.f32 %v1422, %v1468
    %v1477 = vadd.f32 %v1423, %v1469
    %v1478 = vadd.f32 %v1424, %v1470
    %v1479 = vadd.f32 %v1425, %v1471
    %v1480 = vadd.f32 %v1426, %v1472
    %v1481 = vadd.f32 %v1427, %v1473
    %v1482 = vadd.f32 %v1428, %v1474
    %v1483 = vadd.f32 %v1429, %v1475
    %v1485 = vrot.slane %v1002, 6
    %v1487 = vmul.f32 %v261, %v1485
    %v1488 = vmul.f32 %v1321, %v220
    %1490 = vrot.lane.b32.xlu0 %v1488, 32
    %v1491 = vpop.permute.xlu0 %1490
    %v1493 = vadd.f32 %v1487, %v1491
    %v1494 = vmul.f32 %v1493, %v480
    %1496 = vrot.lane.b32.xlu0 %v1494, 96
    %v1497 = vpop.permute.xlu0 %1496
    %vm1499 = vcmask 257026
    %v1500 = vsel %vm1499, %v1497, 0.0
    %1501 = vadd.xlane.f32.xlu0 %v1500
    %v1502 = vpop.xlane.xlu0 %1501
    %v1503 = vand.u32 2147483647, %v1502
    %v1504 = vmax.f32 %v1503, 1.0
    %v1505 = vcombine.high %v507, %v507
    %v1506 = vcombine.high %v514, %v514
    %v1507 = vlaneseq
    %v1508 = vshrl.u32 %v1507, 7
    %v1509 = vsub.s32 0, %v1508
    %v1510 = vrot.slane %v1505, %v1509
    %v1511 = vlaneseq
    %v1512 = vshrl.u32 %v1511, 7
    %v1513 = vsub.s32 0, %v1512
    %v1514 = vrot.slane %v1506, %v1513
    %1515 = vrot.lane.b32.xlu0 %v1510, 32
    %v1516 = vpop.permute.xlu0 %1515
    %1517 = vrot.lane.b32.xlu0 %v1514, 32
    %v1518 = vpop.permute.xlu0 %1517
    %v1521 = vmul.f32 %v1476, %v1516
    %v1522 = vmul.f32 %v1477, %v1516
    %v1523 = vmul.f32 %v1478, %v1516
    %v1524 = vmul.f32 %v1479, %v1516
    %v1525 = vmul.f32 %v1480, %v1518
    %v1526 = vmul.f32 %v1481, %v1518
    %v1527 = vmul.f32 %v1482, %v1518
    %v1528 = vmul.f32 %v1483, %v1518
    %v1529 = vsel %vm537, %v1521, 0.0
    %1530 = vadd.xlane.f32.xlu0 %v1529
    %v1531 = vpop.xlane.xlu0 %1530
    %v1532 = vsel %vm537, %v1522, 0.0
    %1533 = vadd.xlane.f32.xlu0 %v1532
    %v1534 = vpop.xlane.xlu0 %1533
    %v1535 = vsel %vm537, %v1523, 0.0
    %1536 = vadd.xlane.f32.xlu0 %v1535
    %v1537 = vpop.xlane.xlu0 %1536
    %v1538 = vsel %vm537, %v1524, 0.0
    %1539 = vadd.xlane.f32.xlu0 %v1538
    %v1540 = vpop.xlane.xlu0 %1539
    %v1541 = vsel %vm537, %v1525, 0.0
    %1542 = vadd.xlane.f32.xlu0 %v1541
    %v1543 = vpop.xlane.xlu0 %1542
    %v1544 = vsel %vm537, %v1526, 0.0
    %1545 = vadd.xlane.f32.xlu0 %v1544
    %v1546 = vpop.xlane.xlu0 %1545
    %v1547 = vsel %vm537, %v1527, 0.0
    %1548 = vadd.xlane.f32.xlu0 %v1547
    %v1549 = vpop.xlane.xlu0 %1548
    %v1550 = vsel %vm537, %v1528, 0.0
    %1551 = vadd.xlane.f32.xlu0 %v1550
    %v1552 = vpop.xlane.xlu0 %1551
    %v1554 = vlaneseq
    %v1555 = vshrl.u32 %v1554, 7
    %v1556 = vsub.s32 2, %v1555
    %v1557 = vrot.slane %v1504, %v1556
    %v1558 = vlaneseq
    %v1559 = vshrl.u32 %v1558, 7
    %v1560 = vsub.s32 3, %v1559
    %v1561 = vrot.slane %v1504, %v1560
    %v1564 = vrcp.pop %v1557
    %v1565 = vmul.f32 %v1531, %v1564
    %v1566 = vmul.f32 %v1534, %v1564
    %v1567 = vmul.f32 %v1537, %v1564
    %v1568 = vmul.f32 %v1540, %v1564
    %v1569 = vrcp.pop %v1561
    %v1570 = vmul.f32 %v1543, %v1569
    %v1571 = vmul.f32 %v1546, %v1569
    %v1572 = vmul.f32 %v1549, %v1569
    %v1573 = vmul.f32 %v1552, %v1569
    %1582 = vset.pattern.permute.xlu0 0
    %1583 = vperm.xlu0 %1582, %v1565
    %v1584 = vpop.permute.xlu0 %1583
    %1585 = vset.pattern.permute.xlu0 0
    %1586 = vperm.xlu0 %1585, %v1566
    %v1587 = vpop.permute.xlu0 %1586
    %1588 = vset.pattern.permute.xlu0 0
    %1589 = vperm.xlu0 %1588, %v1567
    %v1590 = vpop.permute.xlu0 %1589
    %1591 = vset.pattern.permute.xlu0 0
    %1592 = vperm.xlu0 %1591, %v1568
    %v1593 = vpop.permute.xlu0 %1592
    %1594 = vset.pattern.permute.xlu0 0
    %1595 = vperm.xlu0 %1594, %v1570
    %v1596 = vpop.permute.xlu0 %1595
    %1597 = vset.pattern.permute.xlu0 0
    %1598 = vperm.xlu0 %1597, %v1571
    %v1599 = vpop.permute.xlu0 %1598
    %1600 = vset.pattern.permute.xlu0 0
    %1601 = vperm.xlu0 %1600, %v1572
    %v1602 = vpop.permute.xlu0 %1601
    %1603 = vset.pattern.permute.xlu0 0
    %1604 = vperm.xlu0 %1603, %v1573
    %v1605 = vpop.permute.xlu0 %1604
    %v1606 = vlaneseq
    %v1607 = vshrl.u32 %v1606, 7
    %v1608 = vsub.s32 %v617, %v1607
    %v1609 = vrot.slane %v1584, %v1608
    %v1610 = vlaneseq
    %v1611 = vshrl.u32 %v1610, 7
    %v1612 = vsub.s32 %v622, %v1611
    %v1613 = vrot.slane %v1587, %v1612
    %v1614 = vsel %vm627, %v1613, %v1609
    %v1615 = vlaneseq
    %v1616 = vshrl.u32 %v1615, 7
    %v1617 = vsub.s32 %v629, %v1616
    %v1618 = vrot.slane %v1590, %v1617
    %v1619 = vsel %vm634, %v1618, %v1614
    %v1620 = vlaneseq
    %v1621 = vshrl.u32 %v1620, 7
    %v1622 = vsub.s32 %v636, %v1621
    %v1623 = vrot.slane %v1593, %v1622
    %v1624 = vsel %vm641, %v1623, %v1619
    %v1625 = vlaneseq
    %v1626 = vshrl.u32 %v1625, 7
    %v1627 = vsub.s32 %v617, %v1626
    %v1628 = vrot.slane %v1596, %v1627
    %v1629 = vlaneseq
    %v1630 = vshrl.u32 %v1629, 7
    %v1631 = vsub.s32 %v622, %v1630
    %v1632 = vrot.slane %v1599, %v1631
    %v1633 = vsel %vm627, %v1632, %v1628
    %v1634 = vlaneseq
    %v1635 = vshrl.u32 %v1634, 7
    %v1636 = vsub.s32 %v629, %v1635
    %v1637 = vrot.slane %v1602, %v1636
    %v1638 = vsel %vm634, %v1637, %v1633
    %v1639 = vlaneseq
    %v1640 = vshrl.u32 %v1639, 7
    %v1641 = vsub.s32 %v636, %v1640
    %v1642 = vrot.slane %v1605, %v1641
    %v1643 = vsel %vm641, %v1642, %v1638
    %vm1644 = vcmask 1043459
    %v1645 = vsel %vm1644, %v1643, %v1624
    %v1647 = vmul.f32 %v261, %v1645
    %1649 = vrot.lane.b32.xlu0 %v1647, 64
    %v1650 = vpop.permute.xlu0 %1649
    %v1652 = vsel %vm1499, %v1650, 0.0
    %1653 = vadd.xlane.f32.xlu0 %v1652
    %v1654 = vpop.xlane.xlu0 %1653
    %v1655 = vmul.f32 %v1654, %v673
    %v1656 = vsub.f32 %v1647, %v1655
    %v1657 = vmul.f32 %v1656, %v1656
    %1659 = vrot.lane.b32.xlu0 %v1657, 64
    %v1660 = vpop.permute.xlu0 %1659
    %v1662 = vsel %vm1499, %v1660, 0.0
    %1663 = vadd.xlane.f32.xlu0 %v1662
    %v1664 = vpop.xlane.xlu0 %1663
    %v1665 = vmul.f32 %v1664, %v673
    %v1666 = vadd.f32 %v1665, 1e-05
    %v1667 = vrsqrt.pop %v1666
    %v1668 = vmul.f32 %v1656, %v1667
    %v1669 = vmul.f32 %v1668, %v694
    %v1670 = vadd.f32 %v1669, %v703
    %v1671 = vpack.c.bf16 %v1670, %v1670
    %v1673 = vrot.slane %v1671, 1
    %1674 = vrot.lane.b32.xlu0 %v1673, 64
    %v1675 = vpop.permute.xlu0 %1674
    %v1677 = vsel %vm537, %v1675, 0
    %1679 = vmatprep.subr.bf16.mxu0 %v734
    %1680 = vmatpush1.bf16.msra.mxu0 %v733
    %1681 = vmatprep.subr.bf16.mxu0 %v736
    %1682 = vmatpush1.bf16.msra.mxu0 %v735
    %1683 = vmatprep.subr.bf16.mxu0 0
    %1684 = vmatpush1.bf16.msra.mxu0 0
    %1685 = vmatprep.subr.bf16.mxu0 0
    %1686 = vmatpush1.bf16.msra.mxu0 0
    %1687 = vmatprep.subr.bf16.mxu0 0
    %1688 = vmatpush1.bf16.msra.mxu0 0
    %1689 = vmatprep.subr.bf16.mxu0 0
    %1690 = vmatpush1.bf16.msra.mxu0 0
    %1691 = vmatprep.subr.bf16.mxu0 0
    %1692 = vmatpush1.bf16.msra.mxu0 0
    %1693 = vmatprep.subr.bf16.mxu0 0
    %1694 = vmatpush1.bf16.msra.mxu0 0
    %1695 = vmatprep.subr.bf16.mxu0 0
    %1696 = vmatpush1.bf16.msra.mxu0 0
    %1697 = vmatprep.subr.bf16.mxu0 0
    %1698 = vmatpush1.bf16.msra.mxu0 0
    %1699 = vmatprep.subr.bf16.mxu0 0
    %1700 = vmatpush1.bf16.msra.mxu0 0
    %1701 = vmatprep.subr.bf16.mxu0 0
    %1702 = vmatpush1.bf16.msra.mxu0 0
    %1703 = vmatprep.subr.bf16.mxu0 0
    %1704 = vmatpush1.bf16.msra.mxu0 0
    %1705 = vmatprep.subr.bf16.mxu0 0
    %1706 = vmatpush1.bf16.msra.mxu0 0
    %1707 = vmatprep.subr.bf16.mxu0 0
    %1708 = vmatpush1.bf16.msra.mxu0 0
    %1709 = vmatprep.subr.bf16.mxu0 0
    %1710 = vmatpush1.bf16.msra.mxu0 0
    %1711 = vmatprep.mubr.bf16.mxu0 0
    %1712 = vmatmul.mubr.bf16.gmra.mrb[0].mxu0 %v1677
    %v1713 = vpop.f32.mrb[0].mxu0
    %v1714 = vadd.f32 %v711, %v1713
    %v1715 = vpop.f32.mrb[0].mxu0
    %v1716 = vadd.f32 %v715, %v1715
    %v1717 = vpop.f32.mrb[0].mxu0
    %v1718 = vpop.f32.mrb[0].mxu0
    %1719 = vdwg.mxu0
    %v1720 = vmax.f32 %v1714, -100.0
    %v1721 = vmin.f32 %v1720, 100.0
    %v1722 = vmul.f32 %v1721, 1.442695
    %v1723 = vpow.pop %v1722
    %v1724 = vxor.u32 %v1721, 2147483648
    %v1725 = vmul.f32 %v1724, 1.442695
    %v1726 = vpow.pop %v1725
    %v1727 = vadd.f32 %v1726, 1.0
    %v1728 = vrcp.pop %v1727
    %v1729 = vmul.f32 1.0, %v1728
    %v1730 = vmax.f32 %v1721, -18.420681
    %v1731 = vmax.f32 %v1729, 1e-08
    %v1732 = vlog2.pop %v1731
    %v1733 = vmul.f32 %v1732, 0.6931472
    %v1734 = vrot.slane %v1313, 2
    %v1736 = vadd.f32 %v1733, %v1734
    %1738 = vrot.lane.b32.xlu0 %v1730, 32
    %v1739 = vpop.permute.xlu0 %1738
    %v1741 = vmax.f32 %v1736, %v1739
    %1743 = vrot.lane.b32.xlu0 %v1741, 96
    %v1744 = vpop.permute.xlu0 %1743
    %v1746 = vsub.f32 %v1723, %v1744
    %v1747 = vmin.f32 %v1746, 20.0
    %v1748 = vmul.f32 %v1747, 1.442695
    %v1749 = vpow.pop %v1748
    %v1750 = vlaneseq
    %v1751 = vshrl.u32 %v1750, 7
    %v1752 = vsub.s32 0, %v1751
    %v1753 = vrot.slane %v1716, %v1752
    %s1755 = sor.u32 256, 32
    %1756 = vbcast.lane.b32.xlu0 %v1753, %s1755
    %v1757 = vpop.permute.xlu0 %1756
    %s1759 = sor.u32 256, 40
    %1760 = vbcast.lane.b32.xlu0 %v1753, %s1759
    %v1761 = vpop.permute.xlu0 %1760
    %s1763 = sor.u32 256, 48
    %1764 = vbcast.lane.b32.xlu0 %v1753, %s1763
    %v1765 = vpop.permute.xlu0 %1764
    %s1767 = sor.u32 256, 56
    %1768 = vbcast.lane.b32.xlu0 %v1753, %s1767
    %v1769 = vpop.permute.xlu0 %1768
    %v1770 = vlaneseq
    %v1771 = vshrl.u32 %v1770, 7
    %v1772 = vsub.s32 1, %v1771
    %v1773 = vrot.slane %v1716, %v1772
    %s1775 = sor.u32 256, 32
    %1776 = vbcast.lane.b32.xlu0 %v1773, %s1775
    %v1777 = vpop.permute.xlu0 %1776
    %s1779 = sor.u32 256, 40
    %1780 = vbcast.lane.b32.xlu0 %v1773, %s1779
    %v1781 = vpop.permute.xlu0 %1780
    %s1783 = sor.u32 256, 48
    %1784 = vbcast.lane.b32.xlu0 %v1773, %s1783
    %v1785 = vpop.permute.xlu0 %1784
    %s1787 = sor.u32 256, 56
    %1788 = vbcast.lane.b32.xlu0 %v1773, %s1787
    %v1789 = vpop.permute.xlu0 %1788
    %v1792 = vunpack.c.l.s4 1966171168
    %v1793 = vunpack.c.0.s8 %v1792
    %v1794 = vlaneseq
    %v1795 = vshrl.u32 %v1794, 7
    %v1796 = vsub.s32 %v1793, %v1795
    %v1797 = vrot.slane %v1716, %v1796
    %v1798 = vcombine.high %v1797, %v1797
    %v1800 = vunpack.c.l.s4 1966171168
    %v1801 = vunpack.c.0.s8 %v1800
    %v1802 = vlaneseq
    %v1803 = vshrl.u32 %v1802, 7
    %v1804 = vsub.s32 %v1801, %v1803
    %v1805 = vrot.slane %v1797, %v1804
    %v1807 = vunpack.c.l.s4 1966171168
    %v1808 = vunpack.c.0.s8 %v1807
    %v1809 = vlaneseq
    %v1810 = vshrl.u32 %v1809, 7
    %v1811 = vsub.s32 %v1808, %v1810
    %v1812 = vrot.slane %v1798, %v1811
    %v1813 = vlaneseq
    %v1814 = vshrl.u32 %v1813, 7
    %v1815 = vsub.s32 0, %v1814
    %v1816 = vrot.slane %v1805, %v1815
    %v1817 = vlaneseq
    %v1818 = vshrl.u32 %v1817, 7
    %v1819 = vsub.s32 0, %v1818
    %v1820 = vrot.slane %v1812, %v1819
    %v1823 = vmul.f32 %v1757, %v1816
    %v1824 = vmul.f32 %v1761, %v1816
    %v1825 = vmul.f32 %v1765, %v1816
    %v1826 = vmul.f32 %v1769, %v1816
    %v1827 = vmul.f32 %v1777, %v1820
    %v1828 = vmul.f32 %v1781, %v1820
    %v1829 = vmul.f32 %v1785, %v1820
    %v1830 = vmul.f32 %v1789, %v1820
    %v1831 = vlaneseq
    %v1832 = vshrl.u32 %v1831, 7
    %v1833 = vsub.s32 0, %v1832
    %v1834 = vrot.slane %v1729, %v1833
    %s1836 = sor.u32 256, 32
    %1837 = vbcast.lane.b32.xlu0 %v1834, %s1836
    %v1838 = vpop.permute.xlu0 %1837
    %s1840 = sor.u32 256, 40
    %1841 = vbcast.lane.b32.xlu0 %v1834, %s1840
    %v1842 = vpop.permute.xlu0 %1841
    %s1844 = sor.u32 256, 48
    %1845 = vbcast.lane.b32.xlu0 %v1834, %s1844
    %v1846 = vpop.permute.xlu0 %1845
    %s1848 = sor.u32 256, 56
    %1849 = vbcast.lane.b32.xlu0 %v1834, %s1848
    %v1850 = vpop.permute.xlu0 %1849
    %v1851 = vlaneseq
    %v1852 = vshrl.u32 %v1851, 7
    %v1853 = vsub.s32 1, %v1852
    %v1854 = vrot.slane %v1729, %v1853
    %s1856 = sor.u32 256, 32
    %1857 = vbcast.lane.b32.xlu0 %v1854, %s1856
    %v1858 = vpop.permute.xlu0 %1857
    %s1860 = sor.u32 256, 40
    %1861 = vbcast.lane.b32.xlu0 %v1854, %s1860
    %v1862 = vpop.permute.xlu0 %1861
    %s1864 = sor.u32 256, 48
    %1865 = vbcast.lane.b32.xlu0 %v1854, %s1864
    %v1866 = vpop.permute.xlu0 %1865
    %s1868 = sor.u32 256, 56
    %1869 = vbcast.lane.b32.xlu0 %v1854, %s1868
    %v1870 = vpop.permute.xlu0 %1869
    %v1871 = vmul.f32 %v1838, %v1476
    %v1872 = vmul.f32 %v1842, %v1477
    %v1873 = vmul.f32 %v1846, %v1478
    %v1874 = vmul.f32 %v1850, %v1479
    %v1875 = vmul.f32 %v1858, %v1480
    %v1876 = vmul.f32 %v1862, %v1481
    %v1877 = vmul.f32 %v1866, %v1482
    %v1878 = vmul.f32 %v1870, %v1483
    %v1879 = vlaneseq
    %v1880 = vshrl.u32 %v1879, 7
    %v1881 = vsub.s32 0, %v1880
    %v1882 = vrot.slane %v1749, %v1881
    %1884 = vbcast.lane.b32.xlu0 %v1882, 256
    %v1885 = vpop.permute.xlu0 %1884
    %s1887 = sor.u32 256, 8
    %1888 = vbcast.lane.b32.xlu0 %v1882, %s1887
    %v1889 = vpop.permute.xlu0 %1888
    %s1891 = sor.u32 256, 16
    %1892 = vbcast.lane.b32.xlu0 %v1882, %s1891
    %v1893 = vpop.permute.xlu0 %1892
    %s1895 = sor.u32 256, 24
    %1896 = vbcast.lane.b32.xlu0 %v1882, %s1895
    %v1897 = vpop.permute.xlu0 %1896
    %v1898 = vlaneseq
    %v1899 = vshrl.u32 %v1898, 7
    %v1900 = vsub.s32 1, %v1899
    %v1901 = vrot.slane %v1749, %v1900
    %1903 = vbcast.lane.b32.xlu0 %v1901, 256
    %v1904 = vpop.permute.xlu0 %1903
    %s1906 = sor.u32 256, 8
    %1907 = vbcast.lane.b32.xlu0 %v1901, %s1906
    %v1908 = vpop.permute.xlu0 %1907
    %s1910 = sor.u32 256, 16
    %1911 = vbcast.lane.b32.xlu0 %v1901, %s1910
    %v1912 = vpop.permute.xlu0 %1911
    %s1914 = sor.u32 256, 24
    %1915 = vbcast.lane.b32.xlu0 %v1901, %s1914
    %v1916 = vpop.permute.xlu0 %1915
    %v1917 = vmul.f32 %v1885, %v1823
    %v1918 = vmul.f32 %v1889, %v1824
    %v1919 = vmul.f32 %v1893, %v1825
    %v1920 = vmul.f32 %v1897, %v1826
    %v1921 = vmul.f32 %v1904, %v1827
    %v1922 = vmul.f32 %v1908, %v1828
    %v1923 = vmul.f32 %v1912, %v1829
    %v1924 = vmul.f32 %v1916, %v1830
    %v1925 = vadd.f32 %v1871, %v1917
    %v1926 = vadd.f32 %v1872, %v1918
    %v1927 = vadd.f32 %v1873, %v1919
    %v1928 = vadd.f32 %v1874, %v1920
    %v1929 = vadd.f32 %v1875, %v1921
    %v1930 = vadd.f32 %v1876, %v1922
    %v1931 = vadd.f32 %v1877, %v1923
    %v1932 = vadd.f32 %v1878, %v1924
    %v1934 = vrot.slane %v1493, 2
    %v1936 = vmul.f32 %v1729, %v1934
    %v1937 = vmul.f32 %v1749, %v1716
    %1939 = vrot.lane.b32.xlu0 %v1937, 32
    %v1940 = vpop.permute.xlu0 %1939
    %v1942 = vadd.f32 %v1936, %v1940
    %1944 = vrot.lane.b32.xlu0 %v1714, 64
    %v1945 = vpop.permute.xlu0 %1944
    %v1947 = vmul.f32 %v1942, %v1945
    %1949 = vrot.lane.b32.xlu0 %v1947, 96
    %v1950 = vpop.permute.xlu0 %1949
    %v1952 = vsel %vm487, %v1950, 0.0
    %1953 = vadd.xlane.f32.xlu0 %v1952
    %v1954 = vpop.xlane.xlu0 %1953
    %v1955 = vand.u32 2147483647, %v1954
    %v1956 = vmax.f32 %v1955, 1.0
    %v1958 = vunpack.c.l.s4 1966171168
    %v1959 = vunpack.c.0.s8 %v1958
    %v1960 = vlaneseq
    %v1961 = vshrl.u32 %v1960, 7
    %v1962 = vsub.s32 %v1959, %v1961
    %v1963 = vrot.slane %v1714, %v1962
    %v1964 = vcombine.high %v1963, %v1963
    %v1966 = vunpack.c.l.s4 1966171168
    %v1967 = vunpack.c.0.s8 %v1966
    %v1968 = vlaneseq
    %v1969 = vshrl.u32 %v1968, 7
    %v1970 = vsub.s32 %v1967, %v1969
    %v1971 = vrot.slane %v1963, %v1970
    %v1973 = vunpack.c.l.s4 1966171168
    %v1974 = vunpack.c.0.s8 %v1973
    %v1975 = vlaneseq
    %v1976 = vshrl.u32 %v1975, 7
    %v1977 = vsub.s32 %v1974, %v1976
    %v1978 = vrot.slane %v1964, %v1977
    %v1979 = vlaneseq
    %v1980 = vshrl.u32 %v1979, 7
    %v1981 = vsub.s32 0, %v1980
    %v1982 = vrot.slane %v1971, %v1981
    %v1983 = vlaneseq
    %v1984 = vshrl.u32 %v1983, 7
    %v1985 = vsub.s32 0, %v1984
    %v1986 = vrot.slane %v1978, %v1985
    %1987 = vrot.lane.b32.xlu0 %v1982, 32
    %v1988 = vpop.permute.xlu0 %1987
    %1989 = vrot.lane.b32.xlu0 %v1986, 32
    %v1990 = vpop.permute.xlu0 %1989
    %v1993 = vmul.f32 %v1925, %v1988
    %v1994 = vmul.f32 %v1926, %v1988
    %v1995 = vmul.f32 %v1927, %v1988
    %v1996 = vmul.f32 %v1928, %v1988
    %v1997 = vmul.f32 %v1929, %v1990
    %v1998 = vmul.f32 %v1930, %v1990
    %v1999 = vmul.f32 %v1931, %v1990
    %v2000 = vmul.f32 %v1932, %v1990
    %v2001 = vsel %vm537, %v1993, 0.0
    %2002 = vadd.xlane.f32.xlu0 %v2001
    %v2003 = vpop.xlane.xlu0 %2002
    %v2004 = vsel %vm537, %v1994, 0.0
    %2005 = vadd.xlane.f32.xlu0 %v2004
    %v2006 = vpop.xlane.xlu0 %2005
    %v2007 = vsel %vm537, %v1995, 0.0
    %2008 = vadd.xlane.f32.xlu0 %v2007
    %v2009 = vpop.xlane.xlu0 %2008
    %v2010 = vsel %vm537, %v1996, 0.0
    %2011 = vadd.xlane.f32.xlu0 %v2010
    %v2012 = vpop.xlane.xlu0 %2011
    %v2013 = vsel %vm537, %v1997, 0.0
    %2014 = vadd.xlane.f32.xlu0 %v2013
    %v2015 = vpop.xlane.xlu0 %2014
    %v2016 = vsel %vm537, %v1998, 0.0
    %2017 = vadd.xlane.f32.xlu0 %v2016
    %v2018 = vpop.xlane.xlu0 %2017
    %v2019 = vsel %vm537, %v1999, 0.0
    %2020 = vadd.xlane.f32.xlu0 %v2019
    %v2021 = vpop.xlane.xlu0 %2020
    %v2022 = vsel %vm537, %v2000, 0.0
    %2023 = vadd.xlane.f32.xlu0 %v2022
    %v2024 = vpop.xlane.xlu0 %2023
    %v2026 = vlaneseq
    %v2027 = vshrl.u32 %v2026, 7
    %v2028 = vsub.s32 0, %v2027
    %v2029 = vrot.slane %v1956, %v2028
    %v2030 = vlaneseq
    %v2031 = vshrl.u32 %v2030, 7
    %v2032 = vsub.s32 1, %v2031
    %v2033 = vrot.slane %v1956, %v2032
    %v2036 = vrcp.pop %v2029
    %v2037 = vmul.f32 %v2003, %v2036
    %v2038 = vmul.f32 %v2006, %v2036
    %v2039 = vmul.f32 %v2009, %v2036
    %v2040 = vmul.f32 %v2012, %v2036
    %v2041 = vrcp.pop %v2033
    %v2042 = vmul.f32 %v2015, %v2041
    %v2043 = vmul.f32 %v2018, %v2041
    %v2044 = vmul.f32 %v2021, %v2041
    %v2045 = vmul.f32 %v2024, %v2041
    %2054 = vset.pattern.permute.xlu0 0
    %2055 = vperm.xlu0 %2054, %v2037
    %v2056 = vpop.permute.xlu0 %2055
    %2057 = vset.pattern.permute.xlu0 0
    %2058 = vperm.xlu0 %2057, %v2038
    %v2059 = vpop.permute.xlu0 %2058
    %2060 = vset.pattern.permute.xlu0 0
    %2061 = vperm.xlu0 %2060, %v2039
    %v2062 = vpop.permute.xlu0 %2061
    %2063 = vset.pattern.permute.xlu0 0
    %2064 = vperm.xlu0 %2063, %v2040
    %v2065 = vpop.permute.xlu0 %2064
    %2066 = vset.pattern.permute.xlu0 0
    %2067 = vperm.xlu0 %2066, %v2042
    %v2068 = vpop.permute.xlu0 %2067
    %2069 = vset.pattern.permute.xlu0 0
    %2070 = vperm.xlu0 %2069, %v2043
    %v2071 = vpop.permute.xlu0 %2070
    %2072 = vset.pattern.permute.xlu0 0
    %2073 = vperm.xlu0 %2072, %v2044
    %v2074 = vpop.permute.xlu0 %2073
    %2075 = vset.pattern.permute.xlu0 0
    %2076 = vperm.xlu0 %2075, %v2045
    %v2077 = vpop.permute.xlu0 %2076
    %v2078 = vlaneseq
    %v2079 = vshrl.u32 %v2078, 7
    %v2080 = vsub.s32 %v617, %v2079
    %v2081 = vrot.slane %v2056, %v2080
    %v2082 = vlaneseq
    %v2083 = vshrl.u32 %v2082, 7
    %v2084 = vsub.s32 %v622, %v2083
    %v2085 = vrot.slane %v2059, %v2084
    %v2086 = vsel %vm627, %v2085, %v2081
    %v2087 = vlaneseq
    %v2088 = vshrl.u32 %v2087, 7
    %v2089 = vsub.s32 %v629, %v2088
    %v2090 = vrot.slane %v2062, %v2089
    %v2091 = vsel %vm634, %v2090, %v2086
    %v2092 = vlaneseq
    %v2093 = vshrl.u32 %v2092, 7
    %v2094 = vsub.s32 %v636, %v2093
    %v2095 = vrot.slane %v2065, %v2094
    %v2096 = vsel %vm641, %v2095, %v2091
    %v2097 = vlaneseq
    %v2098 = vshrl.u32 %v2097, 7
    %v2099 = vsub.s32 %v617, %v2098
    %v2100 = vrot.slane %v2068, %v2099
    %v2101 = vlaneseq
    %v2102 = vshrl.u32 %v2101, 7
    %v2103 = vsub.s32 %v622, %v2102
    %v2104 = vrot.slane %v2071, %v2103
    %v2105 = vsel %vm627, %v2104, %v2100
    %v2106 = vlaneseq
    %v2107 = vshrl.u32 %v2106, 7
    %v2108 = vsub.s32 %v629, %v2107
    %v2109 = vrot.slane %v2074, %v2108
    %v2110 = vsel %vm634, %v2109, %v2105
    %v2111 = vlaneseq
    %v2112 = vshrl.u32 %v2111, 7
    %v2113 = vsub.s32 %v636, %v2112
    %v2114 = vrot.slane %v2077, %v2113
    %v2115 = vsel %vm641, %v2114, %v2110
    %v2116 = vsel %vm662, %v2115, %v2096
    %v2118 = vmul.f32 %v1729, %v2116
    %v2119 = vpack.c.bf16 %v1647, %v1647
    %v2120 = vpack.c.bf16 %v2118, %v2118
    %2122 = vrot.lane.b32.xlu0 %v2120, 64
    %v2123 = vpop.permute.xlu0 %2122
    %v2125 = vsel %vm537, %v2123, 0
    %2127 = vmatprep.subr.bf16.mxu0 0
    %2128 = vmatpush1.bf16.msra.mxu0 %v1192
    %2129 = vmatprep.subr.bf16.mxu0 0
    %2130 = vmatpush1.bf16.msra.mxu0 %v1193
    %2131 = vmatprep.subr.bf16.mxu0 0
    %2132 = vmatpush1.bf16.msra.mxu0 0
    %2133 = vmatprep.subr.bf16.mxu0 0
    %2134 = vmatpush1.bf16.msra.mxu0 0
    %2135 = vmatprep.subr.bf16.mxu0 0
    %2136 = vmatpush1.bf16.msra.mxu0 0
    %2137 = vmatprep.subr.bf16.mxu0 0
    %2138 = vmatpush1.bf16.msra.mxu0 0
    %2139 = vmatprep.subr.bf16.mxu0 0
    %2140 = vmatpush1.bf16.msra.mxu0 0
    %2141 = vmatprep.subr.bf16.mxu0 0
    %2142 = vmatpush1.bf16.msra.mxu0 0
    %2143 = vmatprep.subr.bf16.mxu0 0
    %2144 = vmatpush1.bf16.msra.mxu0 0
    %2145 = vmatprep.subr.bf16.mxu0 0
    %2146 = vmatpush1.bf16.msra.mxu0 0
    %2147 = vmatprep.subr.bf16.mxu0 0
    %2148 = vmatpush1.bf16.msra.mxu0 0
    %2149 = vmatprep.subr.bf16.mxu0 0
    %2150 = vmatpush1.bf16.msra.mxu0 0
    %2151 = vmatprep.subr.bf16.mxu0 0
    %2152 = vmatpush1.bf16.msra.mxu0 0
    %2153 = vmatprep.subr.bf16.mxu0 0
    %2154 = vmatpush1.bf16.msra.mxu0 0
    %2155 = vmatprep.subr.bf16.mxu0 0
    %2156 = vmatpush1.bf16.msra.mxu0 0
    %2157 = vmatprep.subr.bf16.mxu0 0
    %2158 = vmatpush1.bf16.msra.mxu0 0
    %2159 = vmatprep.mubr.bf16.mxu0 0
    %2160 = vmatmul.mubr.bf16.gmra.mrb[0].mxu0 %v2125
    %v2161 = vpop.f32.mrb[0].mxu0
    %v2162 = vadd.f32 0.0, %v2161
    %v2163 = vpop.f32.mrb[0].mxu0
    %v2164 = vpop.f32.mrb[0].mxu0
    %v2165 = vpop.f32.mrb[0].mxu0
    %2166 = vdwg.mxu0
    %v2168 = vrot.slane %v2119, 1
    %2169 = vrot.lane.b32.xlu0 %v2168, 64
    %v2170 = vpop.permute.xlu0 %2169
    %v2172 = vsel %vm537, %v2170, 0
    %2174 = vmatprep.subr.bf16.mxu0 0
    %2175 = vmatpush1.bf16.msra.mxu0 %v1250
    %2176 = vmatprep.subr.bf16.mxu0 0
    %2177 = vmatpush1.bf16.msra.mxu0 %v1251
    %2178 = vmatprep.subr.bf16.mxu0 0
    %2179 = vmatpush1.bf16.msra.mxu0 0
    %2180 = vmatprep.subr.bf16.mxu0 0
    %2181 = vmatpush1.bf16.msra.mxu0 0
    %2182 = vmatprep.subr.bf16.mxu0 0
    %2183 = vmatpush1.bf16.msra.mxu0 0
    %2184 = vmatprep.subr.bf16.mxu0 0
    %2185 = vmatpush1.bf16.msra.mxu0 0
    %2186 = vmatprep.subr.bf16.mxu0 0
    %2187 = vmatpush1.bf16.msra.mxu0 0
    %2188 = vmatprep.subr.bf16.mxu0 0
    %2189 = vmatpush1.bf16.msra.mxu0 0
    %2190 = vmatprep.subr.bf16.mxu0 0
    %2191 = vmatpush1.bf16.msra.mxu0 0
    %2192 = vmatprep.subr.bf16.mxu0 0
    %2193 = vmatpush1.bf16.msra.mxu0 0
    %2194 = vmatprep.subr.bf16.mxu0 0
    %2195 = vmatpush1.bf16.msra.mxu0 0
    %2196 = vmatprep.subr.bf16.mxu0 0
    %2197 = vmatpush1.bf16.msra.mxu0 0
    %2198 = vmatprep.subr.bf16.mxu0 0
    %2199 = vmatpush1.bf16.msra.mxu0 0
    %2200 = vmatprep.subr.bf16.mxu0 0
    %2201 = vmatpush1.bf16.msra.mxu0 0
    %2202 = vmatprep.subr.bf16.mxu0 0
    %2203 = vmatpush1.bf16.msra.mxu0 0
    %2204 = vmatprep.subr.bf16.mxu0 0
    %2205 = vmatpush1.bf16.msra.mxu0 0
    %2206 = vmatprep.mubr.bf16.mxu0 0
    %2207 = vmatmul.mubr.bf16.gmra.mrb[0].mxu0 %v2172
    %v2208 = vpop.f32.mrb[0].mxu0
    %v2209 = vadd.f32 %v2162, %v2208
    %v2210 = vpop.f32.mrb[0].mxu0
    %v2211 = vpop.f32.mrb[0].mxu0
    %v2212 = vpop.f32.mrb[0].mxu0
    %2213 = vdwg.mxu0
    %v2214 = vadd.f32 %v2209, %v1301
    %2216 = vrot.lane.b32.xlu0 %v2118, 64
    %v2217 = vpop.permute.xlu0 %2216
    %v2219 = vadd.f32 %v2214, %v2217
    %s2220 = scalar_lea.vmem [#allocation13], 2
    %2221 = vst.msk [vmem:[%s2220] sm:$0x3] %vm487, %v2219
    %v2222 = vrot.slane %v1741, 4
    %v2224 = vadd.f32 %v265, %v2222
    %v2225 = vmax.f32 %v2224, %v273
    %2227 = vrot.lane.b32.xlu0 %v2225, 96
    %v2228 = vpop.permute.xlu0 %2227
    %v2230 = vsub.f32 %v255, %v2228
    %v2231 = vmin.f32 %v2230, 20.0
    %v2232 = vmul.f32 %v2231, 1.442695
    %v2233 = vpow.pop %v2232
    %v2234 = vlaneseq
    %v2235 = vshrl.u32 %v2234, 7
    %v2236 = vsub.s32 4, %v2235
    %v2237 = vrot.slane %v220, %v2236
    %s2239 = sor.u32 256, 32
    %2240 = vbcast.lane.b32.xlu0 %v2237, %s2239
    %v2241 = vpop.permute.xlu0 %2240
    %s2243 = sor.u32 256, 40
    %2244 = vbcast.lane.b32.xlu0 %v2237, %s2243
    %v2245 = vpop.permute.xlu0 %2244
    %s2247 = sor.u32 256, 48
    %2248 = vbcast.lane.b32.xlu0 %v2237, %s2247
    %v2249 = vpop.permute.xlu0 %2248
    %s2251 = sor.u32 256, 56
    %2252 = vbcast.lane.b32.xlu0 %v2237, %s2251
    %v2253 = vpop.permute.xlu0 %2252
    %v2254 = vlaneseq
    %v2255 = vshrl.u32 %v2254, 7
    %v2256 = vsub.s32 5, %v2255
    %v2257 = vrot.slane %v220, %v2256
    %s2259 = sor.u32 256, 32
    %2260 = vbcast.lane.b32.xlu0 %v2257, %s2259
    %v2261 = vpop.permute.xlu0 %2260
    %s2263 = sor.u32 256, 40
    %2264 = vbcast.lane.b32.xlu0 %v2257, %s2263
    %v2265 = vpop.permute.xlu0 %2264
    %s2267 = sor.u32 256, 48
    %2268 = vbcast.lane.b32.xlu0 %v2257, %s2267
    %v2269 = vpop.permute.xlu0 %2268
    %s2271 = sor.u32 256, 56
    %2272 = vbcast.lane.b32.xlu0 %v2257, %s2271
    %v2273 = vpop.permute.xlu0 %2272
    %v2274 = vcombine.high %v220, %v220
    %v2276 = vunpack.c.l.s4 1966171168
    %v2277 = vunpack.c.0.s8 %v2276
    %v2278 = vlaneseq
    %v2279 = vshrl.u32 %v2278, 7
    %v2280 = vsub.s32 %v2277, %v2279
    %v2281 = vrot.slane %v2274, %v2280
    %v2282 = vcombine.high %v2281, %v2281
    %v2284 = vunpack.c.l.s4 1966171168
    %v2285 = vunpack.c.0.s8 %v2284
    %v2286 = vlaneseq
    %v2287 = vshrl.u32 %v2286, 7
    %v2288 = vsub.s32 %v2285, %v2287
    %v2289 = vrot.slane %v2281, %v2288
    %v2291 = vunpack.c.l.s4 1966171168
    %v2292 = vunpack.c.0.s8 %v2291
    %v2293 = vlaneseq
    %v2294 = vshrl.u32 %v2293, 7
    %v2295 = vsub.s32 %v2292, %v2294
    %v2296 = vrot.slane %v2282, %v2295
    %v2297 = vlaneseq
    %v2298 = vshrl.u32 %v2297, 7
    %v2299 = vsub.s32 0, %v2298
    %v2300 = vrot.slane %v2289, %v2299
    %v2301 = vlaneseq
    %v2302 = vshrl.u32 %v2301, 7
    %v2303 = vsub.s32 0, %v2302
    %v2304 = vrot.slane %v2296, %v2303
    %v2307 = vmul.f32 %v2241, %v2300
    %v2308 = vmul.f32 %v2245, %v2300
    %v2309 = vmul.f32 %v2249, %v2300
    %v2310 = vmul.f32 %v2253, %v2300
    %v2311 = vmul.f32 %v2261, %v2304
    %v2312 = vmul.f32 %v2265, %v2304
    %v2313 = vmul.f32 %v2269, %v2304
    %v2314 = vmul.f32 %v2273, %v2304
    %v2315 = vlaneseq
    %v2316 = vshrl.u32 %v2315, 7
    %v2317 = vsub.s32 4, %v2316
    %v2318 = vrot.slane %v261, %v2317
    %s2320 = sor.u32 256, 32
    %2321 = vbcast.lane.b32.xlu0 %v2318, %s2320
    %v2322 = vpop.permute.xlu0 %2321
    %s2324 = sor.u32 256, 40
    %2325 = vbcast.lane.b32.xlu0 %v2318, %s2324
    %v2326 = vpop.permute.xlu0 %2325
    %s2328 = sor.u32 256, 48
    %2329 = vbcast.lane.b32.xlu0 %v2318, %s2328
    %v2330 = vpop.permute.xlu0 %2329
    %s2332 = sor.u32 256, 56
    %2333 = vbcast.lane.b32.xlu0 %v2318, %s2332
    %v2334 = vpop.permute.xlu0 %2333
    %v2335 = vlaneseq
    %v2336 = vshrl.u32 %v2335, 7
    %v2337 = vsub.s32 5, %v2336
    %v2338 = vrot.slane %v261, %v2337
    %s2340 = sor.u32 256, 32
    %2341 = vbcast.lane.b32.xlu0 %v2338, %s2340
    %v2342 = vpop.permute.xlu0 %2341
    %s2344 = sor.u32 256, 40
    %2345 = vbcast.lane.b32.xlu0 %v2338, %s2344
    %v2346 = vpop.permute.xlu0 %2345
    %s2348 = sor.u32 256, 48
    %2349 = vbcast.lane.b32.xlu0 %v2338, %s2348
    %v2350 = vpop.permute.xlu0 %2349
    %s2352 = sor.u32 256, 56
    %2353 = vbcast.lane.b32.xlu0 %v2338, %s2352
    %v2354 = vpop.permute.xlu0 %2353
    %v2355 = vmul.f32 %v2322, %v1925
    %v2356 = vmul.f32 %v2326, %v1926
    %v2357 = vmul.f32 %v2330, %v1927
    %v2358 = vmul.f32 %v2334, %v1928
    %v2359 = vmul.f32 %v2342, %v1929
    %v2360 = vmul.f32 %v2346, %v1930
    %v2361 = vmul.f32 %v2350, %v1931
    %v2362 = vmul.f32 %v2354, %v1932
    %v2363 = vlaneseq
    %v2364 = vshrl.u32 %v2363, 7
    %v2365 = vsub.s32 4, %v2364
    %v2366 = vrot.slane %v2233, %v2365
    %2368 = vbcast.lane.b32.xlu0 %v2366, 256
    %v2369 = vpop.permute.xlu0 %2368
    %s2371 = sor.u32 256, 8
    %2372 = vbcast.lane.b32.xlu0 %v2366, %s2371
    %v2373 = vpop.permute.xlu0 %2372
    %s2375 = sor.u32 256, 16
    %2376 = vbcast.lane.b32.xlu0 %v2366, %s2375
    %v2377 = vpop.permute.xlu0 %2376
    %s2379 = sor.u32 256, 24
    %2380 = vbcast.lane.b32.xlu0 %v2366, %s2379
    %v2381 = vpop.permute.xlu0 %2380
    %v2382 = vlaneseq
    %v2383 = vshrl.u32 %v2382, 7
    %v2384 = vsub.s32 5, %v2383
    %v2385 = vrot.slane %v2233, %v2384
    %2387 = vbcast.lane.b32.xlu0 %v2385, 256
    %v2388 = vpop.permute.xlu0 %2387
    %s2390 = sor.u32 256, 8
    %2391 = vbcast.lane.b32.xlu0 %v2385, %s2390
    %v2392 = vpop.permute.xlu0 %2391
    %s2394 = sor.u32 256, 16
    %2395 = vbcast.lane.b32.xlu0 %v2385, %s2394
    %v2396 = vpop.permute.xlu0 %2395
    %s2398 = sor.u32 256, 24
    %2399 = vbcast.lane.b32.xlu0 %v2385, %s2398
    %v2400 = vpop.permute.xlu0 %2399
    %v2401 = vmul.f32 %v2369, %v2307
    %v2402 = vmul.f32 %v2373, %v2308
    %v2403 = vmul.f32 %v2377, %v2309
    %v2404 = vmul.f32 %v2381, %v2310
    %v2405 = vmul.f32 %v2388, %v2311
    %v2406 = vmul.f32 %v2392, %v2312
    %v2407 = vmul.f32 %v2396, %v2313
    %v2408 = vmul.f32 %v2400, %v2314
    %v2409 = vadd.f32 %v2355, %v2401
    %v2410 = vadd.f32 %v2356, %v2402
    %v2411 = vadd.f32 %v2357, %v2403
    %v2412 = vadd.f32 %v2358, %v2404
    %v2413 = vadd.f32 %v2359, %v2405
    %v2414 = vadd.f32 %v2360, %v2406
    %v2415 = vadd.f32 %v2361, %v2407
    %v2416 = vadd.f32 %v2362, %v2408
    %v2418 = vrot.slane %v1942, 4
    %v2420 = vmul.f32 %v261, %v2418
    %v2421 = vmul.f32 %v2233, %v220
    %2423 = vrot.lane.b32.xlu0 %v2421, 32
    %v2424 = vpop.permute.xlu0 %2423
    %v2426 = vadd.f32 %v2420, %v2424
    %v2427 = vmul.f32 %v2426, %v480
    %2429 = vrot.lane.b32.xlu0 %v2427, 96
    %v2430 = vpop.permute.xlu0 %2429
    %vm2432 = vcmask 259076
    %v2433 = vsel %vm2432, %v2430, 0.0
    %2434 = vadd.xlane.f32.xlu0 %v2433
    %v2435 = vpop.xlane.xlu0 %2434
    %v2436 = vand.u32 2147483647, %v2435
    %v2437 = vmax.f32 %v2436, 1.0
    %v2438 = vcombine.high %v218, %v218
    %v2440 = vunpack.c.l.s4 1966171168
    %v2441 = vunpack.c.0.s8 %v2440
    %v2442 = vlaneseq
    %v2443 = vshrl.u32 %v2442, 7
    %v2444 = vsub.s32 %v2441, %v2443
    %v2445 = vrot.slane %v2438, %v2444
    %v2446 = vcombine.high %v2445, %v2445
    %v2448 = vunpack.c.l.s4 1966171168
    %v2449 = vunpack.c.0.s8 %v2448
    %v2450 = vlaneseq
    %v2451 = vshrl.u32 %v2450, 7
    %v2452 = vsub.s32 %v2449, %v2451
    %v2453 = vrot.slane %v2445, %v2452
    %v2455 = vunpack.c.l.s4 1966171168
    %v2456 = vunpack.c.0.s8 %v2455
    %v2457 = vlaneseq
    %v2458 = vshrl.u32 %v2457, 7
    %v2459 = vsub.s32 %v2456, %v2458
    %v2460 = vrot.slane %v2446, %v2459
    %v2461 = vlaneseq
    %v2462 = vshrl.u32 %v2461, 7
    %v2463 = vsub.s32 0, %v2462
    %v2464 = vrot.slane %v2453, %v2463
    %v2465 = vlaneseq
    %v2466 = vshrl.u32 %v2465, 7
    %v2467 = vsub.s32 0, %v2466
    %v2468 = vrot.slane %v2460, %v2467
    %2469 = vrot.lane.b32.xlu0 %v2464, 32
    %v2470 = vpop.permute.xlu0 %2469
    %2471 = vrot.lane.b32.xlu0 %v2468, 32
    %v2472 = vpop.permute.xlu0 %2471
    %v2475 = vmul.f32 %v2409, %v2470
    %v2476 = vmul.f32 %v2410, %v2470
    %v2477 = vmul.f32 %v2411, %v2470
    %v2478 = vmul.f32 %v2412, %v2470
    %v2479 = vmul.f32 %v2413, %v2472
    %v2480 = vmul.f32 %v2414, %v2472
    %v2481 = vmul.f32 %v2415, %v2472
    %v2482 = vmul.f32 %v2416, %v2472
    %v2483 = vsel %vm537, %v2475, 0.0
    %2484 = vadd.xlane.f32.xlu0 %v2483
    %v2485 = vpop.xlane.xlu0 %2484
    %v2486 = vsel %vm537, %v2476, 0.0
    %2487 = vadd.xlane.f32.xlu0 %v2486
    %v2488 = vpop.xlane.xlu0 %2487
    %v2489 = vsel %vm537, %v2477, 0.0
    %2490 = vadd.xlane.f32.xlu0 %v2489
    %v2491 = vpop.xlane.xlu0 %2490
    %v2492 = vsel %vm537, %v2478, 0.0
    %2493 = vadd.xlane.f32.xlu0 %v2492
    %v2494 = vpop.xlane.xlu0 %2493
    %v2495 = vsel %vm537, %v2479, 0.0
    %2496 = vadd.xlane.f32.xlu0 %v2495
    %v2497 = vpop.xlane.xlu0 %2496
    %v2498 = vsel %vm537, %v2480, 0.0
    %2499 = vadd.xlane.f32.xlu0 %v2498
    %v2500 = vpop.xlane.xlu0 %2499
    %v2501 = vsel %vm537, %v2481, 0.0
    %2502 = vadd.xlane.f32.xlu0 %v2501
    %v2503 = vpop.xlane.xlu0 %2502
    %v2504 = vsel %vm537, %v2482, 0.0
    %2505 = vadd.xlane.f32.xlu0 %v2504
    %v2506 = vpop.xlane.xlu0 %2505
    %v2508 = vlaneseq
    %v2509 = vshrl.u32 %v2508, 7
    %v2510 = vsub.s32 4, %v2509
    %v2511 = vrot.slane %v2437, %v2510
    %v2512 = vlaneseq
    %v2513 = vshrl.u32 %v2512, 7
    %v2514 = vsub.s32 5, %v2513
    %v2515 = vrot.slane %v2437, %v2514
    %v2518 = vrcp.pop %v2511
    %v2519 = vmul.f32 %v2485, %v2518
    %v2520 = vmul.f32 %v2488, %v2518
    %v2521 = vmul.f32 %v2491, %v2518
    %v2522 = vmul.f32 %v2494, %v2518
    %v2523 = vrcp.pop %v2515
    %v2524 = vmul.f32 %v2497, %v2523
    %v2525 = vmul.f32 %v2500, %v2523
    %v2526 = vmul.f32 %v2503, %v2523
    %v2527 = vmul.f32 %v2506, %v2523
    %2536 = vset.pattern.permute.xlu0 0
    %2537 = vperm.xlu0 %2536, %v2519
    %v2538 = vpop.permute.xlu0 %2537
    %2539 = vset.pattern.permute.xlu0 0
    %2540 = vperm.xlu0 %2539, %v2520
    %v2541 = vpop.permute.xlu0 %2540
    %2542 = vset.pattern.permute.xlu0 0
    %2543 = vperm.xlu0 %2542, %v2521
    %v2544 = vpop.permute.xlu0 %2543
    %2545 = vset.pattern.permute.xlu0 0
    %2546 = vperm.xlu0 %2545, %v2522
    %v2547 = vpop.permute.xlu0 %2546
    %2548 = vset.pattern.permute.xlu0 0
    %2549 = vperm.xlu0 %2548, %v2524
    %v2550 = vpop.permute.xlu0 %2549
    %2551 = vset.pattern.permute.xlu0 0
    %2552 = vperm.xlu0 %2551, %v2525
    %v2553 = vpop.permute.xlu0 %2552
    %2554 = vset.pattern.permute.xlu0 0
    %2555 = vperm.xlu0 %2554, %v2526
    %v2556 = vpop.permute.xlu0 %2555
    %2557 = vset.pattern.permute.xlu0 0
    %2558 = vperm.xlu0 %2557, %v2527
    %v2559 = vpop.permute.xlu0 %2558
    %v2560 = vlaneseq
    %v2561 = vshrl.u32 %v2560, 7
    %v2562 = vsub.s32 %v617, %v2561
    %v2563 = vrot.slane %v2538, %v2562
    %v2564 = vlaneseq
    %v2565 = vshrl.u32 %v2564, 7
    %v2566 = vsub.s32 %v622, %v2565
    %v2567 = vrot.slane %v2541, %v2566
    %v2568 = vsel %vm627, %v2567, %v2563
    %v2569 = vlaneseq
    %v2570 = vshrl.u32 %v2569, 7
    %v2571 = vsub.s32 %v629, %v2570
    %v2572 = vrot.slane %v2544, %v2571
    %v2573 = vsel %vm634, %v2572, %v2568
    %v2574 = vlaneseq
    %v2575 = vshrl.u32 %v2574, 7
    %v2576 = vsub.s32 %v636, %v2575
    %v2577 = vrot.slane %v2547, %v2576
    %v2578 = vsel %vm641, %v2577, %v2573
    %v2579 = vlaneseq
    %v2580 = vshrl.u32 %v2579, 7
    %v2581 = vsub.s32 %v617, %v2580
    %v2582 = vrot.slane %v2550, %v2581
    %v2583 = vlaneseq
    %v2584 = vshrl.u32 %v2583, 7
    %v2585 = vsub.s32 %v622, %v2584
    %v2586 = vrot.slane %v2553, %v2585
    %v2587 = vsel %vm627, %v2586, %v2582
    %v2588 = vlaneseq
    %v2589 = vshrl.u32 %v2588, 7
    %v2590 = vsub.s32 %v629, %v2589
    %v2591 = vrot.slane %v2556, %v2590
    %v2592 = vsel %vm634, %v2591, %v2587
    %v2593 = vlaneseq
    %v2594 = vshrl.u32 %v2593, 7
    %v2595 = vsub.s32 %v636, %v2594
    %v2596 = vrot.slane %v2559, %v2595
    %v2597 = vsel %vm641, %v2596, %v2592
    %vm2598 = vcmask 1045509
    %v2599 = vsel %vm2598, %v2597, %v2578
    %v2601 = vmul.f32 %v261, %v2599
    %2603 = vrot.lane.b32.xlu0 %v2601, 64
    %v2604 = vpop.permute.xlu0 %2603
    %v2606 = vsel %vm2432, %v2604, 0.0
    %2607 = vadd.xlane.f32.xlu0 %v2606
    %v2608 = vpop.xlane.xlu0 %2607
    %v2609 = vmul.f32 %v2608, %v673
    %v2610 = vsub.f32 %v2601, %v2609
    %v2611 = vmul.f32 %v2610, %v2610
    %2613 = vrot.lane.b32.xlu0 %v2611, 64
    %v2614 = vpop.permute.xlu0 %2613
    %v2616 = vsel %vm2432, %v2614, 0.0
    %2617 = vadd.xlane.f32.xlu0 %v2616
    %v2618 = vpop.xlane.xlu0 %2617
    %v2619 = vmul.f32 %v2618, %v673
    %v2620 = vadd.f32 %v2619, 1e-05
    %v2621 = vrsqrt.pop %v2620
    %v2622 = vmul.f32 %v2610, %v2621
    %v2623 = vmul.f32 %v2622, %v694
    %v2624 = vadd.f32 %v2623, %v703
    %v2625 = vpack.c.bf16 %v2624, %v2624
    %v2627 = vrot.slane %v2625, 2
    %2628 = vrot.lane.b32.xlu0 %v2627, 64
    %v2629 = vpop.permute.xlu0 %2628
    %v2631 = vsel %vm537, %v2629, 0
    %2633 = vmatprep.subr.bf16.mxu0 %v734
    %2634 = vmatpush1.bf16.msra.mxu0 %v733
    %2635 = vmatprep.subr.bf16.mxu0 %v736
    %2636 = vmatpush1.bf16.msra.mxu0 %v735
    %2637 = vmatprep.subr.bf16.mxu0 0
    %2638 = vmatpush1.bf16.msra.mxu0 0
    %2639 = vmatprep.subr.bf16.mxu0 0
    %2640 = vmatpush1.bf16.msra.mxu0 0
    %2641 = vmatprep.subr.bf16.mxu0 0
    %2642 = vmatpush1.bf16.msra.mxu0 0
    %2643 = vmatprep.subr.bf16.mxu0 0
    %2644 = vmatpush1.bf16.msra.mxu0 0
    %2645 = vmatprep.subr.bf16.mxu0 0
    %2646 = vmatpush1.bf16.msra.mxu0 0
    %2647 = vmatprep.subr.bf16.mxu0 0
    %2648 = vmatpush1.bf16.msra.mxu0 0
    %2649 = vmatprep.subr.bf16.mxu0 0
    %2650 = vmatpush1.bf16.msra.mxu0 0
    %2651 = vmatprep.subr.bf16.mxu0 0
    %2652 = vmatpush1.bf16.msra.mxu0 0
    %2653 = vmatprep.subr.bf16.mxu0 0
    %2654 = vmatpush1.bf16.msra.mxu0 0
    %2655 = vmatprep.subr.bf16.mxu0 0
    %2656 = vmatpush1.bf16.msra.mxu0 0
    %2657 = vmatprep.subr.bf16.mxu0 0
    %2658 = vmatpush1.bf16.msra.mxu0 0
    %2659 = vmatprep.subr.bf16.mxu0 0
    %2660 = vmatpush1.bf16.msra.mxu0 0
    %2661 = vmatprep.subr.bf16.mxu0 0
    %2662 = vmatpush1.bf16.msra.mxu0 0
    %2663 = vmatprep.subr.bf16.mxu0 0
    %2664 = vmatpush1.bf16.msra.mxu0 0
    %2665 = vmatprep.mubr.bf16.mxu0 0
    %2666 = vmatmul.mubr.bf16.gmra.mrb[0].mxu0 %v2631
    %v2667 = vpop.f32.mrb[0].mxu0
    %v2668 = vadd.f32 %v711, %v2667
    %v2669 = vpop.f32.mrb[0].mxu0
    %v2670 = vadd.f32 %v715, %v2669
    %v2671 = vpop.f32.mrb[0].mxu0
    %v2672 = vpop.f32.mrb[0].mxu0
    %2673 = vdwg.mxu0
    %v2674 = vmax.f32 %v2668, -100.0
    %v2675 = vmin.f32 %v2674, 100.0
    %v2676 = vmul.f32 %v2675, 1.442695
    %v2677 = vpow.pop %v2676
    %v2678 = vxor.u32 %v2675, 2147483648
    %v2679 = vmul.f32 %v2678, 1.442695
    %v2680 = vpow.pop %v2679
    %v2681 = vadd.f32 %v2680, 1.0
    %v2682 = vrcp.pop %v2681
    %v2683 = vmul.f32 1.0, %v2682
    %v2684 = vmax.f32 %v2675, -18.420681
    %v2685 = vmax.f32 %v2683, 1e-08
    %v2686 = vlog2.pop %v2685
    %v2687 = vmul.f32 %v2686, 0.6931472
    %v2688 = vrot.slane %v2225, 4
    %v2690 = vadd.f32 %v2687, %v2688
    %2692 = vrot.lane.b32.xlu0 %v2684, 32
    %v2693 = vpop.permute.xlu0 %2692
    %v2695 = vmax.f32 %v2690, %v2693
    %2697 = vrot.lane.b32.xlu0 %v2695, 96
    %v2698 = vpop.permute.xlu0 %2697
    %v2700 = vsub.f32 %v2677, %v2698
    %v2701 = vmin.f32 %v2700, 20.0
    %v2702 = vmul.f32 %v2701, 1.442695
    %v2703 = vpow.pop %v2702
    %v2704 = vlaneseq
    %v2705 = vshrl.u32 %v2704, 7
    %v2706 = vsub.s32 0, %v2705
    %v2707 = vrot.slane %v2670, %v2706
    %s2709 = sor.u32 256, 32
    %2710 = vbcast.lane.b32.xlu0 %v2707, %s2709
    %v2711 = vpop.permute.xlu0 %2710
    %s2713 = sor.u32 256, 40
    %2714 = vbcast.lane.b32.xlu0 %v2707, %s2713
    %v2715 = vpop.permute.xlu0 %2714
    %s2717 = sor.u32 256, 48
    %2718 = vbcast.lane.b32.xlu0 %v2707, %s2717
    %v2719 = vpop.permute.xlu0 %2718
    %s2721 = sor.u32 256, 56
    %2722 = vbcast.lane.b32.xlu0 %v2707, %s2721
    %v2723 = vpop.permute.xlu0 %2722
    %v2724 = vlaneseq
    %v2725 = vshrl.u32 %v2724, 7
    %v2726 = vsub.s32 1, %v2725
    %v2727 = vrot.slane %v2670, %v2726
    %s2729 = sor.u32 256, 32
    %2730 = vbcast.lane.b32.xlu0 %v2727, %s2729
    %v2731 = vpop.permute.xlu0 %2730
    %s2733 = sor.u32 256, 40
    %2734 = vbcast.lane.b32.xlu0 %v2727, %s2733
    %v2735 = vpop.permute.xlu0 %2734
    %s2737 = sor.u32 256, 48
    %2738 = vbcast.lane.b32.xlu0 %v2727, %s2737
    %v2739 = vpop.permute.xlu0 %2738
    %s2741 = sor.u32 256, 56
    %2742 = vbcast.lane.b32.xlu0 %v2727, %s2741
    %v2743 = vpop.permute.xlu0 %2742
    %v2746 = vunpack.c.l.s4 1966171168
    %v2747 = vunpack.c.0.s8 %v2746
    %v2748 = vlaneseq
    %v2749 = vshrl.u32 %v2748, 7
    %v2750 = vsub.s32 %v2747, %v2749
    %v2751 = vrot.slane %v2670, %v2750
    %v2752 = vcombine.high %v2751, %v2751
    %v2754 = vunpack.c.l.s4 1966171168
    %v2755 = vunpack.c.0.s8 %v2754
    %v2756 = vlaneseq
    %v2757 = vshrl.u32 %v2756, 7
    %v2758 = vsub.s32 %v2755, %v2757
    %v2759 = vrot.slane %v2751, %v2758
    %v2761 = vunpack.c.l.s4 1966171168
    %v2762 = vunpack.c.0.s8 %v2761
    %v2763 = vlaneseq
    %v2764 = vshrl.u32 %v2763, 7
    %v2765 = vsub.s32 %v2762, %v2764
    %v2766 = vrot.slane %v2752, %v2765
    %v2767 = vlaneseq
    %v2768 = vshrl.u32 %v2767, 7
    %v2769 = vsub.s32 0, %v2768
    %v2770 = vrot.slane %v2759, %v2769
    %v2771 = vlaneseq
    %v2772 = vshrl.u32 %v2771, 7
    %v2773 = vsub.s32 0, %v2772
    %v2774 = vrot.slane %v2766, %v2773
    %v2777 = vmul.f32 %v2711, %v2770
    %v2778 = vmul.f32 %v2715, %v2770
    %v2779 = vmul.f32 %v2719, %v2770
    %v2780 = vmul.f32 %v2723, %v2770
    %v2781 = vmul.f32 %v2731, %v2774
    %v2782 = vmul.f32 %v2735, %v2774
    %v2783 = vmul.f32 %v2739, %v2774
    %v2784 = vmul.f32 %v2743, %v2774
    %v2785 = vlaneseq
    %v2786 = vshrl.u32 %v2785, 7
    %v2787 = vsub.s32 0, %v2786
    %v2788 = vrot.slane %v2683, %v2787
    %s2790 = sor.u32 256, 32
    %2791 = vbcast.lane.b32.xlu0 %v2788, %s2790
    %v2792 = vpop.permute.xlu0 %2791
    %s2794 = sor.u32 256, 40
    %2795 = vbcast.lane.b32.xlu0 %v2788, %s2794
    %v2796 = vpop.permute.xlu0 %2795
    %s2798 = sor.u32 256, 48
    %2799 = vbcast.lane.b32.xlu0 %v2788, %s2798
    %v2800 = vpop.permute.xlu0 %2799
    %s2802 = sor.u32 256, 56
    %2803 = vbcast.lane.b32.xlu0 %v2788, %s2802
    %v2804 = vpop.permute.xlu0 %2803
    %v2805 = vlaneseq
    %v2806 = vshrl.u32 %v2805, 7
    %v2807 = vsub.s32 1, %v2806
    %v2808 = vrot.slane %v2683, %v2807
    %s2810 = sor.u32 256, 32
    %2811 = vbcast.lane.b32.xlu0 %v2808, %s2810
    %v2812 = vpop.permute.xlu0 %2811
    %s2814 = sor.u32 256, 40
    %2815 = vbcast.lane.b32.xlu0 %v2808, %s2814
    %v2816 = vpop.permute.xlu0 %2815
    %s2818 = sor.u32 256, 48
    %2819 = vbcast.lane.b32.xlu0 %v2808, %s2818
    %v2820 = vpop.permute.xlu0 %2819
    %s2822 = sor.u32 256, 56
    %2823 = vbcast.lane.b32.xlu0 %v2808, %s2822
    %v2824 = vpop.permute.xlu0 %2823
    %v2825 = vmul.f32 %v2792, %v2409
    %v2826 = vmul.f32 %v2796, %v2410
    %v2827 = vmul.f32 %v2800, %v2411
    %v2828 = vmul.f32 %v2804, %v2412
    %v2829 = vmul.f32 %v2812, %v2413
    %v2830 = vmul.f32 %v2816, %v2414
    %v2831 = vmul.f32 %v2820, %v2415
    %v2832 = vmul.f32 %v2824, %v2416
    %v2833 = vlaneseq
    %v2834 = vshrl.u32 %v2833, 7
    %v2835 = vsub.s32 0, %v2834
    %v2836 = vrot.slane %v2703, %v2835
    %2838 = vbcast.lane.b32.xlu0 %v2836, 256
    %v2839 = vpop.permute.xlu0 %2838
    %s2841 = sor.u32 256, 8
    %2842 = vbcast.lane.b32.xlu0 %v2836, %s2841
    %v2843 = vpop.permute.xlu0 %2842
    %s2845 = sor.u32 256, 16
    %2846 = vbcast.lane.b32.xlu0 %v2836, %s2845
    %v2847 = vpop.permute.xlu0 %2846
    %s2849 = sor.u32 256, 24
    %2850 = vbcast.lane.b32.xlu0 %v2836, %s2849
    %v2851 = vpop.permute.xlu0 %2850
    %v2852 = vlaneseq
    %v2853 = vshrl.u32 %v2852, 7
    %v2854 = vsub.s32 1, %v2853
    %v2855 = vrot.slane %v2703, %v2854
    %2857 = vbcast.lane.b32.xlu0 %v2855, 256
    %v2858 = vpop.permute.xlu0 %2857
    %s2860 = sor.u32 256, 8
    %2861 = vbcast.lane.b32.xlu0 %v2855, %s2860
    %v2862 = vpop.permute.xlu0 %2861
    %s2864 = sor.u32 256, 16
    %2865 = vbcast.lane.b32.xlu0 %v2855, %s2864
    %v2866 = vpop.permute.xlu0 %2865
    %s2868 = sor.u32 256, 24
    %2869 = vbcast.lane.b32.xlu0 %v2855, %s2868
    %v2870 = vpop.permute.xlu0 %2869
    %v2871 = vmul.f32 %v2839, %v2777
    %v2872 = vmul.f32 %v2843, %v2778
    %v2873 = vmul.f32 %v2847, %v2779
    %v2874 = vmul.f32 %v2851, %v2780
    %v2875 = vmul.f32 %v2858, %v2781
    %v2876 = vmul.f32 %v2862, %v2782
    %v2877 = vmul.f32 %v2866, %v2783
    %v2878 = vmul.f32 %v2870, %v2784
    %v2879 = vadd.f32 %v2825, %v2871
    %v2880 = vadd.f32 %v2826, %v2872
    %v2881 = vadd.f32 %v2827, %v2873
    %v2882 = vadd.f32 %v2828, %v2874
    %v2883 = vadd.f32 %v2829, %v2875
    %v2884 = vadd.f32 %v2830, %v2876
    %v2885 = vadd.f32 %v2831, %v2877
    %v2886 = vadd.f32 %v2832, %v2878
    %v2888 = vrot.slane %v2426, 4
    %v2890 = vmul.f32 %v2683, %v2888
    %v2891 = vmul.f32 %v2703, %v2670
    %2893 = vrot.lane.b32.xlu0 %v2891, 32
    %v2894 = vpop.permute.xlu0 %2893
    %v2896 = vadd.f32 %v2890, %v2894
    %2898 = vrot.lane.b32.xlu0 %v2668, 64
    %v2899 = vpop.permute.xlu0 %2898
    %v2901 = vmul.f32 %v2896, %v2899
    %2903 = vrot.lane.b32.xlu0 %v2901, 96
    %v2904 = vpop.permute.xlu0 %2903
    %v2906 = vsel %vm487, %v2904, 0.0
    %2907 = vadd.xlane.f32.xlu0 %v2906
    %v2908 = vpop.xlane.xlu0 %2907
    %v2909 = vand.u32 2147483647, %v2908
    %v2910 = vmax.f32 %v2909, 1.0
    %v2912 = vunpack.c.l.s4 1966171168
    %v2913 = vunpack.c.0.s8 %v2912
    %v2914 = vlaneseq
    %v2915 = vshrl.u32 %v2914, 7
    %v2916 = vsub.s32 %v2913, %v2915
    %v2917 = vrot.slane %v2668, %v2916
    %v2918 = vcombine.high %v2917, %v2917
    %v2920 = vunpack.c.l.s4 1966171168
    %v2921 = vunpack.c.0.s8 %v2920
    %v2922 = vlaneseq
    %v2923 = vshrl.u32 %v2922, 7
    %v2924 = vsub.s32 %v2921, %v2923
    %v2925 = vrot.slane %v2917, %v2924
    %v2927 = vunpack.c.l.s4 1966171168
    %v2928 = vunpack.c.0.s8 %v2927
    %v2929 = vlaneseq
    %v2930 = vshrl.u32 %v2929, 7
    %v2931 = vsub.s32 %v2928, %v2930
    %v2932 = vrot.slane %v2918, %v2931
    %v2933 = vlaneseq
    %v2934 = vshrl.u32 %v2933, 7
    %v2935 = vsub.s32 0, %v2934
    %v2936 = vrot.slane %v2925, %v2935
    %v2937 = vlaneseq
    %v2938 = vshrl.u32 %v2937, 7
    %v2939 = vsub.s32 0, %v2938
    %v2940 = vrot.slane %v2932, %v2939
    %2941 = vrot.lane.b32.xlu0 %v2936, 32
    %v2942 = vpop.permute.xlu0 %2941
    %2943 = vrot.lane.b32.xlu0 %v2940, 32
    %v2944 = vpop.permute.xlu0 %2943
    %v2947 = vmul.f32 %v2879, %v2942
    %v2948 = vmul.f32 %v2880, %v2942
    %v2949 = vmul.f32 %v2881, %v2942
    %v2950 = vmul.f32 %v2882, %v2942
    %v2951 = vmul.f32 %v2883, %v2944
    %v2952 = vmul.f32 %v2884, %v2944
    %v2953 = vmul.f32 %v2885, %v2944
    %v2954 = vmul.f32 %v2886, %v2944
    %v2955 = vsel %vm537, %v2947, 0.0
    %2956 = vadd.xlane.f32.xlu0 %v2955
    %v2957 = vpop.xlane.xlu0 %2956
    %v2958 = vsel %vm537, %v2948, 0.0
    %2959 = vadd.xlane.f32.xlu0 %v2958
    %v2960 = vpop.xlane.xlu0 %2959
    %v2961 = vsel %vm537, %v2949, 0.0
    %2962 = vadd.xlane.f32.xlu0 %v2961
    %v2963 = vpop.xlane.xlu0 %2962
    %v2964 = vsel %vm537, %v2950, 0.0
    %2965 = vadd.xlane.f32.xlu0 %v2964
    %v2966 = vpop.xlane.xlu0 %2965
    %v2967 = vsel %vm537, %v2951, 0.0
    %2968 = vadd.xlane.f32.xlu0 %v2967
    %v2969 = vpop.xlane.xlu0 %2968
    %v2970 = vsel %vm537, %v2952, 0.0
    %2971 = vadd.xlane.f32.xlu0 %v2970
    %v2972 = vpop.xlane.xlu0 %2971
    %v2973 = vsel %vm537, %v2953, 0.0
    %2974 = vadd.xlane.f32.xlu0 %v2973
    %v2975 = vpop.xlane.xlu0 %2974
    %v2976 = vsel %vm537, %v2954, 0.0
    %2977 = vadd.xlane.f32.xlu0 %v2976
    %v2978 = vpop.xlane.xlu0 %2977
    %v2980 = vlaneseq
    %v2981 = vshrl.u32 %v2980, 7
    %v2982 = vsub.s32 0, %v2981
    %v2983 = vrot.slane %v2910, %v2982
    %v2984 = vlaneseq
    %v2985 = vshrl.u32 %v2984, 7
    %v2986 = vsub.s32 1, %v2985
    %v2987 = vrot.slane %v2910, %v2986
    %v2990 = vrcp.pop %v2983
    %v2991 = vmul.f32 %v2957, %v2990
    %v2992 = vmul.f32 %v2960, %v2990
    %v2993 = vmul.f32 %v2963, %v2990
    %v2994 = vmul.f32 %v2966, %v2990
    %v2995 = vrcp.pop %v2987
    %v2996 = vmul.f32 %v2969, %v2995
    %v2997 = vmul.f32 %v2972, %v2995
    %v2998 = vmul.f32 %v2975, %v2995
    %v2999 = vmul.f32 %v2978, %v2995
    %3008 = vset.pattern.permute.xlu0 0
    %3009 = vperm.xlu0 %3008, %v2991
    %v3010 = vpop.permute.xlu0 %3009
    %3011 = vset.pattern.permute.xlu0 0
    %3012 = vperm.xlu0 %3011, %v2992
    %v3013 = vpop.permute.xlu0 %3012
    %3014 = vset.pattern.permute.xlu0 0
    %3015 = vperm.xlu0 %3014, %v2993
    %v3016 = vpop.permute.xlu0 %3015
    %3017 = vset.pattern.permute.xlu0 0
    %3018 = vperm.xlu0 %3017, %v2994
    %v3019 = vpop.permute.xlu0 %3018
    %3020 = vset.pattern.permute.xlu0 0
    %3021 = vperm.xlu0 %3020, %v2996
    %v3022 = vpop.permute.xlu0 %3021
    %3023 = vset.pattern.permute.xlu0 0
    %3024 = vperm.xlu0 %3023, %v2997
    %v3025 = vpop.permute.xlu0 %3024
    %3026 = vset.pattern.permute.xlu0 0
    %3027 = vperm.xlu0 %3026, %v2998
    %v3028 = vpop.permute.xlu0 %3027
    %3029 = vset.pattern.permute.xlu0 0
    %3030 = vperm.xlu0 %3029, %v2999
    %v3031 = vpop.permute.xlu0 %3030
    %v3032 = vlaneseq
    %v3033 = vshrl.u32 %v3032, 7
    %v3034 = vsub.s32 %v617, %v3033
    %v3035 = vrot.slane %v3010, %v3034
    %v3036 = vlaneseq
    %v3037 = vshrl.u32 %v3036, 7
    %v3038 = vsub.s32 %v622, %v3037
    %v3039 = vrot.slane %v3013, %v3038
    %v3040 = vsel %vm627, %v3039, %v3035
    %v3041 = vlaneseq
    %v3042 = vshrl.u32 %v3041, 7
    %v3043 = vsub.s32 %v629, %v3042
    %v3044 = vrot.slane %v3016, %v3043
    %v3045 = vsel %vm634, %v3044, %v3040
    %v3046 = vlaneseq
    %v3047 = vshrl.u32 %v3046, 7
    %v3048 = vsub.s32 %v636, %v3047
    %v3049 = vrot.slane %v3019, %v3048
    %v3050 = vsel %vm641, %v3049, %v3045
    %v3051 = vlaneseq
    %v3052 = vshrl.u32 %v3051, 7
    %v3053 = vsub.s32 %v617, %v3052
    %v3054 = vrot.slane %v3022, %v3053
    %v3055 = vlaneseq
    %v3056 = vshrl.u32 %v3055, 7
    %v3057 = vsub.s32 %v622, %v3056
    %v3058 = vrot.slane %v3025, %v3057
    %v3059 = vsel %vm627, %v3058, %v3054
    %v3060 = vlaneseq
    %v3061 = vshrl.u32 %v3060, 7
    %v3062 = vsub.s32 %v629, %v3061
    %v3063 = vrot.slane %v3028, %v3062
    %v3064 = vsel %vm634, %v3063, %v3059
    %v3065 = vlaneseq
    %v3066 = vshrl.u32 %v3065, 7
    %v3067 = vsub.s32 %v636, %v3066
    %v3068 = vrot.slane %v3031, %v3067
    %v3069 = vsel %vm641, %v3068, %v3064
    %v3070 = vsel %vm662, %v3069, %v3050
    %v3072 = vmul.f32 %v2683, %v3070
    %v3073 = vpack.c.bf16 %v2601, %v2601
    %v3074 = vpack.c.bf16 %v3072, %v3072
    %3076 = vrot.lane.b32.xlu0 %v3074, 64
    %v3077 = vpop.permute.xlu0 %3076
    %v3079 = vsel %vm537, %v3077, 0
    %3081 = vmatprep.subr.bf16.mxu0 0
    %3082 = vmatpush1.bf16.msra.mxu0 %v1192
    %3083 = vmatprep.subr.bf16.mxu0 0
    %3084 = vmatpush1.bf16.msra.mxu0 %v1193
    %3085 = vmatprep.subr.bf16.mxu0 0
    %3086 = vmatpush1.bf16.msra.mxu0 0
    %3087 = vmatprep.subr.bf16.mxu0 0
    %3088 = vmatpush1.bf16.msra.mxu0 0
    %3089 = vmatprep.subr.bf16.mxu0 0
    %3090 = vmatpush1.bf16.msra.mxu0 0
    %3091 = vmatprep.subr.bf16.mxu0 0
    %3092 = vmatpush1.bf16.msra.mxu0 0
    %3093 = vmatprep.subr.bf16.mxu0 0
    %3094 = vmatpush1.bf16.msra.mxu0 0
    %3095 = vmatprep.subr.bf16.mxu0 0
    %3096 = vmatpush1.bf16.msra.mxu0 0
    %3097 = vmatprep.subr.bf16.mxu0 0
    %3098 = vmatpush1.bf16.msra.mxu0 0
    %3099 = vmatprep.subr.bf16.mxu0 0
    %3100 = vmatpush1.bf16.msra.mxu0 0
    %3101 = vmatprep.subr.bf16.mxu0 0
    %3102 = vmatpush1.bf16.msra.mxu0 0
    %3103 = vmatprep.subr.bf16.mxu0 0
    %3104 = vmatpush1.bf16.msra.mxu0 0
    %3105 = vmatprep.subr.bf16.mxu0 0
    %3106 = vmatpush1.bf16.msra.mxu0 0
    %3107 = vmatprep.subr.bf16.mxu0 0
    %3108 = vmatpush1.bf16.msra.mxu0 0
    %3109 = vmatprep.subr.bf16.mxu0 0
    %3110 = vmatpush1.bf16.msra.mxu0 0
    %3111 = vmatprep.subr.bf16.mxu0 0
    %3112 = vmatpush1.bf16.msra.mxu0 0
    %3113 = vmatprep.mubr.bf16.mxu0 0
    %3114 = vmatmul.mubr.bf16.gmra.mrb[0].mxu0 %v3079
    %v3115 = vpop.f32.mrb[0].mxu0
    %v3116 = vadd.f32 0.0, %v3115
    %v3117 = vpop.f32.mrb[0].mxu0
    %v3118 = vpop.f32.mrb[0].mxu0
    %v3119 = vpop.f32.mrb[0].mxu0
    %3120 = vdwg.mxu0
    %v3122 = vrot.slane %v3073, 2
    %3123 = vrot.lane.b32.xlu0 %v3122, 64
    %v3124 = vpop.permute.xlu0 %3123
    %v3126 = vsel %vm537, %v3124, 0
    %3128 = vmatprep.subr.bf16.mxu0 0
    %3129 = vmatpush1.bf16.msra.mxu0 %v1250
    %3130 = vmatprep.subr.bf16.mxu0 0
    %3131 = vmatpush1.bf16.msra.mxu0 %v1251
    %3132 = vmatprep.subr.bf16.mxu0 0
    %3133 = vmatpush1.bf16.msra.mxu0 0
    %3134 = vmatprep.subr.bf16.mxu0 0
    %3135 = vmatpush1.bf16.msra.mxu0 0
    %3136 = vmatprep.subr.bf16.mxu0 0
    %3137 = vmatpush1.bf16.msra.mxu0 0
    %3138 = vmatprep.subr.bf16.mxu0 0
    %3139 = vmatpush1.bf16.msra.mxu0 0
    %3140 = vmatprep.subr.bf16.mxu0 0
    %3141 = vmatpush1.bf16.msra.mxu0 0
    %3142 = vmatprep.subr.bf16.mxu0 0
    %3143 = vmatpush1.bf16.msra.mxu0 0
    %3144 = vmatprep.subr.bf16.mxu0 0
    %3145 = vmatpush1.bf16.msra.mxu0 0
    %3146 = vmatprep.subr.bf16.mxu0 0
    %3147 = vmatpush1.bf16.msra.mxu0 0
    %3148 = vmatprep.subr.bf16.mxu0 0
    %3149 = vmatpush1.bf16.msra.mxu0 0
    %3150 = vmatprep.subr.bf16.mxu0 0
    %3151 = vmatpush1.bf16.msra.mxu0 0
    %3152 = vmatprep.subr.bf16.mxu0 0
    %3153 = vmatpush1.bf16.msra.mxu0 0
    %3154 = vmatprep.subr.bf16.mxu0 0
    %3155 = vmatpush1.bf16.msra.mxu0 0
    %3156 = vmatprep.subr.bf16.mxu0 0
    %3157 = vmatpush1.bf16.msra.mxu0 0
    %3158 = vmatprep.subr.bf16.mxu0 0
    %3159 = vmatpush1.bf16.msra.mxu0 0
    %3160 = vmatprep.mubr.bf16.mxu0 0
    %3161 = vmatmul.mubr.bf16.gmra.mrb[0].mxu0 %v3126
    %v3162 = vpop.f32.mrb[0].mxu0
    %v3163 = vadd.f32 %v3116, %v3162
    %v3164 = vpop.f32.mrb[0].mxu0
    %v3165 = vpop.f32.mrb[0].mxu0
    %v3166 = vpop.f32.mrb[0].mxu0
    %3167 = vdwg.mxu0
    %v3168 = vadd.f32 %v3163, %v1301
    %3170 = vrot.lane.b32.xlu0 %v3072, 64
    %v3171 = vpop.permute.xlu0 %3170
    %v3173 = vadd.f32 %v3168, %v3171
    %s3174 = scalar_lea.vmem [#allocation13], 4
    %3175 = vst.msk [vmem:[%s3174] sm:$0x3] %vm487, %v3173
    %v3176 = vrot.slane %v2695, 2
    %v3178 = vadd.f32 %v265, %v3176
    %v3179 = vmax.f32 %v3178, %v273
    %3181 = vrot.lane.b32.xlu0 %v3179, 96
    %v3182 = vpop.permute.xlu0 %3181
    %v3184 = vsub.f32 %v255, %v3182
    %v3185 = vmin.f32 %v3184, 20.0
    %v3186 = vmul.f32 %v3185, 1.442695
    %v3187 = vpow.pop %v3186
    %v3188 = vlaneseq
    %v3189 = vshrl.u32 %v3188, 7
    %v3190 = vsub.s32 6, %v3189
    %v3191 = vrot.slane %v220, %v3190
    %s3193 = sor.u32 256, 32
    %3194 = vbcast.lane.b32.xlu0 %v3191, %s3193
    %v3195 = vpop.permute.xlu0 %3194
    %s3197 = sor.u32 256, 40
    %3198 = vbcast.lane.b32.xlu0 %v3191, %s3197
    %v3199 = vpop.permute.xlu0 %3198
    %s3201 = sor.u32 256, 48
    %3202 = vbcast.lane.b32.xlu0 %v3191, %s3201
    %v3203 = vpop.permute.xlu0 %3202
    %s3205 = sor.u32 256, 56
    %3206 = vbcast.lane.b32.xlu0 %v3191, %s3205
    %v3207 = vpop.permute.xlu0 %3206
    %v3208 = vlaneseq
    %v3209 = vshrl.u32 %v3208, 7
    %v3210 = vsub.s32 7, %v3209
    %v3211 = vrot.slane %v220, %v3210
    %s3213 = sor.u32 256, 32
    %3214 = vbcast.lane.b32.xlu0 %v3211, %s3213
    %v3215 = vpop.permute.xlu0 %3214
    %s3217 = sor.u32 256, 40
    %3218 = vbcast.lane.b32.xlu0 %v3211, %s3217
    %v3219 = vpop.permute.xlu0 %3218
    %s3221 = sor.u32 256, 48
    %3222 = vbcast.lane.b32.xlu0 %v3211, %s3221
    %v3223 = vpop.permute.xlu0 %3222
    %s3225 = sor.u32 256, 56
    %3226 = vbcast.lane.b32.xlu0 %v3211, %s3225
    %v3227 = vpop.permute.xlu0 %3226
    %v3228 = vcombine.high %v2289, %v2289
    %v3229 = vcombine.high %v2296, %v2296
    %v3230 = vlaneseq
    %v3231 = vshrl.u32 %v3230, 7
    %v3232 = vsub.s32 0, %v3231
    %v3233 = vrot.slane %v3228, %v3232
    %v3234 = vlaneseq
    %v3235 = vshrl.u32 %v3234, 7
    %v3236 = vsub.s32 0, %v3235
    %v3237 = vrot.slane %v3229, %v3236
    %v3240 = vmul.f32 %v3195, %v3233
    %v3241 = vmul.f32 %v3199, %v3233
    %v3242 = vmul.f32 %v3203, %v3233
    %v3243 = vmul.f32 %v3207, %v3233
    %v3244 = vmul.f32 %v3215, %v3237
    %v3245 = vmul.f32 %v3219, %v3237
    %v3246 = vmul.f32 %v3223, %v3237
    %v3247 = vmul.f32 %v3227, %v3237
    %v3248 = vlaneseq
    %v3249 = vshrl.u32 %v3248, 7
    %v3250 = vsub.s32 6, %v3249
    %v3251 = vrot.slane %v261, %v3250
    %s3253 = sor.u32 256, 32
    %3254 = vbcast.lane.b32.xlu0 %v3251, %s3253
    %v3255 = vpop.permute.xlu0 %3254
    %s3257 = sor.u32 256, 40
    %3258 = vbcast.lane.b32.xlu0 %v3251, %s3257
    %v3259 = vpop.permute.xlu0 %3258
    %s3261 = sor.u32 256, 48
    %3262 = vbcast.lane.b32.xlu0 %v3251, %s3261
    %v3263 = vpop.permute.xlu0 %3262
    %s3265 = sor.u32 256, 56
    %3266 = vbcast.lane.b32.xlu0 %v3251, %s3265
    %v3267 = vpop.permute.xlu0 %3266
    %v3268 = vlaneseq
    %v3269 = vshrl.u32 %v3268, 7
    %v3270 = vsub.s32 7, %v3269
    %v3271 = vrot.slane %v261, %v3270
    %s3273 = sor.u32 256, 32
    %3274 = vbcast.lane.b32.xlu0 %v3271, %s3273
    %v3275 = vpop.permute.xlu0 %3274
    %s3277 = sor.u32 256, 40
    %3278 = vbcast.lane.b32.xlu0 %v3271, %s3277
    %v3279 = vpop.permute.xlu0 %3278
    %s3281 = sor.u32 256, 48
    %3282 = vbcast.lane.b32.xlu0 %v3271, %s3281
    %v3283 = vpop.permute.xlu0 %3282
    %s3285 = sor.u32 256, 56
    %3286 = vbcast.lane.b32.xlu0 %v3271, %s3285
    %v3287 = vpop.permute.xlu0 %3286
    %v3288 = vmul.f32 %v3255, %v2879
    %v3289 = vmul.f32 %v3259, %v2880
    %v3290 = vmul.f32 %v3263, %v2881
    %v3291 = vmul.f32 %v3267, %v2882
    %v3292 = vmul.f32 %v3275, %v2883
    %v3293 = vmul.f32 %v3279, %v2884
    %v3294 = vmul.f32 %v3283, %v2885
    %v3295 = vmul.f32 %v3287, %v2886
    %v3296 = vlaneseq
    %v3297 = vshrl.u32 %v3296, 7
    %v3298 = vsub.s32 6, %v3297
    %v3299 = vrot.slane %v3187, %v3298
    %3301 = vbcast.lane.b32.xlu0 %v3299, 256
    %v3302 = vpop.permute.xlu0 %3301
    %s3304 = sor.u32 256, 8
    %3305 = vbcast.lane.b32.xlu0 %v3299, %s3304
    %v3306 = vpop.permute.xlu0 %3305
    %s3308 = sor.u32 256, 16
    %3309 = vbcast.lane.b32.xlu0 %v3299, %s3308
    %v3310 = vpop.permute.xlu0 %3309
    %s3312 = sor.u32 256, 24
    %3313 = vbcast.lane.b32.xlu0 %v3299, %s3312
    %v3314 = vpop.permute.xlu0 %3313
    %v3315 = vlaneseq
    %v3316 = vshrl.u32 %v3315, 7
    %v3317 = vsub.s32 7, %v3316
    %v3318 = vrot.slane %v3187, %v3317
    %3320 = vbcast.lane.b32.xlu0 %v3318, 256
    %v3321 = vpop.permute.xlu0 %3320
    %s3323 = sor.u32 256, 8
    %3324 = vbcast.lane.b32.xlu0 %v3318, %s3323
    %v3325 = vpop.permute.xlu0 %3324
    %s3327 = sor.u32 256, 16
    %3328 = vbcast.lane.b32.xlu0 %v3318, %s3327
    %v3329 = vpop.permute.xlu0 %3328
    %s3331 = sor.u32 256, 24
    %3332 = vbcast.lane.b32.xlu0 %v3318, %s3331
    %v3333 = vpop.permute.xlu0 %3332
    %v3334 = vmul.f32 %v3302, %v3240
    %v3335 = vmul.f32 %v3306, %v3241
    %v3336 = vmul.f32 %v3310, %v3242
    %v3337 = vmul.f32 %v3314, %v3243
    %v3338 = vmul.f32 %v3321, %v3244
    %v3339 = vmul.f32 %v3325, %v3245
    %v3340 = vmul.f32 %v3329, %v3246
    %v3341 = vmul.f32 %v3333, %v3247
    %v3342 = vadd.f32 %v3288, %v3334
    %v3343 = vadd.f32 %v3289, %v3335
    %v3344 = vadd.f32 %v3290, %v3336
    %v3345 = vadd.f32 %v3291, %v3337
    %v3346 = vadd.f32 %v3292, %v3338
    %v3347 = vadd.f32 %v3293, %v3339
    %v3348 = vadd.f32 %v3294, %v3340
    %v3349 = vadd.f32 %v3295, %v3341
    %v3351 = vrot.slane %v2896, 2
    %v3353 = vmul.f32 %v261, %v3351
    %v3354 = vmul.f32 %v3187, %v220
    %3356 = vrot.lane.b32.xlu0 %v3354, 32
    %v3357 = vpop.permute.xlu0 %3356
    %v3359 = vadd.f32 %v3353, %v3357
    %v3360 = vmul.f32 %v3359, %v480
    %3362 = vrot.lane.b32.xlu0 %v3360, 96
    %v3363 = vpop.permute.xlu0 %3362
    %vm3365 = vcmask 261126
    %v3366 = vsel %vm3365, %v3363, 0.0
    %3367 = vadd.xlane.f32.xlu0 %v3366
    %v3368 = vpop.xlane.xlu0 %3367
    %v3369 = vand.u32 2147483647, %v3368
    %v3370 = vmax.f32 %v3369, 1.0
    %v3371 = vcombine.high %v2453, %v2453
    %v3372 = vcombine.high %v2460, %v2460
    %v3373 = vlaneseq
    %v3374 = vshrl.u32 %v3373, 7
    %v3375 = vsub.s32 0, %v3374
    %v3376 = vrot.slane %v3371, %v3375
    %v3377 = vlaneseq
    %v3378 = vshrl.u32 %v3377, 7
    %v3379 = vsub.s32 0, %v3378
    %v3380 = vrot.slane %v3372, %v3379
    %3381 = vrot.lane.b32.xlu0 %v3376, 32
    %v3382 = vpop.permute.xlu0 %3381
    %3383 = vrot.lane.b32.xlu0 %v3380, 32
    %v3384 = vpop.permute.xlu0 %3383
    %v3387 = vmul.f32 %v3342, %v3382
    %v3388 = vmul.f32 %v3343, %v3382
    %v3389 = vmul.f32 %v3344, %v3382
    %v3390 = vmul.f32 %v3345, %v3382
    %v3391 = vmul.f32 %v3346, %v3384
    %v3392 = vmul.f32 %v3347, %v3384
    %v3393 = vmul.f32 %v3348, %v3384
    %v3394 = vmul.f32 %v3349, %v3384
    %v3395 = vsel %vm537, %v3387, 0.0
    %3396 = vadd.xlane.f32.xlu0 %v3395
    %v3397 = vpop.xlane.xlu0 %3396
    %v3398 = vsel %vm537, %v3388, 0.0
    %3399 = vadd.xlane.f32.xlu0 %v3398
    %v3400 = vpop.xlane.xlu0 %3399
    %v3401 = vsel %vm537, %v3389, 0.0
    %3402 = vadd.xlane.f32.xlu0 %v3401
    %v3403 = vpop.xlane.xlu0 %3402
    %v3404 = vsel %vm537, %v3390, 0.0
    %3405 = vadd.xlane.f32.xlu0 %v3404
    %v3406 = vpop.xlane.xlu0 %3405
    %v3407 = vsel %vm537, %v3391, 0.0
    %3408 = vadd.xlane.f32.xlu0 %v3407
    %v3409 = vpop.xlane.xlu0 %3408
    %v3410 = vsel %vm537, %v3392, 0.0
    %3411 = vadd.xlane.f32.xlu0 %v3410
    %v3412 = vpop.xlane.xlu0 %3411
    %v3413 = vsel %vm537, %v3393, 0.0
    %3414 = vadd.xlane.f32.xlu0 %v3413
    %v3415 = vpop.xlane.xlu0 %3414
    %v3416 = vsel %vm537, %v3394, 0.0
    %3417 = vadd.xlane.f32.xlu0 %v3416
    %v3418 = vpop.xlane.xlu0 %3417
    %v3420 = vlaneseq
    %v3421 = vshrl.u32 %v3420, 7
    %v3422 = vsub.s32 6, %v3421
    %v3423 = vrot.slane %v3370, %v3422
    %v3424 = vlaneseq
    %v3425 = vshrl.u32 %v3424, 7
    %v3426 = vsub.s32 7, %v3425
    %v3427 = vrot.slane %v3370, %v3426
    %v3430 = vrcp.pop %v3423
    %v3431 = vmul.f32 %v3397, %v3430
    %v3432 = vmul.f32 %v3400, %v3430
    %v3433 = vmul.f32 %v3403, %v3430
    %v3434 = vmul.f32 %v3406, %v3430
    %v3435 = vrcp.pop %v3427
    %v3436 = vmul.f32 %v3409, %v3435
    %v3437 = vmul.f32 %v3412, %v3435
    %v3438 = vmul.f32 %v3415, %v3435
    %v3439 = vmul.f32 %v3418, %v3435
    %3448 = vset.pattern.permute.xlu0 0
    %3449 = vperm.xlu0 %3448, %v3431
    %v3450 = vpop.permute.xlu0 %3449
    %3451 = vset.pattern.permute.xlu0 0
    %3452 = vperm.xlu0 %3451, %v3432
    %v3453 = vpop.permute.xlu0 %3452
    %3454 = vset.pattern.permute.xlu0 0
    %3455 = vperm.xlu0 %3454, %v3433
    %v3456 = vpop.permute.xlu0 %3455
    %3457 = vset.pattern.permute.xlu0 0
    %3458 = vperm.xlu0 %3457, %v3434
    %v3459 = vpop.permute.xlu0 %3458
    %3460 = vset.pattern.permute.xlu0 0
    %3461 = vperm.xlu0 %3460, %v3436
    %v3462 = vpop.permute.xlu0 %3461
    %3463 = vset.pattern.permute.xlu0 0
    %3464 = vperm.xlu0 %3463, %v3437
    %v3465 = vpop.permute.xlu0 %3464
    %3466 = vset.pattern.permute.xlu0 0
    %3467 = vperm.xlu0 %3466, %v3438
    %v3468 = vpop.permute.xlu0 %3467
    %3469 = vset.pattern.permute.xlu0 0
    %3470 = vperm.xlu0 %3469, %v3439
    %v3471 = vpop.permute.xlu0 %3470
    %v3472 = vlaneseq
    %v3473 = vshrl.u32 %v3472, 7
    %v3474 = vsub.s32 %v617, %v3473
    %v3475 = vrot.slane %v3450, %v3474
    %v3476 = vlaneseq
    %v3477 = vshrl.u32 %v3476, 7
    %v3478 = vsub.s32 %v622, %v3477
    %v3479 = vrot.slane %v3453, %v3478
    %v3480 = vsel %vm627, %v3479, %v3475
    %v3481 = vlaneseq
    %v3482 = vshrl.u32 %v3481, 7
    %v3483 = vsub.s32 %v629, %v3482
    %v3484 = vrot.slane %v3456, %v3483
    %v3485 = vsel %vm634, %v3484, %v3480
    %v3486 = vlaneseq
    %v3487 = vshrl.u32 %v3486, 7
    %v3488 = vsub.s32 %v636, %v3487
    %v3489 = vrot.slane %v3459, %v3488
    %v3490 = vsel %vm641, %v3489, %v3485
    %v3491 = vlaneseq
    %v3492 = vshrl.u32 %v3491, 7
    %v3493 = vsub.s32 %v617, %v3492
    %v3494 = vrot.slane %v3462, %v3493
    %v3495 = vlaneseq
    %v3496 = vshrl.u32 %v3495, 7
    %v3497 = vsub.s32 %v622, %v3496
    %v3498 = vrot.slane %v3465, %v3497
    %v3499 = vsel %vm627, %v3498, %v3494
    %v3500 = vlaneseq
    %v3501 = vshrl.u32 %v3500, 7
    %v3502 = vsub.s32 %v629, %v3501
    %v3503 = vrot.slane %v3468, %v3502
    %v3504 = vsel %vm634, %v3503, %v3499
    %v3505 = vlaneseq
    %v3506 = vshrl.u32 %v3505, 7
    %v3507 = vsub.s32 %v636, %v3506
    %v3508 = vrot.slane %v3471, %v3507
    %v3509 = vsel %vm641, %v3508, %v3504
    %vm3510 = vcmask 1047559
    %v3511 = vsel %vm3510, %v3509, %v3490
    %v3513 = vmul.f32 %v261, %v3511
    %3515 = vrot.lane.b32.xlu0 %v3513, 64
    %v3516 = vpop.permute.xlu0 %3515
    %v3518 = vsel %vm3365, %v3516, 0.0
    %3519 = vadd.xlane.f32.xlu0 %v3518
    %v3520 = vpop.xlane.xlu0 %3519
    %v3521 = vmul.f32 %v3520, %v673
    %v3522 = vsub.f32 %v3513, %v3521
    %v3523 = vmul.f32 %v3522, %v3522
    %3525 = vrot.lane.b32.xlu0 %v3523, 64
    %v3526 = vpop.permute.xlu0 %3525
    %v3528 = vsel %vm3365, %v3526, 0.0
    %3529 = vadd.xlane.f32.xlu0 %v3528
    %v3530 = vpop.xlane.xlu0 %3529
    %v3531 = vmul.f32 %v3530, %v673
    %v3532 = vadd.f32 %v3531, 1e-05
    %v3533 = vrsqrt.pop %v3532
    %v3534 = vmul.f32 %v3522, %v3533
    %v3535 = vmul.f32 %v3534, %v694
    %v3536 = vadd.f32 %v3535, %v703
    %v3537 = vpack.c.bf16 %v3536, %v3536
    %v3539 = vrot.slane %v3537, 3
    %3540 = vrot.lane.b32.xlu0 %v3539, 64
    %v3541 = vpop.permute.xlu0 %3540
    %v3543 = vsel %vm537, %v3541, 0
    %3545 = vmatprep.subr.bf16.mxu0 %v734
    %3546 = vmatpush1.bf16.msra.mxu0 %v733
    %3547 = vmatprep.subr.bf16.mxu0 %v736
    %3548 = vmatpush1.bf16.msra.mxu0 %v735
    %3549 = vmatprep.subr.bf16.mxu0 0
    %3550 = vmatpush1.bf16.msra.mxu0 0
    %3551 = vmatprep.subr.bf16.mxu0 0
    %3552 = vmatpush1.bf16.msra.mxu0 0
    %3553 = vmatprep.subr.bf16.mxu0 0
    %3554 = vmatpush1.bf16.msra.mxu0 0
    %3555 = vmatprep.subr.bf16.mxu0 0
    %3556 = vmatpush1.bf16.msra.mxu0 0
    %3557 = vmatprep.subr.bf16.mxu0 0
    %3558 = vmatpush1.bf16.msra.mxu0 0
    %3559 = vmatprep.subr.bf16.mxu0 0
    %3560 = vmatpush1.bf16.msra.mxu0 0
    %3561 = vmatprep.subr.bf16.mxu0 0
    %3562 = vmatpush1.bf16.msra.mxu0 0
    %3563 = vmatprep.subr.bf16.mxu0 0
    %3564 = vmatpush1.bf16.msra.mxu0 0
    %3565 = vmatprep.subr.bf16.mxu0 0
    %3566 = vmatpush1.bf16.msra.mxu0 0
    %3567 = vmatprep.subr.bf16.mxu0 0
    %3568 = vmatpush1.bf16.msra.mxu0 0
    %3569 = vmatprep.subr.bf16.mxu0 0
    %3570 = vmatpush1.bf16.msra.mxu0 0
    %3571 = vmatprep.subr.bf16.mxu0 0
    %3572 = vmatpush1.bf16.msra.mxu0 0
    %3573 = vmatprep.subr.bf16.mxu0 0
    %3574 = vmatpush1.bf16.msra.mxu0 0
    %3575 = vmatprep.subr.bf16.mxu0 0
    %3576 = vmatpush1.bf16.msra.mxu0 0
    %3577 = vmatprep.mubr.bf16.mxu0 0
    %3578 = vmatmul.mubr.bf16.gmra.mrb[0].mxu0 %v3543
    %v3579 = vpop.f32.mrb[0].mxu0
    %v3580 = vadd.f32 %v711, %v3579
    %v3581 = vpop.f32.mrb[0].mxu0
    %v3582 = vadd.f32 %v715, %v3581
    %v3583 = vpop.f32.mrb[0].mxu0
    %v3584 = vpop.f32.mrb[0].mxu0
    %3585 = vdwg.mxu0
    %v3586 = vmax.f32 %v3580, -100.0
    %v3587 = vmin.f32 %v3586, 100.0
    %v3588 = vmul.f32 %v3587, 1.442695
    %v3589 = vpow.pop %v3588
    %v3590 = vxor.u32 %v3587, 2147483648
    %v3591 = vmul.f32 %v3590, 1.442695
    %v3592 = vpow.pop %v3591
    %v3593 = vadd.f32 %v3592, 1.0
    %v3594 = vrcp.pop %v3593
    %v3595 = vmul.f32 1.0, %v3594
    %v3596 = vmax.f32 %v3587, -18.420681
    %v3597 = vmax.f32 %v3595, 1e-08
    %v3598 = vlog2.pop %v3597
    %v3599 = vmul.f32 %v3598, 0.6931472
    %v3600 = vrot.slane %v3179, 6
    %v3602 = vadd.f32 %v3599, %v3600
    %3604 = vrot.lane.b32.xlu0 %v3596, 32
    %v3605 = vpop.permute.xlu0 %3604
    %v3607 = vmax.f32 %v3602, %v3605
    %3609 = vrot.lane.b32.xlu0 %v3607, 96
    %v3610 = vpop.permute.xlu0 %3609
    %v3612 = vsub.f32 %v3589, %v3610
    %v3613 = vmin.f32 %v3612, 20.0
    %v3614 = vmul.f32 %v3613, 1.442695
    %v3615 = vpow.pop %v3614
    %v3616 = vlaneseq
    %v3617 = vshrl.u32 %v3616, 7
    %v3618 = vsub.s32 0, %v3617
    %v3619 = vrot.slane %v3582, %v3618
    %s3621 = sor.u32 256, 32
    %3622 = vbcast.lane.b32.xlu0 %v3619, %s3621
    %v3623 = vpop.permute.xlu0 %3622
    %s3625 = sor.u32 256, 40
    %3626 = vbcast.lane.b32.xlu0 %v3619, %s3625
    %v3627 = vpop.permute.xlu0 %3626
    %s3629 = sor.u32 256, 48
    %3630 = vbcast.lane.b32.xlu0 %v3619, %s3629
    %v3631 = vpop.permute.xlu0 %3630
    %s3633 = sor.u32 256, 56
    %3634 = vbcast.lane.b32.xlu0 %v3619, %s3633
    %v3635 = vpop.permute.xlu0 %3634
    %v3636 = vlaneseq
    %v3637 = vshrl.u32 %v3636, 7
    %v3638 = vsub.s32 1, %v3637
    %v3639 = vrot.slane %v3582, %v3638
    %s3641 = sor.u32 256, 32
    %3642 = vbcast.lane.b32.xlu0 %v3639, %s3641
    %v3643 = vpop.permute.xlu0 %3642
    %s3645 = sor.u32 256, 40
    %3646 = vbcast.lane.b32.xlu0 %v3639, %s3645
    %v3647 = vpop.permute.xlu0 %3646
    %s3649 = sor.u32 256, 48
    %3650 = vbcast.lane.b32.xlu0 %v3639, %s3649
    %v3651 = vpop.permute.xlu0 %3650
    %s3653 = sor.u32 256, 56
    %3654 = vbcast.lane.b32.xlu0 %v3639, %s3653
    %v3655 = vpop.permute.xlu0 %3654
    %v3658 = vunpack.c.l.s4 1966171168
    %v3659 = vunpack.c.0.s8 %v3658
    %v3660 = vlaneseq
    %v3661 = vshrl.u32 %v3660, 7
    %v3662 = vsub.s32 %v3659, %v3661
    %v3663 = vrot.slane %v3582, %v3662
    %v3664 = vcombine.high %v3663, %v3663
    %v3666 = vunpack.c.l.s4 1966171168
    %v3667 = vunpack.c.0.s8 %v3666
    %v3668 = vlaneseq
    %v3669 = vshrl.u32 %v3668, 7
    %v3670 = vsub.s32 %v3667, %v3669
    %v3671 = vrot.slane %v3663, %v3670
    %v3673 = vunpack.c.l.s4 1966171168
    %v3674 = vunpack.c.0.s8 %v3673
    %v3675 = vlaneseq
    %v3676 = vshrl.u32 %v3675, 7
    %v3677 = vsub.s32 %v3674, %v3676
    %v3678 = vrot.slane %v3664, %v3677
    %v3679 = vlaneseq
    %v3680 = vshrl.u32 %v3679, 7
    %v3681 = vsub.s32 0, %v3680
    %v3682 = vrot.slane %v3671, %v3681
    %v3683 = vlaneseq
    %v3684 = vshrl.u32 %v3683, 7
    %v3685 = vsub.s32 0, %v3684
    %v3686 = vrot.slane %v3678, %v3685
    %v3689 = vmul.f32 %v3623, %v3682
    %v3690 = vmul.f32 %v3627, %v3682
    %v3691 = vmul.f32 %v3631, %v3682
    %v3692 = vmul.f32 %v3635, %v3682
    %v3693 = vmul.f32 %v3643, %v3686
    %v3694 = vmul.f32 %v3647, %v3686
    %v3695 = vmul.f32 %v3651, %v3686
    %v3696 = vmul.f32 %v3655, %v3686
    %v3697 = vlaneseq
    %v3698 = vshrl.u32 %v3697, 7
    %v3699 = vsub.s32 0, %v3698
    %v3700 = vrot.slane %v3595, %v3699
    %s3702 = sor.u32 256, 32
    %3703 = vbcast.lane.b32.xlu0 %v3700, %s3702
    %v3704 = vpop.permute.xlu0 %3703
    %s3706 = sor.u32 256, 40
    %3707 = vbcast.lane.b32.xlu0 %v3700, %s3706
    %v3708 = vpop.permute.xlu0 %3707
    %s3710 = sor.u32 256, 48
    %3711 = vbcast.lane.b32.xlu0 %v3700, %s3710
    %v3712 = vpop.permute.xlu0 %3711
    %s3714 = sor.u32 256, 56
    %3715 = vbcast.lane.b32.xlu0 %v3700, %s3714
    %v3716 = vpop.permute.xlu0 %3715
    %v3717 = vlaneseq
    %v3718 = vshrl.u32 %v3717, 7
    %v3719 = vsub.s32 1, %v3718
    %v3720 = vrot.slane %v3595, %v3719
    %s3722 = sor.u32 256, 32
    %3723 = vbcast.lane.b32.xlu0 %v3720, %s3722
    %v3724 = vpop.permute.xlu0 %3723
    %s3726 = sor.u32 256, 40
    %3727 = vbcast.lane.b32.xlu0 %v3720, %s3726
    %v3728 = vpop.permute.xlu0 %3727
    %s3730 = sor.u32 256, 48
    %3731 = vbcast.lane.b32.xlu0 %v3720, %s3730
    %v3732 = vpop.permute.xlu0 %3731
    %s3734 = sor.u32 256, 56
    %3735 = vbcast.lane.b32.xlu0 %v3720, %s3734
    %v3736 = vpop.permute.xlu0 %3735
    %v3737 = vmul.f32 %v3704, %v3342
    %v3738 = vmul.f32 %v3708, %v3343
    %v3739 = vmul.f32 %v3712, %v3344
    %v3740 = vmul.f32 %v3716, %v3345
    %v3741 = vmul.f32 %v3724, %v3346
    %v3742 = vmul.f32 %v3728, %v3347
    %v3743 = vmul.f32 %v3732, %v3348
    %v3744 = vmul.f32 %v3736, %v3349
    %v3745 = vlaneseq
    %v3746 = vshrl.u32 %v3745, 7
    %v3747 = vsub.s32 0, %v3746
    %v3748 = vrot.slane %v3615, %v3747
    %3750 = vbcast.lane.b32.xlu0 %v3748, 256
    %v3751 = vpop.permute.xlu0 %3750
    %s3753 = sor.u32 256, 8
    %3754 = vbcast.lane.b32.xlu0 %v3748, %s3753
    %v3755 = vpop.permute.xlu0 %3754
    %s3757 = sor.u32 256, 16
    %3758 = vbcast.lane.b32.xlu0 %v3748, %s3757
    %v3759 = vpop.permute.xlu0 %3758
    %s3761 = sor.u32 256, 24
    %3762 = vbcast.lane.b32.xlu0 %v3748, %s3761
    %v3763 = vpop.permute.xlu0 %3762
    %v3764 = vlaneseq
    %v3765 = vshrl.u32 %v3764, 7
    %v3766 = vsub.s32 1, %v3765
    %v3767 = vrot.slane %v3615, %v3766
    %3769 = vbcast.lane.b32.xlu0 %v3767, 256
    %v3770 = vpop.permute.xlu0 %3769
    %s3772 = sor.u32 256, 8
    %3773 = vbcast.lane.b32.xlu0 %v3767, %s3772
    %v3774 = vpop.permute.xlu0 %3773
    %s3776 = sor.u32 256, 16
    %3777 = vbcast.lane.b32.xlu0 %v3767, %s3776
    %v3778 = vpop.permute.xlu0 %3777
    %s3780 = sor.u32 256, 24
    %3781 = vbcast.lane.b32.xlu0 %v3767, %s3780
    %v3782 = vpop.permute.xlu0 %3781
    %v3783 = vmul.f32 %v3751, %v3689
    %v3784 = vmul.f32 %v3755, %v3690
    %v3785 = vmul.f32 %v3759, %v3691
    %v3786 = vmul.f32 %v3763, %v3692
    %v3787 = vmul.f32 %v3770, %v3693
    %v3788 = vmul.f32 %v3774, %v3694
    %v3789 = vmul.f32 %v3778, %v3695
    %v3790 = vmul.f32 %v3782, %v3696
    %v3791 = vadd.f32 %v3737, %v3783
    %v3792 = vadd.f32 %v3738, %v3784
    %v3793 = vadd.f32 %v3739, %v3785
    %v3794 = vadd.f32 %v3740, %v3786
    %v3795 = vadd.f32 %v3741, %v3787
    %v3796 = vadd.f32 %v3742, %v3788
    %v3797 = vadd.f32 %v3743, %v3789
    %v3798 = vadd.f32 %v3744, %v3790
    %v3800 = vrot.slane %v3359, 6
    %v3802 = vmul.f32 %v3595, %v3800
    %v3803 = vmul.f32 %v3615, %v3582
    %3805 = vrot.lane.b32.xlu0 %v3803, 32
    %v3806 = vpop.permute.xlu0 %3805
    %v3808 = vadd.f32 %v3802, %v3806
    %3810 = vrot.lane.b32.xlu0 %v3580, 64
    %v3811 = vpop.permute.xlu0 %3810
    %v3813 = vmul.f32 %v3808, %v3811
    %3815 = vrot.lane.b32.xlu0 %v3813, 96
    %v3816 = vpop.permute.xlu0 %3815
    %v3818 = vsel %vm487, %v3816, 0.0
    %3819 = vadd.xlane.f32.xlu0 %v3818
    %v3820 = vpop.xlane.xlu0 %3819
    %v3821 = vand.u32 2147483647, %v3820
    %v3822 = vmax.f32 %v3821, 1.0
    %v3824 = vunpack.c.l.s4 1966171168
    %v3825 = vunpack.c.0.s8 %v3824
    %v3826 = vlaneseq
    %v3827 = vshrl.u32 %v3826, 7
    %v3828 = vsub.s32 %v3825, %v3827
    %v3829 = vrot.slane %v3580, %v3828
    %v3830 = vcombine.high %v3829, %v3829
    %v3832 = vunpack.c.l.s4 1966171168
    %v3833 = vunpack.c.0.s8 %v3832
    %v3834 = vlaneseq
    %v3835 = vshrl.u32 %v3834, 7
    %v3836 = vsub.s32 %v3833, %v3835
    %v3837 = vrot.slane %v3829, %v3836
    %v3839 = vunpack.c.l.s4 1966171168
    %v3840 = vunpack.c.0.s8 %v3839
    %v3841 = vlaneseq
    %v3842 = vshrl.u32 %v3841, 7
    %v3843 = vsub.s32 %v3840, %v3842
    %v3844 = vrot.slane %v3830, %v3843
    %v3845 = vlaneseq
    %v3846 = vshrl.u32 %v3845, 7
    %v3847 = vsub.s32 0, %v3846
    %v3848 = vrot.slane %v3837, %v3847
    %v3849 = vlaneseq
    %v3850 = vshrl.u32 %v3849, 7
    %v3851 = vsub.s32 0, %v3850
    %v3852 = vrot.slane %v3844, %v3851
    %3853 = vrot.lane.b32.xlu0 %v3848, 32
    %v3854 = vpop.permute.xlu0 %3853
    %3855 = vrot.lane.b32.xlu0 %v3852, 32
    %v3856 = vpop.permute.xlu0 %3855
    %v3859 = vmul.f32 %v3791, %v3854
    %v3860 = vmul.f32 %v3792, %v3854
    %v3861 = vmul.f32 %v3793, %v3854
    %v3862 = vmul.f32 %v3794, %v3854
    %v3863 = vmul.f32 %v3795, %v3856
    %v3864 = vmul.f32 %v3796, %v3856
    %v3865 = vmul.f32 %v3797, %v3856
    %v3866 = vmul.f32 %v3798, %v3856
    %v3867 = vsel %vm537, %v3859, 0.0
    %3868 = vadd.xlane.f32.xlu0 %v3867
    %v3869 = vpop.xlane.xlu0 %3868
    %v3870 = vsel %vm537, %v3860, 0.0
    %3871 = vadd.xlane.f32.xlu0 %v3870
    %v3872 = vpop.xlane.xlu0 %3871
    %v3873 = vsel %vm537, %v3861, 0.0
    %3874 = vadd.xlane.f32.xlu0 %v3873
    %v3875 = vpop.xlane.xlu0 %3874
    %v3876 = vsel %vm537, %v3862, 0.0
    %3877 = vadd.xlane.f32.xlu0 %v3876
    %v3878 = vpop.xlane.xlu0 %3877
    %v3879 = vsel %vm537, %v3863, 0.0
    %3880 = vadd.xlane.f32.xlu0 %v3879
    %v3881 = vpop.xlane.xlu0 %3880
    %v3882 = vsel %vm537, %v3864, 0.0
    %3883 = vadd.xlane.f32.xlu0 %v3882
    %v3884 = vpop.xlane.xlu0 %3883
    %v3885 = vsel %vm537, %v3865, 0.0
    %3886 = vadd.xlane.f32.xlu0 %v3885
    %v3887 = vpop.xlane.xlu0 %3886
    %v3888 = vsel %vm537, %v3866, 0.0
    %3889 = vadd.xlane.f32.xlu0 %v3888
    %v3890 = vpop.xlane.xlu0 %3889
    %v3892 = vlaneseq
    %v3893 = vshrl.u32 %v3892, 7
    %v3894 = vsub.s32 0, %v3893
    %v3895 = vrot.slane %v3822, %v3894
    %v3896 = vlaneseq
    %v3897 = vshrl.u32 %v3896, 7
    %v3898 = vsub.s32 1, %v3897
    %v3899 = vrot.slane %v3822, %v3898
    %v3902 = vrcp.pop %v3895
    %v3903 = vmul.f32 %v3869, %v3902
    %v3904 = vmul.f32 %v3872, %v3902
    %v3905 = vmul.f32 %v3875, %v3902
    %v3906 = vmul.f32 %v3878, %v3902
    %v3907 = vrcp.pop %v3899
    %v3908 = vmul.f32 %v3881, %v3907
    %v3909 = vmul.f32 %v3884, %v3907
    %v3910 = vmul.f32 %v3887, %v3907
    %v3911 = vmul.f32 %v3890, %v3907
    %3920 = vset.pattern.permute.xlu0 0
    %3921 = vperm.xlu0 %3920, %v3903
    %v3922 = vpop.permute.xlu0 %3921
    %3923 = vset.pattern.permute.xlu0 0
    %3924 = vperm.xlu0 %3923, %v3904
    %v3925 = vpop.permute.xlu0 %3924
    %3926 = vset.pattern.permute.xlu0 0
    %3927 = vperm.xlu0 %3926, %v3905
    %v3928 = vpop.permute.xlu0 %3927
    %3929 = vset.pattern.permute.xlu0 0
    %3930 = vperm.xlu0 %3929, %v3906
    %v3931 = vpop.permute.xlu0 %3930
    %3932 = vset.pattern.permute.xlu0 0
    %3933 = vperm.xlu0 %3932, %v3908
    %v3934 = vpop.permute.xlu0 %3933
    %3935 = vset.pattern.permute.xlu0 0
    %3936 = vperm.xlu0 %3935, %v3909
    %v3937 = vpop.permute.xlu0 %3936
    %3938 = vset.pattern.permute.xlu0 0
    %3939 = vperm.xlu0 %3938, %v3910
    %v3940 = vpop.permute.xlu0 %3939
    %3941 = vset.pattern.permute.xlu0 0
    %3942 = vperm.xlu0 %3941, %v3911
    %v3943 = vpop.permute.xlu0 %3942
    %v3944 = vlaneseq
    %v3945 = vshrl.u32 %v3944, 7
    %v3946 = vsub.s32 %v617, %v3945
    %v3947 = vrot.slane %v3922, %v3946
    %v3948 = vlaneseq
    %v3949 = vshrl.u32 %v3948, 7
    %v3950 = vsub.s32 %v622, %v3949
    %v3951 = vrot.slane %v3925, %v3950
    %v3952 = vsel %vm627, %v3951, %v3947
    %v3953 = vlaneseq
    %v3954 = vshrl.u32 %v3953, 7
    %v3955 = vsub.s32 %v629, %v3954
    %v3956 = vrot.slane %v3928, %v3955
    %v3957 = vsel %vm634, %v3956, %v3952
    %v3958 = vlaneseq
    %v3959 = vshrl.u32 %v3958, 7
    %v3960 = vsub.s32 %v636, %v3959
    %v3961 = vrot.slane %v3931, %v3960
    %v3962 = vsel %vm641, %v3961, %v3957
    %v3963 = vlaneseq
    %v3964 = vshrl.u32 %v3963, 7
    %v3965 = vsub.s32 %v617, %v3964
    %v3966 = vrot.slane %v3934, %v3965
    %v3967 = vlaneseq
    %v3968 = vshrl.u32 %v3967, 7
    %v3969 = vsub.s32 %v622, %v3968
    %v3970 = vrot.slane %v3937, %v3969
    %v3971 = vsel %vm627, %v3970, %v3966
    %v3972 = vlaneseq
    %v3973 = vshrl.u32 %v3972, 7
    %v3974 = vsub.s32 %v629, %v3973
    %v3975 = vrot.slane %v3940, %v3974
    %v3976 = vsel %vm634, %v3975, %v3971
    %v3977 = vlaneseq
    %v3978 = vshrl.u32 %v3977, 7
    %v3979 = vsub.s32 %v636, %v3978
    %v3980 = vrot.slane %v3943, %v3979
    %v3981 = vsel %vm641, %v3980, %v3976
    %v3982 = vsel %vm662, %v3981, %v3962
    %v3984 = vmul.f32 %v3595, %v3982
    %v3985 = vpack.c.bf16 %v3513, %v3513
    %v3986 = vpack.c.bf16 %v3984, %v3984
    %3988 = vrot.lane.b32.xlu0 %v3986, 64
    %v3989 = vpop.permute.xlu0 %3988
    %v3991 = vsel %vm537, %v3989, 0
    %3993 = vmatprep.subr.bf16.mxu0 0
    %3994 = vmatpush1.bf16.msra.mxu0 %v1192
    %3995 = vmatprep.subr.bf16.mxu0 0
    %3996 = vmatpush1.bf16.msra.mxu0 %v1193
    %3997 = vmatprep.subr.bf16.mxu0 0
    %3998 = vmatpush1.bf16.msra.mxu0 0
    %3999 = vmatprep.subr.bf16.mxu0 0
    %4000 = vmatpush1.bf16.msra.mxu0 0
    %4001 = vmatprep.subr.bf16.mxu0 0
    %4002 = vmatpush1.bf16.msra.mxu0 0
    %4003 = vmatprep.subr.bf16.mxu0 0
    %4004 = vmatpush1.bf16.msra.mxu0 0
    %4005 = vmatprep.subr.bf16.mxu0 0
    %4006 = vmatpush1.bf16.msra.mxu0 0
    %4007 = vmatprep.subr.bf16.mxu0 0
    %4008 = vmatpush1.bf16.msra.mxu0 0
    %4009 = vmatprep.subr.bf16.mxu0 0
    %4010 = vmatpush1.bf16.msra.mxu0 0
    %4011 = vmatprep.subr.bf16.mxu0 0
    %4012 = vmatpush1.bf16.msra.mxu0 0
    %4013 = vmatprep.subr.bf16.mxu0 0
    %4014 = vmatpush1.bf16.msra.mxu0 0
    %4015 = vmatprep.subr.bf16.mxu0 0
    %4016 = vmatpush1.bf16.msra.mxu0 0
    %4017 = vmatprep.subr.bf16.mxu0 0
    %4018 = vmatpush1.bf16.msra.mxu0 0
    %4019 = vmatprep.subr.bf16.mxu0 0
    %4020 = vmatpush1.bf16.msra.mxu0 0
    %4021 = vmatprep.subr.bf16.mxu0 0
    %4022 = vmatpush1.bf16.msra.mxu0 0
    %4023 = vmatprep.subr.bf16.mxu0 0
    %4024 = vmatpush1.bf16.msra.mxu0 0
    %4025 = vmatprep.mubr.bf16.mxu0 0
    %4026 = vmatmul.mubr.bf16.gmra.mrb[0].mxu0 %v3991
    %v4027 = vpop.f32.mrb[0].mxu0
    %v4028 = vadd.f32 0.0, %v4027
    %v4029 = vpop.f32.mrb[0].mxu0
    %v4030 = vpop.f32.mrb[0].mxu0
    %v4031 = vpop.f32.mrb[0].mxu0
    %4032 = vdwg.mxu0
    %v4034 = vrot.slane %v3985, 3
    %4035 = vrot.lane.b32.xlu0 %v4034, 64
    %v4036 = vpop.permute.xlu0 %4035
    %v4038 = vsel %vm537, %v4036, 0
    %4040 = vmatprep.subr.bf16.mxu0 0
    %4041 = vmatpush1.bf16.msra.mxu0 %v1250
    %4042 = vmatprep.subr.bf16.mxu0 0
    %4043 = vmatpush1.bf16.msra.mxu0 %v1251
    %4044 = vmatprep.subr.bf16.mxu0 0
    %4045 = vmatpush1.bf16.msra.mxu0 0
    %4046 = vmatprep.subr.bf16.mxu0 0
    %4047 = vmatpush1.bf16.msra.mxu0 0
    %4048 = vmatprep.subr.bf16.mxu0 0
    %4049 = vmatpush1.bf16.msra.mxu0 0
    %4050 = vmatprep.subr.bf16.mxu0 0
    %4051 = vmatpush1.bf16.msra.mxu0 0
    %4052 = vmatprep.subr.bf16.mxu0 0
    %4053 = vmatpush1.bf16.msra.mxu0 0
    %4054 = vmatprep.subr.bf16.mxu0 0
    %4055 = vmatpush1.bf16.msra.mxu0 0
    %4056 = vmatprep.subr.bf16.mxu0 0
    %4057 = vmatpush1.bf16.msra.mxu0 0
    %4058 = vmatprep.subr.bf16.mxu0 0
    %4059 = vmatpush1.bf16.msra.mxu0 0
    %4060 = vmatprep.subr.bf16.mxu0 0
    %4061 = vmatpush1.bf16.msra.mxu0 0
    %4062 = vmatprep.subr.bf16.mxu0 0
    %4063 = vmatpush1.bf16.msra.mxu0 0
    %4064 = vmatprep.subr.bf16.mxu0 0
    %4065 = vmatpush1.bf16.msra.mxu0 0
    %4066 = vmatprep.subr.bf16.mxu0 0
    %4067 = vmatpush1.bf16.msra.mxu0 0
    %4068 = vmatprep.subr.bf16.mxu0 0
    %4069 = vmatpush1.bf16.msra.mxu0 0
    %4070 = vmatprep.subr.bf16.mxu0 0
    %4071 = vmatpush1.bf16.msra.mxu0 0
    %4072 = vmatprep.mubr.bf16.mxu0 0
    %4073 = vmatmul.mubr.bf16.gmra.mrb[0].mxu0 %v4038
    %v4074 = vpop.f32.mrb[0].mxu0
    %v4075 = vadd.f32 %v4028, %v4074
    %v4076 = vpop.f32.mrb[0].mxu0
    %v4077 = vpop.f32.mrb[0].mxu0
    %v4078 = vpop.f32.mrb[0].mxu0
    %4079 = vdwg.mxu0
    %v4080 = vadd.f32 %v4075, %v1301
    %4082 = vrot.lane.b32.xlu0 %v3984, 64
    %v4083 = vpop.permute.xlu0 %4082
    %v4085 = vadd.f32 %v4080, %v4083
    %s4086 = scalar_lea.vmem [#allocation13], 6
    %4087 = vst.msk [vmem:[%s4086] sm:$0x3] %vm487, %v4085
    %v4088 = vmax.f32 %v222, -100.0
    %v4089 = vmin.f32 %v4088, 100.0
    %v4090 = vmul.f32 %v4089, 1.442695
    %v4091 = vpow.pop %v4090
    %v4092 = vxor.u32 %v4089, 2147483648
    %v4093 = vmul.f32 %v4092, 1.442695
    %v4094 = vpow.pop %v4093
    %v4095 = vadd.f32 %v4094, 1.0
    %v4096 = vrcp.pop %v4095
    %v4097 = vmul.f32 1.0, %v4096
    %v4098 = vmax.f32 %v4089, -18.420681
    %v4099 = vmax.f32 %v4097, 1e-08
    %v4100 = vlog2.pop %v4099
    %v4101 = vmul.f32 %v4100, 0.6931472
    %v4102 = vadd.f32 %v4101, %v3607
    %4104 = vrot.lane.b32.xlu0 %v4098, 32
    %v4105 = vpop.permute.xlu0 %4104
    %v4107 = vmax.f32 %v4102, %v4105
    %4109 = vrot.lane.b32.xlu0 %v4107, 96
    %v4110 = vpop.permute.xlu0 %4109
    %v4112 = vsub.f32 %v4091, %v4110
    %v4113 = vmin.f32 %v4112, 20.0
    %v4114 = vmul.f32 %v4113, 1.442695
    %v4115 = vpow.pop %v4114
    %v4116 = vlaneseq
    %v4117 = vshrl.u32 %v4116, 7
    %v4118 = vsub.s32 0, %v4117
    %v4119 = vrot.slane %v224, %v4118
    %s4121 = sor.u32 256, 32
    %4122 = vbcast.lane.b32.xlu0 %v4119, %s4121
    %v4123 = vpop.permute.xlu0 %4122
    %s4125 = sor.u32 256, 40
    %4126 = vbcast.lane.b32.xlu0 %v4119, %s4125
    %v4127 = vpop.permute.xlu0 %4126
    %s4129 = sor.u32 256, 48
    %4130 = vbcast.lane.b32.xlu0 %v4119, %s4129
    %v4131 = vpop.permute.xlu0 %4130
    %s4133 = sor.u32 256, 56
    %4134 = vbcast.lane.b32.xlu0 %v4119, %s4133
    %v4135 = vpop.permute.xlu0 %4134
    %v4136 = vlaneseq
    %v4137 = vshrl.u32 %v4136, 7
    %v4138 = vsub.s32 1, %v4137
    %v4139 = vrot.slane %v224, %v4138
    %s4141 = sor.u32 256, 32
    %4142 = vbcast.lane.b32.xlu0 %v4139, %s4141
    %v4143 = vpop.permute.xlu0 %4142
    %s4145 = sor.u32 256, 40
    %4146 = vbcast.lane.b32.xlu0 %v4139, %s4145
    %v4147 = vpop.permute.xlu0 %4146
    %s4149 = sor.u32 256, 48
    %4150 = vbcast.lane.b32.xlu0 %v4139, %s4149
    %v4151 = vpop.permute.xlu0 %4150
    %s4153 = sor.u32 256, 56
    %4154 = vbcast.lane.b32.xlu0 %v4139, %s4153
    %v4155 = vpop.permute.xlu0 %4154
    %v4158 = vunpack.c.l.s4 1966171168
    %v4159 = vunpack.c.0.s8 %v4158
    %v4160 = vlaneseq
    %v4161 = vshrl.u32 %v4160, 7
    %v4162 = vsub.s32 %v4159, %v4161
    %v4163 = vrot.slane %v224, %v4162
    %v4164 = vcombine.high %v4163, %v4163
    %v4166 = vunpack.c.l.s4 1966171168
    %v4167 = vunpack.c.0.s8 %v4166
    %v4168 = vlaneseq
    %v4169 = vshrl.u32 %v4168, 7
    %v4170 = vsub.s32 %v4167, %v4169
    %v4171 = vrot.slane %v4163, %v4170
    %v4173 = vunpack.c.l.s4 1966171168
    %v4174 = vunpack.c.0.s8 %v4173
    %v4175 = vlaneseq
    %v4176 = vshrl.u32 %v4175, 7
    %v4177 = vsub.s32 %v4174, %v4176
    %v4178 = vrot.slane %v4164, %v4177
    %v4179 = vlaneseq
    %v4180 = vshrl.u32 %v4179, 7
    %v4181 = vsub.s32 0, %v4180
    %v4182 = vrot.slane %v4171, %v4181
    %v4183 = vlaneseq
    %v4184 = vshrl.u32 %v4183, 7
    %v4185 = vsub.s32 0, %v4184
    %v4186 = vrot.slane %v4178, %v4185
    %v4189 = vmul.f32 %v4123, %v4182
    %v4190 = vmul.f32 %v4127, %v4182
    %v4191 = vmul.f32 %v4131, %v4182
    %v4192 = vmul.f32 %v4135, %v4182
    %v4193 = vmul.f32 %v4143, %v4186
    %v4194 = vmul.f32 %v4147, %v4186
    %v4195 = vmul.f32 %v4151, %v4186
    %v4196 = vmul.f32 %v4155, %v4186
    %v4197 = vlaneseq
    %v4198 = vshrl.u32 %v4197, 7
    %v4199 = vsub.s32 0, %v4198
    %v4200 = vrot.slane %v4097, %v4199
    %s4202 = sor.u32 256, 32
    %4203 = vbcast.lane.b32.xlu0 %v4200, %s4202
    %v4204 = vpop.permute.xlu0 %4203
    %s4206 = sor.u32 256, 40
    %4207 = vbcast.lane.b32.xlu0 %v4200, %s4206
    %v4208 = vpop.permute.xlu0 %4207
    %s4210 = sor.u32 256, 48
    %4211 = vbcast.lane.b32.xlu0 %v4200, %s4210
    %v4212 = vpop.permute.xlu0 %4211
    %s4214 = sor.u32 256, 56
    %4215 = vbcast.lane.b32.xlu0 %v4200, %s4214
    %v4216 = vpop.permute.xlu0 %4215
    %v4217 = vlaneseq
    %v4218 = vshrl.u32 %v4217, 7
    %v4219 = vsub.s32 1, %v4218
    %v4220 = vrot.slane %v4097, %v4219
    %s4222 = sor.u32 256, 32
    %4223 = vbcast.lane.b32.xlu0 %v4220, %s4222
    %v4224 = vpop.permute.xlu0 %4223
    %s4226 = sor.u32 256, 40
    %4227 = vbcast.lane.b32.xlu0 %v4220, %s4226
    %v4228 = vpop.permute.xlu0 %4227
    %s4230 = sor.u32 256, 48
    %4231 = vbcast.lane.b32.xlu0 %v4220, %s4230
    %v4232 = vpop.permute.xlu0 %4231
    %s4234 = sor.u32 256, 56
    %4235 = vbcast.lane.b32.xlu0 %v4220, %s4234
    %v4236 = vpop.permute.xlu0 %4235
    %v4237 = vmul.f32 %v4204, %v3791
    %v4238 = vmul.f32 %v4208, %v3792
    %v4239 = vmul.f32 %v4212, %v3793
    %v4240 = vmul.f32 %v4216, %v3794
    %v4241 = vmul.f32 %v4224, %v3795
    %v4242 = vmul.f32 %v4228, %v3796
    %v4243 = vmul.f32 %v4232, %v3797
    %v4244 = vmul.f32 %v4236, %v3798
    %v4245 = vlaneseq
    %v4246 = vshrl.u32 %v4245, 7
    %v4247 = vsub.s32 0, %v4246
    %v4248 = vrot.slane %v4115, %v4247
    %4250 = vbcast.lane.b32.xlu0 %v4248, 256
    %v4251 = vpop.permute.xlu0 %4250
    %s4253 = sor.u32 256, 8
    %4254 = vbcast.lane.b32.xlu0 %v4248, %s4253
    %v4255 = vpop.permute.xlu0 %4254
    %s4257 = sor.u32 256, 16
    %4258 = vbcast.lane.b32.xlu0 %v4248, %s4257
    %v4259 = vpop.permute.xlu0 %4258
    %s4261 = sor.u32 256, 24
    %4262 = vbcast.lane.b32.xlu0 %v4248, %s4261
    %v4263 = vpop.permute.xlu0 %4262
    %v4264 = vlaneseq
    %v4265 = vshrl.u32 %v4264, 7
    %v4266 = vsub.s32 1, %v4265
    %v4267 = vrot.slane %v4115, %v4266
    %4269 = vbcast.lane.b32.xlu0 %v4267, 256
    %v4270 = vpop.permute.xlu0 %4269
    %s4272 = sor.u32 256, 8
    %4273 = vbcast.lane.b32.xlu0 %v4267, %s4272
    %v4274 = vpop.permute.xlu0 %4273
    %s4276 = sor.u32 256, 16
    %4277 = vbcast.lane.b32.xlu0 %v4267, %s4276
    %v4278 = vpop.permute.xlu0 %4277
    %s4280 = sor.u32 256, 24
    %4281 = vbcast.lane.b32.xlu0 %v4267, %s4280
    %v4282 = vpop.permute.xlu0 %4281
    %v4283 = vmul.f32 %v4251, %v4189
    %v4284 = vmul.f32 %v4255, %v4190
    %v4285 = vmul.f32 %v4259, %v4191
    %v4286 = vmul.f32 %v4263, %v4192
    %v4287 = vmul.f32 %v4270, %v4193
    %v4288 = vmul.f32 %v4274, %v4194
    %v4289 = vmul.f32 %v4278, %v4195
    %v4290 = vmul.f32 %v4282, %v4196
    %v4291 = vadd.f32 %v4237, %v4283
    %v4292 = vadd.f32 %v4238, %v4284
    %v4293 = vadd.f32 %v4239, %v4285
    %v4294 = vadd.f32 %v4240, %v4286
    %v4295 = vadd.f32 %v4241, %v4287
    %v4296 = vadd.f32 %v4242, %v4288
    %v4297 = vadd.f32 %v4243, %v4289
    %v4298 = vadd.f32 %v4244, %v4290
    %v4299 = vmul.f32 %v4097, %v3808
    %v4300 = vmul.f32 %v4115, %v224
    %4302 = vrot.lane.b32.xlu0 %v4300, 32
    %v4303 = vpop.permute.xlu0 %4302
    %v4305 = vadd.f32 %v4299, %v4303
    %4307 = vrot.lane.b32.xlu0 %v222, 64
    %v4308 = vpop.permute.xlu0 %4307
    %v4310 = vmul.f32 %v4305, %v4308
    %4312 = vrot.lane.b32.xlu0 %v4310, 96
    %v4313 = vpop.permute.xlu0 %4312
    %v4315 = vsel %vm487, %v4313, 0.0
    %4316 = vadd.xlane.f32.xlu0 %v4315
    %v4317 = vpop.xlane.xlu0 %4316
    %v4318 = vand.u32 2147483647, %v4317
    %v4319 = vmax.f32 %v4318, 1.0
    %v4321 = vunpack.c.l.s4 1966171168
    %v4322 = vunpack.c.0.s8 %v4321
    %v4323 = vlaneseq
    %v4324 = vshrl.u32 %v4323, 7
    %v4325 = vsub.s32 %v4322, %v4324
    %v4326 = vrot.slane %v222, %v4325
    %v4327 = vcombine.high %v4326, %v4326
    %v4329 = vunpack.c.l.s4 1966171168
    %v4330 = vunpack.c.0.s8 %v4329
    %v4331 = vlaneseq
    %v4332 = vshrl.u32 %v4331, 7
    %v4333 = vsub.s32 %v4330, %v4332
    %v4334 = vrot.slane %v4326, %v4333
    %v4336 = vunpack.c.l.s4 1966171168
    %v4337 = vunpack.c.0.s8 %v4336
    %v4338 = vlaneseq
    %v4339 = vshrl.u32 %v4338, 7
    %v4340 = vsub.s32 %v4337, %v4339
    %v4341 = vrot.slane %v4327, %v4340
    %v4342 = vlaneseq
    %v4343 = vshrl.u32 %v4342, 7
    %v4344 = vsub.s32 0, %v4343
    %v4345 = vrot.slane %v4334, %v4344
    %v4346 = vlaneseq
    %v4347 = vshrl.u32 %v4346, 7
    %v4348 = vsub.s32 0, %v4347
    %v4349 = vrot.slane %v4341, %v4348
    %4350 = vrot.lane.b32.xlu0 %v4345, 32
    %v4351 = vpop.permute.xlu0 %4350
    %4352 = vrot.lane.b32.xlu0 %v4349, 32
    %v4353 = vpop.permute.xlu0 %4352
    %v4356 = vmul.f32 %v4291, %v4351
    %v4357 = vmul.f32 %v4292, %v4351
    %v4358 = vmul.f32 %v4293, %v4351
    %v4359 = vmul.f32 %v4294, %v4351
    %v4360 = vmul.f32 %v4295, %v4353
    %v4361 = vmul.f32 %v4296, %v4353
    %v4362 = vmul.f32 %v4297, %v4353
    %v4363 = vmul.f32 %v4298, %v4353
    %v4364 = vsel %vm537, %v4356, 0.0
    %4365 = vadd.xlane.f32.xlu0 %v4364
    %v4366 = vpop.xlane.xlu0 %4365
    %v4367 = vsel %vm537, %v4357, 0.0
    %4368 = vadd.xlane.f32.xlu0 %v4367
    %v4369 = vpop.xlane.xlu0 %4368
    %v4370 = vsel %vm537, %v4358, 0.0
    %4371 = vadd.xlane.f32.xlu0 %v4370
    %v4372 = vpop.xlane.xlu0 %4371
    %v4373 = vsel %vm537, %v4359, 0.0
    %4374 = vadd.xlane.f32.xlu0 %v4373
    %v4375 = vpop.xlane.xlu0 %4374
    %v4376 = vsel %vm537, %v4360, 0.0
    %4377 = vadd.xlane.f32.xlu0 %v4376
    %v4378 = vpop.xlane.xlu0 %4377
    %v4379 = vsel %vm537, %v4361, 0.0
    %4380 = vadd.xlane.f32.xlu0 %v4379
    %v4381 = vpop.xlane.xlu0 %4380
    %v4382 = vsel %vm537, %v4362, 0.0
    %4383 = vadd.xlane.f32.xlu0 %v4382
    %v4384 = vpop.xlane.xlu0 %4383
    %v4385 = vsel %vm537, %v4363, 0.0
    %4386 = vadd.xlane.f32.xlu0 %v4385
    %v4387 = vpop.xlane.xlu0 %4386
    %v4389 = vlaneseq
    %v4390 = vshrl.u32 %v4389, 7
    %v4391 = vsub.s32 0, %v4390
    %v4392 = vrot.slane %v4319, %v4391
    %v4393 = vlaneseq
    %v4394 = vshrl.u32 %v4393, 7
    %v4395 = vsub.s32 1, %v4394
    %v4396 = vrot.slane %v4319, %v4395
    %v4399 = vrcp.pop %v4392
    %v4400 = vmul.f32 %v4366, %v4399
    %v4401 = vmul.f32 %v4369, %v4399
    %v4402 = vmul.f32 %v4372, %v4399
    %v4403 = vmul.f32 %v4375, %v4399
    %v4404 = vrcp.pop %v4396
    %v4405 = vmul.f32 %v4378, %v4404
    %v4406 = vmul.f32 %v4381, %v4404
    %v4407 = vmul.f32 %v4384, %v4404
    %v4408 = vmul.f32 %v4387, %v4404
    %4417 = vset.pattern.permute.xlu0 0
    %4418 = vperm.xlu0 %4417, %v4400
    %v4419 = vpop.permute.xlu0 %4418
    %4420 = vset.pattern.permute.xlu0 0
    %4421 = vperm.xlu0 %4420, %v4401
    %v4422 = vpop.permute.xlu0 %4421
    %4423 = vset.pattern.permute.xlu0 0
    %4424 = vperm.xlu0 %4423, %v4402
    %v4425 = vpop.permute.xlu0 %4424
    %4426 = vset.pattern.permute.xlu0 0
    %4427 = vperm.xlu0 %4426, %v4403
    %v4428 = vpop.permute.xlu0 %4427
    %4429 = vset.pattern.permute.xlu0 0
    %4430 = vperm.xlu0 %4429, %v4405
    %v4431 = vpop.permute.xlu0 %4430
    %4432 = vset.pattern.permute.xlu0 0
    %4433 = vperm.xlu0 %4432, %v4406
    %v4434 = vpop.permute.xlu0 %4433
    %4435 = vset.pattern.permute.xlu0 0
    %4436 = vperm.xlu0 %4435, %v4407
    %v4437 = vpop.permute.xlu0 %4436
    %4438 = vset.pattern.permute.xlu0 0
    %4439 = vperm.xlu0 %4438, %v4408
    %v4440 = vpop.permute.xlu0 %4439
    %v4441 = vlaneseq
    %v4442 = vshrl.u32 %v4441, 7
    %v4443 = vsub.s32 %v617, %v4442
    %v4444 = vrot.slane %v4419, %v4443
    %v4445 = vlaneseq
    %v4446 = vshrl.u32 %v4445, 7
    %v4447 = vsub.s32 %v622, %v4446
    %v4448 = vrot.slane %v4422, %v4447
    %v4449 = vsel %vm627, %v4448, %v4444
    %v4450 = vlaneseq
    %v4451 = vshrl.u32 %v4450, 7
    %v4452 = vsub.s32 %v629, %v4451
    %v4453 = vrot.slane %v4425, %v4452
    %v4454 = vsel %vm634, %v4453, %v4449
    %v4455 = vlaneseq
    %v4456 = vshrl.u32 %v4455, 7
    %v4457 = vsub.s32 %v636, %v4456
    %v4458 = vrot.slane %v4428, %v4457
    %v4459 = vsel %vm641, %v4458, %v4454
    %v4460 = vlaneseq
    %v4461 = vshrl.u32 %v4460, 7
    %v4462 = vsub.s32 %v617, %v4461
    %v4463 = vrot.slane %v4431, %v4462
    %v4464 = vlaneseq
    %v4465 = vshrl.u32 %v4464, 7
    %v4466 = vsub.s32 %v622, %v4465
    %v4467 = vrot.slane %v4434, %v4466
    %v4468 = vsel %vm627, %v4467, %v4463
    %v4469 = vlaneseq
    %v4470 = vshrl.u32 %v4469, 7
    %v4471 = vsub.s32 %v629, %v4470
    %v4472 = vrot.slane %v4437, %v4471
    %v4473 = vsel %vm634, %v4472, %v4468
    %v4474 = vlaneseq
    %v4475 = vshrl.u32 %v4474, 7
    %v4476 = vsub.s32 %v636, %v4475
    %v4477 = vrot.slane %v4440, %v4476
    %v4478 = vsel %vm641, %v4477, %v4473
    %v4479 = vsel %vm662, %v4478, %v4459
    %v4481 = vmul.f32 %v4097, %v4479
    %4483 = vrot.lane.b32.xlu0 %v4481, 64
    %v4484 = vpop.permute.xlu0 %4483
    %v4486 = vsel %vm487, %v4484, 0.0
    %4487 = vadd.xlane.f32.xlu0 %v4486
    %v4488 = vpop.xlane.xlu0 %4487
    %v4489 = vmul.f32 %v4488, %v673
    %v4490 = vsub.f32 %v4481, %v4489
    %v4491 = vmul.f32 %v4490, %v4490
    %4493 = vrot.lane.b32.xlu0 %v4491, 64
    %v4494 = vpop.permute.xlu0 %4493
    %v4496 = vsel %vm487, %v4494, 0.0
    %4497 = vadd.xlane.f32.xlu0 %v4496
    %v4498 = vpop.xlane.xlu0 %4497
    %v4499 = vmul.f32 %v4498, %v673
    %v4500 = vadd.f32 %v4499, 1e-05
    %v4501 = vrsqrt.pop %v4500
    %v4502 = vmul.f32 %v4490, %v4501
    %v4503 = vmul.f32 %v4502, %v694
    %v4504 = vadd.f32 %v4503, %v703
    %v4505 = vpack.c.bf16 %v4504, %v4504
    %4507 = vrot.lane.b32.xlu0 %v4505, 64
    %v4508 = vpop.permute.xlu0 %4507
    %v4510 = vsel %vm537, %v4508, 0
    %4512 = vmatprep.subr.bf16.mxu0 %v734
    %4513 = vmatpush1.bf16.msra.mxu0 %v733
    %4514 = vmatprep.subr.bf16.mxu0 %v736
    %4515 = vmatpush1.bf16.msra.mxu0 %v735
    %4516 = vmatprep.subr.bf16.mxu0 0
    %4517 = vmatpush1.bf16.msra.mxu0 0
    %4518 = vmatprep.subr.bf16.mxu0 0
    %4519 = vmatpush1.bf16.msra.mxu0 0
    %4520 = vmatprep.subr.bf16.mxu0 0
    %4521 = vmatpush1.bf16.msra.mxu0 0
    %4522 = vmatprep.subr.bf16.mxu0 0
    %4523 = vmatpush1.bf16.msra.mxu0 0
    %4524 = vmatprep.subr.bf16.mxu0 0
    %4525 = vmatpush1.bf16.msra.mxu0 0
    %4526 = vmatprep.subr.bf16.mxu0 0
    %4527 = vmatpush1.bf16.msra.mxu0 0
    %4528 = vmatprep.subr.bf16.mxu0 0
    %4529 = vmatpush1.bf16.msra.mxu0 0
    %4530 = vmatprep.subr.bf16.mxu0 0
    %4531 = vmatpush1.bf16.msra.mxu0 0
    %4532 = vmatprep.subr.bf16.mxu0 0
    %4533 = vmatpush1.bf16.msra.mxu0 0
    %4534 = vmatprep.subr.bf16.mxu0 0
    %4535 = vmatpush1.bf16.msra.mxu0 0
    %4536 = vmatprep.subr.bf16.mxu0 0
    %4537 = vmatpush1.bf16.msra.mxu0 0
    %4538 = vmatprep.subr.bf16.mxu0 0
    %4539 = vmatpush1.bf16.msra.mxu0 0
    %4540 = vmatprep.subr.bf16.mxu0 0
    %4541 = vmatpush1.bf16.msra.mxu0 0
    %4542 = vmatprep.subr.bf16.mxu0 0
    %4543 = vmatpush1.bf16.msra.mxu0 0
    %4544 = vmatprep.mubr.bf16.mxu0 0
    %4545 = vmatmul.mubr.bf16.gmra.mrb[0].mxu0 %v4510
    %v4546 = vpop.f32.mrb[0].mxu0
    %v4547 = vadd.f32 %v711, %v4546
    %v4548 = vpop.f32.mrb[0].mxu0
    %v4549 = vadd.f32 %v715, %v4548
    %v4550 = vpop.f32.mrb[0].mxu0
    %v4551 = vpop.f32.mrb[0].mxu0
    %4552 = vdwg.mxu0
    %v4553 = vmax.f32 %v4547, -100.0
    %v4554 = vmin.f32 %v4553, 100.0
    %v4555 = vmul.f32 %v4554, 1.442695
    %v4556 = vpow.pop %v4555
    %v4557 = vxor.u32 %v4554, 2147483648
    %v4558 = vmul.f32 %v4557, 1.442695
    %v4559 = vpow.pop %v4558
    %v4560 = vadd.f32 %v4559, 1.0
    %v4561 = vrcp.pop %v4560
    %v4562 = vmul.f32 1.0, %v4561
    %v4563 = vmax.f32 %v4554, -18.420681
    %v4564 = vmax.f32 %v4562, 1e-08
    %v4565 = vlog2.pop %v4564
    %v4566 = vmul.f32 %v4565, 0.6931472
    %v4567 = vadd.f32 %v4566, %v4107
    %4569 = vrot.lane.b32.xlu0 %v4563, 32
    %v4570 = vpop.permute.xlu0 %4569
    %v4572 = vmax.f32 %v4567, %v4570
    %4574 = vrot.lane.b32.xlu0 %v4572, 96
    %v4575 = vpop.permute.xlu0 %4574
    %v4577 = vsub.f32 %v4556, %v4575
    %v4578 = vmin.f32 %v4577, 20.0
    %v4579 = vmul.f32 %v4578, 1.442695
    %v4580 = vpow.pop %v4579
    %v4581 = vlaneseq
    %v4582 = vshrl.u32 %v4581, 7
    %v4583 = vsub.s32 0, %v4582
    %v4584 = vrot.slane %v4549, %v4583
    %s4586 = sor.u32 256, 32
    %4587 = vbcast.lane.b32.xlu0 %v4584, %s4586
    %v4588 = vpop.permute.xlu0 %4587
    %s4590 = sor.u32 256, 40
    %4591 = vbcast.lane.b32.xlu0 %v4584, %s4590
    %v4592 = vpop.permute.xlu0 %4591
    %s4594 = sor.u32 256, 48
    %4595 = vbcast.lane.b32.xlu0 %v4584, %s4594
    %v4596 = vpop.permute.xlu0 %4595
    %s4598 = sor.u32 256, 56
    %4599 = vbcast.lane.b32.xlu0 %v4584, %s4598
    %v4600 = vpop.permute.xlu0 %4599
    %v4601 = vlaneseq
    %v4602 = vshrl.u32 %v4601, 7
    %v4603 = vsub.s32 1, %v4602
    %v4604 = vrot.slane %v4549, %v4603
    %s4606 = sor.u32 256, 32
    %4607 = vbcast.lane.b32.xlu0 %v4604, %s4606
    %v4608 = vpop.permute.xlu0 %4607
    %s4610 = sor.u32 256, 40
    %4611 = vbcast.lane.b32.xlu0 %v4604, %s4610
    %v4612 = vpop.permute.xlu0 %4611
    %s4614 = sor.u32 256, 48
    %4615 = vbcast.lane.b32.xlu0 %v4604, %s4614
    %v4616 = vpop.permute.xlu0 %4615
    %s4618 = sor.u32 256, 56
    %4619 = vbcast.lane.b32.xlu0 %v4604, %s4618
    %v4620 = vpop.permute.xlu0 %4619
    %v4623 = vunpack.c.l.s4 1966171168
    %v4624 = vunpack.c.0.s8 %v4623
    %v4625 = vlaneseq
    %v4626 = vshrl.u32 %v4625, 7
    %v4627 = vsub.s32 %v4624, %v4626
    %v4628 = vrot.slane %v4549, %v4627
    %v4629 = vcombine.high %v4628, %v4628
    %v4631 = vunpack.c.l.s4 1966171168
    %v4632 = vunpack.c.0.s8 %v4631
    %v4633 = vlaneseq
    %v4634 = vshrl.u32 %v4633, 7
    %v4635 = vsub.s32 %v4632, %v4634
    %v4636 = vrot.slane %v4628, %v4635
    %v4638 = vunpack.c.l.s4 1966171168
    %v4639 = vunpack.c.0.s8 %v4638
    %v4640 = vlaneseq
    %v4641 = vshrl.u32 %v4640, 7
    %v4642 = vsub.s32 %v4639, %v4641
    %v4643 = vrot.slane %v4629, %v4642
    %v4644 = vlaneseq
    %v4645 = vshrl.u32 %v4644, 7
    %v4646 = vsub.s32 0, %v4645
    %v4647 = vrot.slane %v4636, %v4646
    %v4648 = vlaneseq
    %v4649 = vshrl.u32 %v4648, 7
    %v4650 = vsub.s32 0, %v4649
    %v4651 = vrot.slane %v4643, %v4650
    %v4654 = vmul.f32 %v4588, %v4647
    %v4655 = vmul.f32 %v4592, %v4647
    %v4656 = vmul.f32 %v4596, %v4647
    %v4657 = vmul.f32 %v4600, %v4647
    %v4658 = vmul.f32 %v4608, %v4651
    %v4659 = vmul.f32 %v4612, %v4651
    %v4660 = vmul.f32 %v4616, %v4651
    %v4661 = vmul.f32 %v4620, %v4651
    %v4662 = vlaneseq
    %v4663 = vshrl.u32 %v4662, 7
    %v4664 = vsub.s32 0, %v4663
    %v4665 = vrot.slane %v4562, %v4664
    %s4667 = sor.u32 256, 32
    %4668 = vbcast.lane.b32.xlu0 %v4665, %s4667
    %v4669 = vpop.permute.xlu0 %4668
    %s4671 = sor.u32 256, 40
    %4672 = vbcast.lane.b32.xlu0 %v4665, %s4671
    %v4673 = vpop.permute.xlu0 %4672
    %s4675 = sor.u32 256, 48
    %4676 = vbcast.lane.b32.xlu0 %v4665, %s4675
    %v4677 = vpop.permute.xlu0 %4676
    %s4679 = sor.u32 256, 56
    %4680 = vbcast.lane.b32.xlu0 %v4665, %s4679
    %v4681 = vpop.permute.xlu0 %4680
    %v4682 = vlaneseq
    %v4683 = vshrl.u32 %v4682, 7
    %v4684 = vsub.s32 1, %v4683
    %v4685 = vrot.slane %v4562, %v4684
    %s4687 = sor.u32 256, 32
    %4688 = vbcast.lane.b32.xlu0 %v4685, %s4687
    %v4689 = vpop.permute.xlu0 %4688
    %s4691 = sor.u32 256, 40
    %4692 = vbcast.lane.b32.xlu0 %v4685, %s4691
    %v4693 = vpop.permute.xlu0 %4692
    %s4695 = sor.u32 256, 48
    %4696 = vbcast.lane.b32.xlu0 %v4685, %s4695
    %v4697 = vpop.permute.xlu0 %4696
    %s4699 = sor.u32 256, 56
    %4700 = vbcast.lane.b32.xlu0 %v4685, %s4699
    %v4701 = vpop.permute.xlu0 %4700
    %v4702 = vmul.f32 %v4669, %v4291
    %v4703 = vmul.f32 %v4673, %v4292
    %v4704 = vmul.f32 %v4677, %v4293
    %v4705 = vmul.f32 %v4681, %v4294
    %v4706 = vmul.f32 %v4689, %v4295
    %v4707 = vmul.f32 %v4693, %v4296
    %v4708 = vmul.f32 %v4697, %v4297
    %v4709 = vmul.f32 %v4701, %v4298
    %v4710 = vlaneseq
    %v4711 = vshrl.u32 %v4710, 7
    %v4712 = vsub.s32 0, %v4711
    %v4713 = vrot.slane %v4580, %v4712
    %4715 = vbcast.lane.b32.xlu0 %v4713, 256
    %v4716 = vpop.permute.xlu0 %4715
    %s4718 = sor.u32 256, 8
    %4719 = vbcast.lane.b32.xlu0 %v4713, %s4718
    %v4720 = vpop.permute.xlu0 %4719
    %s4722 = sor.u32 256, 16
    %4723 = vbcast.lane.b32.xlu0 %v4713, %s4722
    %v4724 = vpop.permute.xlu0 %4723
    %s4726 = sor.u32 256, 24
    %4727 = vbcast.lane.b32.xlu0 %v4713, %s4726
    %v4728 = vpop.permute.xlu0 %4727
    %v4729 = vlaneseq
    %v4730 = vshrl.u32 %v4729, 7
    %v4731 = vsub.s32 1, %v4730
    %v4732 = vrot.slane %v4580, %v4731
    %4734 = vbcast.lane.b32.xlu0 %v4732, 256
    %v4735 = vpop.permute.xlu0 %4734
    %s4737 = sor.u32 256, 8
    %4738 = vbcast.lane.b32.xlu0 %v4732, %s4737
    %v4739 = vpop.permute.xlu0 %4738
    %s4741 = sor.u32 256, 16
    %4742 = vbcast.lane.b32.xlu0 %v4732, %s4741
    %v4743 = vpop.permute.xlu0 %4742
    %s4745 = sor.u32 256, 24
    %4746 = vbcast.lane.b32.xlu0 %v4732, %s4745
    %v4747 = vpop.permute.xlu0 %4746
    %v4748 = vmul.f32 %v4716, %v4654
    %v4749 = vmul.f32 %v4720, %v4655
    %v4750 = vmul.f32 %v4724, %v4656
    %v4751 = vmul.f32 %v4728, %v4657
    %v4752 = vmul.f32 %v4735, %v4658
    %v4753 = vmul.f32 %v4739, %v4659
    %v4754 = vmul.f32 %v4743, %v4660
    %v4755 = vmul.f32 %v4747, %v4661
    %v4756 = vadd.f32 %v4702, %v4748
    %v4757 = vadd.f32 %v4703, %v4749
    %v4758 = vadd.f32 %v4704, %v4750
    %v4759 = vadd.f32 %v4705, %v4751
    %v4760 = vadd.f32 %v4706, %v4752
    %v4761 = vadd.f32 %v4707, %v4753
    %v4762 = vadd.f32 %v4708, %v4754
    %v4763 = vadd.f32 %v4709, %v4755
    %v4764 = vmul.f32 %v4562, %v4305
    %v4765 = vmul.f32 %v4580, %v4549
    %4767 = vrot.lane.b32.xlu0 %v4765, 32
    %v4768 = vpop.permute.xlu0 %4767
    %v4770 = vadd.f32 %v4764, %v4768
    %4772 = vrot.lane.b32.xlu0 %v4547, 64
    %v4773 = vpop.permute.xlu0 %4772
    %v4775 = vmul.f32 %v4770, %v4773
    %4777 = vrot.lane.b32.xlu0 %v4775, 96
    %v4778 = vpop.permute.xlu0 %4777
    %v4780 = vsel %vm487, %v4778, 0.0
    %4781 = vadd.xlane.f32.xlu0 %v4780
    %v4782 = vpop.xlane.xlu0 %4781
    %v4783 = vand.u32 2147483647, %v4782
    %v4784 = vmax.f32 %v4783, 1.0
    %v4786 = vunpack.c.l.s4 1966171168
    %v4787 = vunpack.c.0.s8 %v4786
    %v4788 = vlaneseq
    %v4789 = vshrl.u32 %v4788, 7
    %v4790 = vsub.s32 %v4787, %v4789
    %v4791 = vrot.slane %v4547, %v4790
    %v4792 = vcombine.high %v4791, %v4791
    %v4794 = vunpack.c.l.s4 1966171168
    %v4795 = vunpack.c.0.s8 %v4794
    %v4796 = vlaneseq
    %v4797 = vshrl.u32 %v4796, 7
    %v4798 = vsub.s32 %v4795, %v4797
    %v4799 = vrot.slane %v4791, %v4798
    %v4801 = vunpack.c.l.s4 1966171168
    %v4802 = vunpack.c.0.s8 %v4801
    %v4803 = vlaneseq
    %v4804 = vshrl.u32 %v4803, 7
    %v4805 = vsub.s32 %v4802, %v4804
    %v4806 = vrot.slane %v4792, %v4805
    %v4807 = vlaneseq
    %v4808 = vshrl.u32 %v4807, 7
    %v4809 = vsub.s32 0, %v4808
    %v4810 = vrot.slane %v4799, %v4809
    %v4811 = vlaneseq
    %v4812 = vshrl.u32 %v4811, 7
    %v4813 = vsub.s32 0, %v4812
    %v4814 = vrot.slane %v4806, %v4813
    %4815 = vrot.lane.b32.xlu0 %v4810, 32
    %v4816 = vpop.permute.xlu0 %4815
    %4817 = vrot.lane.b32.xlu0 %v4814, 32
    %v4818 = vpop.permute.xlu0 %4817
    %v4821 = vmul.f32 %v4756, %v4816
    %v4822 = vmul.f32 %v4757, %v4816
    %v4823 = vmul.f32 %v4758, %v4816
    %v4824 = vmul.f32 %v4759, %v4816
    %v4825 = vmul.f32 %v4760, %v4818
    %v4826 = vmul.f32 %v4761, %v4818
    %v4827 = vmul.f32 %v4762, %v4818
    %v4828 = vmul.f32 %v4763, %v4818
    %v4829 = vsel %vm537, %v4821, 0.0
    %4830 = vadd.xlane.f32.xlu0 %v4829
    %v4831 = vpop.xlane.xlu0 %4830
    %v4832 = vsel %vm537, %v4822, 0.0
    %4833 = vadd.xlane.f32.xlu0 %v4832
    %v4834 = vpop.xlane.xlu0 %4833
    %v4835 = vsel %vm537, %v4823, 0.0
    %4836 = vadd.xlane.f32.xlu0 %v4835
    %v4837 = vpop.xlane.xlu0 %4836
    %v4838 = vsel %vm537, %v4824, 0.0
    %4839 = vadd.xlane.f32.xlu0 %v4838
    %v4840 = vpop.xlane.xlu0 %4839
    %v4841 = vsel %vm537, %v4825, 0.0
    %4842 = vadd.xlane.f32.xlu0 %v4841
    %v4843 = vpop.xlane.xlu0 %4842
    %v4844 = vsel %vm537, %v4826, 0.0
    %4845 = vadd.xlane.f32.xlu0 %v4844
    %v4846 = vpop.xlane.xlu0 %4845
    %v4847 = vsel %vm537, %v4827, 0.0
    %4848 = vadd.xlane.f32.xlu0 %v4847
    %v4849 = vpop.xlane.xlu0 %4848
    %v4850 = vsel %vm537, %v4828, 0.0
    %4851 = vadd.xlane.f32.xlu0 %v4850
    %v4852 = vpop.xlane.xlu0 %4851
    %v4854 = vlaneseq
    %v4855 = vshrl.u32 %v4854, 7
    %v4856 = vsub.s32 0, %v4855
    %v4857 = vrot.slane %v4784, %v4856
    %v4858 = vlaneseq
    %v4859 = vshrl.u32 %v4858, 7
    %v4860 = vsub.s32 1, %v4859
    %v4861 = vrot.slane %v4784, %v4860
    %v4864 = vrcp.pop %v4857
    %v4865 = vmul.f32 %v4831, %v4864
    %v4866 = vmul.f32 %v4834, %v4864
    %v4867 = vmul.f32 %v4837, %v4864
    %v4868 = vmul.f32 %v4840, %v4864
    %v4869 = vrcp.pop %v4861
    %v4870 = vmul.f32 %v4843, %v4869
    %v4871 = vmul.f32 %v4846, %v4869
    %v4872 = vmul.f32 %v4849, %v4869
    %v4873 = vmul.f32 %v4852, %v4869
    %4882 = vset.pattern.permute.xlu0 0
    %4883 = vperm.xlu0 %4882, %v4865
    %v4884 = vpop.permute.xlu0 %4883
    %4885 = vset.pattern.permute.xlu0 0
    %4886 = vperm.xlu0 %4885, %v4866
    %v4887 = vpop.permute.xlu0 %4886
    %4888 = vset.pattern.permute.xlu0 0
    %4889 = vperm.xlu0 %4888, %v4867
    %v4890 = vpop.permute.xlu0 %4889
    %4891 = vset.pattern.permute.xlu0 0
    %4892 = vperm.xlu0 %4891, %v4868
    %v4893 = vpop.permute.xlu0 %4892
    %4894 = vset.pattern.permute.xlu0 0
    %4895 = vperm.xlu0 %4894, %v4870
    %v4896 = vpop.permute.xlu0 %4895
    %4897 = vset.pattern.permute.xlu0 0
    %4898 = vperm.xlu0 %4897, %v4871
    %v4899 = vpop.permute.xlu0 %4898
    %4900 = vset.pattern.permute.xlu0 0
    %4901 = vperm.xlu0 %4900, %v4872
    %v4902 = vpop.permute.xlu0 %4901
    %4903 = vset.pattern.permute.xlu0 0
    %4904 = vperm.xlu0 %4903, %v4873
    %v4905 = vpop.permute.xlu0 %4904
    %v4906 = vlaneseq
    %v4907 = vshrl.u32 %v4906, 7
    %v4908 = vsub.s32 %v617, %v4907
    %v4909 = vrot.slane %v4884, %v4908
    %v4910 = vlaneseq
    %v4911 = vshrl.u32 %v4910, 7
    %v4912 = vsub.s32 %v622, %v4911
    %v4913 = vrot.slane %v4887, %v4912
    %v4914 = vsel %vm627, %v4913, %v4909
    %v4915 = vlaneseq
    %v4916 = vshrl.u32 %v4915, 7
    %v4917 = vsub.s32 %v629, %v4916
    %v4918 = vrot.slane %v4890, %v4917
    %v4919 = vsel %vm634, %v4918, %v4914
    %v4920 = vlaneseq
    %v4921 = vshrl.u32 %v4920, 7
    %v4922 = vsub.s32 %v636, %v4921
    %v4923 = vrot.slane %v4893, %v4922
    %v4924 = vsel %vm641, %v4923, %v4919
    %v4925 = vlaneseq
    %v4926 = vshrl.u32 %v4925, 7
    %v4927 = vsub.s32 %v617, %v4926
    %v4928 = vrot.slane %v4896, %v4927
    %v4929 = vlaneseq
    %v4930 = vshrl.u32 %v4929, 7
    %v4931 = vsub.s32 %v622, %v4930
    %v4932 = vrot.slane %v4899, %v4931
    %v4933 = vsel %vm627, %v4932, %v4928
    %v4934 = vlaneseq
    %v4935 = vshrl.u32 %v4934, 7
    %v4936 = vsub.s32 %v629, %v4935
    %v4937 = vrot.slane %v4902, %v4936
    %v4938 = vsel %vm634, %v4937, %v4933
    %v4939 = vlaneseq
    %v4940 = vshrl.u32 %v4939, 7
    %v4941 = vsub.s32 %v636, %v4940
    %v4942 = vrot.slane %v4905, %v4941
    %v4943 = vsel %vm641, %v4942, %v4938
    %v4944 = vsel %vm662, %v4943, %v4924
    %v4946 = vmul.f32 %v4562, %v4944
    %v4947 = vpack.c.bf16 %v4481, %v4481
    %v4948 = vpack.c.bf16 %v4946, %v4946
    %4950 = vrot.lane.b32.xlu0 %v4948, 64
    %v4951 = vpop.permute.xlu0 %4950
    %v4953 = vsel %vm537, %v4951, 0
    %4955 = vmatprep.subr.bf16.mxu0 0
    %4956 = vmatpush1.bf16.msra.mxu0 %v1192
    %4957 = vmatprep.subr.bf16.mxu0 0
    %4958 = vmatpush1.bf16.msra.mxu0 %v1193
    %4959 = vmatprep.subr.bf16.mxu0 0
    %4960 = vmatpush1.bf16.msra.mxu0 0
    %4961 = vmatprep.subr.bf16.mxu0 0
    %4962 = vmatpush1.bf16.msra.mxu0 0
    %4963 = vmatprep.subr.bf16.mxu0 0
    %4964 = vmatpush1.bf16.msra.mxu0 0
    %4965 = vmatprep.subr.bf16.mxu0 0
    %4966 = vmatpush1.bf16.msra.mxu0 0
    %4967 = vmatprep.subr.bf16.mxu0 0
    %4968 = vmatpush1.bf16.msra.mxu0 0
    %4969 = vmatprep.subr.bf16.mxu0 0
    %4970 = vmatpush1.bf16.msra.mxu0 0
    %4971 = vmatprep.subr.bf16.mxu0 0
    %4972 = vmatpush1.bf16.msra.mxu0 0
    %4973 = vmatprep.subr.bf16.mxu0 0
    %4974 = vmatpush1.bf16.msra.mxu0 0
    %4975 = vmatprep.subr.bf16.mxu0 0
    %4976 = vmatpush1.bf16.msra.mxu0 0
    %4977 = vmatprep.subr.bf16.mxu0 0
    %4978 = vmatpush1.bf16.msra.mxu0 0
    %4979 = vmatprep.subr.bf16.mxu0 0
    %4980 = vmatpush1.bf16.msra.mxu0 0
    %4981 = vmatprep.subr.bf16.mxu0 0
    %4982 = vmatpush1.bf16.msra.mxu0 0
    %4983 = vmatprep.subr.bf16.mxu0 0
    %4984 = vmatpush1.bf16.msra.mxu0 0
    %4985 = vmatprep.subr.bf16.mxu0 0
    %4986 = vmatpush1.bf16.msra.mxu0 0
    %4987 = vmatprep.mubr.bf16.mxu0 0
    %4988 = vmatmul.mubr.bf16.gmra.mrb[0].mxu0 %v4953
    %v4989 = vpop.f32.mrb[0].mxu0
    %v4990 = vadd.f32 0.0, %v4989
    %v4991 = vpop.f32.mrb[0].mxu0
    %v4992 = vpop.f32.mrb[0].mxu0
    %v4993 = vpop.f32.mrb[0].mxu0
    %4994 = vdwg.mxu0
    %4996 = vrot.lane.b32.xlu0 %v4947, 64
    %v4997 = vpop.permute.xlu0 %4996
    %v4999 = vsel %vm537, %v4997, 0
    %5001 = vmatprep.subr.bf16.mxu0 0
    %5002 = vmatpush1.bf16.msra.mxu0 %v1250
    %5003 = vmatprep.subr.bf16.mxu0 0
    %5004 = vmatpush1.bf16.msra.mxu0 %v1251
    %5005 = vmatprep.subr.bf16.mxu0 0
    %5006 = vmatpush1.bf16.msra.mxu0 0
    %5007 = vmatprep.subr.bf16.mxu0 0
    %5008 = vmatpush1.bf16.msra.mxu0 0
    %5009 = vmatprep.subr.bf16.mxu0 0
    %5010 = vmatpush1.bf16.msra.mxu0 0
    %5011 = vmatprep.subr.bf16.mxu0 0
    %5012 = vmatpush1.bf16.msra.mxu0 0
    %5013 = vmatprep.subr.bf16.mxu0 0
    %5014 = vmatpush1.bf16.msra.mxu0 0
    %5015 = vmatprep.subr.bf16.mxu0 0
    %5016 = vmatpush1.bf16.msra.mxu0 0
    %5017 = vmatprep.subr.bf16.mxu0 0
    %5018 = vmatpush1.bf16.msra.mxu0 0
    %5019 = vmatprep.subr.bf16.mxu0 0
    %5020 = vmatpush1.bf16.msra.mxu0 0
    %5021 = vmatprep.subr.bf16.mxu0 0
    %5022 = vmatpush1.bf16.msra.mxu0 0
    %5023 = vmatprep.subr.bf16.mxu0 0
    %5024 = vmatpush1.bf16.msra.mxu0 0
    %5025 = vmatprep.subr.bf16.mxu0 0
    %5026 = vmatpush1.bf16.msra.mxu0 0
    %5027 = vmatprep.subr.bf16.mxu0 0
    %5028 = vmatpush1.bf16.msra.mxu0 0
    %5029 = vmatprep.subr.bf16.mxu0 0
    %5030 = vmatpush1.bf16.msra.mxu0 0
    %5031 = vmatprep.subr.bf16.mxu0 0
    %5032 = vmatpush1.bf16.msra.mxu0 0
    %5033 = vmatprep.mubr.bf16.mxu0 0
    %5034 = vmatmul.mubr.bf16.gmra.mrb[0].mxu0 %v4999
    %v5035 = vpop.f32.mrb[0].mxu0
    %v5036 = vadd.f32 %v4990, %v5035
    %v5037 = vpop.f32.mrb[0].mxu0
    %v5038 = vpop.f32.mrb[0].mxu0
    %v5039 = vpop.f32.mrb[0].mxu0
    %5040 = vdwg.mxu0
    %v5041 = vadd.f32 %v5036, %v1301
    %5043 = vrot.lane.b32.xlu0 %v4946, 64
    %v5044 = vpop.permute.xlu0 %5043
    %v5046 = vadd.f32 %v5041, %v5044
    %s5047 = scalar_lea.vmem [#allocation13], 8
    %5048 = vst.msk [vmem:[%s5047] sm:$0x3] %vm487, %v5046
    %v5049 = vrot.slane %v4572, 6
    %v5051 = vadd.f32 %v4101, %v5049
    %v5052 = vmax.f32 %v5051, %v4105
    %5054 = vrot.lane.b32.xlu0 %v5052, 96
    %v5055 = vpop.permute.xlu0 %5054
    %v5057 = vsub.f32 %v4091, %v5055
    %v5058 = vmin.f32 %v5057, 20.0
    %v5059 = vmul.f32 %v5058, 1.442695
    %v5060 = vpow.pop %v5059
    %v5061 = vlaneseq
    %v5062 = vshrl.u32 %v5061, 7
    %v5063 = vsub.s32 2, %v5062
    %v5064 = vrot.slane %v224, %v5063
    %s5066 = sor.u32 256, 32
    %5067 = vbcast.lane.b32.xlu0 %v5064, %s5066
    %v5068 = vpop.permute.xlu0 %5067
    %s5070 = sor.u32 256, 40
    %5071 = vbcast.lane.b32.xlu0 %v5064, %s5070
    %v5072 = vpop.permute.xlu0 %5071
    %s5074 = sor.u32 256, 48
    %5075 = vbcast.lane.b32.xlu0 %v5064, %s5074
    %v5076 = vpop.permute.xlu0 %5075
    %s5078 = sor.u32 256, 56
    %5079 = vbcast.lane.b32.xlu0 %v5064, %s5078
    %v5080 = vpop.permute.xlu0 %5079
    %v5081 = vlaneseq
    %v5082 = vshrl.u32 %v5081, 7
    %v5083 = vsub.s32 3, %v5082
    %v5084 = vrot.slane %v224, %v5083
    %s5086 = sor.u32 256, 32
    %5087 = vbcast.lane.b32.xlu0 %v5084, %s5086
    %v5088 = vpop.permute.xlu0 %5087
    %s5090 = sor.u32 256, 40
    %5091 = vbcast.lane.b32.xlu0 %v5084, %s5090
    %v5092 = vpop.permute.xlu0 %5091
    %s5094 = sor.u32 256, 48
    %5095 = vbcast.lane.b32.xlu0 %v5084, %s5094
    %v5096 = vpop.permute.xlu0 %5095
    %s5098 = sor.u32 256, 56
    %5099 = vbcast.lane.b32.xlu0 %v5084, %s5098
    %v5100 = vpop.permute.xlu0 %5099
    %v5101 = vcombine.high %v4171, %v4171
    %v5102 = vcombine.high %v4178, %v4178
    %v5103 = vlaneseq
    %v5104 = vshrl.u32 %v5103, 7
    %v5105 = vsub.s32 0, %v5104
    %v5106 = vrot.slane %v5101, %v5105
    %v5107 = vlaneseq
    %v5108 = vshrl.u32 %v5107, 7
    %v5109 = vsub.s32 0, %v5108
    %v5110 = vrot.slane %v5102, %v5109
    %v5113 = vmul.f32 %v5068, %v5106
    %v5114 = vmul.f32 %v5072, %v5106
    %v5115 = vmul.f32 %v5076, %v5106
    %v5116 = vmul.f32 %v5080, %v5106
    %v5117 = vmul.f32 %v5088, %v5110
    %v5118 = vmul.f32 %v5092, %v5110
    %v5119 = vmul.f32 %v5096, %v5110
    %v5120 = vmul.f32 %v5100, %v5110
    %v5121 = vlaneseq
    %v5122 = vshrl.u32 %v5121, 7
    %v5123 = vsub.s32 2, %v5122
    %v5124 = vrot.slane %v4097, %v5123
    %s5126 = sor.u32 256, 32
    %5127 = vbcast.lane.b32.xlu0 %v5124, %s5126
    %v5128 = vpop.permute.xlu0 %5127
    %s5130 = sor.u32 256, 40
    %5131 = vbcast.lane.b32.xlu0 %v5124, %s5130
    %v5132 = vpop.permute.xlu0 %5131
    %s5134 = sor.u32 256, 48
    %5135 = vbcast.lane.b32.xlu0 %v5124, %s5134
    %v5136 = vpop.permute.xlu0 %5135
    %s5138 = sor.u32 256, 56
    %5139 = vbcast.lane.b32.xlu0 %v5124, %s5138
    %v5140 = vpop.permute.xlu0 %5139
    %v5141 = vlaneseq
    %v5142 = vshrl.u32 %v5141, 7
    %v5143 = vsub.s32 3, %v5142
    %v5144 = vrot.slane %v4097, %v5143
    %s5146 = sor.u32 256, 32
    %5147 = vbcast.lane.b32.xlu0 %v5144, %s5146
    %v5148 = vpop.permute.xlu0 %5147
    %s5150 = sor.u32 256, 40
    %5151 = vbcast.lane.b32.xlu0 %v5144, %s5150
    %v5152 = vpop.permute.xlu0 %5151
    %s5154 = sor.u32 256, 48
    %5155 = vbcast.lane.b32.xlu0 %v5144, %s5154
    %v5156 = vpop.permute.xlu0 %5155
    %s5158 = sor.u32 256, 56
    %5159 = vbcast.lane.b32.xlu0 %v5144, %s5158
    %v5160 = vpop.permute.xlu0 %5159
    %v5161 = vmul.f32 %v5128, %v4756
    %v5162 = vmul.f32 %v5132, %v4757
    %v5163 = vmul.f32 %v5136, %v4758
    %v5164 = vmul.f32 %v5140, %v4759
    %v5165 = vmul.f32 %v5148, %v4760
    %v5166 = vmul.f32 %v5152, %v4761
    %v5167 = vmul.f32 %v5156, %v4762
    %v5168 = vmul.f32 %v5160, %v4763
    %v5169 = vlaneseq
    %v5170 = vshrl.u32 %v5169, 7
    %v5171 = vsub.s32 2, %v5170
    %v5172 = vrot.slane %v5060, %v5171
    %5174 = vbcast.lane.b32.xlu0 %v5172, 256
    %v5175 = vpop.permute.xlu0 %5174
    %s5177 = sor.u32 256, 8
    %5178 = vbcast.lane.b32.xlu0 %v5172, %s5177
    %v5179 = vpop.permute.xlu0 %5178
    %s5181 = sor.u32 256, 16
    %5182 = vbcast.lane.b32.xlu0 %v5172, %s5181
    %v5183 = vpop.permute.xlu0 %5182
    %s5185 = sor.u32 256, 24
    %5186 = vbcast.lane.b32.xlu0 %v5172, %s5185
    %v5187 = vpop.permute.xlu0 %5186
    %v5188 = vlaneseq
    %v5189 = vshrl.u32 %v5188, 7
    %v5190 = vsub.s32 3, %v5189
    %v5191 = vrot.slane %v5060, %v5190
    %5193 = vbcast.lane.b32.xlu0 %v5191, 256
    %v5194 = vpop.permute.xlu0 %5193
    %s5196 = sor.u32 256, 8
    %5197 = vbcast.lane.b32.xlu0 %v5191, %s5196
    %v5198 = vpop.permute.xlu0 %5197
    %s5200 = sor.u32 256, 16
    %5201 = vbcast.lane.b32.xlu0 %v5191, %s5200
    %v5202 = vpop.permute.xlu0 %5201
    %s5204 = sor.u32 256, 24
    %5205 = vbcast.lane.b32.xlu0 %v5191, %s5204
    %v5206 = vpop.permute.xlu0 %5205
    %v5207 = vmul.f32 %v5175, %v5113
    %v5208 = vmul.f32 %v5179, %v5114
    %v5209 = vmul.f32 %v5183, %v5115
    %v5210 = vmul.f32 %v5187, %v5116
    %v5211 = vmul.f32 %v5194, %v5117
    %v5212 = vmul.f32 %v5198, %v5118
    %v5213 = vmul.f32 %v5202, %v5119
    %v5214 = vmul.f32 %v5206, %v5120
    %v5215 = vadd.f32 %v5161, %v5207
    %v5216 = vadd.f32 %v5162, %v5208
    %v5217 = vadd.f32 %v5163, %v5209
    %v5218 = vadd.f32 %v5164, %v5210
    %v5219 = vadd.f32 %v5165, %v5211
    %v5220 = vadd.f32 %v5166, %v5212
    %v5221 = vadd.f32 %v5167, %v5213
    %v5222 = vadd.f32 %v5168, %v5214
    %v5224 = vrot.slane %v4770, 6
    %v5226 = vmul.f32 %v4097, %v5224
    %v5227 = vmul.f32 %v5060, %v224
    %5229 = vrot.lane.b32.xlu0 %v5227, 32
    %v5230 = vpop.permute.xlu0 %5229
    %v5232 = vadd.f32 %v5226, %v5230
    %v5233 = vmul.f32 %v5232, %v4308
    %5235 = vrot.lane.b32.xlu0 %v5233, 96
    %v5236 = vpop.permute.xlu0 %5235
    %v5238 = vsel %vm1499, %v5236, 0.0
    %5239 = vadd.xlane.f32.xlu0 %v5238
    %v5240 = vpop.xlane.xlu0 %5239
    %v5241 = vand.u32 2147483647, %v5240
    %v5242 = vmax.f32 %v5241, 1.0
    %v5243 = vcombine.high %v4334, %v4334
    %v5244 = vcombine.high %v4341, %v4341
    %v5245 = vlaneseq
    %v5246 = vshrl.u32 %v5245, 7
    %v5247 = vsub.s32 0, %v5246
    %v5248 = vrot.slane %v5243, %v5247
    %v5249 = vlaneseq
    %v5250 = vshrl.u32 %v5249, 7
    %v5251 = vsub.s32 0, %v5250
    %v5252 = vrot.slane %v5244, %v5251
    %5253 = vrot.lane.b32.xlu0 %v5248, 32
    %v5254 = vpop.permute.xlu0 %5253
    %5255 = vrot.lane.b32.xlu0 %v5252, 32
    %v5256 = vpop.permute.xlu0 %5255
    %v5259 = vmul.f32 %v5215, %v5254
    %v5260 = vmul.f32 %v5216, %v5254
    %v5261 = vmul.f32 %v5217, %v5254
    %v5262 = vmul.f32 %v5218, %v5254
    %v5263 = vmul.f32 %v5219, %v5256
    %v5264 = vmul.f32 %v5220, %v5256
    %v5265 = vmul.f32 %v5221, %v5256
    %v5266 = vmul.f32 %v5222, %v5256
    %v5267 = vsel %vm537, %v5259, 0.0
    %5268 = vadd.xlane.f32.xlu0 %v5267
    %v5269 = vpop.xlane.xlu0 %5268
    %v5270 = vsel %vm537, %v5260, 0.0
    %5271 = vadd.xlane.f32.xlu0 %v5270
    %v5272 = vpop.xlane.xlu0 %5271
    %v5273 = vsel %vm537, %v5261, 0.0
    %5274 = vadd.xlane.f32.xlu0 %v5273
    %v5275 = vpop.xlane.xlu0 %5274
    %v5276 = vsel %vm537, %v5262, 0.0
    %5277 = vadd.xlane.f32.xlu0 %v5276
    %v5278 = vpop.xlane.xlu0 %5277
    %v5279 = vsel %vm537, %v5263, 0.0
    %5280 = vadd.xlane.f32.xlu0 %v5279
    %v5281 = vpop.xlane.xlu0 %5280
    %v5282 = vsel %vm537, %v5264, 0.0
    %5283 = vadd.xlane.f32.xlu0 %v5282
    %v5284 = vpop.xlane.xlu0 %5283
    %v5285 = vsel %vm537, %v5265, 0.0
    %5286 = vadd.xlane.f32.xlu0 %v5285
    %v5287 = vpop.xlane.xlu0 %5286
    %v5288 = vsel %vm537, %v5266, 0.0
    %5289 = vadd.xlane.f32.xlu0 %v5288
    %v5290 = vpop.xlane.xlu0 %5289
    %v5292 = vlaneseq
    %v5293 = vshrl.u32 %v5292, 7
    %v5294 = vsub.s32 2, %v5293
    %v5295 = vrot.slane %v5242, %v5294
    %v5296 = vlaneseq
    %v5297 = vshrl.u32 %v5296, 7
    %v5298 = vsub.s32 3, %v5297
    %v5299 = vrot.slane %v5242, %v5298
    %v5302 = vrcp.pop %v5295
    %v5303 = vmul.f32 %v5269, %v5302
    %v5304 = vmul.f32 %v5272, %v5302
    %v5305 = vmul.f32 %v5275, %v5302
    %v5306 = vmul.f32 %v5278, %v5302
    %v5307 = vrcp.pop %v5299
    %v5308 = vmul.f32 %v5281, %v5307
    %v5309 = vmul.f32 %v5284, %v5307
    %v5310 = vmul.f32 %v5287, %v5307
    %v5311 = vmul.f32 %v5290, %v5307
    %5320 = vset.pattern.permute.xlu0 0
    %5321 = vperm.xlu0 %5320, %v5303
    %v5322 = vpop.permute.xlu0 %5321
    %5323 = vset.pattern.permute.xlu0 0
    %5324 = vperm.xlu0 %5323, %v5304
    %v5325 = vpop.permute.xlu0 %5324
    %5326 = vset.pattern.permute.xlu0 0
    %5327 = vperm.xlu0 %5326, %v5305
    %v5328 = vpop.permute.xlu0 %5327
    %5329 = vset.pattern.permute.xlu0 0
    %5330 = vperm.xlu0 %5329, %v5306
    %v5331 = vpop.permute.xlu0 %5330
    %5332 = vset.pattern.permute.xlu0 0
    %5333 = vperm.xlu0 %5332, %v5308
    %v5334 = vpop.permute.xlu0 %5333
    %5335 = vset.pattern.permute.xlu0 0
    %5336 = vperm.xlu0 %5335, %v5309
    %v5337 = vpop.permute.xlu0 %5336
    %5338 = vset.pattern.permute.xlu0 0
    %5339 = vperm.xlu0 %5338, %v5310
    %v5340 = vpop.permute.xlu0 %5339
    %5341 = vset.pattern.permute.xlu0 0
    %5342 = vperm.xlu0 %5341, %v5311
    %v5343 = vpop.permute.xlu0 %5342
    %v5344 = vlaneseq
    %v5345 = vshrl.u32 %v5344, 7
    %v5346 = vsub.s32 %v617, %v5345
    %v5347 = vrot.slane %v5322, %v5346
    %v5348 = vlaneseq
    %v5349 = vshrl.u32 %v5348, 7
    %v5350 = vsub.s32 %v622, %v5349
    %v5351 = vrot.slane %v5325, %v5350
    %v5352 = vsel %vm627, %v5351, %v5347
    %v5353 = vlaneseq
    %v5354 = vshrl.u32 %v5353, 7
    %v5355 = vsub.s32 %v629, %v5354
    %v5356 = vrot.slane %v5328, %v5355
    %v5357 = vsel %vm634, %v5356, %v5352
    %v5358 = vlaneseq
    %v5359 = vshrl.u32 %v5358, 7
    %v5360 = vsub.s32 %v636, %v5359
    %v5361 = vrot.slane %v5331, %v5360
    %v5362 = vsel %vm641, %v5361, %v5357
    %v5363 = vlaneseq
    %v5364 = vshrl.u32 %v5363, 7
    %v5365 = vsub.s32 %v617, %v5364
    %v5366 = vrot.slane %v5334, %v5365
    %v5367 = vlaneseq
    %v5368 = vshrl.u32 %v5367, 7
    %v5369 = vsub.s32 %v622, %v5368
    %v5370 = vrot.slane %v5337, %v5369
    %v5371 = vsel %vm627, %v5370, %v5366
    %v5372 = vlaneseq
    %v5373 = vshrl.u32 %v5372, 7
    %v5374 = vsub.s32 %v629, %v5373
    %v5375 = vrot.slane %v5340, %v5374
    %v5376 = vsel %vm634, %v5375, %v5371
    %v5377 = vlaneseq
    %v5378 = vshrl.u32 %v5377, 7
    %v5379 = vsub.s32 %v636, %v5378
    %v5380 = vrot.slane %v5343, %v5379
    %v5381 = vsel %vm641, %v5380, %v5376
    %v5382 = vsel %vm1644, %v5381, %v5362
    %v5384 = vmul.f32 %v4097, %v5382
    %5386 = vrot.lane.b32.xlu0 %v5384, 64
    %v5387 = vpop.permute.xlu0 %5386
    %v5389 = vsel %vm1499, %v5387, 0.0
    %5390 = vadd.xlane.f32.xlu0 %v5389
    %v5391 = vpop.xlane.xlu0 %5390
    %v5392 = vmul.f32 %v5391, %v673
    %v5393 = vsub.f32 %v5384, %v5392
    %v5394 = vmul.f32 %v5393, %v5393
    %5396 = vrot.lane.b32.xlu0 %v5394, 64
    %v5397 = vpop.permute.xlu0 %5396
    %v5399 = vsel %vm1499, %v5397, 0.0
    %5400 = vadd.xlane.f32.xlu0 %v5399
    %v5401 = vpop.xlane.xlu0 %5400
    %v5402 = vmul.f32 %v5401, %v673
    %v5403 = vadd.f32 %v5402, 1e-05
    %v5404 = vrsqrt.pop %v5403
    %v5405 = vmul.f32 %v5393, %v5404
    %v5406 = vmul.f32 %v5405, %v694
    %v5407 = vadd.f32 %v5406, %v703
    %v5408 = vpack.c.bf16 %v5407, %v5407
    %v5410 = vrot.slane %v5408, 1
    %5411 = vrot.lane.b32.xlu0 %v5410, 64
    %v5412 = vpop.permute.xlu0 %5411
    %v5414 = vsel %vm537, %v5412, 0
    %5416 = vmatprep.subr.bf16.mxu0 %v734
    %5417 = vmatpush1.bf16.msra.mxu0 %v733
    %5418 = vmatprep.subr.bf16.mxu0 %v736
    %5419 = vmatpush1.bf16.msra.mxu0 %v735
    %5420 = vmatprep.subr.bf16.mxu0 0
    %5421 = vmatpush1.bf16.msra.mxu0 0
    %5422 = vmatprep.subr.bf16.mxu0 0
    %5423 = vmatpush1.bf16.msra.mxu0 0
    %5424 = vmatprep.subr.bf16.mxu0 0
    %5425 = vmatpush1.bf16.msra.mxu0 0
    %5426 = vmatprep.subr.bf16.mxu0 0
    %5427 = vmatpush1.bf16.msra.mxu0 0
    %5428 = vmatprep.subr.bf16.mxu0 0
    %5429 = vmatpush1.bf16.msra.mxu0 0
    %5430 = vmatprep.subr.bf16.mxu0 0
    %5431 = vmatpush1.bf16.msra.mxu0 0
    %5432 = vmatprep.subr.bf16.mxu0 0
    %5433 = vmatpush1.bf16.msra.mxu0 0
    %5434 = vmatprep.subr.bf16.mxu0 0
    %5435 = vmatpush1.bf16.msra.mxu0 0
    %5436 = vmatprep.subr.bf16.mxu0 0
    %5437 = vmatpush1.bf16.msra.mxu0 0
    %5438 = vmatprep.subr.bf16.mxu0 0
    %5439 = vmatpush1.bf16.msra.mxu0 0
    %5440 = vmatprep.subr.bf16.mxu0 0
    %5441 = vmatpush1.bf16.msra.mxu0 0
    %5442 = vmatprep.subr.bf16.mxu0 0
    %5443 = vmatpush1.bf16.msra.mxu0 0
    %5444 = vmatprep.subr.bf16.mxu0 0
    %5445 = vmatpush1.bf16.msra.mxu0 0
    %5446 = vmatprep.subr.bf16.mxu0 0
    %5447 = vmatpush1.bf16.msra.mxu0 0
    %5448 = vmatprep.mubr.bf16.mxu0 0
    %5449 = vmatmul.mubr.bf16.gmra.mrb[0].mxu0 %v5414
    %v5450 = vpop.f32.mrb[0].mxu0
    %v5451 = vadd.f32 %v711, %v5450
    %v5452 = vpop.f32.mrb[0].mxu0
    %v5453 = vadd.f32 %v715, %v5452
    %v5454 = vpop.f32.mrb[0].mxu0
    %v5455 = vpop.f32.mrb[0].mxu0
    %5456 = vdwg.mxu0
    %v5457 = vmax.f32 %v5451, -100.0
    %v5458 = vmin.f32 %v5457, 100.0
    %v5459 = vmul.f32 %v5458, 1.442695
    %v5460 = vpow.pop %v5459
    %v5461 = vxor.u32 %v5458, 2147483648
    %v5462 = vmul.f32 %v5461, 1.442695
    %v5463 = vpow.pop %v5462
    %v5464 = vadd.f32 %v5463, 1.0
    %v5465 = vrcp.pop %v5464
    %v5466 = vmul.f32 1.0, %v5465
    %v5467 = vmax.f32 %v5458, -18.420681
    %v5468 = vmax.f32 %v5466, 1e-08
    %v5469 = vlog2.pop %v5468
    %v5470 = vmul.f32 %v5469, 0.6931472
    %v5471 = vrot.slane %v5052, 2
    %v5473 = vadd.f32 %v5470, %v5471
    %5475 = vrot.lane.b32.xlu0 %v5467, 32
    %v5476 = vpop.permute.xlu0 %5475
    %v5478 = vmax.f32 %v5473, %v5476
    %5480 = vrot.lane.b32.xlu0 %v5478, 96
    %v5481 = vpop.permute.xlu0 %5480
    %v5483 = vsub.f32 %v5460, %v5481
    %v5484 = vmin.f32 %v5483, 20.0
    %v5485 = vmul.f32 %v5484, 1.442695
    %v5486 = vpow.pop %v5485
    %v5487 = vlaneseq
    %v5488 = vshrl.u32 %v5487, 7
    %v5489 = vsub.s32 0, %v5488
    %v5490 = vrot.slane %v5453, %v5489
    %s5492 = sor.u32 256, 32
    %5493 = vbcast.lane.b32.xlu0 %v5490, %s5492
    %v5494 = vpop.permute.xlu0 %5493
    %s5496 = sor.u32 256, 40
    %5497 = vbcast.lane.b32.xlu0 %v5490, %s5496
    %v5498 = vpop.permute.xlu0 %5497
    %s5500 = sor.u32 256, 48
    %5501 = vbcast.lane.b32.xlu0 %v5490, %s5500
    %v5502 = vpop.permute.xlu0 %5501
    %s5504 = sor.u32 256, 56
    %5505 = vbcast.lane.b32.xlu0 %v5490, %s5504
    %v5506 = vpop.permute.xlu0 %5505
    %v5507 = vlaneseq
    %v5508 = vshrl.u32 %v5507, 7
    %v5509 = vsub.s32 1, %v5508
    %v5510 = vrot.slane %v5453, %v5509
    %s5512 = sor.u32 256, 32
    %5513 = vbcast.lane.b32.xlu0 %v5510, %s5512
    %v5514 = vpop.permute.xlu0 %5513
    %s5516 = sor.u32 256, 40
    %5517 = vbcast.lane.b32.xlu0 %v5510, %s5516
    %v5518 = vpop.permute.xlu0 %5517
    %s5520 = sor.u32 256, 48
    %5521 = vbcast.lane.b32.xlu0 %v5510, %s5520
    %v5522 = vpop.permute.xlu0 %5521
    %s5524 = sor.u32 256, 56
    %5525 = vbcast.lane.b32.xlu0 %v5510, %s5524
    %v5526 = vpop.permute.xlu0 %5525
    %v5529 = vunpack.c.l.s4 1966171168
    %v5530 = vunpack.c.0.s8 %v5529
    %v5531 = vlaneseq
    %v5532 = vshrl.u32 %v5531, 7
    %v5533 = vsub.s32 %v5530, %v5532
    %v5534 = vrot.slane %v5453, %v5533
    %v5535 = vcombine.high %v5534, %v5534
    %v5537 = vunpack.c.l.s4 1966171168
    %v5538 = vunpack.c.0.s8 %v5537
    %v5539 = vlaneseq
    %v5540 = vshrl.u32 %v5539, 7
    %v5541 = vsub.s32 %v5538, %v5540
    %v5542 = vrot.slane %v5534, %v5541
    %v5544 = vunpack.c.l.s4 1966171168
    %v5545 = vunpack.c.0.s8 %v5544
    %v5546 = vlaneseq
    %v5547 = vshrl.u32 %v5546, 7
    %v5548 = vsub.s32 %v5545, %v5547
    %v5549 = vrot.slane %v5535, %v5548
    %v5550 = vlaneseq
    %v5551 = vshrl.u32 %v5550, 7
    %v5552 = vsub.s32 0, %v5551
    %v5553 = vrot.slane %v5542, %v5552
    %v5554 = vlaneseq
    %v5555 = vshrl.u32 %v5554, 7
    %v5556 = vsub.s32 0, %v5555
    %v5557 = vrot.slane %v5549, %v5556
    %v5560 = vmul.f32 %v5494, %v5553
    %v5561 = vmul.f32 %v5498, %v5553
    %v5562 = vmul.f32 %v5502, %v5553
    %v5563 = vmul.f32 %v5506, %v5553
    %v5564 = vmul.f32 %v5514, %v5557
    %v5565 = vmul.f32 %v5518, %v5557
    %v5566 = vmul.f32 %v5522, %v5557
    %v5567 = vmul.f32 %v5526, %v5557
    %v5568 = vlaneseq
    %v5569 = vshrl.u32 %v5568, 7
    %v5570 = vsub.s32 0, %v5569
    %v5571 = vrot.slane %v5466, %v5570
    %s5573 = sor.u32 256, 32
    %5574 = vbcast.lane.b32.xlu0 %v5571, %s5573
    %v5575 = vpop.permute.xlu0 %5574
    %s5577 = sor.u32 256, 40
    %5578 = vbcast.lane.b32.xlu0 %v5571, %s5577
    %v5579 = vpop.permute.xlu0 %5578
    %s5581 = sor.u32 256, 48
    %5582 = vbcast.lane.b32.xlu0 %v5571, %s5581
    %v5583 = vpop.permute.xlu0 %5582
    %s5585 = sor.u32 256, 56
    %5586 = vbcast.lane.b32.xlu0 %v5571, %s5585
    %v5587 = vpop.permute.xlu0 %5586
    %v5588 = vlaneseq
    %v5589 = vshrl.u32 %v5588, 7
    %v5590 = vsub.s32 1, %v5589
    %v5591 = vrot.slane %v5466, %v5590
    %s5593 = sor.u32 256, 32
    %5594 = vbcast.lane.b32.xlu0 %v5591, %s5593
    %v5595 = vpop.permute.xlu0 %5594
    %s5597 = sor.u32 256, 40
    %5598 = vbcast.lane.b32.xlu0 %v5591, %s5597
    %v5599 = vpop.permute.xlu0 %5598
    %s5601 = sor.u32 256, 48
    %5602 = vbcast.lane.b32.xlu0 %v5591, %s5601
    %v5603 = vpop.permute.xlu0 %5602
    %s5605 = sor.u32 256, 56
    %5606 = vbcast.lane.b32.xlu0 %v5591, %s5605
    %v5607 = vpop.permute.xlu0 %5606
    %v5608 = vmul.f32 %v5575, %v5215
    %v5609 = vmul.f32 %v5579, %v5216
    %v5610 = vmul.f32 %v5583, %v5217
    %v5611 = vmul.f32 %v5587, %v5218
    %v5612 = vmul.f32 %v5595, %v5219
    %v5613 = vmul.f32 %v5599, %v5220
    %v5614 = vmul.f32 %v5603, %v5221
    %v5615 = vmul.f32 %v5607, %v5222
    %v5616 = vlaneseq
    %v5617 = vshrl.u32 %v5616, 7
    %v5618 = vsub.s32 0, %v5617
    %v5619 = vrot.slane %v5486, %v5618
    %5621 = vbcast.lane.b32.xlu0 %v5619, 256
    %v5622 = vpop.permute.xlu0 %5621
    %s5624 = sor.u32 256, 8
    %5625 = vbcast.lane.b32.xlu0 %v5619, %s5624
    %v5626 = vpop.permute.xlu0 %5625
    %s5628 = sor.u32 256, 16
    %5629 = vbcast.lane.b32.xlu0 %v5619, %s5628
    %v5630 = vpop.permute.xlu0 %5629
    %s5632 = sor.u32 256, 24
    %5633 = vbcast.lane.b32.xlu0 %v5619, %s5632
    %v5634 = vpop.permute.xlu0 %5633
    %v5635 = vlaneseq
    %v5636 = vshrl.u32 %v5635, 7
    %v5637 = vsub.s32 1, %v5636
    %v5638 = vrot.slane %v5486, %v5637
    %5640 = vbcast.lane.b32.xlu0 %v5638, 256
    %v5641 = vpop.permute.xlu0 %5640
    %s5643 = sor.u32 256, 8
    %5644 = vbcast.lane.b32.xlu0 %v5638, %s5643
    %v5645 = vpop.permute.xlu0 %5644
    %s5647 = sor.u32 256, 16
    %5648 = vbcast.lane.b32.xlu0 %v5638, %s5647
    %v5649 = vpop.permute.xlu0 %5648
    %s5651 = sor.u32 256, 24
    %5652 = vbcast.lane.b32.xlu0 %v5638, %s5651
    %v5653 = vpop.permute.xlu0 %5652
    %v5654 = vmul.f32 %v5622, %v5560
    %v5655 = vmul.f32 %v5626, %v5561
    %v5656 = vmul.f32 %v5630, %v5562
    %v5657 = vmul.f32 %v5634, %v5563
    %v5658 = vmul.f32 %v5641, %v5564
    %v5659 = vmul.f32 %v5645, %v5565
    %v5660 = vmul.f32 %v5649, %v5566
    %v5661 = vmul.f32 %v5653, %v5567
    %v5662 = vadd.f32 %v5608, %v5654
    %v5663 = vadd.f32 %v5609, %v5655
    %v5664 = vadd.f32 %v5610, %v5656
    %v5665 = vadd.f32 %v5611, %v5657
    %v5666 = vadd.f32 %v5612, %v5658
    %v5667 = vadd.f32 %v5613, %v5659
    %v5668 = vadd.f32 %v5614, %v5660
    %v5669 = vadd.f32 %v5615, %v5661
    %v5671 = vrot.slane %v5232, 2
    %v5673 = vmul.f32 %v5466, %v5671
    %v5674 = vmul.f32 %v5486, %v5453
    %5676 = vrot.lane.b32.xlu0 %v5674, 32
    %v5677 = vpop.permute.xlu0 %5676
    %v5679 = vadd.f32 %v5673, %v5677
    %5681 = vrot.lane.b32.xlu0 %v5451, 64
    %v5682 = vpop.permute.xlu0 %5681
    %v5684 = vmul.f32 %v5679, %v5682
    %5686 = vrot.lane.b32.xlu0 %v5684, 96
    %v5687 = vpop.permute.xlu0 %5686
    %v5689 = vsel %vm487, %v5687, 0.0
    %5690 = vadd.xlane.f32.xlu0 %v5689
    %v5691 = vpop.xlane.xlu0 %5690
    %v5692 = vand.u32 2147483647, %v5691
    %v5693 = vmax.f32 %v5692, 1.0
    %v5695 = vunpack.c.l.s4 1966171168
    %v5696 = vunpack.c.0.s8 %v5695
    %v5697 = vlaneseq
    %v5698 = vshrl.u32 %v5697, 7
    %v5699 = vsub.s32 %v5696, %v5698
    %v5700 = vrot.slane %v5451, %v5699
    %v5701 = vcombine.high %v5700, %v5700
    %v5703 = vunpack.c.l.s4 1966171168
    %v5704 = vunpack.c.0.s8 %v5703
    %v5705 = vlaneseq
    %v5706 = vshrl.u32 %v5705, 7
    %v5707 = vsub.s32 %v5704, %v5706
    %v5708 = vrot.slane %v5700, %v5707
    %v5710 = vunpack.c.l.s4 1966171168
    %v5711 = vunpack.c.0.s8 %v5710
    %v5712 = vlaneseq
    %v5713 = vshrl.u32 %v5712, 7
    %v5714 = vsub.s32 %v5711, %v5713
    %v5715 = vrot.slane %v5701, %v5714
    %v5716 = vlaneseq
    %v5717 = vshrl.u32 %v5716, 7
    %v5718 = vsub.s32 0, %v5717
    %v5719 = vrot.slane %v5708, %v5718
    %v5720 = vlaneseq
    %v5721 = vshrl.u32 %v5720, 7
    %v5722 = vsub.s32 0, %v5721
    %v5723 = vrot.slane %v5715, %v5722
    %5724 = vrot.lane.b32.xlu0 %v5719, 32
    %v5725 = vpop.permute.xlu0 %5724
    %5726 = vrot.lane.b32.xlu0 %v5723, 32
    %v5727 = vpop.permute.xlu0 %5726
    %v5730 = vmul.f32 %v5662, %v5725
    %v5731 = vmul.f32 %v5663, %v5725
    %v5732 = vmul.f32 %v5664, %v5725
    %v5733 = vmul.f32 %v5665, %v5725
    %v5734 = vmul.f32 %v5666, %v5727
    %v5735 = vmul.f32 %v5667, %v5727
    %v5736 = vmul.f32 %v5668, %v5727
    %v5737 = vmul.f32 %v5669, %v5727
    %v5738 = vsel %vm537, %v5730, 0.0
    %5739 = vadd.xlane.f32.xlu0 %v5738
    %v5740 = vpop.xlane.xlu0 %5739
    %v5741 = vsel %vm537, %v5731, 0.0
    %5742 = vadd.xlane.f32.xlu0 %v5741
    %v5743 = vpop.xlane.xlu0 %5742
    %v5744 = vsel %vm537, %v5732, 0.0
    %5745 = vadd.xlane.f32.xlu0 %v5744
    %v5746 = vpop.xlane.xlu0 %5745
    %v5747 = vsel %vm537, %v5733, 0.0
    %5748 = vadd.xlane.f32.xlu0 %v5747
    %v5749 = vpop.xlane.xlu0 %5748
    %v5750 = vsel %vm537, %v5734, 0.0
    %5751 = vadd.xlane.f32.xlu0 %v5750
    %v5752 = vpop.xlane.xlu0 %5751
    %v5753 = vsel %vm537, %v5735, 0.0
    %5754 = vadd.xlane.f32.xlu0 %v5753
    %v5755 = vpop.xlane.xlu0 %5754
    %v5756 = vsel %vm537, %v5736, 0.0
    %5757 = vadd.xlane.f32.xlu0 %v5756
    %v5758 = vpop.xlane.xlu0 %5757
    %v5759 = vsel %vm537, %v5737, 0.0
    %5760 = vadd.xlane.f32.xlu0 %v5759
    %v5761 = vpop.xlane.xlu0 %5760
    %v5763 = vlaneseq
    %v5764 = vshrl.u32 %v5763, 7
    %v5765 = vsub.s32 0, %v5764
    %v5766 = vrot.slane %v5693, %v5765
    %v5767 = vlaneseq
    %v5768 = vshrl.u32 %v5767, 7
    %v5769 = vsub.s32 1, %v5768
    %v5770 = vrot.slane %v5693, %v5769
    %v5773 = vrcp.pop %v5766
    %v5774 = vmul.f32 %v5740, %v5773
    %v5775 = vmul.f32 %v5743, %v5773
    %v5776 = vmul.f32 %v5746, %v5773
    %v5777 = vmul.f32 %v5749, %v5773
    %v5778 = vrcp.pop %v5770
    %v5779 = vmul.f32 %v5752, %v5778
    %v5780 = vmul.f32 %v5755, %v5778
    %v5781 = vmul.f32 %v5758, %v5778
    %v5782 = vmul.f32 %v5761, %v5778
    %5791 = vset.pattern.permute.xlu0 0
    %5792 = vperm.xlu0 %5791, %v5774
    %v5793 = vpop.permute.xlu0 %5792
    %5794 = vset.pattern.permute.xlu0 0
    %5795 = vperm.xlu0 %5794, %v5775
    %v5796 = vpop.permute.xlu0 %5795
    %5797 = vset.pattern.permute.xlu0 0
    %5798 = vperm.xlu0 %5797, %v5776
    %v5799 = vpop.permute.xlu0 %5798
    %5800 = vset.pattern.permute.xlu0 0
    %5801 = vperm.xlu0 %5800, %v5777
    %v5802 = vpop.permute.xlu0 %5801
    %5803 = vset.pattern.permute.xlu0 0
    %5804 = vperm.xlu0 %5803, %v5779
    %v5805 = vpop.permute.xlu0 %5804
    %5806 = vset.pattern.permute.xlu0 0
    %5807 = vperm.xlu0 %5806, %v5780
    %v5808 = vpop.permute.xlu0 %5807
    %5809 = vset.pattern.permute.xlu0 0
    %5810 = vperm.xlu0 %5809, %v5781
    %v5811 = vpop.permute.xlu0 %5810
    %5812 = vset.pattern.permute.xlu0 0
    %5813 = vperm.xlu0 %5812, %v5782
    %v5814 = vpop.permute.xlu0 %5813
    %v5815 = vlaneseq
    %v5816 = vshrl.u32 %v5815, 7
    %v5817 = vsub.s32 %v617, %v5816
    %v5818 = vrot.slane %v5793, %v5817
    %v5819 = vlaneseq
    %v5820 = vshrl.u32 %v5819, 7
    %v5821 = vsub.s32 %v622, %v5820
    %v5822 = vrot.slane %v5796, %v5821
    %v5823 = vsel %vm627, %v5822, %v5818
    %v5824 = vlaneseq
    %v5825 = vshrl.u32 %v5824, 7
    %v5826 = vsub.s32 %v629, %v5825
    %v5827 = vrot.slane %v5799, %v5826
    %v5828 = vsel %vm634, %v5827, %v5823
    %v5829 = vlaneseq
    %v5830 = vshrl.u32 %v5829, 7
    %v5831 = vsub.s32 %v636, %v5830
    %v5832 = vrot.slane %v5802, %v5831
    %v5833 = vsel %vm641, %v5832, %v5828
    %v5834 = vlaneseq
    %v5835 = vshrl.u32 %v5834, 7
    %v5836 = vsub.s32 %v617, %v5835
    %v5837 = vrot.slane %v5805, %v5836
    %v5838 = vlaneseq
    %v5839 = vshrl.u32 %v5838, 7
    %v5840 = vsub.s32 %v622, %v5839
    %v5841 = vrot.slane %v5808, %v5840
    %v5842 = vsel %vm627, %v5841, %v5837
    %v5843 = vlaneseq
    %v5844 = vshrl.u32 %v5843, 7
    %v5845 = vsub.s32 %v629, %v5844
    %v5846 = vrot.slane %v5811, %v5845
    %v5847 = vsel %vm634, %v5846, %v5842
    %v5848 = vlaneseq
    %v5849 = vshrl.u32 %v5848, 7
    %v5850 = vsub.s32 %v636, %v5849
    %v5851 = vrot.slane %v5814, %v5850
    %v5852 = vsel %vm641, %v5851, %v5847
    %v5853 = vsel %vm662, %v5852, %v5833
    %v5855 = vmul.f32 %v5466, %v5853
    %v5856 = vpack.c.bf16 %v5384, %v5384
    %v5857 = vpack.c.bf16 %v5855, %v5855
    %5859 = vrot.lane.b32.xlu0 %v5857, 64
    %v5860 = vpop.permute.xlu0 %5859
    %v5862 = vsel %vm537, %v5860, 0
    %5864 = vmatprep.subr.bf16.mxu0 0
    %5865 = vmatpush1.bf16.msra.mxu0 %v1192
    %5866 = vmatprep.subr.bf16.mxu0 0
    %5867 = vmatpush1.bf16.msra.mxu0 %v1193
    %5868 = vmatprep.subr.bf16.mxu0 0
    %5869 = vmatpush1.bf16.msra.mxu0 0
    %5870 = vmatprep.subr.bf16.mxu0 0
    %5871 = vmatpush1.bf16.msra.mxu0 0
    %5872 = vmatprep.subr.bf16.mxu0 0
    %5873 = vmatpush1.bf16.msra.mxu0 0
    %5874 = vmatprep.subr.bf16.mxu0 0
    %5875 = vmatpush1.bf16.msra.mxu0 0
    %5876 = vmatprep.subr.bf16.mxu0 0
    %5877 = vmatpush1.bf16.msra.mxu0 0
    %5878 = vmatprep.subr.bf16.mxu0 0
    %5879 = vmatpush1.bf16.msra.mxu0 0
    %5880 = vmatprep.subr.bf16.mxu0 0
    %5881 = vmatpush1.bf16.msra.mxu0 0
    %5882 = vmatprep.subr.bf16.mxu0 0
    %5883 = vmatpush1.bf16.msra.mxu0 0
    %5884 = vmatprep.subr.bf16.mxu0 0
    %5885 = vmatpush1.bf16.msra.mxu0 0
    %5886 = vmatprep.subr.bf16.mxu0 0
    %5887 = vmatpush1.bf16.msra.mxu0 0
    %5888 = vmatprep.subr.bf16.mxu0 0
    %5889 = vmatpush1.bf16.msra.mxu0 0
    %5890 = vmatprep.subr.bf16.mxu0 0
    %5891 = vmatpush1.bf16.msra.mxu0 0
    %5892 = vmatprep.subr.bf16.mxu0 0
    %5893 = vmatpush1.bf16.msra.mxu0 0
    %5894 = vmatprep.subr.bf16.mxu0 0
    %5895 = vmatpush1.bf16.msra.mxu0 0
    %5896 = vmatprep.mubr.bf16.mxu0 0
    %5897 = vmatmul.mubr.bf16.gmra.mrb[0].mxu0 %v5862
    %v5898 = vpop.f32.mrb[0].mxu0
    %v5899 = vadd.f32 0.0, %v5898
    %v5900 = vpop.f32.mrb[0].mxu0
    %v5901 = vpop.f32.mrb[0].mxu0
    %v5902 = vpop.f32.mrb[0].mxu0
    %5903 = vdwg.mxu0
    %v5905 = vrot.slane %v5856, 1
    %5906 = vrot.lane.b32.xlu0 %v5905, 64
    %v5907 = vpop.permute.xlu0 %5906
    %v5909 = vsel %vm537, %v5907, 0
    %5911 = vmatprep.subr.bf16.mxu0 0
    %5912 = vmatpush1.bf16.msra.mxu0 %v1250
    %5913 = vmatprep.subr.bf16.mxu0 0
    %5914 = vmatpush1.bf16.msra.mxu0 %v1251
    %5915 = vmatprep.subr.bf16.mxu0 0
    %5916 = vmatpush1.bf16.msra.mxu0 0
    %5917 = vmatprep.subr.bf16.mxu0 0
    %5918 = vmatpush1.bf16.msra.mxu0 0
    %5919 = vmatprep.subr.bf16.mxu0 0
    %5920 = vmatpush1.bf16.msra.mxu0 0
    %5921 = vmatprep.subr.bf16.mxu0 0
    %5922 = vmatpush1.bf16.msra.mxu0 0
    %5923 = vmatprep.subr.bf16.mxu0 0
    %5924 = vmatpush1.bf16.msra.mxu0 0
    %5925 = vmatprep.subr.bf16.mxu0 0
    %5926 = vmatpush1.bf16.msra.mxu0 0
    %5927 = vmatprep.subr.bf16.mxu0 0
    %5928 = vmatpush1.bf16.msra.mxu0 0
    %5929 = vmatprep.subr.bf16.mxu0 0
    %5930 = vmatpush1.bf16.msra.mxu0 0
    %5931 = vmatprep.subr.bf16.mxu0 0
    %5932 = vmatpush1.bf16.msra.mxu0 0
    %5933 = vmatprep.subr.bf16.mxu0 0
    %5934 = vmatpush1.bf16.msra.mxu0 0
    %5935 = vmatprep.subr.bf16.mxu0 0
    %5936 = vmatpush1.bf16.msra.mxu0 0
    %5937 = vmatprep.subr.bf16.mxu0 0
    %5938 = vmatpush1.bf16.msra.mxu0 0
    %5939 = vmatprep.subr.bf16.mxu0 0
    %5940 = vmatpush1.bf16.msra.mxu0 0
    %5941 = vmatprep.subr.bf16.mxu0 0
    %5942 = vmatpush1.bf16.msra.mxu0 0
    %5943 = vmatprep.mubr.bf16.mxu0 0
    %5944 = vmatmul.mubr.bf16.gmra.mrb[0].mxu0 %v5909
    %v5945 = vpop.f32.mrb[0].mxu0
    %v5946 = vadd.f32 %v5899, %v5945
    %v5947 = vpop.f32.mrb[0].mxu0
    %v5948 = vpop.f32.mrb[0].mxu0
    %v5949 = vpop.f32.mrb[0].mxu0
    %5950 = vdwg.mxu0
    %v5951 = vadd.f32 %v5946, %v1301
    %5953 = vrot.lane.b32.xlu0 %v5855, 64
    %v5954 = vpop.permute.xlu0 %5953
    %v5956 = vadd.f32 %v5951, %v5954
    %s5957 = scalar_lea.vmem [#allocation13], 10
    %5958 = vst.msk [vmem:[%s5957] sm:$0x3] %vm487, %v5956
    %v5959 = vrot.slane %v5478, 4
    %v5961 = vadd.f32 %v4101, %v5959
    %v5962 = vmax.f32 %v5961, %v4105
    %5964 = vrot.lane.b32.xlu0 %v5962, 96
    %v5965 = vpop.permute.xlu0 %5964
    %v5967 = vsub.f32 %v4091, %v5965
    %v5968 = vmin.f32 %v5967, 20.0
    %v5969 = vmul.f32 %v5968, 1.442695
    %v5970 = vpow.pop %v5969
    %v5971 = vlaneseq
    %v5972 = vshrl.u32 %v5971, 7
    %v5973 = vsub.s32 4, %v5972
    %v5974 = vrot.slane %v224, %v5973
    %s5976 = sor.u32 256, 32
    %5977 = vbcast.lane.b32.xlu0 %v5974, %s5976
    %v5978 = vpop.permute.xlu0 %5977
    %s5980 = sor.u32 256, 40
    %5981 = vbcast.lane.b32.xlu0 %v5974, %s5980
    %v5982 = vpop.permute.xlu0 %5981
    %s5984 = sor.u32 256, 48
    %5985 = vbcast.lane.b32.xlu0 %v5974, %s5984
    %v5986 = vpop.permute.xlu0 %5985
    %s5988 = sor.u32 256, 56
    %5989 = vbcast.lane.b32.xlu0 %v5974, %s5988
    %v5990 = vpop.permute.xlu0 %5989
    %v5991 = vlaneseq
    %v5992 = vshrl.u32 %v5991, 7
    %v5993 = vsub.s32 5, %v5992
    %v5994 = vrot.slane %v224, %v5993
    %s5996 = sor.u32 256, 32
    %5997 = vbcast.lane.b32.xlu0 %v5994, %s5996
    %v5998 = vpop.permute.xlu0 %5997
    %s6000 = sor.u32 256, 40
    %6001 = vbcast.lane.b32.xlu0 %v5994, %s6000
    %v6002 = vpop.permute.xlu0 %6001
    %s6004 = sor.u32 256, 48
    %6005 = vbcast.lane.b32.xlu0 %v5994, %s6004
    %v6006 = vpop.permute.xlu0 %6005
    %s6008 = sor.u32 256, 56
    %6009 = vbcast.lane.b32.xlu0 %v5994, %s6008
    %v6010 = vpop.permute.xlu0 %6009
    %v6011 = vcombine.high %v224, %v224
    %v6013 = vunpack.c.l.s4 1966171168
    %v6014 = vunpack.c.0.s8 %v6013
    %v6015 = vlaneseq
    %v6016 = vshrl.u32 %v6015, 7
    %v6017 = vsub.s32 %v6014, %v6016
    %v6018 = vrot.slane %v6011, %v6017
    %v6019 = vcombine.high %v6018, %v6018
    %v6021 = vunpack.c.l.s4 1966171168
    %v6022 = vunpack.c.0.s8 %v6021
    %v6023 = vlaneseq
    %v6024 = vshrl.u32 %v6023, 7
    %v6025 = vsub.s32 %v6022, %v6024
    %v6026 = vrot.slane %v6018, %v6025
    %v6028 = vunpack.c.l.s4 1966171168
    %v6029 = vunpack.c.0.s8 %v6028
    %v6030 = vlaneseq
    %v6031 = vshrl.u32 %v6030, 7
    %v6032 = vsub.s32 %v6029, %v6031
    %v6033 = vrot.slane %v6019, %v6032
    %v6034 = vlaneseq
    %v6035 = vshrl.u32 %v6034, 7
    %v6036 = vsub.s32 0, %v6035
    %v6037 = vrot.slane %v6026, %v6036
    %v6038 = vlaneseq
    %v6039 = vshrl.u32 %v6038, 7
    %v6040 = vsub.s32 0, %v6039
    %v6041 = vrot.slane %v6033, %v6040
    %v6044 = vmul.f32 %v5978, %v6037
    %v6045 = vmul.f32 %v5982, %v6037
    %v6046 = vmul.f32 %v5986, %v6037
    %v6047 = vmul.f32 %v5990, %v6037
    %v6048 = vmul.f32 %v5998, %v6041
    %v6049 = vmul.f32 %v6002, %v6041
    %v6050 = vmul.f32 %v6006, %v6041
    %v6051 = vmul.f32 %v6010, %v6041
    %v6052 = vlaneseq
    %v6053 = vshrl.u32 %v6052, 7
    %v6054 = vsub.s32 4, %v6053
    %v6055 = vrot.slane %v4097, %v6054
    %s6057 = sor.u32 256, 32
    %6058 = vbcast.lane.b32.xlu0 %v6055, %s6057
    %v6059 = vpop.permute.xlu0 %6058
    %s6061 = sor.u32 256, 40
    %6062 = vbcast.lane.b32.xlu0 %v6055, %s6061
    %v6063 = vpop.permute.xlu0 %6062
    %s6065 = sor.u32 256, 48
    %6066 = vbcast.lane.b32.xlu0 %v6055, %s6065
    %v6067 = vpop.permute.xlu0 %6066
    %s6069 = sor.u32 256, 56
    %6070 = vbcast.lane.b32.xlu0 %v6055, %s6069
    %v6071 = vpop.permute.xlu0 %6070
    %v6072 = vlaneseq
    %v6073 = vshrl.u32 %v6072, 7
    %v6074 = vsub.s32 5, %v6073
    %v6075 = vrot.slane %v4097, %v6074
    %s6077 = sor.u32 256, 32
    %6078 = vbcast.lane.b32.xlu0 %v6075, %s6077
    %v6079 = vpop.permute.xlu0 %6078
    %s6081 = sor.u32 256, 40
    %6082 = vbcast.lane.b32.xlu0 %v6075, %s6081
    %v6083 = vpop.permute.xlu0 %6082
    %s6085 = sor.u32 256, 48
    %6086 = vbcast.lane.b32.xlu0 %v6075, %s6085
    %v6087 = vpop.permute.xlu0 %6086
    %s6089 = sor.u32 256, 56
    %6090 = vbcast.lane.b32.xlu0 %v6075, %s6089
    %v6091 = vpop.permute.xlu0 %6090
    %v6092 = vmul.f32 %v6059, %v5662
    %v6093 = vmul.f32 %v6063, %v5663
    %v6094 = vmul.f32 %v6067, %v5664
    %v6095 = vmul.f32 %v6071, %v5665
    %v6096 = vmul.f32 %v6079, %v5666
    %v6097 = vmul.f32 %v6083, %v5667
    %v6098 = vmul.f32 %v6087, %v5668
    %v6099 = vmul.f32 %v6091, %v5669
    %v6100 = vlaneseq
    %v6101 = vshrl.u32 %v6100, 7
    %v6102 = vsub.s32 4, %v6101
    %v6103 = vrot.slane %v5970, %v6102
    %6105 = vbcast.lane.b32.xlu0 %v6103, 256
    %v6106 = vpop.permute.xlu0 %6105
    %s6108 = sor.u32 256, 8
    %6109 = vbcast.lane.b32.xlu0 %v6103, %s6108
    %v6110 = vpop.permute.xlu0 %6109
    %s6112 = sor.u32 256, 16
    %6113 = vbcast.lane.b32.xlu0 %v6103, %s6112
    %v6114 = vpop.permute.xlu0 %6113
    %s6116 = sor.u32 256, 24
    %6117 = vbcast.lane.b32.xlu0 %v6103, %s6116
    %v6118 = vpop.permute.xlu0 %6117
    %v6119 = vlaneseq
    %v6120 = vshrl.u32 %v6119, 7
    %v6121 = vsub.s32 5, %v6120
    %v6122 = vrot.slane %v5970, %v6121
    %6124 = vbcast.lane.b32.xlu0 %v6122, 256
    %v6125 = vpop.permute.xlu0 %6124
    %s6127 = sor.u32 256, 8
    %6128 = vbcast.lane.b32.xlu0 %v6122, %s6127
    %v6129 = vpop.permute.xlu0 %6128
    %s6131 = sor.u32 256, 16
    %6132 = vbcast.lane.b32.xlu0 %v6122, %s6131
    %v6133 = vpop.permute.xlu0 %6132
    %s6135 = sor.u32 256, 24
    %6136 = vbcast.lane.b32.xlu0 %v6122, %s6135
    %v6137 = vpop.permute.xlu0 %6136
    %v6138 = vmul.f32 %v6106, %v6044
    %v6139 = vmul.f32 %v6110, %v6045
    %v6140 = vmul.f32 %v6114, %v6046
    %v6141 = vmul.f32 %v6118, %v6047
    %v6142 = vmul.f32 %v6125, %v6048
    %v6143 = vmul.f32 %v6129, %v6049
    %v6144 = vmul.f32 %v6133, %v6050
    %v6145 = vmul.f32 %v6137, %v6051
    %v6146 = vadd.f32 %v6092, %v6138
    %v6147 = vadd.f32 %v6093, %v6139
    %v6148 = vadd.f32 %v6094, %v6140
    %v6149 = vadd.f32 %v6095, %v6141
    %v6150 = vadd.f32 %v6096, %v6142
    %v6151 = vadd.f32 %v6097, %v6143
    %v6152 = vadd.f32 %v6098, %v6144
    %v6153 = vadd.f32 %v6099, %v6145
    %v6155 = vrot.slane %v5679, 4
    %v6157 = vmul.f32 %v4097, %v6155
    %v6158 = vmul.f32 %v5970, %v224
    %6160 = vrot.lane.b32.xlu0 %v6158, 32
    %v6161 = vpop.permute.xlu0 %6160
    %v6163 = vadd.f32 %v6157, %v6161
    %v6164 = vmul.f32 %v6163, %v4308
    %6166 = vrot.lane.b32.xlu0 %v6164, 96
    %v6167 = vpop.permute.xlu0 %6166
    %v6169 = vsel %vm2432, %v6167, 0.0
    %6170 = vadd.xlane.f32.xlu0 %v6169
    %v6171 = vpop.xlane.xlu0 %6170
    %v6172 = vand.u32 2147483647, %v6171
    %v6173 = vmax.f32 %v6172, 1.0
    %v6174 = vcombine.high %v222, %v222
    %v6176 = vunpack.c.l.s4 1966171168
    %v6177 = vunpack.c.0.s8 %v6176
    %v6178 = vlaneseq
    %v6179 = vshrl.u32 %v6178, 7
    %v6180 = vsub.s32 %v6177, %v6179
    %v6181 = vrot.slane %v6174, %v6180
    %v6182 = vcombine.high %v6181, %v6181
    %v6184 = vunpack.c.l.s4 1966171168
    %v6185 = vunpack.c.0.s8 %v6184
    %v6186 = vlaneseq
    %v6187 = vshrl.u32 %v6186, 7
    %v6188 = vsub.s32 %v6185, %v6187
    %v6189 = vrot.slane %v6181, %v6188
    %v6191 = vunpack.c.l.s4 1966171168
    %v6192 = vunpack.c.0.s8 %v6191
    %v6193 = vlaneseq
    %v6194 = vshrl.u32 %v6193, 7
    %v6195 = vsub.s32 %v6192, %v6194
    %v6196 = vrot.slane %v6182, %v6195
    %v6197 = vlaneseq
    %v6198 = vshrl.u32 %v6197, 7
    %v6199 = vsub.s32 0, %v6198
    %v6200 = vrot.slane %v6189, %v6199
    %v6201 = vlaneseq
    %v6202 = vshrl.u32 %v6201, 7
    %v6203 = vsub.s32 0, %v6202
    %v6204 = vrot.slane %v6196, %v6203
    %6205 = vrot.lane.b32.xlu0 %v6200, 32
    %v6206 = vpop.permute.xlu0 %6205
    %6207 = vrot.lane.b32.xlu0 %v6204, 32
    %v6208 = vpop.permute.xlu0 %6207
    %v6211 = vmul.f32 %v6146, %v6206
    %v6212 = vmul.f32 %v6147, %v6206
    %v6213 = vmul.f32 %v6148, %v6206
    %v6214 = vmul.f32 %v6149, %v6206
    %v6215 = vmul.f32 %v6150, %v6208
    %v6216 = vmul.f32 %v6151, %v6208
    %v6217 = vmul.f32 %v6152, %v6208
    %v6218 = vmul.f32 %v6153, %v6208
    %v6219 = vsel %vm537, %v6211, 0.0
    %6220 = vadd.xlane.f32.xlu0 %v6219
    %v6221 = vpop.xlane.xlu0 %6220
    %v6222 = vsel %vm537, %v6212, 0.0
    %6223 = vadd.xlane.f32.xlu0 %v6222
    %v6224 = vpop.xlane.xlu0 %6223
    %v6225 = vsel %vm537, %v6213, 0.0
    %6226 = vadd.xlane.f32.xlu0 %v6225
    %v6227 = vpop.xlane.xlu0 %6226
    %v6228 = vsel %vm537, %v6214, 0.0
    %6229 = vadd.xlane.f32.xlu0 %v6228
    %v6230 = vpop.xlane.xlu0 %6229
    %v6231 = vsel %vm537, %v6215, 0.0
    %6232 = vadd.xlane.f32.xlu0 %v6231
    %v6233 = vpop.xlane.xlu0 %6232
    %v6234 = vsel %vm537, %v6216, 0.0
    %6235 = vadd.xlane.f32.xlu0 %v6234
    %v6236 = vpop.xlane.xlu0 %6235
    %v6237 = vsel %vm537, %v6217, 0.0
    %6238 = vadd.xlane.f32.xlu0 %v6237
    %v6239 = vpop.xlane.xlu0 %6238
    %v6240 = vsel %vm537, %v6218, 0.0
    %6241 = vadd.xlane.f32.xlu0 %v6240
    %v6242 = vpop.xlane.xlu0 %6241
    %v6244 = vlaneseq
    %v6245 = vshrl.u32 %v6244, 7
    %v6246 = vsub.s32 4, %v6245
    %v6247 = vrot.slane %v6173, %v6246
    %v6248 = vlaneseq
    %v6249 = vshrl.u32 %v6248, 7
    %v6250 = vsub.s32 5, %v6249
    %v6251 = vrot.slane %v6173, %v6250
    %v6254 = vrcp.pop %v6247
    %v6255 = vmul.f32 %v6221, %v6254
    %v6256 = vmul.f32 %v6224, %v6254
    %v6257 = vmul.f32 %v6227, %v6254
    %v6258 = vmul.f32 %v6230, %v6254
    %v6259 = vrcp.pop %v6251
    %v6260 = vmul.f32 %v6233, %v6259
    %v6261 = vmul.f32 %v6236, %v6259
    %v6262 = vmul.f32 %v6239, %v6259
    %v6263 = vmul.f32 %v6242, %v6259
    %6272 = vset.pattern.permute.xlu0 0
    %6273 = vperm.xlu0 %6272, %v6255
    %v6274 = vpop.permute.xlu0 %6273
    %6275 = vset.pattern.permute.xlu0 0
    %6276 = vperm.xlu0 %6275, %v6256
    %v6277 = vpop.permute.xlu0 %6276
    %6278 = vset.pattern.permute.xlu0 0
    %6279 = vperm.xlu0 %6278, %v6257
    %v6280 = vpop.permute.xlu0 %6279
    %6281 = vset.pattern.permute.xlu0 0
    %6282 = vperm.xlu0 %6281, %v6258
    %v6283 = vpop.permute.xlu0 %6282
    %6284 = vset.pattern.permute.xlu0 0
    %6285 = vperm.xlu0 %6284, %v6260
    %v6286 = vpop.permute.xlu0 %6285
    %6287 = vset.pattern.permute.xlu0 0
    %6288 = vperm.xlu0 %6287, %v6261
    %v6289 = vpop.permute.xlu0 %6288
    %6290 = vset.pattern.permute.xlu0 0
    %6291 = vperm.xlu0 %6290, %v6262
    %v6292 = vpop.permute.xlu0 %6291
    %6293 = vset.pattern.permute.xlu0 0
    %6294 = vperm.xlu0 %6293, %v6263
    %v6295 = vpop.permute.xlu0 %6294
    %v6296 = vlaneseq
    %v6297 = vshrl.u32 %v6296, 7
    %v6298 = vsub.s32 %v617, %v6297
    %v6299 = vrot.slane %v6274, %v6298
    %v6300 = vlaneseq
    %v6301 = vshrl.u32 %v6300, 7
    %v6302 = vsub.s32 %v622, %v6301
    %v6303 = vrot.slane %v6277, %v6302
    %v6304 = vsel %vm627, %v6303, %v6299
    %v6305 = vlaneseq
    %v6306 = vshrl.u32 %v6305, 7
    %v6307 = vsub.s32 %v629, %v6306
    %v6308 = vrot.slane %v6280, %v6307
    %v6309 = vsel %vm634, %v6308, %v6304
    %v6310 = vlaneseq
    %v6311 = vshrl.u32 %v6310, 7
    %v6312 = vsub.s32 %v636, %v6311
    %v6313 = vrot.slane %v6283, %v6312
    %v6314 = vsel %vm641, %v6313, %v6309
    %v6315 = vlaneseq
    %v6316 = vshrl.u32 %v6315, 7
    %v6317 = vsub.s32 %v617, %v6316
    %v6318 = vrot.slane %v6286, %v6317
    %v6319 = vlaneseq
    %v6320 = vshrl.u32 %v6319, 7
    %v6321 = vsub.s32 %v622, %v6320
    %v6322 = vrot.slane %v6289, %v6321
    %v6323 = vsel %vm627, %v6322, %v6318
    %v6324 = vlaneseq
    %v6325 = vshrl.u32 %v6324, 7
    %v6326 = vsub.s32 %v629, %v6325
    %v6327 = vrot.slane %v6292, %v6326
    %v6328 = vsel %vm634, %v6327, %v6323
    %v6329 = vlaneseq
    %v6330 = vshrl.u32 %v6329, 7
    %v6331 = vsub.s32 %v636, %v6330
    %v6332 = vrot.slane %v6295, %v6331
    %v6333 = vsel %vm641, %v6332, %v6328
    %v6334 = vsel %vm2598, %v6333, %v6314
    %v6336 = vmul.f32 %v4097, %v6334
    %6338 = vrot.lane.b32.xlu0 %v6336, 64
    %v6339 = vpop.permute.xlu0 %6338
    %v6341 = vsel %vm2432, %v6339, 0.0
    %6342 = vadd.xlane.f32.xlu0 %v6341
    %v6343 = vpop.xlane.xlu0 %6342
    %v6344 = vmul.f32 %v6343, %v673
    %v6345 = vsub.f32 %v6336, %v6344
    %v6346 = vmul.f32 %v6345, %v6345
    %6348 = vrot.lane.b32.xlu0 %v6346, 64
    %v6349 = vpop.permute.xlu0 %6348
    %v6351 = vsel %vm2432, %v6349, 0.0
    %6352 = vadd.xlane.f32.xlu0 %v6351
    %v6353 = vpop.xlane.xlu0 %6352
    %v6354 = vmul.f32 %v6353, %v673
    %v6355 = vadd.f32 %v6354, 1e-05
    %v6356 = vrsqrt.pop %v6355
    %v6357 = vmul.f32 %v6345, %v6356
    %v6358 = vmul.f32 %v6357, %v694
    %v6359 = vadd.f32 %v6358, %v703
    %v6360 = vpack.c.bf16 %v6359, %v6359
    %v6362 = vrot.slane %v6360, 2
    %6363 = vrot.lane.b32.xlu0 %v6362, 64
    %v6364 = vpop.permute.xlu0 %6363
    %v6366 = vsel %vm537, %v6364, 0
    %6368 = vmatprep.subr.bf16.mxu0 %v734
    %6369 = vmatpush1.bf16.msra.mxu0 %v733
    %6370 = vmatprep.subr.bf16.mxu0 %v736
    %6371 = vmatpush1.bf16.msra.mxu0 %v735
    %6372 = vmatprep.subr.bf16.mxu0 0
    %6373 = vmatpush1.bf16.msra.mxu0 0
    %6374 = vmatprep.subr.bf16.mxu0 0
    %6375 = vmatpush1.bf16.msra.mxu0 0
    %6376 = vmatprep.subr.bf16.mxu0 0
    %6377 = vmatpush1.bf16.msra.mxu0 0
    %6378 = vmatprep.subr.bf16.mxu0 0
    %6379 = vmatpush1.bf16.msra.mxu0 0
    %6380 = vmatprep.subr.bf16.mxu0 0
    %6381 = vmatpush1.bf16.msra.mxu0 0
    %6382 = vmatprep.subr.bf16.mxu0 0
    %6383 = vmatpush1.bf16.msra.mxu0 0
    %6384 = vmatprep.subr.bf16.mxu0 0
    %6385 = vmatpush1.bf16.msra.mxu0 0
    %6386 = vmatprep.subr.bf16.mxu0 0
    %6387 = vmatpush1.bf16.msra.mxu0 0
    %6388 = vmatprep.subr.bf16.mxu0 0
    %6389 = vmatpush1.bf16.msra.mxu0 0
    %6390 = vmatprep.subr.bf16.mxu0 0
    %6391 = vmatpush1.bf16.msra.mxu0 0
    %6392 = vmatprep.subr.bf16.mxu0 0
    %6393 = vmatpush1.bf16.msra.mxu0 0
    %6394 = vmatprep.subr.bf16.mxu0 0
    %6395 = vmatpush1.bf16.msra.mxu0 0
    %6396 = vmatprep.subr.bf16.mxu0 0
    %6397 = vmatpush1.bf16.msra.mxu0 0
    %6398 = vmatprep.subr.bf16.mxu0 0
    %6399 = vmatpush1.bf16.msra.mxu0 0
    %6400 = vmatprep.mubr.bf16.mxu0 0
    %6401 = vmatmul.mubr.bf16.gmra.mrb[0].mxu0 %v6366
    %v6402 = vpop.f32.mrb[0].mxu0
    %v6403 = vadd.f32 %v711, %v6402
    %v6404 = vpop.f32.mrb[0].mxu0
    %v6405 = vadd.f32 %v715, %v6404
    %v6406 = vpop.f32.mrb[0].mxu0
    %v6407 = vpop.f32.mrb[0].mxu0
    %6408 = vdwg.mxu0
    %v6409 = vmax.f32 %v6403, -100.0
    %v6410 = vmin.f32 %v6409, 100.0
    %v6411 = vmul.f32 %v6410, 1.442695
    %v6412 = vpow.pop %v6411
    %v6413 = vxor.u32 %v6410, 2147483648
    %v6414 = vmul.f32 %v6413, 1.442695
    %v6415 = vpow.pop %v6414
    %v6416 = vadd.f32 %v6415, 1.0
    %v6417 = vrcp.pop %v6416
    %v6418 = vmul.f32 1.0, %v6417
    %v6419 = vmax.f32 %v6410, -18.420681
    %v6420 = vmax.f32 %v6418, 1e-08
    %v6421 = vlog2.pop %v6420
    %v6422 = vmul.f32 %v6421, 0.6931472
    %v6423 = vrot.slane %v5962, 4
    %v6425 = vadd.f32 %v6422, %v6423
    %6427 = vrot.lane.b32.xlu0 %v6419, 32
    %v6428 = vpop.permute.xlu0 %6427
    %v6430 = vmax.f32 %v6425, %v6428
    %6432 = vrot.lane.b32.xlu0 %v6430, 96
    %v6433 = vpop.permute.xlu0 %6432
    %v6435 = vsub.f32 %v6412, %v6433
    %v6436 = vmin.f32 %v6435, 20.0
    %v6437 = vmul.f32 %v6436, 1.442695
    %v6438 = vpow.pop %v6437
    %v6439 = vlaneseq
    %v6440 = vshrl.u32 %v6439, 7
    %v6441 = vsub.s32 0, %v6440
    %v6442 = vrot.slane %v6405, %v6441
    %s6444 = sor.u32 256, 32
    %6445 = vbcast.lane.b32.xlu0 %v6442, %s6444
    %v6446 = vpop.permute.xlu0 %6445
    %s6448 = sor.u32 256, 40
    %6449 = vbcast.lane.b32.xlu0 %v6442, %s6448
    %v6450 = vpop.permute.xlu0 %6449
    %s6452 = sor.u32 256, 48
    %6453 = vbcast.lane.b32.xlu0 %v6442, %s6452
    %v6454 = vpop.permute.xlu0 %6453
    %s6456 = sor.u32 256, 56
    %6457 = vbcast.lane.b32.xlu0 %v6442, %s6456
    %v6458 = vpop.permute.xlu0 %6457
    %v6459 = vlaneseq
    %v6460 = vshrl.u32 %v6459, 7
    %v6461 = vsub.s32 1, %v6460
    %v6462 = vrot.slane %v6405, %v6461
    %s6464 = sor.u32 256, 32
    %6465 = vbcast.lane.b32.xlu0 %v6462, %s6464
    %v6466 = vpop.permute.xlu0 %6465
    %s6468 = sor.u32 256, 40
    %6469 = vbcast.lane.b32.xlu0 %v6462, %s6468
    %v6470 = vpop.permute.xlu0 %6469
    %s6472 = sor.u32 256, 48
    %6473 = vbcast.lane.b32.xlu0 %v6462, %s6472
    %v6474 = vpop.permute.xlu0 %6473
    %s6476 = sor.u32 256, 56
    %6477 = vbcast.lane.b32.xlu0 %v6462, %s6476
    %v6478 = vpop.permute.xlu0 %6477
    %v6481 = vunpack.c.l.s4 1966171168
    %v6482 = vunpack.c.0.s8 %v6481
    %v6483 = vlaneseq
    %v6484 = vshrl.u32 %v6483, 7
    %v6485 = vsub.s32 %v6482, %v6484
    %v6486 = vrot.slane %v6405, %v6485
    %v6487 = vcombine.high %v6486, %v6486
    %v6489 = vunpack.c.l.s4 1966171168
    %v6490 = vunpack.c.0.s8 %v6489
    %v6491 = vlaneseq
    %v6492 = vshrl.u32 %v6491, 7
    %v6493 = vsub.s32 %v6490, %v6492
    %v6494 = vrot.slane %v6486, %v6493
    %v6496 = vunpack.c.l.s4 1966171168
    %v6497 = vunpack.c.0.s8 %v6496
    %v6498 = vlaneseq
    %v6499 = vshrl.u32 %v6498, 7
    %v6500 = vsub.s32 %v6497, %v6499
    %v6501 = vrot.slane %v6487, %v6500
    %v6502 = vlaneseq
    %v6503 = vshrl.u32 %v6502, 7
    %v6504 = vsub.s32 0, %v6503
    %v6505 = vrot.slane %v6494, %v6504
    %v6506 = vlaneseq
    %v6507 = vshrl.u32 %v6506, 7
    %v6508 = vsub.s32 0, %v6507
    %v6509 = vrot.slane %v6501, %v6508
    %v6512 = vmul.f32 %v6446, %v6505
    %v6513 = vmul.f32 %v6450, %v6505
    %v6514 = vmul.f32 %v6454, %v6505
    %v6515 = vmul.f32 %v6458, %v6505
    %v6516 = vmul.f32 %v6466, %v6509
    %v6517 = vmul.f32 %v6470, %v6509
    %v6518 = vmul.f32 %v6474, %v6509
    %v6519 = vmul.f32 %v6478, %v6509
    %v6520 = vlaneseq
    %v6521 = vshrl.u32 %v6520, 7
    %v6522 = vsub.s32 0, %v6521
    %v6523 = vrot.slane %v6418, %v6522
    %s6525 = sor.u32 256, 32
    %6526 = vbcast.lane.b32.xlu0 %v6523, %s6525
    %v6527 = vpop.permute.xlu0 %6526
    %s6529 = sor.u32 256, 40
    %6530 = vbcast.lane.b32.xlu0 %v6523, %s6529
    %v6531 = vpop.permute.xlu0 %6530
    %s6533 = sor.u32 256, 48
    %6534 = vbcast.lane.b32.xlu0 %v6523, %s6533
    %v6535 = vpop.permute.xlu0 %6534
    %s6537 = sor.u32 256, 56
    %6538 = vbcast.lane.b32.xlu0 %v6523, %s6537
    %v6539 = vpop.permute.xlu0 %6538
    %v6540 = vlaneseq
    %v6541 = vshrl.u32 %v6540, 7
    %v6542 = vsub.s32 1, %v6541
    %v6543 = vrot.slane %v6418, %v6542
    %s6545 = sor.u32 256, 32
    %6546 = vbcast.lane.b32.xlu0 %v6543, %s6545
    %v6547 = vpop.permute.xlu0 %6546
    %s6549 = sor.u32 256, 40
    %6550 = vbcast.lane.b32.xlu0 %v6543, %s6549
    %v6551 = vpop.permute.xlu0 %6550
    %s6553 = sor.u32 256, 48
    %6554 = vbcast.lane.b32.xlu0 %v6543, %s6553
    %v6555 = vpop.permute.xlu0 %6554
    %s6557 = sor.u32 256, 56
    %6558 = vbcast.lane.b32.xlu0 %v6543, %s6557
    %v6559 = vpop.permute.xlu0 %6558
    %v6560 = vmul.f32 %v6527, %v6146
    %v6561 = vmul.f32 %v6531, %v6147
    %v6562 = vmul.f32 %v6535, %v6148
    %v6563 = vmul.f32 %v6539, %v6149
    %v6564 = vmul.f32 %v6547, %v6150
    %v6565 = vmul.f32 %v6551, %v6151
    %v6566 = vmul.f32 %v6555, %v6152
    %v6567 = vmul.f32 %v6559, %v6153
    %v6568 = vlaneseq
    %v6569 = vshrl.u32 %v6568, 7
    %v6570 = vsub.s32 0, %v6569
    %v6571 = vrot.slane %v6438, %v6570
    %6573 = vbcast.lane.b32.xlu0 %v6571, 256
    %v6574 = vpop.permute.xlu0 %6573
    %s6576 = sor.u32 256, 8
    %6577 = vbcast.lane.b32.xlu0 %v6571, %s6576
    %v6578 = vpop.permute.xlu0 %6577
    %s6580 = sor.u32 256, 16
    %6581 = vbcast.lane.b32.xlu0 %v6571, %s6580
    %v6582 = vpop.permute.xlu0 %6581
    %s6584 = sor.u32 256, 24
    %6585 = vbcast.lane.b32.xlu0 %v6571, %s6584
    %v6586 = vpop.permute.xlu0 %6585
    %v6587 = vlaneseq
    %v6588 = vshrl.u32 %v6587, 7
    %v6589 = vsub.s32 1, %v6588
    %v6590 = vrot.slane %v6438, %v6589
    %6592 = vbcast.lane.b32.xlu0 %v6590, 256
    %v6593 = vpop.permute.xlu0 %6592
    %s6595 = sor.u32 256, 8
    %6596 = vbcast.lane.b32.xlu0 %v6590, %s6595
    %v6597 = vpop.permute.xlu0 %6596
    %s6599 = sor.u32 256, 16
    %6600 = vbcast.lane.b32.xlu0 %v6590, %s6599
    %v6601 = vpop.permute.xlu0 %6600
    %s6603 = sor.u32 256, 24
    %6604 = vbcast.lane.b32.xlu0 %v6590, %s6603
    %v6605 = vpop.permute.xlu0 %6604
    %v6606 = vmul.f32 %v6574, %v6512
    %v6607 = vmul.f32 %v6578, %v6513
    %v6608 = vmul.f32 %v6582, %v6514
    %v6609 = vmul.f32 %v6586, %v6515
    %v6610 = vmul.f32 %v6593, %v6516
    %v6611 = vmul.f32 %v6597, %v6517
    %v6612 = vmul.f32 %v6601, %v6518
    %v6613 = vmul.f32 %v6605, %v6519
    %v6614 = vadd.f32 %v6560, %v6606
    %v6615 = vadd.f32 %v6561, %v6607
    %v6616 = vadd.f32 %v6562, %v6608
    %v6617 = vadd.f32 %v6563, %v6609
    %v6618 = vadd.f32 %v6564, %v6610
    %v6619 = vadd.f32 %v6565, %v6611
    %v6620 = vadd.f32 %v6566, %v6612
    %v6621 = vadd.f32 %v6567, %v6613
    %v6623 = vrot.slane %v6163, 4
    %v6625 = vmul.f32 %v6418, %v6623
    %v6626 = vmul.f32 %v6438, %v6405
    %6628 = vrot.lane.b32.xlu0 %v6626, 32
    %v6629 = vpop.permute.xlu0 %6628
    %v6631 = vadd.f32 %v6625, %v6629
    %6633 = vrot.lane.b32.xlu0 %v6403, 64
    %v6634 = vpop.permute.xlu0 %6633
    %v6636 = vmul.f32 %v6631, %v6634
    %6638 = vrot.lane.b32.xlu0 %v6636, 96
    %v6639 = vpop.permute.xlu0 %6638
    %v6641 = vsel %vm487, %v6639, 0.0
    %6642 = vadd.xlane.f32.xlu0 %v6641
    %v6643 = vpop.xlane.xlu0 %6642
    %v6644 = vand.u32 2147483647, %v6643
    %v6645 = vmax.f32 %v6644, 1.0
    %v6647 = vunpack.c.l.s4 1966171168
    %v6648 = vunpack.c.0.s8 %v6647
    %v6649 = vlaneseq
    %v6650 = vshrl.u32 %v6649, 7
    %v6651 = vsub.s32 %v6648, %v6650
    %v6652 = vrot.slane %v6403, %v6651
    %v6653 = vcombine.high %v6652, %v6652
    %v6655 = vunpack.c.l.s4 1966171168
    %v6656 = vunpack.c.0.s8 %v6655
    %v6657 = vlaneseq
    %v6658 = vshrl.u32 %v6657, 7
    %v6659 = vsub.s32 %v6656, %v6658
    %v6660 = vrot.slane %v6652, %v6659
    %v6662 = vunpack.c.l.s4 1966171168
    %v6663 = vunpack.c.0.s8 %v6662
    %v6664 = vlaneseq
    %v6665 = vshrl.u32 %v6664, 7
    %v6666 = vsub.s32 %v6663, %v6665
    %v6667 = vrot.slane %v6653, %v6666
    %v6668 = vlaneseq
    %v6669 = vshrl.u32 %v6668, 7
    %v6670 = vsub.s32 0, %v6669
    %v6671 = vrot.slane %v6660, %v6670
    %v6672 = vlaneseq
    %v6673 = vshrl.u32 %v6672, 7
    %v6674 = vsub.s32 0, %v6673
    %v6675 = vrot.slane %v6667, %v6674
    %6676 = vrot.lane.b32.xlu0 %v6671, 32
    %v6677 = vpop.permute.xlu0 %6676
    %6678 = vrot.lane.b32.xlu0 %v6675, 32
    %v6679 = vpop.permute.xlu0 %6678
    %v6682 = vmul.f32 %v6614, %v6677
    %v6683 = vmul.f32 %v6615, %v6677
    %v6684 = vmul.f32 %v6616, %v6677
    %v6685 = vmul.f32 %v6617, %v6677
    %v6686 = vmul.f32 %v6618, %v6679
    %v6687 = vmul.f32 %v6619, %v6679
    %v6688 = vmul.f32 %v6620, %v6679
    %v6689 = vmul.f32 %v6621, %v6679
    %v6690 = vsel %vm537, %v6682, 0.0
    %6691 = vadd.xlane.f32.xlu0 %v6690
    %v6692 = vpop.xlane.xlu0 %6691
    %v6693 = vsel %vm537, %v6683, 0.0
    %6694 = vadd.xlane.f32.xlu0 %v6693
    %v6695 = vpop.xlane.xlu0 %6694
    %v6696 = vsel %vm537, %v6684, 0.0
    %6697 = vadd.xlane.f32.xlu0 %v6696
    %v6698 = vpop.xlane.xlu0 %6697
    %v6699 = vsel %vm537, %v6685, 0.0
    %6700 = vadd.xlane.f32.xlu0 %v6699
    %v6701 = vpop.xlane.xlu0 %6700
    %v6702 = vsel %vm537, %v6686, 0.0
    %6703 = vadd.xlane.f32.xlu0 %v6702
    %v6704 = vpop.xlane.xlu0 %6703
    %v6705 = vsel %vm537, %v6687, 0.0
    %6706 = vadd.xlane.f32.xlu0 %v6705
    %v6707 = vpop.xlane.xlu0 %6706
    %v6708 = vsel %vm537, %v6688, 0.0
    %6709 = vadd.xlane.f32.xlu0 %v6708
    %v6710 = vpop.xlane.xlu0 %6709
    %v6711 = vsel %vm537, %v6689, 0.0
    %6712 = vadd.xlane.f32.xlu0 %v6711
    %v6713 = vpop.xlane.xlu0 %6712
    %v6715 = vlaneseq
    %v6716 = vshrl.u32 %v6715, 7
    %v6717 = vsub.s32 0, %v6716
    %v6718 = vrot.slane %v6645, %v6717
    %v6719 = vlaneseq
    %v6720 = vshrl.u32 %v6719, 7
    %v6721 = vsub.s32 1, %v6720
    %v6722 = vrot.slane %v6645, %v6721
    %v6725 = vrcp.pop %v6718
    %v6726 = vmul.f32 %v6692, %v6725
    %v6727 = vmul.f32 %v6695, %v6725
    %v6728 = vmul.f32 %v6698, %v6725
    %v6729 = vmul.f32 %v6701, %v6725
    %v6730 = vrcp.pop %v6722
    %v6731 = vmul.f32 %v6704, %v6730
    %v6732 = vmul.f32 %v6707, %v6730
    %v6733 = vmul.f32 %v6710, %v6730
    %v6734 = vmul.f32 %v6713, %v6730
    %6743 = vset.pattern.permute.xlu0 0
    %6744 = vperm.xlu0 %6743, %v6726
    %v6745 = vpop.permute.xlu0 %6744
    %6746 = vset.pattern.permute.xlu0 0
    %6747 = vperm.xlu0 %6746, %v6727
    %v6748 = vpop.permute.xlu0 %6747
    %6749 = vset.pattern.permute.xlu0 0
    %6750 = vperm.xlu0 %6749, %v6728
    %v6751 = vpop.permute.xlu0 %6750
    %6752 = vset.pattern.permute.xlu0 0
    %6753 = vperm.xlu0 %6752, %v6729
    %v6754 = vpop.permute.xlu0 %6753
    %6755 = vset.pattern.permute.xlu0 0
    %6756 = vperm.xlu0 %6755, %v6731
    %v6757 = vpop.permute.xlu0 %6756
    %6758 = vset.pattern.permute.xlu0 0
    %6759 = vperm.xlu0 %6758, %v6732
    %v6760 = vpop.permute.xlu0 %6759
    %6761 = vset.pattern.permute.xlu0 0
    %6762 = vperm.xlu0 %6761, %v6733
    %v6763 = vpop.permute.xlu0 %6762
    %6764 = vset.pattern.permute.xlu0 0
    %6765 = vperm.xlu0 %6764, %v6734
    %v6766 = vpop.permute.xlu0 %6765
    %v6767 = vlaneseq
    %v6768 = vshrl.u32 %v6767, 7
    %v6769 = vsub.s32 %v617, %v6768
    %v6770 = vrot.slane %v6745, %v6769
    %v6771 = vlaneseq
    %v6772 = vshrl.u32 %v6771, 7
    %v6773 = vsub.s32 %v622, %v6772
    %v6774 = vrot.slane %v6748, %v6773
    %v6775 = vsel %vm627, %v6774, %v6770
    %v6776 = vlaneseq
    %v6777 = vshrl.u32 %v6776, 7
    %v6778 = vsub.s32 %v629, %v6777
    %v6779 = vrot.slane %v6751, %v6778
    %v6780 = vsel %vm634, %v6779, %v6775
    %v6781 = vlaneseq
    %v6782 = vshrl.u32 %v6781, 7
    %v6783 = vsub.s32 %v636, %v6782
    %v6784 = vrot.slane %v6754, %v6783
    %v6785 = vsel %vm641, %v6784, %v6780
    %v6786 = vlaneseq
    %v6787 = vshrl.u32 %v6786, 7
    %v6788 = vsub.s32 %v617, %v6787
    %v6789 = vrot.slane %v6757, %v6788
    %v6790 = vlaneseq
    %v6791 = vshrl.u32 %v6790, 7
    %v6792 = vsub.s32 %v622, %v6791
    %v6793 = vrot.slane %v6760, %v6792
    %v6794 = vsel %vm627, %v6793, %v6789
    %v6795 = vlaneseq
    %v6796 = vshrl.u32 %v6795, 7
    %v6797 = vsub.s32 %v629, %v6796
    %v6798 = vrot.slane %v6763, %v6797
    %v6799 = vsel %vm634, %v6798, %v6794
    %v6800 = vlaneseq
    %v6801 = vshrl.u32 %v6800, 7
    %v6802 = vsub.s32 %v636, %v6801
    %v6803 = vrot.slane %v6766, %v6802
    %v6804 = vsel %vm641, %v6803, %v6799
    %v6805 = vsel %vm662, %v6804, %v6785
    %v6807 = vmul.f32 %v6418, %v6805
    %v6808 = vpack.c.bf16 %v6336, %v6336
    %v6809 = vpack.c.bf16 %v6807, %v6807
    %6811 = vrot.lane.b32.xlu0 %v6809, 64
    %v6812 = vpop.permute.xlu0 %6811
    %v6814 = vsel %vm537, %v6812, 0
    %6816 = vmatprep.subr.bf16.mxu0 0
    %6817 = vmatpush1.bf16.msra.mxu0 %v1192
    %6818 = vmatprep.subr.bf16.mxu0 0
    %6819 = vmatpush1.bf16.msra.mxu0 %v1193
    %6820 = vmatprep.subr.bf16.mxu0 0
    %6821 = vmatpush1.bf16.msra.mxu0 0
    %6822 = vmatprep.subr.bf16.mxu0 0
    %6823 = vmatpush1.bf16.msra.mxu0 0
    %6824 = vmatprep.subr.bf16.mxu0 0
    %6825 = vmatpush1.bf16.msra.mxu0 0
    %6826 = vmatprep.subr.bf16.mxu0 0
    %6827 = vmatpush1.bf16.msra.mxu0 0
    %6828 = vmatprep.subr.bf16.mxu0 0
    %6829 = vmatpush1.bf16.msra.mxu0 0
    %6830 = vmatprep.subr.bf16.mxu0 0
    %6831 = vmatpush1.bf16.msra.mxu0 0
    %6832 = vmatprep.subr.bf16.mxu0 0
    %6833 = vmatpush1.bf16.msra.mxu0 0
    %6834 = vmatprep.subr.bf16.mxu0 0
    %6835 = vmatpush1.bf16.msra.mxu0 0
    %6836 = vmatprep.subr.bf16.mxu0 0
    %6837 = vmatpush1.bf16.msra.mxu0 0
    %6838 = vmatprep.subr.bf16.mxu0 0
    %6839 = vmatpush1.bf16.msra.mxu0 0
    %6840 = vmatprep.subr.bf16.mxu0 0
    %6841 = vmatpush1.bf16.msra.mxu0 0
    %6842 = vmatprep.subr.bf16.mxu0 0
    %6843 = vmatpush1.bf16.msra.mxu0 0
    %6844 = vmatprep.subr.bf16.mxu0 0
    %6845 = vmatpush1.bf16.msra.mxu0 0
    %6846 = vmatprep.subr.bf16.mxu0 0
    %6847 = vmatpush1.bf16.msra.mxu0 0
    %6848 = vmatprep.mubr.bf16.mxu0 0
    %6849 = vmatmul.mubr.bf16.gmra.mrb[0].mxu0 %v6814
    %v6850 = vpop.f32.mrb[0].mxu0
    %v6851 = vadd.f32 0.0, %v6850
    %v6852 = vpop.f32.mrb[0].mxu0
    %v6853 = vpop.f32.mrb[0].mxu0
    %v6854 = vpop.f32.mrb[0].mxu0
    %6855 = vdwg.mxu0
    %v6857 = vrot.slane %v6808, 2
    %6858 = vrot.lane.b32.xlu0 %v6857, 64
    %v6859 = vpop.permute.xlu0 %6858
    %v6861 = vsel %vm537, %v6859, 0
    %6863 = vmatprep.subr.bf16.mxu0 0
    %6864 = vmatpush1.bf16.msra.mxu0 %v1250
    %6865 = vmatprep.subr.bf16.mxu0 0
    %6866 = vmatpush1.bf16.msra.mxu0 %v1251
    %6867 = vmatprep.subr.bf16.mxu0 0
    %6868 = vmatpush1.bf16.msra.mxu0 0
    %6869 = vmatprep.subr.bf16.mxu0 0
    %6870 = vmatpush1.bf16.msra.mxu0 0
    %6871 = vmatprep.subr.bf16.mxu0 0
    %6872 = vmatpush1.bf16.msra.mxu0 0
    %6873 = vmatprep.subr.bf16.mxu0 0
    %6874 = vmatpush1.bf16.msra.mxu0 0
    %6875 = vmatprep.subr.bf16.mxu0 0
    %6876 = vmatpush1.bf16.msra.mxu0 0
    %6877 = vmatprep.subr.bf16.mxu0 0
    %6878 = vmatpush1.bf16.msra.mxu0 0
    %6879 = vmatprep.subr.bf16.mxu0 0
    %6880 = vmatpush1.bf16.msra.mxu0 0
    %6881 = vmatprep.subr.bf16.mxu0 0
    %6882 = vmatpush1.bf16.msra.mxu0 0
    %6883 = vmatprep.subr.bf16.mxu0 0
    %6884 = vmatpush1.bf16.msra.mxu0 0
    %6885 = vmatprep.subr.bf16.mxu0 0
    %6886 = vmatpush1.bf16.msra.mxu0 0
    %6887 = vmatprep.subr.bf16.mxu0 0
    %6888 = vmatpush1.bf16.msra.mxu0 0
    %6889 = vmatprep.subr.bf16.mxu0 0
    %6890 = vmatpush1.bf16.msra.mxu0 0
    %6891 = vmatprep.subr.bf16.mxu0 0
    %6892 = vmatpush1.bf16.msra.mxu0 0
    %6893 = vmatprep.subr.bf16.mxu0 0
    %6894 = vmatpush1.bf16.msra.mxu0 0
    %6895 = vmatprep.mubr.bf16.mxu0 0
    %6896 = vmatmul.mubr.bf16.gmra.mrb[0].mxu0 %v6861
    %v6897 = vpop.f32.mrb[0].mxu0
    %v6898 = vadd.f32 %v6851, %v6897
    %v6899 = vpop.f32.mrb[0].mxu0
    %v6900 = vpop.f32.mrb[0].mxu0
    %v6901 = vpop.f32.mrb[0].mxu0
    %6902 = vdwg.mxu0
    %v6903 = vadd.f32 %v6898, %v1301
    %6905 = vrot.lane.b32.xlu0 %v6807, 64
    %v6906 = vpop.permute.xlu0 %6905
    %v6908 = vadd.f32 %v6903, %v6906
    %s6909 = scalar_lea.vmem [#allocation13], 12
    %6910 = vst.msk [vmem:[%s6909] sm:$0x3] %vm487, %v6908
    %v6911 = vrot.slane %v6430, 2
    %v6913 = vadd.f32 %v4101, %v6911
    %v6914 = vmax.f32 %v6913, %v4105
    %6916 = vrot.lane.b32.xlu0 %v6914, 96
    %v6917 = vpop.permute.xlu0 %6916
    %v6919 = vsub.f32 %v4091, %v6917
    %v6920 = vmin.f32 %v6919, 20.0
    %v6921 = vmul.f32 %v6920, 1.442695
    %v6922 = vpow.pop %v6921
    %v6923 = vlaneseq
    %v6924 = vshrl.u32 %v6923, 7
    %v6925 = vsub.s32 6, %v6924
    %v6926 = vrot.slane %v224, %v6925
    %s6928 = sor.u32 256, 32
    %6929 = vbcast.lane.b32.xlu0 %v6926, %s6928
    %v6930 = vpop.permute.xlu0 %6929
    %s6932 = sor.u32 256, 40
    %6933 = vbcast.lane.b32.xlu0 %v6926, %s6932
    %v6934 = vpop.permute.xlu0 %6933
    %s6936 = sor.u32 256, 48
    %6937 = vbcast.lane.b32.xlu0 %v6926, %s6936
    %v6938 = vpop.permute.xlu0 %6937
    %s6940 = sor.u32 256, 56
    %6941 = vbcast.lane.b32.xlu0 %v6926, %s6940
    %v6942 = vpop.permute.xlu0 %6941
    %v6943 = vlaneseq
    %v6944 = vshrl.u32 %v6943, 7
    %v6945 = vsub.s32 7, %v6944
    %v6946 = vrot.slane %v224, %v6945
    %s6948 = sor.u32 256, 32
    %6949 = vbcast.lane.b32.xlu0 %v6946, %s6948
    %v6950 = vpop.permute.xlu0 %6949
    %s6952 = sor.u32 256, 40
    %6953 = vbcast.lane.b32.xlu0 %v6946, %s6952
    %v6954 = vpop.permute.xlu0 %6953
    %s6956 = sor.u32 256, 48
    %6957 = vbcast.lane.b32.xlu0 %v6946, %s6956
    %v6958 = vpop.permute.xlu0 %6957
    %s6960 = sor.u32 256, 56
    %6961 = vbcast.lane.b32.xlu0 %v6946, %s6960
    %v6962 = vpop.permute.xlu0 %6961
    %v6963 = vcombine.high %v6026, %v6026
    %v6964 = vcombine.high %v6033, %v6033
    %v6965 = vlaneseq
    %v6966 = vshrl.u32 %v6965, 7
    %v6967 = vsub.s32 0, %v6966
    %v6968 = vrot.slane %v6963, %v6967
    %v6969 = vlaneseq
    %v6970 = vshrl.u32 %v6969, 7
    %v6971 = vsub.s32 0, %v6970
    %v6972 = vrot.slane %v6964, %v6971
    %v6975 = vmul.f32 %v6930, %v6968
    %v6976 = vmul.f32 %v6934, %v6968
    %v6977 = vmul.f32 %v6938, %v6968
    %v6978 = vmul.f32 %v6942, %v6968
    %v6979 = vmul.f32 %v6950, %v6972
    %v6980 = vmul.f32 %v6954, %v6972
    %v6981 = vmul.f32 %v6958, %v6972
    %v6982 = vmul.f32 %v6962, %v6972
    %v6983 = vlaneseq
    %v6984 = vshrl.u32 %v6983, 7
    %v6985 = vsub.s32 6, %v6984
    %v6986 = vrot.slane %v4097, %v6985
    %s6988 = sor.u32 256, 32
    %6989 = vbcast.lane.b32.xlu0 %v6986, %s6988
    %v6990 = vpop.permute.xlu0 %6989
    %s6992 = sor.u32 256, 40
    %6993 = vbcast.lane.b32.xlu0 %v6986, %s6992
    %v6994 = vpop.permute.xlu0 %6993
    %s6996 = sor.u32 256, 48
    %6997 = vbcast.lane.b32.xlu0 %v6986, %s6996
    %v6998 = vpop.permute.xlu0 %6997
    %s7000 = sor.u32 256, 56
    %7001 = vbcast.lane.b32.xlu0 %v6986, %s7000
    %v7002 = vpop.permute.xlu0 %7001
    %v7003 = vlaneseq
    %v7004 = vshrl.u32 %v7003, 7
    %v7005 = vsub.s32 7, %v7004
    %v7006 = vrot.slane %v4097, %v7005
    %s7008 = sor.u32 256, 32
    %7009 = vbcast.lane.b32.xlu0 %v7006, %s7008
    %v7010 = vpop.permute.xlu0 %7009
    %s7012 = sor.u32 256, 40
    %7013 = vbcast.lane.b32.xlu0 %v7006, %s7012
    %v7014 = vpop.permute.xlu0 %7013
    %s7016 = sor.u32 256, 48
    %7017 = vbcast.lane.b32.xlu0 %v7006, %s7016
    %v7018 = vpop.permute.xlu0 %7017
    %s7020 = sor.u32 256, 56
    %7021 = vbcast.lane.b32.xlu0 %v7006, %s7020
    %v7022 = vpop.permute.xlu0 %7021
    %v7023 = vmul.f32 %v6990, %v6614
    %v7024 = vmul.f32 %v6994, %v6615
    %v7025 = vmul.f32 %v6998, %v6616
    %v7026 = vmul.f32 %v7002, %v6617
    %v7027 = vmul.f32 %v7010, %v6618
    %v7028 = vmul.f32 %v7014, %v6619
    %v7029 = vmul.f32 %v7018, %v6620
    %v7030 = vmul.f32 %v7022, %v6621
    %v7031 = vlaneseq
    %v7032 = vshrl.u32 %v7031, 7
    %v7033 = vsub.s32 6, %v7032
    %v7034 = vrot.slane %v6922, %v7033
    %7036 = vbcast.lane.b32.xlu0 %v7034, 256
    %v7037 = vpop.permute.xlu0 %7036
    %s7039 = sor.u32 256, 8
    %7040 = vbcast.lane.b32.xlu0 %v7034, %s7039
    %v7041 = vpop.permute.xlu0 %7040
    %s7043 = sor.u32 256, 16
    %7044 = vbcast.lane.b32.xlu0 %v7034, %s7043
    %v7045 = vpop.permute.xlu0 %7044
    %s7047 = sor.u32 256, 24
    %7048 = vbcast.lane.b32.xlu0 %v7034, %s7047
    %v7049 = vpop.permute.xlu0 %7048
    %v7050 = vlaneseq
    %v7051 = vshrl.u32 %v7050, 7
    %v7052 = vsub.s32 7, %v7051
    %v7053 = vrot.slane %v6922, %v7052
    %7055 = vbcast.lane.b32.xlu0 %v7053, 256
    %v7056 = vpop.permute.xlu0 %7055
    %s7058 = sor.u32 256, 8
    %7059 = vbcast.lane.b32.xlu0 %v7053, %s7058
    %v7060 = vpop.permute.xlu0 %7059
    %s7062 = sor.u32 256, 16
    %7063 = vbcast.lane.b32.xlu0 %v7053, %s7062
    %v7064 = vpop.permute.xlu0 %7063
    %s7066 = sor.u32 256, 24
    %7067 = vbcast.lane.b32.xlu0 %v7053, %s7066
    %v7068 = vpop.permute.xlu0 %7067
    %v7069 = vmul.f32 %v7037, %v6975
    %v7070 = vmul.f32 %v7041, %v6976
    %v7071 = vmul.f32 %v7045, %v6977
    %v7072 = vmul.f32 %v7049, %v6978
    %v7073 = vmul.f32 %v7056, %v6979
    %v7074 = vmul.f32 %v7060, %v6980
    %v7075 = vmul.f32 %v7064, %v6981
    %v7076 = vmul.f32 %v7068, %v6982
    %v7077 = vadd.f32 %v7023, %v7069
    %v7078 = vadd.f32 %v7024, %v7070
    %v7079 = vadd.f32 %v7025, %v7071
    %v7080 = vadd.f32 %v7026, %v7072
    %v7081 = vadd.f32 %v7027, %v7073
    %v7082 = vadd.f32 %v7028, %v7074
    %v7083 = vadd.f32 %v7029, %v7075
    %v7084 = vadd.f32 %v7030, %v7076
    %v7086 = vrot.slane %v6631, 2
    %v7088 = vmul.f32 %v4097, %v7086
    %v7089 = vmul.f32 %v6922, %v224
    %7091 = vrot.lane.b32.xlu0 %v7089, 32
    %v7092 = vpop.permute.xlu0 %7091
    %v7094 = vadd.f32 %v7088, %v7092
    %v7095 = vmul.f32 %v7094, %v4308
    %7097 = vrot.lane.b32.xlu0 %v7095, 96
    %v7098 = vpop.permute.xlu0 %7097
    %v7100 = vsel %vm3365, %v7098, 0.0
    %7101 = vadd.xlane.f32.xlu0 %v7100
    %v7102 = vpop.xlane.xlu0 %7101
    %v7103 = vand.u32 2147483647, %v7102
    %v7104 = vmax.f32 %v7103, 1.0
    %v7105 = vcombine.high %v6189, %v6189
    %v7106 = vcombine.high %v6196, %v6196
    %v7107 = vlaneseq
    %v7108 = vshrl.u32 %v7107, 7
    %v7109 = vsub.s32 0, %v7108
    %v7110 = vrot.slane %v7105, %v7109
    %v7111 = vlaneseq
    %v7112 = vshrl.u32 %v7111, 7
    %v7113 = vsub.s32 0, %v7112
    %v7114 = vrot.slane %v7106, %v7113
    %7115 = vrot.lane.b32.xlu0 %v7110, 32
    %v7116 = vpop.permute.xlu0 %7115
    %7117 = vrot.lane.b32.xlu0 %v7114, 32
    %v7118 = vpop.permute.xlu0 %7117
    %v7121 = vmul.f32 %v7077, %v7116
    %v7122 = vmul.f32 %v7078, %v7116
    %v7123 = vmul.f32 %v7079, %v7116
    %v7124 = vmul.f32 %v7080, %v7116
    %v7125 = vmul.f32 %v7081, %v7118
    %v7126 = vmul.f32 %v7082, %v7118
    %v7127 = vmul.f32 %v7083, %v7118
    %v7128 = vmul.f32 %v7084, %v7118
    %v7129 = vsel %vm537, %v7121, 0.0
    %7130 = vadd.xlane.f32.xlu0 %v7129
    %v7131 = vpop.xlane.xlu0 %7130
    %v7132 = vsel %vm537, %v7122, 0.0
    %7133 = vadd.xlane.f32.xlu0 %v7132
    %v7134 = vpop.xlane.xlu0 %7133
    %v7135 = vsel %vm537, %v7123, 0.0
    %7136 = vadd.xlane.f32.xlu0 %v7135
    %v7137 = vpop.xlane.xlu0 %7136
    %v7138 = vsel %vm537, %v7124, 0.0
    %7139 = vadd.xlane.f32.xlu0 %v7138
    %v7140 = vpop.xlane.xlu0 %7139
    %v7141 = vsel %vm537, %v7125, 0.0
    %7142 = vadd.xlane.f32.xlu0 %v7141
    %v7143 = vpop.xlane.xlu0 %7142
    %v7144 = vsel %vm537, %v7126, 0.0
    %7145 = vadd.xlane.f32.xlu0 %v7144
    %v7146 = vpop.xlane.xlu0 %7145
    %v7147 = vsel %vm537, %v7127, 0.0
    %7148 = vadd.xlane.f32.xlu0 %v7147
    %v7149 = vpop.xlane.xlu0 %7148
    %v7150 = vsel %vm537, %v7128, 0.0
    %7151 = vadd.xlane.f32.xlu0 %v7150
    %v7152 = vpop.xlane.xlu0 %7151
    %v7154 = vlaneseq
    %v7155 = vshrl.u32 %v7154, 7
    %v7156 = vsub.s32 6, %v7155
    %v7157 = vrot.slane %v7104, %v7156
    %v7158 = vlaneseq
    %v7159 = vshrl.u32 %v7158, 7
    %v7160 = vsub.s32 7, %v7159
    %v7161 = vrot.slane %v7104, %v7160
    %v7164 = vrcp.pop %v7157
    %v7165 = vmul.f32 %v7131, %v7164
    %v7166 = vmul.f32 %v7134, %v7164
    %v7167 = vmul.f32 %v7137, %v7164
    %v7168 = vmul.f32 %v7140, %v7164
    %v7169 = vrcp.pop %v7161
    %v7170 = vmul.f32 %v7143, %v7169
    %v7171 = vmul.f32 %v7146, %v7169
    %v7172 = vmul.f32 %v7149, %v7169
    %v7173 = vmul.f32 %v7152, %v7169
    %7182 = vset.pattern.permute.xlu0 0
    %7183 = vperm.xlu0 %7182, %v7165
    %v7184 = vpop.permute.xlu0 %7183
    %7185 = vset.pattern.permute.xlu0 0
    %7186 = vperm.xlu0 %7185, %v7166
    %v7187 = vpop.permute.xlu0 %7186
    %7188 = vset.pattern.permute.xlu0 0
    %7189 = vperm.xlu0 %7188, %v7167
    %v7190 = vpop.permute.xlu0 %7189
    %7191 = vset.pattern.permute.xlu0 0
    %7192 = vperm.xlu0 %7191, %v7168
    %v7193 = vpop.permute.xlu0 %7192
    %7194 = vset.pattern.permute.xlu0 0
    %7195 = vperm.xlu0 %7194, %v7170
    %v7196 = vpop.permute.xlu0 %7195
    %7197 = vset.pattern.permute.xlu0 0
    %7198 = vperm.xlu0 %7197, %v7171
    %v7199 = vpop.permute.xlu0 %7198
    %7200 = vset.pattern.permute.xlu0 0
    %7201 = vperm.xlu0 %7200, %v7172
    %v7202 = vpop.permute.xlu0 %7201
    %7203 = vset.pattern.permute.xlu0 0
    %7204 = vperm.xlu0 %7203, %v7173
    %v7205 = vpop.permute.xlu0 %7204
    %v7206 = vlaneseq
    %v7207 = vshrl.u32 %v7206, 7
    %v7208 = vsub.s32 %v617, %v7207
    %v7209 = vrot.slane %v7184, %v7208
    %v7210 = vlaneseq
    %v7211 = vshrl.u32 %v7210, 7
    %v7212 = vsub.s32 %v622, %v7211
    %v7213 = vrot.slane %v7187, %v7212
    %v7214 = vsel %vm627, %v7213, %v7209
    %v7215 = vlaneseq
    %v7216 = vshrl.u32 %v7215, 7
    %v7217 = vsub.s32 %v629, %v7216
    %v7218 = vrot.slane %v7190, %v7217
    %v7219 = vsel %vm634, %v7218, %v7214
    %v7220 = vlaneseq
    %v7221 = vshrl.u32 %v7220, 7
    %v7222 = vsub.s32 %v636, %v7221
    %v7223 = vrot.slane %v7193, %v7222
    %v7224 = vsel %vm641, %v7223, %v7219
    %v7225 = vlaneseq
    %v7226 = vshrl.u32 %v7225, 7
    %v7227 = vsub.s32 %v617, %v7226
    %v7228 = vrot.slane %v7196, %v7227
    %v7229 = vlaneseq
    %v7230 = vshrl.u32 %v7229, 7
    %v7231 = vsub.s32 %v622, %v7230
    %v7232 = vrot.slane %v7199, %v7231
    %v7233 = vsel %vm627, %v7232, %v7228
    %v7234 = vlaneseq
    %v7235 = vshrl.u32 %v7234, 7
    %v7236 = vsub.s32 %v629, %v7235
    %v7237 = vrot.slane %v7202, %v7236
    %v7238 = vsel %vm634, %v7237, %v7233
    %v7239 = vlaneseq
    %v7240 = vshrl.u32 %v7239, 7
    %v7241 = vsub.s32 %v636, %v7240
    %v7242 = vrot.slane %v7205, %v7241
    %v7243 = vsel %vm641, %v7242, %v7238
    %v7244 = vsel %vm3510, %v7243, %v7224
    %v7246 = vmul.f32 %v4097, %v7244
    %7248 = vrot.lane.b32.xlu0 %v7246, 64
    %v7249 = vpop.permute.xlu0 %7248
    %v7251 = vsel %vm3365, %v7249, 0.0
    %7252 = vadd.xlane.f32.xlu0 %v7251
    %v7253 = vpop.xlane.xlu0 %7252
    %v7254 = vmul.f32 %v7253, %v673
    %v7255 = vsub.f32 %v7246, %v7254
    %v7256 = vmul.f32 %v7255, %v7255
    %7258 = vrot.lane.b32.xlu0 %v7256, 64
    %v7259 = vpop.permute.xlu0 %7258
    %v7261 = vsel %vm3365, %v7259, 0.0
    %7262 = vadd.xlane.f32.xlu0 %v7261
    %v7263 = vpop.xlane.xlu0 %7262
    %v7264 = vmul.f32 %v7263, %v673
    %v7265 = vadd.f32 %v7264, 1e-05
    %v7266 = vrsqrt.pop %v7265
    %v7267 = vmul.f32 %v7255, %v7266
    %v7268 = vmul.f32 %v7267, %v694
    %v7269 = vadd.f32 %v7268, %v703
    %v7270 = vpack.c.bf16 %v7269, %v7269
    %v7272 = vrot.slane %v7270, 3
    %7273 = vrot.lane.b32.xlu0 %v7272, 64
    %v7274 = vpop.permute.xlu0 %7273
    %v7276 = vsel %vm537, %v7274, 0
    %7278 = vmatprep.subr.bf16.mxu0 %v734
    %7279 = vmatpush1.bf16.msra.mxu0 %v733
    %7280 = vmatprep.subr.bf16.mxu0 %v736
    %7281 = vmatpush1.bf16.msra.mxu0 %v735
    %7282 = vmatprep.subr.bf16.mxu0 0
    %7283 = vmatpush1.bf16.msra.mxu0 0
    %7284 = vmatprep.subr.bf16.mxu0 0
    %7285 = vmatpush1.bf16.msra.mxu0 0
    %7286 = vmatprep.subr.bf16.mxu0 0
    %7287 = vmatpush1.bf16.msra.mxu0 0
    %7288 = vmatprep.subr.bf16.mxu0 0
    %7289 = vmatpush1.bf16.msra.mxu0 0
    %7290 = vmatprep.subr.bf16.mxu0 0
    %7291 = vmatpush1.bf16.msra.mxu0 0
    %7292 = vmatprep.subr.bf16.mxu0 0
    %7293 = vmatpush1.bf16.msra.mxu0 0
    %7294 = vmatprep.subr.bf16.mxu0 0
    %7295 = vmatpush1.bf16.msra.mxu0 0
    %7296 = vmatprep.subr.bf16.mxu0 0
    %7297 = vmatpush1.bf16.msra.mxu0 0
    %7298 = vmatprep.subr.bf16.mxu0 0
    %7299 = vmatpush1.bf16.msra.mxu0 0
    %7300 = vmatprep.subr.bf16.mxu0 0
    %7301 = vmatpush1.bf16.msra.mxu0 0
    %7302 = vmatprep.subr.bf16.mxu0 0
    %7303 = vmatpush1.bf16.msra.mxu0 0
    %7304 = vmatprep.subr.bf16.mxu0 0
    %7305 = vmatpush1.bf16.msra.mxu0 0
    %7306 = vmatprep.subr.bf16.mxu0 0
    %7307 = vmatpush1.bf16.msra.mxu0 0
    %7308 = vmatprep.subr.bf16.mxu0 0
    %7309 = vmatpush1.bf16.msra.mxu0 0
    %7310 = vmatprep.mubr.bf16.mxu0 0
    %7311 = vmatmul.mubr.bf16.gmra.mrb[0].mxu0 %v7276
    %v7312 = vpop.f32.mrb[0].mxu0
    %v7313 = vadd.f32 %v711, %v7312
    %v7314 = vpop.f32.mrb[0].mxu0
    %v7315 = vadd.f32 %v715, %v7314
    %v7316 = vpop.f32.mrb[0].mxu0
    %v7317 = vpop.f32.mrb[0].mxu0
    %7318 = vdwg.mxu0
    %v7319 = vmax.f32 %v7313, -100.0
    %v7320 = vmin.f32 %v7319, 100.0
    %v7321 = vmul.f32 %v7320, 1.442695
    %v7322 = vpow.pop %v7321
    %v7323 = vxor.u32 %v7320, 2147483648
    %v7324 = vmul.f32 %v7323, 1.442695
    %v7325 = vpow.pop %v7324
    %v7326 = vadd.f32 %v7325, 1.0
    %v7327 = vrcp.pop %v7326
    %v7328 = vmul.f32 1.0, %v7327
    %v7329 = vmax.f32 %v7320, -18.420681
    %v7330 = vmax.f32 %v7328, 1e-08
    %v7331 = vlog2.pop %v7330
    %v7332 = vmul.f32 %v7331, 0.6931472
    %v7333 = vrot.slane %v6914, 6
    %v7335 = vadd.f32 %v7332, %v7333
    %7337 = vrot.lane.b32.xlu0 %v7329, 32
    %v7338 = vpop.permute.xlu0 %7337
    %v7340 = vmax.f32 %v7335, %v7338
    %7342 = vrot.lane.b32.xlu0 %v7340, 96
    %v7343 = vpop.permute.xlu0 %7342
    %v7345 = vsub.f32 %v7322, %v7343
    %v7346 = vmin.f32 %v7345, 20.0
    %v7347 = vmul.f32 %v7346, 1.442695
    %v7348 = vpow.pop %v7347
    %v7349 = vlaneseq
    %v7350 = vshrl.u32 %v7349, 7
    %v7351 = vsub.s32 0, %v7350
    %v7352 = vrot.slane %v7315, %v7351
    %s7354 = sor.u32 256, 32
    %7355 = vbcast.lane.b32.xlu0 %v7352, %s7354
    %v7356 = vpop.permute.xlu0 %7355
    %s7358 = sor.u32 256, 40
    %7359 = vbcast.lane.b32.xlu0 %v7352, %s7358
    %v7360 = vpop.permute.xlu0 %7359
    %s7362 = sor.u32 256, 48
    %7363 = vbcast.lane.b32.xlu0 %v7352, %s7362
    %v7364 = vpop.permute.xlu0 %7363
    %s7366 = sor.u32 256, 56
    %7367 = vbcast.lane.b32.xlu0 %v7352, %s7366
    %v7368 = vpop.permute.xlu0 %7367
    %v7369 = vlaneseq
    %v7370 = vshrl.u32 %v7369, 7
    %v7371 = vsub.s32 1, %v7370
    %v7372 = vrot.slane %v7315, %v7371
    %s7374 = sor.u32 256, 32
    %7375 = vbcast.lane.b32.xlu0 %v7372, %s7374
    %v7376 = vpop.permute.xlu0 %7375
    %s7378 = sor.u32 256, 40
    %7379 = vbcast.lane.b32.xlu0 %v7372, %s7378
    %v7380 = vpop.permute.xlu0 %7379
    %s7382 = sor.u32 256, 48
    %7383 = vbcast.lane.b32.xlu0 %v7372, %s7382
    %v7384 = vpop.permute.xlu0 %7383
    %s7386 = sor.u32 256, 56
    %7387 = vbcast.lane.b32.xlu0 %v7372, %s7386
    %v7388 = vpop.permute.xlu0 %7387
    %v7391 = vunpack.c.l.s4 1966171168
    %v7392 = vunpack.c.0.s8 %v7391
    %v7393 = vlaneseq
    %v7394 = vshrl.u32 %v7393, 7
    %v7395 = vsub.s32 %v7392, %v7394
    %v7396 = vrot.slane %v7315, %v7395
    %v7397 = vcombine.high %v7396, %v7396
    %v7399 = vunpack.c.l.s4 1966171168
    %v7400 = vunpack.c.0.s8 %v7399
    %v7401 = vlaneseq
    %v7402 = vshrl.u32 %v7401, 7
    %v7403 = vsub.s32 %v7400, %v7402
    %v7404 = vrot.slane %v7396, %v7403
    %v7406 = vunpack.c.l.s4 1966171168
    %v7407 = vunpack.c.0.s8 %v7406
    %v7408 = vlaneseq
    %v7409 = vshrl.u32 %v7408, 7
    %v7410 = vsub.s32 %v7407, %v7409
    %v7411 = vrot.slane %v7397, %v7410
    %v7412 = vlaneseq
    %v7413 = vshrl.u32 %v7412, 7
    %v7414 = vsub.s32 0, %v7413
    %v7415 = vrot.slane %v7404, %v7414
    %v7416 = vlaneseq
    %v7417 = vshrl.u32 %v7416, 7
    %v7418 = vsub.s32 0, %v7417
    %v7419 = vrot.slane %v7411, %v7418
    %v7422 = vmul.f32 %v7356, %v7415
    %v7423 = vmul.f32 %v7360, %v7415
    %v7424 = vmul.f32 %v7364, %v7415
    %v7425 = vmul.f32 %v7368, %v7415
    %v7426 = vmul.f32 %v7376, %v7419
    %v7427 = vmul.f32 %v7380, %v7419
    %v7428 = vmul.f32 %v7384, %v7419
    %v7429 = vmul.f32 %v7388, %v7419
    %v7430 = vlaneseq
    %v7431 = vshrl.u32 %v7430, 7
    %v7432 = vsub.s32 0, %v7431
    %v7433 = vrot.slane %v7328, %v7432
    %s7435 = sor.u32 256, 32
    %7436 = vbcast.lane.b32.xlu0 %v7433, %s7435
    %v7437 = vpop.permute.xlu0 %7436
    %s7439 = sor.u32 256, 40
    %7440 = vbcast.lane.b32.xlu0 %v7433, %s7439
    %v7441 = vpop.permute.xlu0 %7440
    %s7443 = sor.u32 256, 48
    %7444 = vbcast.lane.b32.xlu0 %v7433, %s7443
    %v7445 = vpop.permute.xlu0 %7444
    %s7447 = sor.u32 256, 56
    %7448 = vbcast.lane.b32.xlu0 %v7433, %s7447
    %v7449 = vpop.permute.xlu0 %7448
    %v7450 = vlaneseq
    %v7451 = vshrl.u32 %v7450, 7
    %v7452 = vsub.s32 1, %v7451
    %v7453 = vrot.slane %v7328, %v7452
    %s7455 = sor.u32 256, 32
    %7456 = vbcast.lane.b32.xlu0 %v7453, %s7455
    %v7457 = vpop.permute.xlu0 %7456
    %s7459 = sor.u32 256, 40
    %7460 = vbcast.lane.b32.xlu0 %v7453, %s7459
    %v7461 = vpop.permute.xlu0 %7460
    %s7463 = sor.u32 256, 48
    %7464 = vbcast.lane.b32.xlu0 %v7453, %s7463
    %v7465 = vpop.permute.xlu0 %7464
    %s7467 = sor.u32 256, 56
    %7468 = vbcast.lane.b32.xlu0 %v7453, %s7467
    %v7469 = vpop.permute.xlu0 %7468
    %v7470 = vmul.f32 %v7437, %v7077
    %v7471 = vmul.f32 %v7441, %v7078
    %v7472 = vmul.f32 %v7445, %v7079
    %v7473 = vmul.f32 %v7449, %v7080
    %v7474 = vmul.f32 %v7457, %v7081
    %v7475 = vmul.f32 %v7461, %v7082
    %v7476 = vmul.f32 %v7465, %v7083
    %v7477 = vmul.f32 %v7469, %v7084
    %v7478 = vlaneseq
    %v7479 = vshrl.u32 %v7478, 7
    %v7480 = vsub.s32 0, %v7479
    %v7481 = vrot.slane %v7348, %v7480
    %7483 = vbcast.lane.b32.xlu0 %v7481, 256
    %v7484 = vpop.permute.xlu0 %7483
    %s7486 = sor.u32 256, 8
    %7487 = vbcast.lane.b32.xlu0 %v7481, %s7486
    %v7488 = vpop.permute.xlu0 %7487
    %s7490 = sor.u32 256, 16
    %7491 = vbcast.lane.b32.xlu0 %v7481, %s7490
    %v7492 = vpop.permute.xlu0 %7491
    %s7494 = sor.u32 256, 24
    %7495 = vbcast.lane.b32.xlu0 %v7481, %s7494
    %v7496 = vpop.permute.xlu0 %7495
    %v7497 = vlaneseq
    %v7498 = vshrl.u32 %v7497, 7
    %v7499 = vsub.s32 1, %v7498
    %v7500 = vrot.slane %v7348, %v7499
    %7502 = vbcast.lane.b32.xlu0 %v7500, 256
    %v7503 = vpop.permute.xlu0 %7502
    %s7505 = sor.u32 256, 8
    %7506 = vbcast.lane.b32.xlu0 %v7500, %s7505
    %v7507 = vpop.permute.xlu0 %7506
    %s7509 = sor.u32 256, 16
    %7510 = vbcast.lane.b32.xlu0 %v7500, %s7509
    %v7511 = vpop.permute.xlu0 %7510
    %s7513 = sor.u32 256, 24
    %7514 = vbcast.lane.b32.xlu0 %v7500, %s7513
    %v7515 = vpop.permute.xlu0 %7514
    %v7516 = vmul.f32 %v7484, %v7422
    %v7517 = vmul.f32 %v7488, %v7423
    %v7518 = vmul.f32 %v7492, %v7424
    %v7519 = vmul.f32 %v7496, %v7425
    %v7520 = vmul.f32 %v7503, %v7426
    %v7521 = vmul.f32 %v7507, %v7427
    %v7522 = vmul.f32 %v7511, %v7428
    %v7523 = vmul.f32 %v7515, %v7429
    %v7524 = vadd.f32 %v7470, %v7516
    %v7525 = vadd.f32 %v7471, %v7517
    %v7526 = vadd.f32 %v7472, %v7518
    %v7527 = vadd.f32 %v7473, %v7519
    %v7528 = vadd.f32 %v7474, %v7520
    %v7529 = vadd.f32 %v7475, %v7521
    %v7530 = vadd.f32 %v7476, %v7522
    %v7531 = vadd.f32 %v7477, %v7523
    %v7533 = vrot.slane %v7094, 6
    %v7535 = vmul.f32 %v7328, %v7533
    %v7536 = vmul.f32 %v7348, %v7315
    %7538 = vrot.lane.b32.xlu0 %v7536, 32
    %v7539 = vpop.permute.xlu0 %7538
    %v7541 = vadd.f32 %v7535, %v7539
    %7543 = vrot.lane.b32.xlu0 %v7313, 64
    %v7544 = vpop.permute.xlu0 %7543
    %v7546 = vmul.f32 %v7541, %v7544
    %7548 = vrot.lane.b32.xlu0 %v7546, 96
    %v7549 = vpop.permute.xlu0 %7548
    %v7551 = vsel %vm487, %v7549, 0.0
    %7552 = vadd.xlane.f32.xlu0 %v7551
    %v7553 = vpop.xlane.xlu0 %7552
    %v7554 = vand.u32 2147483647, %v7553
    %v7555 = vmax.f32 %v7554, 1.0
    %v7557 = vunpack.c.l.s4 1966171168
    %v7558 = vunpack.c.0.s8 %v7557
    %v7559 = vlaneseq
    %v7560 = vshrl.u32 %v7559, 7
    %v7561 = vsub.s32 %v7558, %v7560
    %v7562 = vrot.slane %v7313, %v7561
    %v7563 = vcombine.high %v7562, %v7562
    %v7565 = vunpack.c.l.s4 1966171168
    %v7566 = vunpack.c.0.s8 %v7565
    %v7567 = vlaneseq
    %v7568 = vshrl.u32 %v7567, 7
    %v7569 = vsub.s32 %v7566, %v7568
    %v7570 = vrot.slane %v7562, %v7569
    %v7572 = vunpack.c.l.s4 1966171168
    %v7573 = vunpack.c.0.s8 %v7572
    %v7574 = vlaneseq
    %v7575 = vshrl.u32 %v7574, 7
    %v7576 = vsub.s32 %v7573, %v7575
    %v7577 = vrot.slane %v7563, %v7576
    %v7578 = vlaneseq
    %v7579 = vshrl.u32 %v7578, 7
    %v7580 = vsub.s32 0, %v7579
    %v7581 = vrot.slane %v7570, %v7580
    %v7582 = vlaneseq
    %v7583 = vshrl.u32 %v7582, 7
    %v7584 = vsub.s32 0, %v7583
    %v7585 = vrot.slane %v7577, %v7584
    %7586 = vrot.lane.b32.xlu0 %v7581, 32
    %v7587 = vpop.permute.xlu0 %7586
    %7588 = vrot.lane.b32.xlu0 %v7585, 32
    %v7589 = vpop.permute.xlu0 %7588
    %v7592 = vmul.f32 %v7524, %v7587
    %v7593 = vmul.f32 %v7525, %v7587
    %v7594 = vmul.f32 %v7526, %v7587
    %v7595 = vmul.f32 %v7527, %v7587
    %v7596 = vmul.f32 %v7528, %v7589
    %v7597 = vmul.f32 %v7529, %v7589
    %v7598 = vmul.f32 %v7530, %v7589
    %v7599 = vmul.f32 %v7531, %v7589
    %v7600 = vsel %vm537, %v7592, 0.0
    %7601 = vadd.xlane.f32.xlu0 %v7600
    %v7602 = vpop.xlane.xlu0 %7601
    %v7603 = vsel %vm537, %v7593, 0.0
    %7604 = vadd.xlane.f32.xlu0 %v7603
    %v7605 = vpop.xlane.xlu0 %7604
    %v7606 = vsel %vm537, %v7594, 0.0
    %7607 = vadd.xlane.f32.xlu0 %v7606
    %v7608 = vpop.xlane.xlu0 %7607
    %v7609 = vsel %vm537, %v7595, 0.0
    %7610 = vadd.xlane.f32.xlu0 %v7609
    %v7611 = vpop.xlane.xlu0 %7610
    %v7612 = vsel %vm537, %v7596, 0.0
    %7613 = vadd.xlane.f32.xlu0 %v7612
    %v7614 = vpop.xlane.xlu0 %7613
    %v7615 = vsel %vm537, %v7597, 0.0
    %7616 = vadd.xlane.f32.xlu0 %v7615
    %v7617 = vpop.xlane.xlu0 %7616
    %v7618 = vsel %vm537, %v7598, 0.0
    %7619 = vadd.xlane.f32.xlu0 %v7618
    %v7620 = vpop.xlane.xlu0 %7619
    %v7621 = vsel %vm537, %v7599, 0.0
    %7622 = vadd.xlane.f32.xlu0 %v7621
    %v7623 = vpop.xlane.xlu0 %7622
    %v7625 = vlaneseq
    %v7626 = vshrl.u32 %v7625, 7
    %v7627 = vsub.s32 0, %v7626
    %v7628 = vrot.slane %v7555, %v7627
    %v7629 = vlaneseq
    %v7630 = vshrl.u32 %v7629, 7
    %v7631 = vsub.s32 1, %v7630
    %v7632 = vrot.slane %v7555, %v7631
    %v7635 = vrcp.pop %v7628
    %v7636 = vmul.f32 %v7602, %v7635
    %v7637 = vmul.f32 %v7605, %v7635
    %v7638 = vmul.f32 %v7608, %v7635
    %v7639 = vmul.f32 %v7611, %v7635
    %v7640 = vrcp.pop %v7632
    %v7641 = vmul.f32 %v7614, %v7640
    %v7642 = vmul.f32 %v7617, %v7640
    %v7643 = vmul.f32 %v7620, %v7640
    %v7644 = vmul.f32 %v7623, %v7640
    %7653 = vset.pattern.permute.xlu0 0
    %7654 = vperm.xlu0 %7653, %v7636
    %v7655 = vpop.permute.xlu0 %7654
    %7656 = vset.pattern.permute.xlu0 0
    %7657 = vperm.xlu0 %7656, %v7637
    %v7658 = vpop.permute.xlu0 %7657
    %7659 = vset.pattern.permute.xlu0 0
    %7660 = vperm.xlu0 %7659, %v7638
    %v7661 = vpop.permute.xlu0 %7660
    %7662 = vset.pattern.permute.xlu0 0
    %7663 = vperm.xlu0 %7662, %v7639
    %v7664 = vpop.permute.xlu0 %7663
    %7665 = vset.pattern.permute.xlu0 0
    %7666 = vperm.xlu0 %7665, %v7641
    %v7667 = vpop.permute.xlu0 %7666
    %7668 = vset.pattern.permute.xlu0 0
    %7669 = vperm.xlu0 %7668, %v7642
    %v7670 = vpop.permute.xlu0 %7669
    %7671 = vset.pattern.permute.xlu0 0
    %7672 = vperm.xlu0 %7671, %v7643
    %v7673 = vpop.permute.xlu0 %7672
    %7674 = vset.pattern.permute.xlu0 0
    %7675 = vperm.xlu0 %7674, %v7644
    %v7676 = vpop.permute.xlu0 %7675
    %v7677 = vlaneseq
    %v7678 = vshrl.u32 %v7677, 7
    %v7679 = vsub.s32 %v617, %v7678
    %v7680 = vrot.slane %v7655, %v7679
    %v7681 = vlaneseq
    %v7682 = vshrl.u32 %v7681, 7
    %v7683 = vsub.s32 %v622, %v7682
    %v7684 = vrot.slane %v7658, %v7683
    %v7685 = vsel %vm627, %v7684, %v7680
    %v7686 = vlaneseq
    %v7687 = vshrl.u32 %v7686, 7
    %v7688 = vsub.s32 %v629, %v7687
    %v7689 = vrot.slane %v7661, %v7688
    %v7690 = vsel %vm634, %v7689, %v7685
    %v7691 = vlaneseq
    %v7692 = vshrl.u32 %v7691, 7
    %v7693 = vsub.s32 %v636, %v7692
    %v7694 = vrot.slane %v7664, %v7693
    %v7695 = vsel %vm641, %v7694, %v7690
    %v7696 = vlaneseq
    %v7697 = vshrl.u32 %v7696, 7
    %v7698 = vsub.s32 %v617, %v7697
    %v7699 = vrot.slane %v7667, %v7698
    %v7700 = vlaneseq
    %v7701 = vshrl.u32 %v7700, 7
    %v7702 = vsub.s32 %v622, %v7701
    %v7703 = vrot.slane %v7670, %v7702
    %v7704 = vsel %vm627, %v7703, %v7699
    %v7705 = vlaneseq
    %v7706 = vshrl.u32 %v7705, 7
    %v7707 = vsub.s32 %v629, %v7706
    %v7708 = vrot.slane %v7673, %v7707
    %v7709 = vsel %vm634, %v7708, %v7704
    %v7710 = vlaneseq
    %v7711 = vshrl.u32 %v7710, 7
    %v7712 = vsub.s32 %v636, %v7711
    %v7713 = vrot.slane %v7676, %v7712
    %v7714 = vsel %vm641, %v7713, %v7709
    %v7715 = vsel %vm662, %v7714, %v7695
    %v7717 = vmul.f32 %v7328, %v7715
    %v7718 = vpack.c.bf16 %v7246, %v7246
    %v7719 = vpack.c.bf16 %v7717, %v7717
    %7721 = vrot.lane.b32.xlu0 %v7719, 64
    %v7722 = vpop.permute.xlu0 %7721
    %v7724 = vsel %vm537, %v7722, 0
    %7726 = vmatprep.subr.bf16.mxu0 0
    %7727 = vmatpush1.bf16.msra.mxu0 %v1192
    %7728 = vmatprep.subr.bf16.mxu0 0
    %7729 = vmatpush1.bf16.msra.mxu0 %v1193
    %7730 = vmatprep.subr.bf16.mxu0 0
    %7731 = vmatpush1.bf16.msra.mxu0 0
    %7732 = vmatprep.subr.bf16.mxu0 0
    %7733 = vmatpush1.bf16.msra.mxu0 0
    %7734 = vmatprep.subr.bf16.mxu0 0
    %7735 = vmatpush1.bf16.msra.mxu0 0
    %7736 = vmatprep.subr.bf16.mxu0 0
    %7737 = vmatpush1.bf16.msra.mxu0 0
    %7738 = vmatprep.subr.bf16.mxu0 0
    %7739 = vmatpush1.bf16.msra.mxu0 0
    %7740 = vmatprep.subr.bf16.mxu0 0
    %7741 = vmatpush1.bf16.msra.mxu0 0
    %7742 = vmatprep.subr.bf16.mxu0 0
    %7743 = vmatpush1.bf16.msra.mxu0 0
    %7744 = vmatprep.subr.bf16.mxu0 0
    %7745 = vmatpush1.bf16.msra.mxu0 0
    %7746 = vmatprep.subr.bf16.mxu0 0
    %7747 = vmatpush1.bf16.msra.mxu0 0
    %7748 = vmatprep.subr.bf16.mxu0 0
    %7749 = vmatpush1.bf16.msra.mxu0 0
    %7750 = vmatprep.subr.bf16.mxu0 0
    %7751 = vmatpush1.bf16.msra.mxu0 0
    %7752 = vmatprep.subr.bf16.mxu0 0
    %7753 = vmatpush1.bf16.msra.mxu0 0
    %7754 = vmatprep.subr.bf16.mxu0 0
    %7755 = vmatpush1.bf16.msra.mxu0 0
    %7756 = vmatprep.subr.bf16.mxu0 0
    %7757 = vmatpush1.bf16.msra.mxu0 0
    %7758 = vmatprep.mubr.bf16.mxu0 0
    %7759 = vmatmul.mubr.bf16.gmra.mrb[0].mxu0 %v7724
    %v7760 = vpop.f32.mrb[0].mxu0
    %v7761 = vadd.f32 0.0, %v7760
    %v7762 = vpop.f32.mrb[0].mxu0
    %v7763 = vpop.f32.mrb[0].mxu0
    %v7764 = vpop.f32.mrb[0].mxu0
    %7765 = vdwg.mxu0
    %v7767 = vrot.slane %v7718, 3
    %7768 = vrot.lane.b32.xlu0 %v7767, 64
    %v7769 = vpop.permute.xlu0 %7768
    %v7771 = vsel %vm537, %v7769, 0
    %7773 = vmatprep.subr.bf16.mxu0 0
    %7774 = vmatpush1.bf16.msra.mxu0 %v1250
    %7775 = vmatprep.subr.bf16.mxu0 0
    %7776 = vmatpush1.bf16.msra.mxu0 %v1251
    %7777 = vmatprep.subr.bf16.mxu0 0
    %7778 = vmatpush1.bf16.msra.mxu0 0
    %7779 = vmatprep.subr.bf16.mxu0 0
    %7780 = vmatpush1.bf16.msra.mxu0 0
    %7781 = vmatprep.subr.bf16.mxu0 0
    %7782 = vmatpush1.bf16.msra.mxu0 0
    %7783 = vmatprep.subr.bf16.mxu0 0
    %7784 = vmatpush1.bf16.msra.mxu0 0
    %7785 = vmatprep.subr.bf16.mxu0 0
    %7786 = vmatpush1.bf16.msra.mxu0 0
    %7787 = vmatprep.subr.bf16.mxu0 0
    %7788 = vmatpush1.bf16.msra.mxu0 0
    %7789 = vmatprep.subr.bf16.mxu0 0
    %7790 = vmatpush1.bf16.msra.mxu0 0
    %7791 = vmatprep.subr.bf16.mxu0 0
    %7792 = vmatpush1.bf16.msra.mxu0 0
    %7793 = vmatprep.subr.bf16.mxu0 0
    %7794 = vmatpush1.bf16.msra.mxu0 0
    %7795 = vmatprep.subr.bf16.mxu0 0
    %7796 = vmatpush1.bf16.msra.mxu0 0
    %7797 = vmatprep.subr.bf16.mxu0 0
    %7798 = vmatpush1.bf16.msra.mxu0 0
    %7799 = vmatprep.subr.bf16.mxu0 0
    %7800 = vmatpush1.bf16.msra.mxu0 0
    %7801 = vmatprep.subr.bf16.mxu0 0
    %7802 = vmatpush1.bf16.msra.mxu0 0
    %7803 = vmatprep.subr.bf16.mxu0 0
    %7804 = vmatpush1.bf16.msra.mxu0 0
    %7805 = vmatprep.mubr.bf16.mxu0 0
    %7806 = vmatmul.mubr.bf16.gmra.mrb[0].mxu0 %v7771
    %v7807 = vpop.f32.mrb[0].mxu0
    %v7808 = vadd.f32 %v7761, %v7807
    %v7809 = vpop.f32.mrb[0].mxu0
    %v7810 = vpop.f32.mrb[0].mxu0
    %v7811 = vpop.f32.mrb[0].mxu0
    %7812 = vdwg.mxu0
    %v7813 = vadd.f32 %v7808, %v1301
    %7815 = vrot.lane.b32.xlu0 %v7717, 64
    %v7816 = vpop.permute.xlu0 %7815
    %v7818 = vadd.f32 %v7813, %v7816
    %s7819 = scalar_lea.vmem [#allocation13], 14
    %7820 = vst.msk [vmem:[%s7819] sm:$0x3] %vm487, %v7818
    %7821 = vst.msk [vmem:[#allocation2] sm:$0xff] %vm537, %v7524
    %7822 = vst.msk [vmem:[#allocation2 + $0x8] sm:$0xff] %vm537, %v7525
    %7823 = vst.msk [vmem:[#allocation2 + $0x10] sm:$0xff] %vm537, %v7526
    %7824 = vst.msk [vmem:[#allocation2 + $0x18] sm:$0xff] %vm537, %v7527
    %7825 = vst.msk [vmem:[#allocation2 + $0x20] sm:$0xff] %vm537, %v7528
    %7826 = vst.msk [vmem:[#allocation2 + $0x28] sm:$0xff] %vm537, %v7529
    %7827 = vst.msk [vmem:[#allocation2 + $0x30] sm:$0xff] %vm537, %v7530
    %7828 = vst.msk [vmem:[#allocation2 + $0x38] sm:$0xff] %vm537, %v7531
    %7830 = vrot.lane.b32.xlu0 %v7541, 96
    %v7831 = vpop.permute.xlu0 %7830
    %7833 = vst.msk [vmem:[#allocation3] sm:$0x3] %vm487, %v7831
    %7834 = vst.msk [vmem:[#allocation4] sm:$0x3] %vm487, %v7343
    // Predicated region
    $region62: #{tpu_custom_call.1} parent=1 // pred_check
      %p7835 = pneg %p95
    $region63: #{tpu_custom_call.1} parent=1 // pred_check_branch
      %7837 = sbr.rel (%p7835) target = $region65
    $region64: #{tpu_custom_call.1} parent=1 // pred_region
      %7838 = vst.msk [vmem:[#allocation14] sm:$0x3] %vm487, %v7343
    $region65: #{tpu_custom_call.1} parent=1 // pred_fallthru
      _
    // Predicated region
    $region66: #{tpu_custom_call.1} parent=1 // pred_check
      _
    $region67: #{tpu_custom_call.1} parent=1 // pred_check_branch
      %7840 = sbr.rel (0) target = $region69
    $region68: #{tpu_custom_call.1} parent=1 // pred_region
      %s7842 = ssub.s32 256, 256
      %7843 = vsyncadd [#allocation7], %s7842
      %s7844 = sshll.u32 [#allocation13], 4
      %s7845 = int_to_ptr.vmem [resolvable:$true] %s7844
      %7850 = dma.vmem_to_hbm [thread:$0]  %s7845, 256, %s10, [#allocation7], 32, 32, 2
    $region69: #{tpu_custom_call.1} parent=1 // pred_fallthru
      _
    // Predicated region
    $region70: #{tpu_custom_call.1} parent=1 // pred_check
      _
    $region71: #{tpu_custom_call.1} parent=1 // pred_check_branch
      %7852 = sbr.rel (0) target = $region73
    $region72: #{tpu_custom_call.1} parent=1 // pred_region
      %s7854 = ssub.s32 32, 32
      %7855 = vsyncadd [#allocation15], %s7854
      %s7857 = sshll.u32 [#allocation14], 4
      %s7858 = int_to_ptr.vmem [resolvable:$true] %s7857
      %7860 = dma.vmem_to_hbm [thread:$0]  %s7858, 32, %s11, [#allocation15]
    $region73: #{tpu_custom_call.1} parent=1 // pred_fallthru
      _
    // Predicated region
    $region74: #{tpu_custom_call.1} parent=1 // pred_check
      _
    $region75: #{tpu_custom_call.1} parent=1 // pred_check_branch
      %7862 = sbr.rel (0) target = $region77
    $region76: #{tpu_custom_call.1} parent=1 // pred_region
      %7863 = dma.done [#allocation7], 256
    $region77: #{tpu_custom_call.1} parent=1 // pred_fallthru
      _
    // Predicated region
    $region78: #{tpu_custom_call.1} parent=1 // pred_check
      _
    $region79: #{tpu_custom_call.1} parent=1 // pred_check_branch
      %7865 = sbr.rel (0) target = $region81
    $region80: #{tpu_custom_call.1} parent=1 // pred_region
      %7866 = dma.done [#allocation15], 32
    $region81: #{tpu_custom_call.1} parent=1 // pred_fallthru
      _
    %7867 = vsyncpa [#allocation6], 1
    %7868 = vsyncpa [#allocation9], 1
    %7869 = vsyncpa [#allocation12], 1
    %7870 = vsyncpa [#allocation7], 1
    %7871 = vsyncpa [#allocation15], 1

</llo_original>
